<compile_context>
chip_gen: v7x
topology: tpu7x:2x2x1
jax: 0.10.0
libtpu: 0.0.40
codegen_flags: <defaults>
</compile_context>

<pallas_src>
import jax
import jax.numpy as jnp
import numpy as np
from jax import lax
from jax.experimental import pallas as pl
from jax.experimental.pallas import tpu as pltpu


# ---------------------------------------------------------------------------
# The single fused LeNet kernel
# ---------------------------------------------------------------------------
def _lenet_kernel(xs_ref, w1_ref, b1_ref, w2_ref, b2_ref, sel_ref, msk_ref,
                  f1w_ref, f1b_ref, f2w_ref, f2b_ref, f3w_ref, f3b_ref,
                  out_ref, p1_ref, p2_ref):
    f32, bf16 = jnp.float32, jnp.bfloat16
    nb = out_ref.shape[1]                      # samples per grid step

    def lshift(v, s):                          # out[:, L] = v[:, L + s] (tail wraps -> junk lanes only)
        if s == 0:
            return v
        return jnp.concatenate([v[:, s:], v[:, :s]], axis=1)

    # ---------------- conv1 im2col: 25 aligned, full-lane-width stores -------
    # Per-sample layout: pixel (h, w) lives at lane 32*h + w of a 1024-lane block.
    xs = xs_ref[...]                                           # (8, nb*1024) bf16
    for t in range(25):
        i, j = t // 5, t % 5
        p1_ref[8 * t:8 * t + 8, :] = lshift(xs, 32 * i + j).astype(f32)

    # ---------------- conv1 as ONE 2-D MXU matmul + f32 bias/ReLU ------------
    y1 = jnp.dot(w1_ref[...], p1_ref[...].astype(bf16),
                 preferred_element_type=f32)                   # (8, nb*1024)
    y1 = jnp.maximum(y1 + b1_ref[...], 0.0)

    # ---------------- pool1: max over lane shifts {0,1,32,33} ---------------
    # Pooled pixel (ph, pw) lands at lane 64*ph + 2*pw (no decimation needed).
    m1 = jnp.maximum(jnp.maximum(y1, lshift(y1, 1)),
                     jnp.maximum(lshift(y1, 32), lshift(y1, 33))).astype(bf16)

    # ---------------- conv2 im2col on the strided pool1 slab ----------------
    for t in range(25):
        i, j = t // 5, t % 5
        p2_ref[8 * t:8 * t + 8, :] = lshift(m1, 64 * i + 2 * j).astype(f32)

    y2 = jnp.dot(w2_ref[...], p2_ref[...].astype(bf16),
                 preferred_element_type=f32)                   # (16, nb*1024)
    y2 = jnp.maximum(y2 + b2_ref[...], 0.0)

    # ---------------- pool2: shifts {0,2,64,66}; pixel (pr,pc) at 128pr+4pc --
    m2 = jnp.maximum(jnp.maximum(y2, lshift(y2, 2)),
                     jnp.maximum(lshift(y2, 64), lshift(y2, 66))).astype(bf16)

    # ---------------- gather the 400 FC features per sample -----------------
    # One-hot position matmul moves the 25 pooled pixels onto lanes (x16
    # channel columns each); the channel mask + sublane sum keeps the matching
    # channel -> a lane-dense (nb, 400) FC input, no 25-store flatten loop.
    sel = sel_ref[...]                                         # (1024, 400) bf16
    msk = msk_ref[...]                                         # (16, 400)  f32
    rows = []
    for s in range(nb):
        g = jnp.dot(m2[:, s * 1024:(s + 1) * 1024], sel,
                    preferred_element_type=f32)                # (16, 400)
        rows.append(jnp.sum(g * msk, axis=0, keepdims=True))   # (1, 400)
    fcin = (rows[0] if nb == 1 else jnp.concatenate(rows, axis=0)).astype(bf16)

    # ---------------- fc1 -> fc2 -> fc3 (bf16 operands, f32 epilogues) ------
    h1 = jnp.maximum(jnp.dot(fcin, f1w_ref[...], preferred_element_type=f32)
                     + f1b_ref[...], 0.0).astype(bf16)         # (nb, 120)
    h2 = jnp.maximum(jnp.dot(h1, f2w_ref[...], preferred_element_type=f32)
                     + f2b_ref[...], 0.0).astype(bf16)         # (nb, 84)
    logits = jnp.dot(h2, f3w_ref[...], preferred_element_type=f32) + f3b_ref[...]
    out_ref[0] = logits.astype(out_ref.dtype)                  # (nb, 128) lane-dense


# ---------------------------------------------------------------------------
# Wrapper: one pallas_call for the whole forward pass
# ---------------------------------------------------------------------------
def _pick_nb(n):
    nb = 1
    for cand in (2, 4):                      # keep >=2 grid steps (v7x megacore)
        if n % cand == 0 and n // cand >= 2:
            nb = cand
    return nb


def lenet_forward(kp, x):
    """x: (N, 3, 32, 32) float32 NCHW. Returns (N, 10) float32 logits."""
    n = x.shape[0]
    nb = _pick_nb(n)
    g = n // nb

    # Lane-dense bf16 input slab: channels padded 3->8 on sublanes, per-sample
    # H*W flattened to 1024 (8x128-aligned) lanes, samples side by side.
    xs = jnp.pad(x.astype(jnp.float32), ((0, 0), (0, 5), (0, 0), (0, 0)))
    xs = jnp.transpose(xs, (1, 0, 2, 3)).reshape(8, n * 1024).astype(jnp.bfloat16)

    warrs = (kp['w1'], kp['b1'], kp['w2'], kp['b2'], kp['sel'], kp['msk'],
             kp['f1w'], kp['f1b'], kp['f2w'], kp['f2b'], kp['f3w'], kp['f3b'])

    def full_spec(a):                        # whole array, resident every step
        nd = a.ndim
        return pl.BlockSpec(a.shape, lambda b, _nd=nd: (0,) * _nd)

    out = pl.pallas_call(
        _lenet_kernel,
        out_shape=jax.ShapeDtypeStruct((g, nb, 128), jnp.float32),
        grid=(g,),
        in_specs=[pl.BlockSpec((8, nb * 1024), lambda b: (0, b))]
                 + [full_spec(a) for a in warrs],
        out_specs=pl.BlockSpec((1, nb, 128), lambda b: (b, 0, 0)),
        scratch_shapes=[pltpu.VMEM((200, nb * 1024), jnp.float32),   # conv1 patches
                        pltpu.VMEM((200, nb * 1024), jnp.float32)],  # conv2 patches
        compiler_params=pltpu.CompilerParams(
            dimension_semantics=("parallel",),
            vmem_limit_bytes=48 * 1024 * 1024),
    )(xs, *warrs)
    return out.reshape(n, 128)[:, :10]


# ---------------------------------------------------------------------------
# Parameter init (PyTorch-style) and one-time kernel-layout preparation
# ---------------------------------------------------------------------------
def init_params(key):
    def uinit(k, shape, fan_in):
        bound = 1.0 / (fan_in ** 0.5)
        return jax.random.uniform(k, shape, jnp.float32, -bound, bound)

    ks = jax.random.split(key, 10)
    return {
        "conv1_w": uinit(ks[0], (6, 3, 5, 5), 3 * 5 * 5),
        "conv1_b": uinit(ks[1], (6,), 3 * 5 * 5),
        "conv2_w": uinit(ks[2], (16, 6, 5, 5), 6 * 5 * 5),
        "conv2_b": uinit(ks[3], (16,), 6 * 5 * 5),
        "fc1_w": uinit(ks[4], (120, 16 * 5 * 5), 16 * 5 * 5),
        "fc1_b": uinit(ks[5], (120,), 16 * 5 * 5),
        "fc2_w": uinit(ks[6], (84, 120), 120),
        "fc2_b": uinit(ks[7], (84,), 120),
        "fc3_w": uinit(ks[8], (10, 84), 84),
        "fc3_b": uinit(ks[9], (10,), 84),
    }


def prepare_params(p):
    """One-time (outside the jitted forward) re-layout of the PyTorch params."""
    f32, bf16 = jnp.float32, jnp.bfloat16

    def conv_w(w, cin):                       # (O,Cin,5,5) -> (O, 25*8) columns (i,j,c)
        o = w.shape[0]
        w = jnp.transpose(w, (0, 2, 3, 1))
        w = jnp.pad(w, ((0, 0), (0, 0), (0, 0), (0, 8 - cin)))
        return w.reshape(o, 200)

    w1e = jnp.pad(conv_w(p['conv1_w'], 3), ((0, 2), (0, 0))).astype(bf16)   # (8, 200)
    b1 = jnp.pad(p['conv1_b'], (0, 2)).reshape(8, 1).astype(f32)
    w2e = conv_w(p['conv2_w'], 6).astype(bf16)                              # (16, 200)
    b2 = p['conv2_b'].reshape(16, 1).astype(f32)

    # One-hot position selector (pooled pixel (pr,pc) sits at lane 128pr+4pc of
    # the per-sample slab) and the channel-picking mask for the FC gather.
    sel = np.zeros((1024, 400), np.float32)
    for pr in range(5):
        for pc in range(5):
            sel[128 * pr + 4 * pc, 16 * (5 * pr + pc):16 * (5 * pr + pc) + 16] = 1.0
    msk = np.zeros((16, 400), np.float32)
    msk[np.arange(400) % 16, np.arange(400)] = 1.0

    # fc1 columns re-permuted from PyTorch (c, pr, pc) order to (pr, pc, c).
    f1w = (p['fc1_w'].reshape(120, 16, 5, 5).transpose(2, 3, 1, 0)
           .reshape(400, 120).astype(bf16))
    f3w = jnp.zeros((84, 128), f32).at[:, :10].set(p['fc3_w'].T).astype(bf16)
    f3b = jnp.zeros((1, 128), f32).at[:, :10].set(p['fc3_b'].reshape(1, 10))
    return {
        'w1': w1e, 'b1': b1, 'w2': w2e, 'b2': b2,
        'sel': jnp.asarray(sel, bf16), 'msk': jnp.asarray(msk, f32),
        'f1w': f1w, 'f1b': p['fc1_b'].reshape(1, 120).astype(f32),
        'f2w': p['fc2_w'].T.astype(bf16), 'f2b': p['fc2_b'].reshape(1, 84).astype(f32),
        'f3w': f3w, 'f3b': f3b,
    }


# ---------------------------------------------------------------------------
# Pure-XLA reference (for correctness check)
# ---------------------------------------------------------------------------
def lenet_reference(params, x):
    y = lax.conv_general_dilated(x, params['conv1_w'], (1, 1), 'VALID',
                                 dimension_numbers=('NCHW', 'OIHW', 'NCHW'))
    y = jnp.maximum(y + params['conv1_b'][None, :, None, None], 0.0)
    y = lax.reduce_window(y, -jnp.inf, lax.max, (1, 1, 2, 2), (1, 1, 2, 2), 'VALID')
    y = lax.conv_general_dilated(y, params['conv2_w'], (1, 1), 'VALID',
                                 dimension_numbers=('NCHW', 'OIHW', 'NCHW'))
    y = jnp.maximum(y + params['conv2_b'][None, :, None, None], 0.0)
    y = lax.reduce_window(y, -jnp.inf, lax.max, (1, 1, 2, 2), (1, 1, 2, 2), 'VALID')
    y = y.reshape(y.shape[0], 400)
    y = jnp.maximum(y @ params['fc1_w'].T + params['fc1_b'], 0.0)
    y = jnp.maximum(y @ params['fc2_w'].T + params['fc2_b'], 0.0)
    return y @ params['fc3_w'].T + params['fc3_b']


if __name__ == "__main__":
    key = jax.random.PRNGKey(0)
    pkey, xkey = jax.random.split(key)
    params = init_params(pkey)
    x = jax.random.normal(xkey, (2, 3, 32, 32), dtype=jnp.float32)

    kparams = prepare_params(params)                 # one-time weight re-layout
    out = jax.block_until_ready(jax.jit(lenet_forward)(kparams, x))
    assert out.shape == (2, 10), out.shape
    assert out.dtype == jnp.float32

    ref = jax.block_until_ready(jax.jit(lenet_reference)(params, x))
    max_err = float(jnp.max(jnp.abs(out - ref)))
    assert bool(jnp.allclose(out, ref, rtol=2e-2, atol=2e-2)), (
        f"mismatch vs reference, max abs err = {max_err}")
    print("KERNEL_OK")
</pallas_src>

<mosaic_0001>
module attributes {stable_mosaic.version = 11 : i64} {
  func.func @_lenet_kernel(%arg0: i32, %arg1: memref<8x1024xbf16, #tpu.memory_space<vmem>>, %arg2: memref<8x200xbf16, #tpu.memory_space<vmem>>, %arg3: memref<8x1xf32, #tpu.memory_space<vmem>>, %arg4: memref<16x200xbf16, #tpu.memory_space<vmem>>, %arg5: memref<16x1xf32, #tpu.memory_space<vmem>>, %arg6: memref<1024x400xbf16, #tpu.memory_space<vmem>>, %arg7: memref<16x400xf32, #tpu.memory_space<vmem>>, %arg8: memref<400x120xbf16, #tpu.memory_space<vmem>>, %arg9: memref<1x120xf32, #tpu.memory_space<vmem>>, %arg10: memref<120x84xbf16, #tpu.memory_space<vmem>>, %arg11: memref<1x84xf32, #tpu.memory_space<vmem>>, %arg12: memref<84x128xbf16, #tpu.memory_space<vmem>>, %arg13: memref<1x128xf32, #tpu.memory_space<vmem>>, %arg14: memref<1x1x128xf32, #tpu.memory_space<vmem>>, %arg15: memref<200x1024xf32, #tpu.memory_space<vmem>>, %arg16: memref<200x1024xf32, #tpu.memory_space<vmem>>) attributes {dimension_semantics = [#tpu.dimension_semantics<parallel>], iteration_bounds = array<i64: 2>, scalar_prefetch = 0 : i64, scratch_operands = 2 : i64, tpu.core_type = #tpu.core_type<tc>, window_params = [{transform_indices = @transform_0, window_bounds = array<i64: 8, 1024>}, {pipeline_mode = #tpu.pipeline_mode<synchronous>, transform_indices = @transform_1, window_bounds = array<i64: 8, 200>}, {pipeline_mode = #tpu.pipeline_mode<synchronous>, transform_indices = @transform_2, window_bounds = array<i64: 8, 1>}, {pipeline_mode = #tpu.pipeline_mode<synchronous>, transform_indices = @transform_3, window_bounds = array<i64: 16, 200>}, {pipeline_mode = #tpu.pipeline_mode<synchronous>, transform_indices = @transform_4, window_bounds = array<i64: 16, 1>}, {pipeline_mode = #tpu.pipeline_mode<synchronous>, transform_indices = @transform_5, window_bounds = array<i64: 1024, 400>}, {pipeline_mode = #tpu.pipeline_mode<synchronous>, transform_indices = @transform_6, window_bounds = array<i64: 16, 400>}, {pipeline_mode = #tpu.pipeline_mode<synchronous>, transform_indices = @transform_7, window_bounds = array<i64: 400, 120>}, {pipeline_mode = #tpu.pipeline_mode<synchronous>, transform_indices = @transform_8, window_bounds = array<i64: 1, 120>}, {pipeline_mode = #tpu.pipeline_mode<synchronous>, transform_indices = @transform_9, window_bounds = array<i64: 120, 84>}, {pipeline_mode = #tpu.pipeline_mode<synchronous>, transform_indices = @transform_10, window_bounds = array<i64: 1, 84>}, {pipeline_mode = #tpu.pipeline_mode<synchronous>, transform_indices = @transform_11, window_bounds = array<i64: 84, 128>}, {pipeline_mode = #tpu.pipeline_mode<synchronous>, transform_indices = @transform_12, window_bounds = array<i64: 1, 128>}, {transform_indices = @transform_13, window_bounds = array<i64: 1, 1, 128>}]} {
    %c0 = arith.constant 0 : index
    %c0_0 = arith.constant 0 : index
    %0 = vector.load %arg1[%c0, %c0_0] : memref<8x1024xbf16, #tpu.memory_space<vmem>>, vector<8x1024xbf16>
    %1 = arith.extf %0 : vector<8x1024xbf16> to vector<8x1024xf32>
    %c0_1 = arith.constant 0 : index
    %c0_2 = arith.constant 0 : index
    %2 = vector.load %arg15[%c0_1, %c0_2] : memref<200x1024xf32, #tpu.memory_space<vmem>>, vector<8x1024xf32>
    tpu.vector_store %arg15[%c0_1, %c0_2], %1 {strides = array<i32>} : memref<200x1024xf32, #tpu.memory_space<vmem>>, vector<8x1024xf32>,
    %3 = vector.extract_strided_slice %0 {offsets = [0, 1], sizes = [8, 1023], strides = [1, 1]} : vector<8x1024xbf16> to vector<8x1023xbf16>
    %4 = vector.extract_strided_slice %0 {offsets = [0, 0], sizes = [8, 1], strides = [1, 1]} : vector<8x1024xbf16> to vector<8x1xbf16>
    %5 = tpu.concatenate %3, %4 in 1 : vector<8x1023xbf16>, vector<8x1xbf16> -> vector<8x1024xbf16>
    %6 = arith.extf %5 : vector<8x1024xbf16> to vector<8x1024xf32>
    %c8 = arith.constant 8 : index
    %c0_3 = arith.constant 0 : index
    %7 = vector.load %arg15[%c8, %c0_3] : memref<200x1024xf32, #tpu.memory_space<vmem>>, vector<8x1024xf32>
    tpu.vector_store %arg15[%c8, %c0_3], %6 {strides = array<i32>} : memref<200x1024xf32, #tpu.memory_space<vmem>>, vector<8x1024xf32>,
    %8 = vector.extract_strided_slice %0 {offsets = [0, 2], sizes = [8, 1022], strides = [1, 1]} : vector<8x1024xbf16> to vector<8x1022xbf16>
    %9 = vector.extract_strided_slice %0 {offsets = [0, 0], sizes = [8, 2], strides = [1, 1]} : vector<8x1024xbf16> to vector<8x2xbf16>
    %10 = tpu.concatenate %8, %9 in 1 : vector<8x1022xbf16>, vector<8x2xbf16> -> vector<8x1024xbf16>
    %11 = arith.extf %10 : vector<8x1024xbf16> to vector<8x1024xf32>
    %c16 = arith.constant 16 : index
    %c0_4 = arith.constant 0 : index
    %12 = vector.load %arg15[%c16, %c0_4] : memref<200x1024xf32, #tpu.memory_space<vmem>>, vector<8x1024xf32>
    tpu.vector_store %arg15[%c16, %c0_4], %11 {strides = array<i32>} : memref<200x1024xf32, #tpu.memory_space<vmem>>, vector<8x1024xf32>,
    %13 = vector.extract_strided_slice %0 {offsets = [0, 3], sizes = [8, 1021], strides = [1, 1]} : vector<8x1024xbf16> to vector<8x1021xbf16>
    %14 = vector.extract_strided_slice %0 {offsets = [0, 0], sizes = [8, 3], strides = [1, 1]} : vector<8x1024xbf16> to vector<8x3xbf16>
    %15 = tpu.concatenate %13, %14 in 1 : vector<8x1021xbf16>, vector<8x3xbf16> -> vector<8x1024xbf16>
    %16 = arith.extf %15 : vector<8x1024xbf16> to vector<8x1024xf32>
    %c24 = arith.constant 24 : index
    %c0_5 = arith.constant 0 : index
    %17 = vector.load %arg15[%c24, %c0_5] : memref<200x1024xf32, #tpu.memory_space<vmem>>, vector<8x1024xf32>
    tpu.vector_store %arg15[%c24, %c0_5], %16 {strides = array<i32>} : memref<200x1024xf32, #tpu.memory_space<vmem>>, vector<8x1024xf32>,
    %18 = vector.extract_strided_slice %0 {offsets = [0, 4], sizes = [8, 1020], strides = [1, 1]} : vector<8x1024xbf16> to vector<8x1020xbf16>
    %19 = vector.extract_strided_slice %0 {offsets = [0, 0], sizes = [8, 4], strides = [1, 1]} : vector<8x1024xbf16> to vector<8x4xbf16>
    %20 = tpu.concatenate %18, %19 in 1 : vector<8x1020xbf16>, vector<8x4xbf16> -> vector<8x1024xbf16>
    %21 = arith.extf %20 : vector<8x1024xbf16> to vector<8x1024xf32>
    %c32 = arith.constant 32 : index
    %c0_6 = arith.constant 0 : index
    %22 = vector.load %arg15[%c32, %c0_6] : memref<200x1024xf32, #tpu.memory_space<vmem>>, vector<8x1024xf32>
    tpu.vector_store %arg15[%c32, %c0_6], %21 {strides = array<i32>} : memref<200x1024xf32, #tpu.memory_space<vmem>>, vector<8x1024xf32>,
    %23 = vector.extract_strided_slice %0 {offsets = [0, 32], sizes = [8, 992], strides = [1, 1]} : vector<8x1024xbf16> to vector<8x992xbf16>
    %24 = vector.extract_strided_slice %0 {offsets = [0, 0], sizes = [8, 32], strides = [1, 1]} : vector<8x1024xbf16> to vector<8x32xbf16>
    %25 = tpu.concatenate %23, %24 in 1 : vector<8x992xbf16>, vector<8x32xbf16> -> vector<8x1024xbf16>
    %26 = arith.extf %25 : vector<8x1024xbf16> to vector<8x1024xf32>
    %c40 = arith.constant 40 : index
    %c0_7 = arith.constant 0 : index
    %27 = vector.load %arg15[%c40, %c0_7] : memref<200x1024xf32, #tpu.memory_space<vmem>>, vector<8x1024xf32>
    tpu.vector_store %arg15[%c40, %c0_7], %26 {strides = array<i32>} : memref<200x1024xf32, #tpu.memory_space<vmem>>, vector<8x1024xf32>,
    %28 = vector.extract_strided_slice %0 {offsets = [0, 33], sizes = [8, 991], strides = [1, 1]} : vector<8x1024xbf16> to vector<8x991xbf16>
    %29 = vector.extract_strided_slice %0 {offsets = [0, 0], sizes = [8, 33], strides = [1, 1]} : vector<8x1024xbf16> to vector<8x33xbf16>
    %30 = tpu.concatenate %28, %29 in 1 : vector<8x991xbf16>, vector<8x33xbf16> -> vector<8x1024xbf16>
    %31 = arith.extf %30 : vector<8x1024xbf16> to vector<8x1024xf32>
    %c48 = arith.constant 48 : index
    %c0_8 = arith.constant 0 : index
    %32 = vector.load %arg15[%c48, %c0_8] : memref<200x1024xf32, #tpu.memory_space<vmem>>, vector<8x1024xf32>
    tpu.vector_store %arg15[%c48, %c0_8], %31 {strides = array<i32>} : memref<200x1024xf32, #tpu.memory_space<vmem>>, vector<8x1024xf32>,
    %33 = vector.extract_strided_slice %0 {offsets = [0, 34], sizes = [8, 990], strides = [1, 1]} : vector<8x1024xbf16> to vector<8x990xbf16>
    %34 = vector.extract_strided_slice %0 {offsets = [0, 0], sizes = [8, 34], strides = [1, 1]} : vector<8x1024xbf16> to vector<8x34xbf16>
    %35 = tpu.concatenate %33, %34 in 1 : vector<8x990xbf16>, vector<8x34xbf16> -> vector<8x1024xbf16>
    %36 = arith.extf %35 : vector<8x1024xbf16> to vector<8x1024xf32>
    %c56 = arith.constant 56 : index
    %c0_9 = arith.constant 0 : index
    %37 = vector.load %arg15[%c56, %c0_9] : memref<200x1024xf32, #tpu.memory_space<vmem>>, vector<8x1024xf32>
    tpu.vector_store %arg15[%c56, %c0_9], %36 {strides = array<i32>} : memref<200x1024xf32, #tpu.memory_space<vmem>>, vector<8x1024xf32>,
    %38 = vector.extract_strided_slice %0 {offsets = [0, 35], sizes = [8, 989], strides = [1, 1]} : vector<8x1024xbf16> to vector<8x989xbf16>
    %39 = vector.extract_strided_slice %0 {offsets = [0, 0], sizes = [8, 35], strides = [1, 1]} : vector<8x1024xbf16> to vector<8x35xbf16>
    %40 = tpu.concatenate %38, %39 in 1 : vector<8x989xbf16>, vector<8x35xbf16> -> vector<8x1024xbf16>
    %41 = arith.extf %40 : vector<8x1024xbf16> to vector<8x1024xf32>
    %c64 = arith.constant 64 : index
    %c0_10 = arith.constant 0 : index
    %42 = vector.load %arg15[%c64, %c0_10] : memref<200x1024xf32, #tpu.memory_space<vmem>>, vector<8x1024xf32>
    tpu.vector_store %arg15[%c64, %c0_10], %41 {strides = array<i32>} : memref<200x1024xf32, #tpu.memory_space<vmem>>, vector<8x1024xf32>,
    %43 = vector.extract_strided_slice %0 {offsets = [0, 36], sizes = [8, 988], strides = [1, 1]} : vector<8x1024xbf16> to vector<8x988xbf16>
    %44 = vector.extract_strided_slice %0 {offsets = [0, 0], sizes = [8, 36], strides = [1, 1]} : vector<8x1024xbf16> to vector<8x36xbf16>
    %45 = tpu.concatenate %43, %44 in 1 : vector<8x988xbf16>, vector<8x36xbf16> -> vector<8x1024xbf16>
    %46 = arith.extf %45 : vector<8x1024xbf16> to vector<8x1024xf32>
    %c72 = arith.constant 72 : index
    %c0_11 = arith.constant 0 : index
    %47 = vector.load %arg15[%c72, %c0_11] : memref<200x1024xf32, #tpu.memory_space<vmem>>, vector<8x1024xf32>
    tpu.vector_store %arg15[%c72, %c0_11], %46 {strides = array<i32>} : memref<200x1024xf32, #tpu.memory_space<vmem>>, vector<8x1024xf32>,
    %48 = vector.extract_strided_slice %0 {offsets = [0, 64], sizes = [8, 960], strides = [1, 1]} : vector<8x1024xbf16> to vector<8x960xbf16>
    %49 = vector.extract_strided_slice %0 {offsets = [0, 0], sizes = [8, 64], strides = [1, 1]} : vector<8x1024xbf16> to vector<8x64xbf16>
    %50 = tpu.concatenate %48, %49 in 1 : vector<8x960xbf16>, vector<8x64xbf16> -> vector<8x1024xbf16>
    %51 = arith.extf %50 : vector<8x1024xbf16> to vector<8x1024xf32>
    %c80 = arith.constant 80 : index
    %c0_12 = arith.constant 0 : index
    %52 = vector.load %arg15[%c80, %c0_12] : memref<200x1024xf32, #tpu.memory_space<vmem>>, vector<8x1024xf32>
    tpu.vector_store %arg15[%c80, %c0_12], %51 {strides = array<i32>} : memref<200x1024xf32, #tpu.memory_space<vmem>>, vector<8x1024xf32>,
    %53 = vector.extract_strided_slice %0 {offsets = [0, 65], sizes = [8, 959], strides = [1, 1]} : vector<8x1024xbf16> to vector<8x959xbf16>
    %54 = vector.extract_strided_slice %0 {offsets = [0, 0], sizes = [8, 65], strides = [1, 1]} : vector<8x1024xbf16> to vector<8x65xbf16>
    %55 = tpu.concatenate %53, %54 in 1 : vector<8x959xbf16>, vector<8x65xbf16> -> vector<8x1024xbf16>
    %56 = arith.extf %55 : vector<8x1024xbf16> to vector<8x1024xf32>
    %c88 = arith.constant 88 : index
    %c0_13 = arith.constant 0 : index
    %57 = vector.load %arg15[%c88, %c0_13] : memref<200x1024xf32, #tpu.memory_space<vmem>>, vector<8x1024xf32>
    tpu.vector_store %arg15[%c88, %c0_13], %56 {strides = array<i32>} : memref<200x1024xf32, #tpu.memory_space<vmem>>, vector<8x1024xf32>,
    %58 = vector.extract_strided_slice %0 {offsets = [0, 66], sizes = [8, 958], strides = [1, 1]} : vector<8x1024xbf16> to vector<8x958xbf16>
    %59 = vector.extract_strided_slice %0 {offsets = [0, 0], sizes = [8, 66], strides = [1, 1]} : vector<8x1024xbf16> to vector<8x66xbf16>
    %60 = tpu.concatenate %58, %59 in 1 : vector<8x958xbf16>, vector<8x66xbf16> -> vector<8x1024xbf16>
    %61 = arith.extf %60 : vector<8x1024xbf16> to vector<8x1024xf32>
    %c96 = arith.constant 96 : index
    %c0_14 = arith.constant 0 : index
    %62 = vector.load %arg15[%c96, %c0_14] : memref<200x1024xf32, #tpu.memory_space<vmem>>, vector<8x1024xf32>
    tpu.vector_store %arg15[%c96, %c0_14], %61 {strides = array<i32>} : memref<200x1024xf32, #tpu.memory_space<vmem>>, vector<8x1024xf32>,
    %63 = vector.extract_strided_slice %0 {offsets = [0, 67], sizes = [8, 957], strides = [1, 1]} : vector<8x1024xbf16> to vector<8x957xbf16>
    %64 = vector.extract_strided_slice %0 {offsets = [0, 0], sizes = [8, 67], strides = [1, 1]} : vector<8x1024xbf16> to vector<8x67xbf16>
    %65 = tpu.concatenate %63, %64 in 1 : vector<8x957xbf16>, vector<8x67xbf16> -> vector<8x1024xbf16>
    %66 = arith.extf %65 : vector<8x1024xbf16> to vector<8x1024xf32>
    %c104 = arith.constant 104 : index
    %c0_15 = arith.constant 0 : index
    %67 = vector.load %arg15[%c104, %c0_15] : memref<200x1024xf32, #tpu.memory_space<vmem>>, vector<8x1024xf32>
    tpu.vector_store %arg15[%c104, %c0_15], %66 {strides = array<i32>} : memref<200x1024xf32, #tpu.memory_space<vmem>>, vector<8x1024xf32>,
    %68 = vector.extract_strided_slice %0 {offsets = [0, 68], sizes = [8, 956], strides = [1, 1]} : vector<8x1024xbf16> to vector<8x956xbf16>
    %69 = vector.extract_strided_slice %0 {offsets = [0, 0], sizes = [8, 68], strides = [1, 1]} : vector<8x1024xbf16> to vector<8x68xbf16>
    %70 = tpu.concatenate %68, %69 in 1 : vector<8x956xbf16>, vector<8x68xbf16> -> vector<8x1024xbf16>
    %71 = arith.extf %70 : vector<8x1024xbf16> to vector<8x1024xf32>
    %c112 = arith.constant 112 : index
    %c0_16 = arith.constant 0 : index
    %72 = vector.load %arg15[%c112, %c0_16] : memref<200x1024xf32, #tpu.memory_space<vmem>>, vector<8x1024xf32>
    tpu.vector_store %arg15[%c112, %c0_16], %71 {strides = array<i32>} : memref<200x1024xf32, #tpu.memory_space<vmem>>, vector<8x1024xf32>,
    %73 = vector.extract_strided_slice %0 {offsets = [0, 96], sizes = [8, 928], strides = [1, 1]} : vector<8x1024xbf16> to vector<8x928xbf16>
    %74 = vector.extract_strided_slice %0 {offsets = [0, 0], sizes = [8, 96], strides = [1, 1]} : vector<8x1024xbf16> to vector<8x96xbf16>
    %75 = tpu.concatenate %73, %74 in 1 : vector<8x928xbf16>, vector<8x96xbf16> -> vector<8x1024xbf16>
    %76 = arith.extf %75 : vector<8x1024xbf16> to vector<8x1024xf32>
    %c120 = arith.constant 120 : index
    %c0_17 = arith.constant 0 : index
    %77 = vector.load %arg15[%c120, %c0_17] : memref<200x1024xf32, #tpu.memory_space<vmem>>, vector<8x1024xf32>
    tpu.vector_store %arg15[%c120, %c0_17], %76 {strides = array<i32>} : memref<200x1024xf32, #tpu.memory_space<vmem>>, vector<8x1024xf32>,
    %78 = vector.extract_strided_slice %0 {offsets = [0, 97], sizes = [8, 927], strides = [1, 1]} : vector<8x1024xbf16> to vector<8x927xbf16>
    %79 = vector.extract_strided_slice %0 {offsets = [0, 0], sizes = [8, 97], strides = [1, 1]} : vector<8x1024xbf16> to vector<8x97xbf16>
    %80 = tpu.concatenate %78, %79 in 1 : vector<8x927xbf16>, vector<8x97xbf16> -> vector<8x1024xbf16>
    %81 = arith.extf %80 : vector<8x1024xbf16> to vector<8x1024xf32>
    %c128 = arith.constant 128 : index
    %c0_18 = arith.constant 0 : index
    %82 = vector.load %arg15[%c128, %c0_18] : memref<200x1024xf32, #tpu.memory_space<vmem>>, vector<8x1024xf32>
    tpu.vector_store %arg15[%c128, %c0_18], %81 {strides = array<i32>} : memref<200x1024xf32, #tpu.memory_space<vmem>>, vector<8x1024xf32>,
    %83 = vector.extract_strided_slice %0 {offsets = [0, 98], sizes = [8, 926], strides = [1, 1]} : vector<8x1024xbf16> to vector<8x926xbf16>
    %84 = vector.extract_strided_slice %0 {offsets = [0, 0], sizes = [8, 98], strides = [1, 1]} : vector<8x1024xbf16> to vector<8x98xbf16>
    %85 = tpu.concatenate %83, %84 in 1 : vector<8x926xbf16>, vector<8x98xbf16> -> vector<8x1024xbf16>
    %86 = arith.extf %85 : vector<8x1024xbf16> to vector<8x1024xf32>
    %c136 = arith.constant 136 : index
    %c0_19 = arith.constant 0 : index
    %87 = vector.load %arg15[%c136, %c0_19] : memref<200x1024xf32, #tpu.memory_space<vmem>>, vector<8x1024xf32>
    tpu.vector_store %arg15[%c136, %c0_19], %86 {strides = array<i32>} : memref<200x1024xf32, #tpu.memory_space<vmem>>, vector<8x1024xf32>,
    %88 = vector.extract_strided_slice %0 {offsets = [0, 99], sizes = [8, 925], strides = [1, 1]} : vector<8x1024xbf16> to vector<8x925xbf16>
    %89 = vector.extract_strided_slice %0 {offsets = [0, 0], sizes = [8, 99], strides = [1, 1]} : vector<8x1024xbf16> to vector<8x99xbf16>
    %90 = tpu.concatenate %88, %89 in 1 : vector<8x925xbf16>, vector<8x99xbf16> -> vector<8x1024xbf16>
    %91 = arith.extf %90 : vector<8x1024xbf16> to vector<8x1024xf32>
    %c144 = arith.constant 144 : index
    %c0_20 = arith.constant 0 : index
    %92 = vector.load %arg15[%c144, %c0_20] : memref<200x1024xf32, #tpu.memory_space<vmem>>, vector<8x1024xf32>
    tpu.vector_store %arg15[%c144, %c0_20], %91 {strides = array<i32>} : memref<200x1024xf32, #tpu.memory_space<vmem>>, vector<8x1024xf32>,
    %93 = vector.extract_strided_slice %0 {offsets = [0, 100], sizes = [8, 924], strides = [1, 1]} : vector<8x1024xbf16> to vector<8x924xbf16>
    %94 = vector.extract_strided_slice %0 {offsets = [0, 0], sizes = [8, 100], strides = [1, 1]} : vector<8x1024xbf16> to vector<8x100xbf16>
    %95 = tpu.concatenate %93, %94 in 1 : vector<8x924xbf16>, vector<8x100xbf16> -> vector<8x1024xbf16>
    %96 = arith.extf %95 : vector<8x1024xbf16> to vector<8x1024xf32>
    %c152 = arith.constant 152 : index
    %c0_21 = arith.constant 0 : index
    %97 = vector.load %arg15[%c152, %c0_21] : memref<200x1024xf32, #tpu.memory_space<vmem>>, vector<8x1024xf32>
    tpu.vector_store %arg15[%c152, %c0_21], %96 {strides = array<i32>} : memref<200x1024xf32, #tpu.memory_space<vmem>>, vector<8x1024xf32>,
    %98 = vector.extract_strided_slice %0 {offsets = [0, 128], sizes = [8, 896], strides = [1, 1]} : vector<8x1024xbf16> to vector<8x896xbf16>
    %99 = vector.extract_strided_slice %0 {offsets = [0, 0], sizes = [8, 128], strides = [1, 1]} : vector<8x1024xbf16> to vector<8x128xbf16>
    %100 = tpu.concatenate %98, %99 in 1 : vector<8x896xbf16>, vector<8x128xbf16> -> vector<8x1024xbf16>
    %101 = arith.extf %100 : vector<8x1024xbf16> to vector<8x1024xf32>
    %c160 = arith.constant 160 : index
    %c0_22 = arith.constant 0 : index
    %102 = vector.load %arg15[%c160, %c0_22] : memref<200x1024xf32, #tpu.memory_space<vmem>>, vector<8x1024xf32>
    tpu.vector_store %arg15[%c160, %c0_22], %101 {strides = array<i32>} : memref<200x1024xf32, #tpu.memory_space<vmem>>, vector<8x1024xf32>,
    %103 = vector.extract_strided_slice %0 {offsets = [0, 129], sizes = [8, 895], strides = [1, 1]} : vector<8x1024xbf16> to vector<8x895xbf16>
    %104 = vector.extract_strided_slice %0 {offsets = [0, 0], sizes = [8, 129], strides = [1, 1]} : vector<8x1024xbf16> to vector<8x129xbf16>
    %105 = tpu.concatenate %103, %104 in 1 : vector<8x895xbf16>, vector<8x129xbf16> -> vector<8x1024xbf16>
    %106 = arith.extf %105 : vector<8x1024xbf16> to vector<8x1024xf32>
    %c168 = arith.constant 168 : index
    %c0_23 = arith.constant 0 : index
    %107 = vector.load %arg15[%c168, %c0_23] : memref<200x1024xf32, #tpu.memory_space<vmem>>, vector<8x1024xf32>
    tpu.vector_store %arg15[%c168, %c0_23], %106 {strides = array<i32>} : memref<200x1024xf32, #tpu.memory_space<vmem>>, vector<8x1024xf32>,
    %108 = vector.extract_strided_slice %0 {offsets = [0, 130], sizes = [8, 894], strides = [1, 1]} : vector<8x1024xbf16> to vector<8x894xbf16>
    %109 = vector.extract_strided_slice %0 {offsets = [0, 0], sizes = [8, 130], strides = [1, 1]} : vector<8x1024xbf16> to vector<8x130xbf16>
    %110 = tpu.concatenate %108, %109 in 1 : vector<8x894xbf16>, vector<8x130xbf16> -> vector<8x1024xbf16>
    %111 = arith.extf %110 : vector<8x1024xbf16> to vector<8x1024xf32>
    %c176 = arith.constant 176 : index
    %c0_24 = arith.constant 0 : index
    %112 = vector.load %arg15[%c176, %c0_24] : memref<200x1024xf32, #tpu.memory_space<vmem>>, vector<8x1024xf32>
    tpu.vector_store %arg15[%c176, %c0_24], %111 {strides = array<i32>} : memref<200x1024xf32, #tpu.memory_space<vmem>>, vector<8x1024xf32>,
    %113 = vector.extract_strided_slice %0 {offsets = [0, 131], sizes = [8, 893], strides = [1, 1]} : vector<8x1024xbf16> to vector<8x893xbf16>
    %114 = vector.extract_strided_slice %0 {offsets = [0, 0], sizes = [8, 131], strides = [1, 1]} : vector<8x1024xbf16> to vector<8x131xbf16>
    %115 = tpu.concatenate %113, %114 in 1 : vector<8x893xbf16>, vector<8x131xbf16> -> vector<8x1024xbf16>
    %116 = arith.extf %115 : vector<8x1024xbf16> to vector<8x1024xf32>
    %c184 = arith.constant 184 : index
    %c0_25 = arith.constant 0 : index
    %117 = vector.load %arg15[%c184, %c0_25] : memref<200x1024xf32, #tpu.memory_space<vmem>>, vector<8x1024xf32>
    tpu.vector_store %arg15[%c184, %c0_25], %116 {strides = array<i32>} : memref<200x1024xf32, #tpu.memory_space<vmem>>, vector<8x1024xf32>,
    %118 = vector.extract_strided_slice %0 {offsets = [0, 132], sizes = [8, 892], strides = [1, 1]} : vector<8x1024xbf16> to vector<8x892xbf16>
    %119 = vector.extract_strided_slice %0 {offsets = [0, 0], sizes = [8, 132], strides = [1, 1]} : vector<8x1024xbf16> to vector<8x132xbf16>
    %120 = tpu.concatenate %118, %119 in 1 : vector<8x892xbf16>, vector<8x132xbf16> -> vector<8x1024xbf16>
    %121 = arith.extf %120 : vector<8x1024xbf16> to vector<8x1024xf32>
    %c192 = arith.constant 192 : index
    %c0_26 = arith.constant 0 : index
    %122 = vector.load %arg15[%c192, %c0_26] : memref<200x1024xf32, #tpu.memory_space<vmem>>, vector<8x1024xf32>
    tpu.vector_store %arg15[%c192, %c0_26], %121 {strides = array<i32>} : memref<200x1024xf32, #tpu.memory_space<vmem>>, vector<8x1024xf32>,
    %c0_27 = arith.constant 0 : index
    %c0_28 = arith.constant 0 : index
    %123 = vector.load %arg2[%c0_27, %c0_28] : memref<8x200xbf16, #tpu.memory_space<vmem>>, vector<8x200xbf16>
    %c0_29 = arith.constant 0 : index
    %c0_30 = arith.constant 0 : index
    %124 = vector.load %arg15[%c0_29, %c0_30] : memref<200x1024xf32, #tpu.memory_space<vmem>>, vector<200x1024xf32>
    %125 = arith.truncf %124 : vector<200x1024xf32> to vector<200x1024xbf16>
    %cst = arith.constant dense<0.000000e+00> : vector<8x1024xf32>
    %126 = tpu.matmul %123, %125, %cst {dimension_numbers = #tpu.dot_dimension_numbers<[1], [0], [0], [1], [0, 0, 1, 1], [], []>} : vector<8x200xbf16>, vector<200x1024xbf16>, vector<8x1024xf32> -> vector<8x1024xf32>
    %c0_31 = arith.constant 0 : index
    %c0_32 = arith.constant 0 : index
    %127 = vector.load %arg3[%c0_31, %c0_32] : memref<8x1xf32, #tpu.memory_space<vmem>>, vector<8x1xf32>
    %128 = vector.broadcast %127 : vector<8x1xf32> to vector<8x1024xf32>
    %129 = arith.addf %126, %128 : vector<8x1024xf32>
    %cst_33 = arith.constant 0.000000e+00 : f32
    %130 = vector.broadcast %cst_33 : f32 to vector<8x1024xf32>
    %131 = arith.maximumf %129, %130 : vector<8x1024xf32>
    %132 = vector.extract_strided_slice %131 {offsets = [0, 1], sizes = [8, 1023], strides = [1, 1]} : vector<8x1024xf32> to vector<8x1023xf32>
    %133 = vector.extract_strided_slice %131 {offsets = [0, 0], sizes = [8, 1], strides = [1, 1]} : vector<8x1024xf32> to vector<8x1xf32>
    %134 = tpu.concatenate %132, %133 in 1 : vector<8x1023xf32>, vector<8x1xf32> -> vector<8x1024xf32>
    %135 = arith.maximumf %131, %134 : vector<8x1024xf32>
    %136 = vector.extract_strided_slice %131 {offsets = [0, 32], sizes = [8, 992], strides = [1, 1]} : vector<8x1024xf32> to vector<8x992xf32>
    %137 = vector.extract_strided_slice %131 {offsets = [0, 0], sizes = [8, 32], strides = [1, 1]} : vector<8x1024xf32> to vector<8x32xf32>
    %138 = tpu.concatenate %136, %137 in 1 : vector<8x992xf32>, vector<8x32xf32> -> vector<8x1024xf32>
    %139 = vector.extract_strided_slice %131 {offsets = [0, 33], sizes = [8, 991], strides = [1, 1]} : vector<8x1024xf32> to vector<8x991xf32>
    %140 = vector.extract_strided_slice %131 {offsets = [0, 0], sizes = [8, 33], strides = [1, 1]} : vector<8x1024xf32> to vector<8x33xf32>
    %141 = tpu.concatenate %139, %140 in 1 : vector<8x991xf32>, vector<8x33xf32> -> vector<8x1024xf32>
    %142 = arith.maximumf %138, %141 : vector<8x1024xf32>
    %143 = arith.maximumf %135, %142 : vector<8x1024xf32>
    %144 = arith.truncf %143 : vector<8x1024xf32> to vector<8x1024xbf16>
    %145 = arith.extf %144 : vector<8x1024xbf16> to vector<8x1024xf32>
    %c0_34 = arith.constant 0 : index
    %c0_35 = arith.constant 0 : index
    %146 = vector.load %arg16[%c0_34, %c0_35] : memref<200x1024xf32, #tpu.memory_space<vmem>>, vector<8x1024xf32>
    tpu.vector_store %arg16[%c0_34, %c0_35], %145 {strides = array<i32>} : memref<200x1024xf32, #tpu.memory_space<vmem>>, vector<8x1024xf32>,
    %147 = vector.extract_strided_slice %144 {offsets = [0, 2], sizes = [8, 1022], strides = [1, 1]} : vector<8x1024xbf16> to vector<8x1022xbf16>
    %148 = vector.extract_strided_slice %144 {offsets = [0, 0], sizes = [8, 2], strides = [1, 1]} : vector<8x1024xbf16> to vector<8x2xbf16>
    %149 = tpu.concatenate %147, %148 in 1 : vector<8x1022xbf16>, vector<8x2xbf16> -> vector<8x1024xbf16>
    %150 = arith.extf %149 : vector<8x1024xbf16> to vector<8x1024xf32>
    %c8_36 = arith.constant 8 : index
    %c0_37 = arith.constant 0 : index
    %151 = vector.load %arg16[%c8_36, %c0_37] : memref<200x1024xf32, #tpu.memory_space<vmem>>, vector<8x1024xf32>
    tpu.vector_store %arg16[%c8_36, %c0_37], %150 {strides = array<i32>} : memref<200x1024xf32, #tpu.memory_space<vmem>>, vector<8x1024xf32>,
    %152 = vector.extract_strided_slice %144 {offsets = [0, 4], sizes = [8, 1020], strides = [1, 1]} : vector<8x1024xbf16> to vector<8x1020xbf16>
    %153 = vector.extract_strided_slice %144 {offsets = [0, 0], sizes = [8, 4], strides = [1, 1]} : vector<8x1024xbf16> to vector<8x4xbf16>
    %154 = tpu.concatenate %152, %153 in 1 : vector<8x1020xbf16>, vector<8x4xbf16> -> vector<8x1024xbf16>
    %155 = arith.extf %154 : vector<8x1024xbf16> to vector<8x1024xf32>
    %c16_38 = arith.constant 16 : index
    %c0_39 = arith.constant 0 : index
    %156 = vector.load %arg16[%c16_38, %c0_39] : memref<200x1024xf32, #tpu.memory_space<vmem>>, vector<8x1024xf32>
    tpu.vector_store %arg16[%c16_38, %c0_39], %155 {strides = array<i32>} : memref<200x1024xf32, #tpu.memory_space<vmem>>, vector<8x1024xf32>,
    %157 = vector.extract_strided_slice %144 {offsets = [0, 6], sizes = [8, 1018], strides = [1, 1]} : vector<8x1024xbf16> to vector<8x1018xbf16>
    %158 = vector.extract_strided_slice %144 {offsets = [0, 0], sizes = [8, 6], strides = [1, 1]} : vector<8x1024xbf16> to vector<8x6xbf16>
    %159 = tpu.concatenate %157, %158 in 1 : vector<8x1018xbf16>, vector<8x6xbf16> -> vector<8x1024xbf16>
    %160 = arith.extf %159 : vector<8x1024xbf16> to vector<8x1024xf32>
    %c24_40 = arith.constant 24 : index
    %c0_41 = arith.constant 0 : index
    %161 = vector.load %arg16[%c24_40, %c0_41] : memref<200x1024xf32, #tpu.memory_space<vmem>>, vector<8x1024xf32>
    tpu.vector_store %arg16[%c24_40, %c0_41], %160 {strides = array<i32>} : memref<200x1024xf32, #tpu.memory_space<vmem>>, vector<8x1024xf32>,
    %162 = vector.extract_strided_slice %144 {offsets = [0, 8], sizes = [8, 1016], strides = [1, 1]} : vector<8x1024xbf16> to vector<8x1016xbf16>
    %163 = vector.extract_strided_slice %144 {offsets = [0, 0], sizes = [8, 8], strides = [1, 1]} : vector<8x1024xbf16> to vector<8x8xbf16>
    %164 = tpu.concatenate %162, %163 in 1 : vector<8x1016xbf16>, vector<8x8xbf16> -> vector<8x1024xbf16>
    %165 = arith.extf %164 : vector<8x1024xbf16> to vector<8x1024xf32>
    %c32_42 = arith.constant 32 : index
    %c0_43 = arith.constant 0 : index
    %166 = vector.load %arg16[%c32_42, %c0_43] : memref<200x1024xf32, #tpu.memory_space<vmem>>, vector<8x1024xf32>
    tpu.vector_store %arg16[%c32_42, %c0_43], %165 {strides = array<i32>} : memref<200x1024xf32, #tpu.memory_space<vmem>>, vector<8x1024xf32>,
    %167 = vector.extract_strided_slice %144 {offsets = [0, 64], sizes = [8, 960], strides = [1, 1]} : vector<8x1024xbf16> to vector<8x960xbf16>
    %168 = vector.extract_strided_slice %144 {offsets = [0, 0], sizes = [8, 64], strides = [1, 1]} : vector<8x1024xbf16> to vector<8x64xbf16>
    %169 = tpu.concatenate %167, %168 in 1 : vector<8x960xbf16>, vector<8x64xbf16> -> vector<8x1024xbf16>
    %170 = arith.extf %169 : vector<8x1024xbf16> to vector<8x1024xf32>
    %c40_44 = arith.constant 40 : index
    %c0_45 = arith.constant 0 : index
    %171 = vector.load %arg16[%c40_44, %c0_45] : memref<200x1024xf32, #tpu.memory_space<vmem>>, vector<8x1024xf32>
    tpu.vector_store %arg16[%c40_44, %c0_45], %170 {strides = array<i32>} : memref<200x1024xf32, #tpu.memory_space<vmem>>, vector<8x1024xf32>,
    %172 = vector.extract_strided_slice %144 {offsets = [0, 66], sizes = [8, 958], strides = [1, 1]} : vector<8x1024xbf16> to vector<8x958xbf16>
    %173 = vector.extract_strided_slice %144 {offsets = [0, 0], sizes = [8, 66], strides = [1, 1]} : vector<8x1024xbf16> to vector<8x66xbf16>
    %174 = tpu.concatenate %172, %173 in 1 : vector<8x958xbf16>, vector<8x66xbf16> -> vector<8x1024xbf16>
    %175 = arith.extf %174 : vector<8x1024xbf16> to vector<8x1024xf32>
    %c48_46 = arith.constant 48 : index
    %c0_47 = arith.constant 0 : index
    %176 = vector.load %arg16[%c48_46, %c0_47] : memref<200x1024xf32, #tpu.memory_space<vmem>>, vector<8x1024xf32>
    tpu.vector_store %arg16[%c48_46, %c0_47], %175 {strides = array<i32>} : memref<200x1024xf32, #tpu.memory_space<vmem>>, vector<8x1024xf32>,
    %177 = vector.extract_strided_slice %144 {offsets = [0, 68], sizes = [8, 956], strides = [1, 1]} : vector<8x1024xbf16> to vector<8x956xbf16>
    %178 = vector.extract_strided_slice %144 {offsets = [0, 0], sizes = [8, 68], strides = [1, 1]} : vector<8x1024xbf16> to vector<8x68xbf16>
    %179 = tpu.concatenate %177, %178 in 1 : vector<8x956xbf16>, vector<8x68xbf16> -> vector<8x1024xbf16>
    %180 = arith.extf %179 : vector<8x1024xbf16> to vector<8x1024xf32>
    %c56_48 = arith.constant 56 : index
    %c0_49 = arith.constant 0 : index
    %181 = vector.load %arg16[%c56_48, %c0_49] : memref<200x1024xf32, #tpu.memory_space<vmem>>, vector<8x1024xf32>
    tpu.vector_store %arg16[%c56_48, %c0_49], %180 {strides = array<i32>} : memref<200x1024xf32, #tpu.memory_space<vmem>>, vector<8x1024xf32>,
    %182 = vector.extract_strided_slice %144 {offsets = [0, 70], sizes = [8, 954], strides = [1, 1]} : vector<8x1024xbf16> to vector<8x954xbf16>
    %183 = vector.extract_strided_slice %144 {offsets = [0, 0], sizes = [8, 70], strides = [1, 1]} : vector<8x1024xbf16> to vector<8x70xbf16>
    %184 = tpu.concatenate %182, %183 in 1 : vector<8x954xbf16>, vector<8x70xbf16> -> vector<8x1024xbf16>
    %185 = arith.extf %184 : vector<8x1024xbf16> to vector<8x1024xf32>
    %c64_50 = arith.constant 64 : index
    %c0_51 = arith.constant 0 : index
    %186 = vector.load %arg16[%c64_50, %c0_51] : memref<200x1024xf32, #tpu.memory_space<vmem>>, vector<8x1024xf32>
    tpu.vector_store %arg16[%c64_50, %c0_51], %185 {strides = array<i32>} : memref<200x1024xf32, #tpu.memory_space<vmem>>, vector<8x1024xf32>,
    %187 = vector.extract_strided_slice %144 {offsets = [0, 72], sizes = [8, 952], strides = [1, 1]} : vector<8x1024xbf16> to vector<8x952xbf16>
    %188 = vector.extract_strided_slice %144 {offsets = [0, 0], sizes = [8, 72], strides = [1, 1]} : vector<8x1024xbf16> to vector<8x72xbf16>
    %189 = tpu.concatenate %187, %188 in 1 : vector<8x952xbf16>, vector<8x72xbf16> -> vector<8x1024xbf16>
    %190 = arith.extf %189 : vector<8x1024xbf16> to vector<8x1024xf32>
    %c72_52 = arith.constant 72 : index
    %c0_53 = arith.constant 0 : index
    %191 = vector.load %arg16[%c72_52, %c0_53] : memref<200x1024xf32, #tpu.memory_space<vmem>>, vector<8x1024xf32>
    tpu.vector_store %arg16[%c72_52, %c0_53], %190 {strides = array<i32>} : memref<200x1024xf32, #tpu.memory_space<vmem>>, vector<8x1024xf32>,
    %192 = vector.extract_strided_slice %144 {offsets = [0, 128], sizes = [8, 896], strides = [1, 1]} : vector<8x1024xbf16> to vector<8x896xbf16>
    %193 = vector.extract_strided_slice %144 {offsets = [0, 0], sizes = [8, 128], strides = [1, 1]} : vector<8x1024xbf16> to vector<8x128xbf16>
    %194 = tpu.concatenate %192, %193 in 1 : vector<8x896xbf16>, vector<8x128xbf16> -> vector<8x1024xbf16>
    %195 = arith.extf %194 : vector<8x1024xbf16> to vector<8x1024xf32>
    %c80_54 = arith.constant 80 : index
    %c0_55 = arith.constant 0 : index
    %196 = vector.load %arg16[%c80_54, %c0_55] : memref<200x1024xf32, #tpu.memory_space<vmem>>, vector<8x1024xf32>
    tpu.vector_store %arg16[%c80_54, %c0_55], %195 {strides = array<i32>} : memref<200x1024xf32, #tpu.memory_space<vmem>>, vector<8x1024xf32>,
    %197 = vector.extract_strided_slice %144 {offsets = [0, 130], sizes = [8, 894], strides = [1, 1]} : vector<8x1024xbf16> to vector<8x894xbf16>
    %198 = vector.extract_strided_slice %144 {offsets = [0, 0], sizes = [8, 130], strides = [1, 1]} : vector<8x1024xbf16> to vector<8x130xbf16>
    %199 = tpu.concatenate %197, %198 in 1 : vector<8x894xbf16>, vector<8x130xbf16> -> vector<8x1024xbf16>
    %200 = arith.extf %199 : vector<8x1024xbf16> to vector<8x1024xf32>
    %c88_56 = arith.constant 88 : index
    %c0_57 = arith.constant 0 : index
    %201 = vector.load %arg16[%c88_56, %c0_57] : memref<200x1024xf32, #tpu.memory_space<vmem>>, vector<8x1024xf32>
    tpu.vector_store %arg16[%c88_56, %c0_57], %200 {strides = array<i32>} : memref<200x1024xf32, #tpu.memory_space<vmem>>, vector<8x1024xf32>,
    %202 = vector.extract_strided_slice %144 {offsets = [0, 132], sizes = [8, 892], strides = [1, 1]} : vector<8x1024xbf16> to vector<8x892xbf16>
    %203 = vector.extract_strided_slice %144 {offsets = [0, 0], sizes = [8, 132], strides = [1, 1]} : vector<8x1024xbf16> to vector<8x132xbf16>
    %204 = tpu.concatenate %202, %203 in 1 : vector<8x892xbf16>, vector<8x132xbf16> -> vector<8x1024xbf16>
    %205 = arith.extf %204 : vector<8x1024xbf16> to vector<8x1024xf32>
    %c96_58 = arith.constant 96 : index
    %c0_59 = arith.constant 0 : index
    %206 = vector.load %arg16[%c96_58, %c0_59] : memref<200x1024xf32, #tpu.memory_space<vmem>>, vector<8x1024xf32>
    tpu.vector_store %arg16[%c96_58, %c0_59], %205 {strides = array<i32>} : memref<200x1024xf32, #tpu.memory_space<vmem>>, vector<8x1024xf32>,
    %207 = vector.extract_strided_slice %144 {offsets = [0, 134], sizes = [8, 890], strides = [1, 1]} : vector<8x1024xbf16> to vector<8x890xbf16>
    %208 = vector.extract_strided_slice %144 {offsets = [0, 0], sizes = [8, 134], strides = [1, 1]} : vector<8x1024xbf16> to vector<8x134xbf16>
    %209 = tpu.concatenate %207, %208 in 1 : vector<8x890xbf16>, vector<8x134xbf16> -> vector<8x1024xbf16>
    %210 = arith.extf %209 : vector<8x1024xbf16> to vector<8x1024xf32>
    %c104_60 = arith.constant 104 : index
    %c0_61 = arith.constant 0 : index
    %211 = vector.load %arg16[%c104_60, %c0_61] : memref<200x1024xf32, #tpu.memory_space<vmem>>, vector<8x1024xf32>
    tpu.vector_store %arg16[%c104_60, %c0_61], %210 {strides = array<i32>} : memref<200x1024xf32, #tpu.memory_space<vmem>>, vector<8x1024xf32>,
    %212 = vector.extract_strided_slice %144 {offsets = [0, 136], sizes = [8, 888], strides = [1, 1]} : vector<8x1024xbf16> to vector<8x888xbf16>
    %213 = vector.extract_strided_slice %144 {offsets = [0, 0], sizes = [8, 136], strides = [1, 1]} : vector<8x1024xbf16> to vector<8x136xbf16>
    %214 = tpu.concatenate %212, %213 in 1 : vector<8x888xbf16>, vector<8x136xbf16> -> vector<8x1024xbf16>
    %215 = arith.extf %214 : vector<8x1024xbf16> to vector<8x1024xf32>
    %c112_62 = arith.constant 112 : index
    %c0_63 = arith.constant 0 : index
    %216 = vector.load %arg16[%c112_62, %c0_63] : memref<200x1024xf32, #tpu.memory_space<vmem>>, vector<8x1024xf32>
    tpu.vector_store %arg16[%c112_62, %c0_63], %215 {strides = array<i32>} : memref<200x1024xf32, #tpu.memory_space<vmem>>, vector<8x1024xf32>,
    %217 = vector.extract_strided_slice %144 {offsets = [0, 192], sizes = [8, 832], strides = [1, 1]} : vector<8x1024xbf16> to vector<8x832xbf16>
    %218 = vector.extract_strided_slice %144 {offsets = [0, 0], sizes = [8, 192], strides = [1, 1]} : vector<8x1024xbf16> to vector<8x192xbf16>
    %219 = tpu.concatenate %217, %218 in 1 : vector<8x832xbf16>, vector<8x192xbf16> -> vector<8x1024xbf16>
    %220 = arith.extf %219 : vector<8x1024xbf16> to vector<8x1024xf32>
    %c120_64 = arith.constant 120 : index
    %c0_65 = arith.constant 0 : index
    %221 = vector.load %arg16[%c120_64, %c0_65] : memref<200x1024xf32, #tpu.memory_space<vmem>>, vector<8x1024xf32>
    tpu.vector_store %arg16[%c120_64, %c0_65], %220 {strides = array<i32>} : memref<200x1024xf32, #tpu.memory_space<vmem>>, vector<8x1024xf32>,
    %222 = vector.extract_strided_slice %144 {offsets = [0, 194], sizes = [8, 830], strides = [1, 1]} : vector<8x1024xbf16> to vector<8x830xbf16>
    %223 = vector.extract_strided_slice %144 {offsets = [0, 0], sizes = [8, 194], strides = [1, 1]} : vector<8x1024xbf16> to vector<8x194xbf16>
    %224 = tpu.concatenate %222, %223 in 1 : vector<8x830xbf16>, vector<8x194xbf16> -> vector<8x1024xbf16>
    %225 = arith.extf %224 : vector<8x1024xbf16> to vector<8x1024xf32>
    %c128_66 = arith.constant 128 : index
    %c0_67 = arith.constant 0 : index
    %226 = vector.load %arg16[%c128_66, %c0_67] : memref<200x1024xf32, #tpu.memory_space<vmem>>, vector<8x1024xf32>
    tpu.vector_store %arg16[%c128_66, %c0_67], %225 {strides = array<i32>} : memref<200x1024xf32, #tpu.memory_space<vmem>>, vector<8x1024xf32>,
    %227 = vector.extract_strided_slice %144 {offsets = [0, 196], sizes = [8, 828], strides = [1, 1]} : vector<8x1024xbf16> to vector<8x828xbf16>
    %228 = vector.extract_strided_slice %144 {offsets = [0, 0], sizes = [8, 196], strides = [1, 1]} : vector<8x1024xbf16> to vector<8x196xbf16>
    %229 = tpu.concatenate %227, %228 in 1 : vector<8x828xbf16>, vector<8x196xbf16> -> vector<8x1024xbf16>
    %230 = arith.extf %229 : vector<8x1024xbf16> to vector<8x1024xf32>
    %c136_68 = arith.constant 136 : index
    %c0_69 = arith.constant 0 : index
    %231 = vector.load %arg16[%c136_68, %c0_69] : memref<200x1024xf32, #tpu.memory_space<vmem>>, vector<8x1024xf32>
    tpu.vector_store %arg16[%c136_68, %c0_69], %230 {strides = array<i32>} : memref<200x1024xf32, #tpu.memory_space<vmem>>, vector<8x1024xf32>,
    %232 = vector.extract_strided_slice %144 {offsets = [0, 198], sizes = [8, 826], strides = [1, 1]} : vector<8x1024xbf16> to vector<8x826xbf16>
    %233 = vector.extract_strided_slice %144 {offsets = [0, 0], sizes = [8, 198], strides = [1, 1]} : vector<8x1024xbf16> to vector<8x198xbf16>
    %234 = tpu.concatenate %232, %233 in 1 : vector<8x826xbf16>, vector<8x198xbf16> -> vector<8x1024xbf16>
    %235 = arith.extf %234 : vector<8x1024xbf16> to vector<8x1024xf32>
    %c144_70 = arith.constant 144 : index
    %c0_71 = arith.constant 0 : index
    %236 = vector.load %arg16[%c144_70, %c0_71] : memref<200x1024xf32, #tpu.memory_space<vmem>>, vector<8x1024xf32>
    tpu.vector_store %arg16[%c144_70, %c0_71], %235 {strides = array<i32>} : memref<200x1024xf32, #tpu.memory_space<vmem>>, vector<8x1024xf32>,
    %237 = vector.extract_strided_slice %144 {offsets = [0, 200], sizes = [8, 824], strides = [1, 1]} : vector<8x1024xbf16> to vector<8x824xbf16>
    %238 = vector.extract_strided_slice %144 {offsets = [0, 0], sizes = [8, 200], strides = [1, 1]} : vector<8x1024xbf16> to vector<8x200xbf16>
    %239 = tpu.concatenate %237, %238 in 1 : vector<8x824xbf16>, vector<8x200xbf16> -> vector<8x1024xbf16>
    %240 = arith.extf %239 : vector<8x1024xbf16> to vector<8x1024xf32>
    %c152_72 = arith.constant 152 : index
    %c0_73 = arith.constant 0 : index
    %241 = vector.load %arg16[%c152_72, %c0_73] : memref<200x1024xf32, #tpu.memory_space<vmem>>, vector<8x1024xf32>
    tpu.vector_store %arg16[%c152_72, %c0_73], %240 {strides = array<i32>} : memref<200x1024xf32, #tpu.memory_space<vmem>>, vector<8x1024xf32>,
    %242 = vector.extract_strided_slice %144 {offsets = [0, 256], sizes = [8, 768], strides = [1, 1]} : vector<8x1024xbf16> to vector<8x768xbf16>
    %243 = vector.extract_strided_slice %144 {offsets = [0, 0], sizes = [8, 256], strides = [1, 1]} : vector<8x1024xbf16> to vector<8x256xbf16>
    %244 = tpu.concatenate %242, %243 in 1 : vector<8x768xbf16>, vector<8x256xbf16> -> vector<8x1024xbf16>
    %245 = arith.extf %244 : vector<8x1024xbf16> to vector<8x1024xf32>
    %c160_74 = arith.constant 160 : index
    %c0_75 = arith.constant 0 : index
    %246 = vector.load %arg16[%c160_74, %c0_75] : memref<200x1024xf32, #tpu.memory_space<vmem>>, vector<8x1024xf32>
    tpu.vector_store %arg16[%c160_74, %c0_75], %245 {strides = array<i32>} : memref<200x1024xf32, #tpu.memory_space<vmem>>, vector<8x1024xf32>,
    %247 = vector.extract_strided_slice %144 {offsets = [0, 258], sizes = [8, 766], strides = [1, 1]} : vector<8x1024xbf16> to vector<8x766xbf16>
    %248 = vector.extract_strided_slice %144 {offsets = [0, 0], sizes = [8, 258], strides = [1, 1]} : vector<8x1024xbf16> to vector<8x258xbf16>
    %249 = tpu.concatenate %247, %248 in 1 : vector<8x766xbf16>, vector<8x258xbf16> -> vector<8x1024xbf16>
    %250 = arith.extf %249 : vector<8x1024xbf16> to vector<8x1024xf32>
    %c168_76 = arith.constant 168 : index
    %c0_77 = arith.constant 0 : index
    %251 = vector.load %arg16[%c168_76, %c0_77] : memref<200x1024xf32, #tpu.memory_space<vmem>>, vector<8x1024xf32>
    tpu.vector_store %arg16[%c168_76, %c0_77], %250 {strides = array<i32>} : memref<200x1024xf32, #tpu.memory_space<vmem>>, vector<8x1024xf32>,
    %252 = vector.extract_strided_slice %144 {offsets = [0, 260], sizes = [8, 764], strides = [1, 1]} : vector<8x1024xbf16> to vector<8x764xbf16>
    %253 = vector.extract_strided_slice %144 {offsets = [0, 0], sizes = [8, 260], strides = [1, 1]} : vector<8x1024xbf16> to vector<8x260xbf16>
    %254 = tpu.concatenate %252, %253 in 1 : vector<8x764xbf16>, vector<8x260xbf16> -> vector<8x1024xbf16>
    %255 = arith.extf %254 : vector<8x1024xbf16> to vector<8x1024xf32>
    %c176_78 = arith.constant 176 : index
    %c0_79 = arith.constant 0 : index
    %256 = vector.load %arg16[%c176_78, %c0_79] : memref<200x1024xf32, #tpu.memory_space<vmem>>, vector<8x1024xf32>
    tpu.vector_store %arg16[%c176_78, %c0_79], %255 {strides = array<i32>} : memref<200x1024xf32, #tpu.memory_space<vmem>>, vector<8x1024xf32>,
    %257 = vector.extract_strided_slice %144 {offsets = [0, 262], sizes = [8, 762], strides = [1, 1]} : vector<8x1024xbf16> to vector<8x762xbf16>
    %258 = vector.extract_strided_slice %144 {offsets = [0, 0], sizes = [8, 262], strides = [1, 1]} : vector<8x1024xbf16> to vector<8x262xbf16>
    %259 = tpu.concatenate %257, %258 in 1 : vector<8x762xbf16>, vector<8x262xbf16> -> vector<8x1024xbf16>
    %260 = arith.extf %259 : vector<8x1024xbf16> to vector<8x1024xf32>
    %c184_80 = arith.constant 184 : index
    %c0_81 = arith.constant 0 : index
    %261 = vector.load %arg16[%c184_80, %c0_81] : memref<200x1024xf32, #tpu.memory_space<vmem>>, vector<8x1024xf32>
    tpu.vector_store %arg16[%c184_80, %c0_81], %260 {strides = array<i32>} : memref<200x1024xf32, #tpu.memory_space<vmem>>, vector<8x1024xf32>,
    %262 = vector.extract_strided_slice %144 {offsets = [0, 264], sizes = [8, 760], strides = [1, 1]} : vector<8x1024xbf16> to vector<8x760xbf16>
    %263 = vector.extract_strided_slice %144 {offsets = [0, 0], sizes = [8, 264], strides = [1, 1]} : vector<8x1024xbf16> to vector<8x264xbf16>
    %264 = tpu.concatenate %262, %263 in 1 : vector<8x760xbf16>, vector<8x264xbf16> -> vector<8x1024xbf16>
    %265 = arith.extf %264 : vector<8x1024xbf16> to vector<8x1024xf32>
    %c192_82 = arith.constant 192 : index
    %c0_83 = arith.constant 0 : index
    %266 = vector.load %arg16[%c192_82, %c0_83] : memref<200x1024xf32, #tpu.memory_space<vmem>>, vector<8x1024xf32>
    tpu.vector_store %arg16[%c192_82, %c0_83], %265 {strides = array<i32>} : memref<200x1024xf32, #tpu.memory_space<vmem>>, vector<8x1024xf32>,
    %c0_84 = arith.constant 0 : index
    %c0_85 = arith.constant 0 : index
    %267 = vector.load %arg4[%c0_84, %c0_85] : memref<16x200xbf16, #tpu.memory_space<vmem>>, vector<16x200xbf16>
    %c0_86 = arith.constant 0 : index
    %c0_87 = arith.constant 0 : index
    %268 = vector.load %arg16[%c0_86, %c0_87] : memref<200x1024xf32, #tpu.memory_space<vmem>>, vector<200x1024xf32>
    %269 = arith.truncf %268 : vector<200x1024xf32> to vector<200x1024xbf16>
    %cst_88 = arith.constant dense<0.000000e+00> : vector<16x1024xf32>
    %270 = tpu.matmul %267, %269, %cst_88 {dimension_numbers = #tpu.dot_dimension_numbers<[1], [0], [0], [1], [0, 0, 1, 1], [], []>} : vector<16x200xbf16>, vector<200x1024xbf16>, vector<16x1024xf32> -> vector<16x1024xf32>
    %c0_89 = arith.constant 0 : index
    %c0_90 = arith.constant 0 : index
    %271 = vector.load %arg5[%c0_89, %c0_90] : memref<16x1xf32, #tpu.memory_space<vmem>>, vector<16x1xf32>
    %272 = vector.broadcast %271 : vector<16x1xf32> to vector<16x1024xf32>
    %273 = arith.addf %270, %272 : vector<16x1024xf32>
    %cst_91 = arith.constant 0.000000e+00 : f32
    %274 = vector.broadcast %cst_91 : f32 to vector<16x1024xf32>
    %275 = arith.maximumf %273, %274 : vector<16x1024xf32>
    %276 = vector.extract_strided_slice %275 {offsets = [0, 2], sizes = [16, 1022], strides = [1, 1]} : vector<16x1024xf32> to vector<16x1022xf32>
    %277 = vector.extract_strided_slice %275 {offsets = [0, 0], sizes = [16, 2], strides = [1, 1]} : vector<16x1024xf32> to vector<16x2xf32>
    %278 = tpu.concatenate %276, %277 in 1 : vector<16x1022xf32>, vector<16x2xf32> -> vector<16x1024xf32>
    %279 = arith.maximumf %275, %278 : vector<16x1024xf32>
    %280 = vector.extract_strided_slice %275 {offsets = [0, 64], sizes = [16, 960], strides = [1, 1]} : vector<16x1024xf32> to vector<16x960xf32>
    %281 = vector.extract_strided_slice %275 {offsets = [0, 0], sizes = [16, 64], strides = [1, 1]} : vector<16x1024xf32> to vector<16x64xf32>
    %282 = tpu.concatenate %280, %281 in 1 : vector<16x960xf32>, vector<16x64xf32> -> vector<16x1024xf32>
    %283 = vector.extract_strided_slice %275 {offsets = [0, 66], sizes = [16, 958], strides = [1, 1]} : vector<16x1024xf32> to vector<16x958xf32>
    %284 = vector.extract_strided_slice %275 {offsets = [0, 0], sizes = [16, 66], strides = [1, 1]} : vector<16x1024xf32> to vector<16x66xf32>
    %285 = tpu.concatenate %283, %284 in 1 : vector<16x958xf32>, vector<16x66xf32> -> vector<16x1024xf32>
    %286 = arith.maximumf %282, %285 : vector<16x1024xf32>
    %287 = arith.maximumf %279, %286 : vector<16x1024xf32>
    %288 = arith.truncf %287 : vector<16x1024xf32> to vector<16x1024xbf16>
    %c0_92 = arith.constant 0 : index
    %c0_93 = arith.constant 0 : index
    %289 = vector.load %arg6[%c0_92, %c0_93] : memref<1024x400xbf16, #tpu.memory_space<vmem>>, vector<1024x400xbf16>
    %c0_94 = arith.constant 0 : index
    %c0_95 = arith.constant 0 : index
    %290 = vector.load %arg7[%c0_94, %c0_95] : memref<16x400xf32, #tpu.memory_space<vmem>>, vector<16x400xf32>
    %cst_96 = arith.constant dense<0.000000e+00> : vector<16x400xf32>
    %291 = tpu.matmul %288, %289, %cst_96 {dimension_numbers = #tpu.dot_dimension_numbers<[1], [0], [0], [1], [0, 0, 1, 1], [], []>} : vector<16x1024xbf16>, vector<1024x400xbf16>, vector<16x400xf32> -> vector<16x400xf32>
    %292 = arith.mulf %291, %290 : vector<16x400xf32>
    %cst_97 = arith.constant dense<0.000000e+00> : vector<400xf32>
    %293 = vector.multi_reduction <add>, %292, %cst_97 [0] : vector<16x400xf32> to vector<400xf32>
    %294 = vector.shape_cast %293 : vector<400xf32> to vector<1x400xf32>
    %295 = arith.truncf %294 : vector<1x400xf32> to vector<1x400xbf16>
    %c0_98 = arith.constant 0 : index
    %c0_99 = arith.constant 0 : index
    %296 = vector.load %arg8[%c0_98, %c0_99] : memref<400x120xbf16, #tpu.memory_space<vmem>>, vector<400x120xbf16>
    %cst_100 = arith.constant dense<0.000000e+00> : vector<1x120xf32>
    %297 = tpu.matmul %295, %296, %cst_100 {dimension_numbers = #tpu.dot_dimension_numbers<[1], [0], [0], [1], [0, 0, 1, 1], [], []>} : vector<1x400xbf16>, vector<400x120xbf16>, vector<1x120xf32> -> vector<1x120xf32>
    %c0_101 = arith.constant 0 : index
    %c0_102 = arith.constant 0 : index
    %298 = vector.load %arg9[%c0_101, %c0_102] : memref<1x120xf32, #tpu.memory_space<vmem>>, vector<1x120xf32>
    %299 = arith.addf %297, %298 : vector<1x120xf32>
    %cst_103 = arith.constant 0.000000e+00 : f32
    %300 = vector.broadcast %cst_103 : f32 to vector<1x120xf32>
    %301 = arith.maximumf %299, %300 : vector<1x120xf32>
    %302 = arith.truncf %301 : vector<1x120xf32> to vector<1x120xbf16>
    %c0_104 = arith.constant 0 : index
    %c0_105 = arith.constant 0 : index
    %303 = vector.load %arg10[%c0_104, %c0_105] : memref<120x84xbf16, #tpu.memory_space<vmem>>, vector<120x84xbf16>
    %cst_106 = arith.constant dense<0.000000e+00> : vector<1x84xf32>
    %304 = tpu.matmul %302, %303, %cst_106 {dimension_numbers = #tpu.dot_dimension_numbers<[1], [0], [0], [1], [0, 0, 1, 1], [], []>} : vector<1x120xbf16>, vector<120x84xbf16>, vector<1x84xf32> -> vector<1x84xf32>
    %c0_107 = arith.constant 0 : index
    %c0_108 = arith.constant 0 : index
    %305 = vector.load %arg11[%c0_107, %c0_108] : memref<1x84xf32, #tpu.memory_space<vmem>>, vector<1x84xf32>
    %306 = arith.addf %304, %305 : vector<1x84xf32>
    %cst_109 = arith.constant 0.000000e+00 : f32
    %307 = vector.broadcast %cst_109 : f32 to vector<1x84xf32>
    %308 = arith.maximumf %306, %307 : vector<1x84xf32>
    %309 = arith.truncf %308 : vector<1x84xf32> to vector<1x84xbf16>
    %c0_110 = arith.constant 0 : index
    %c0_111 = arith.constant 0 : index
    %310 = vector.load %arg12[%c0_110, %c0_111] : memref<84x128xbf16, #tpu.memory_space<vmem>>, vector<84x128xbf16>
    %cst_112 = arith.constant dense<0.000000e+00> : vector<1x128xf32>
    %311 = tpu.matmul %309, %310, %cst_112 {dimension_numbers = #tpu.dot_dimension_numbers<[1], [0], [0], [1], [0, 0, 1, 1], [], []>} : vector<1x84xbf16>, vector<84x128xbf16>, vector<1x128xf32> -> vector<1x128xf32>
    %c0_113 = arith.constant 0 : index
    %c0_114 = arith.constant 0 : index
    %312 = vector.load %arg13[%c0_113, %c0_114] : memref<1x128xf32, #tpu.memory_space<vmem>>, vector<1x128xf32>
    %313 = arith.addf %311, %312 : vector<1x128xf32>
    %c0_115 = arith.constant 0 : index
    %c0_116 = arith.constant 0 : index
    %c0_117 = arith.constant 0 : index
    %314 = vector.load %arg14[%c0_115, %c0_116, %c0_117] : memref<1x1x128xf32, #tpu.memory_space<vmem>>, vector<1x1x128xf32>
    %315 = vector.shape_cast %314 : vector<1x1x128xf32> to vector<1x128xf32>
    %316 = vector.shape_cast %313 : vector<1x128xf32> to vector<1x1x128xf32>
    tpu.vector_store %arg14[%c0_115, %c0_116, %c0_117], %316 {strides = array<i32>} : memref<1x1x128xf32, #tpu.memory_space<vmem>>, vector<1x1x128xf32>,
    return
  }
  func.func @transform_0(%arg0: i32) -> (i32, i32) {
    %c0_i32 = arith.constant 0 : i32
    %c0_i32_0 = arith.constant 0 : i32
    return %c0_i32, %arg0 : i32, i32
  }
  func.func @transform_1(%arg0: i32) -> (i32, i32) {
    %c0_i32 = arith.constant 0 : i32
    %c0_i32_0 = arith.constant 0 : i32
    %c0_i32_1 = arith.constant 0 : i32
    return %c0_i32, %c0_i32_0 : i32, i32
  }
  func.func @transform_2(%arg0: i32) -> (i32, i32) {
    %c0_i32 = arith.constant 0 : i32
    %c0_i32_0 = arith.constant 0 : i32
    %c0_i32_1 = arith.constant 0 : i32
    return %c0_i32, %c0_i32_0 : i32, i32
  }
  func.func @transform_3(%arg0: i32) -> (i32, i32) {
    %c0_i32 = arith.constant 0 : i32
    %c0_i32_0 = arith.constant 0 : i32
    %c0_i32_1 = arith.constant 0 : i32
    return %c0_i32, %c0_i32_0 : i32, i32
  }
  func.func @transform_4(%arg0: i32) -> (i32, i32) {
    %c0_i32 = arith.constant 0 : i32
    %c0_i32_0 = arith.constant 0 : i32
    %c0_i32_1 = arith.constant 0 : i32
    return %c0_i32, %c0_i32_0 : i32, i32
  }
  func.func @transform_5(%arg0: i32) -> (i32, i32) {
    %c0_i32 = arith.constant 0 : i32
    %c0_i32_0 = arith.constant 0 : i32
    %c0_i32_1 = arith.constant 0 : i32
    return %c0_i32, %c0_i32_0 : i32, i32
  }
  func.func @transform_6(%arg0: i32) -> (i32, i32) {
    %c0_i32 = arith.constant 0 : i32
    %c0_i32_0 = arith.constant 0 : i32
    %c0_i32_1 = arith.constant 0 : i32
    return %c0_i32, %c0_i32_0 : i32, i32
  }
  func.func @transform_7(%arg0: i32) -> (i32, i32) {
    %c0_i32 = arith.constant 0 : i32
    %c0_i32_0 = arith.constant 0 : i32
    %c0_i32_1 = arith.constant 0 : i32
    return %c0_i32, %c0_i32_0 : i32, i32
  }
  func.func @transform_8(%arg0: i32) -> (i32, i32) {
    %c0_i32 = arith.constant 0 : i32
    %c0_i32_0 = arith.constant 0 : i32
    %c0_i32_1 = arith.constant 0 : i32
    return %c0_i32, %c0_i32_0 : i32, i32
  }
  func.func @transform_9(%arg0: i32) -> (i32, i32) {
    %c0_i32 = arith.constant 0 : i32
    %c0_i32_0 = arith.constant 0 : i32
    %c0_i32_1 = arith.constant 0 : i32
    return %c0_i32, %c0_i32_0 : i32, i32
  }
  func.func @transform_10(%arg0: i32) -> (i32, i32) {
    %c0_i32 = arith.constant 0 : i32
    %c0_i32_0 = arith.constant 0 : i32
    %c0_i32_1 = arith.constant 0 : i32
    return %c0_i32, %c0_i32_0 : i32, i32
  }
  func.func @transform_11(%arg0: i32) -> (i32, i32) {
    %c0_i32 = arith.constant 0 : i32
    %c0_i32_0 = arith.constant 0 : i32
    %c0_i32_1 = arith.constant 0 : i32
    return %c0_i32, %c0_i32_0 : i32, i32
  }
  func.func @transform_12(%arg0: i32) -> (i32, i32) {
    %c0_i32 = arith.constant 0 : i32
    %c0_i32_0 = arith.constant 0 : i32
    %c0_i32_1 = arith.constant 0 : i32
    return %c0_i32, %c0_i32_0 : i32, i32
  }
  func.func @transform_13(%arg0: i32) -> (i32, i32, i32) {
    %c0_i32 = arith.constant 0 : i32
    %c0_i32_0 = arith.constant 0 : i32
    %c0_i32_1 = arith.constant 0 : i32
    return %arg0, %c0_i32, %c0_i32_0 : i32, i32, i32
  }
}

</mosaic_0001>

<llo_original>
// kernel: lenet_forward.1
$region0: #{lenet_forward.1}
  #allocation0 [shape = 'u32[]', space=smem, size = 0x4, offset = 0x4, fixed_abs, tag = 'smem constant byte address 0x4 - core index']
  #allocation1 [shape = 'u32[144,128]{1,0:T(1,128)}', space=vmem, size = 0x12000, scoped, tag = 'internal scratch']
  #allocation2 [shape = 'f32[200,1024]{1,0:T(8,128)}', space=vmem, size = 0xc8000, scoped, tag = 'scratch operand']
  #allocation3 [shape = 'f32[200,1024]{1,0:T(8,128)}', space=vmem, size = 0xc8000, scoped, tag = 'scratch operand']
  %s0 = inlined_call_operand.vmem [shape: bf16[8,2048], index: 0, kind: input, shape index: {}]
  %s1 = inlined_call_operand.vmem [shape: bf16[8,200], index: 1, kind: input, shape index: {}]
  %s2 = inlined_call_operand.vmem [shape: f32[8,1], index: 2, kind: input, shape index: {}]
  %s3 = inlined_call_operand.vmem [shape: bf16[16,200], index: 3, kind: input, shape index: {}]
  %s4 = inlined_call_operand.vmem [shape: f32[16,1], index: 4, kind: input, shape index: {}]
  %s5 = inlined_call_operand.vmem [shape: bf16[1024,400], index: 5, kind: input, shape index: {}]
  %s6 = inlined_call_operand.vmem [shape: f32[16,400], index: 6, kind: input, shape index: {}]
  %s7 = inlined_call_operand.vmem [shape: bf16[400,120], index: 7, kind: input, shape index: {}]
  %s8 = inlined_call_operand.vmem [shape: f32[1,120], index: 8, kind: input, shape index: {}]
  %s9 = inlined_call_operand.vmem [shape: bf16[120,84], index: 9, kind: input, shape index: {}]
  %s10 = inlined_call_operand.vmem [shape: f32[1,84], index: 10, kind: input, shape index: {}]
  %s11 = inlined_call_operand.vmem [shape: bf16[84,128], index: 11, kind: input, shape index: {}]
  %s12 = inlined_call_operand.vmem [shape: f32[1,128], index: 12, kind: input, shape index: {}]
  %s13 = inlined_call_operand.hbm [shape: f32[2,1,128], index: 13, kind: output, shape index: {}]
  %s14 = sld [smem:[#allocation0]]
  $region85: #{lenet_forward.1} parent=0
    _
  %s16 = ssub.s32 1, %s14
  %s17 = scalar_select 0, %s16, %s14
  $region1: #{lenet_forward.1} parent=0
    #allocation4 [shape = 'u8[1024]{0}', space=vmem, size = 0x400, scoped, tag = 'output window, operand 0']
    #allocation5 [shape = 's32[2]{0}', space=sflag, size = 0x8, scoped, tag = 'scoped memory for lenet_forward.1']
    %18 = vsyncpa [#allocation5], 0
    %s19 = scalar_lea.sflag [#allocation5], 1
    %20 = vsyncpa %s19, 0
    loop: start=0, step=1, limit=4
    $region2: #{lenet_forward.1} parent=1 // loop_pre_header
      _
    $region3: #{lenet_forward.1} parent=1 // loop_header
      %s22 = sphi 0, %s26
      %p23 = scmp.ge.s32.totalorder %s22, 4
      %s32 = sphi 0, %s34
      %s35 = sphi 0, %s32
      %s36 = sphi 0, %s35
      %s52 = sphi 0, %s36
      %s56 = sphi 0, %s56
      %s58 = sphi 0, %s56
      %s59 = sphi 0, %s58
      %s73 = sphi 0, %s59
      %s77 = sphi 0, %s77
      %s79 = sphi 0, %s77
      %s80 = sphi 0, %s79
      %s94 = sphi 0, %s80
      %s98 = sphi 0, %s98
      %s100 = sphi 0, %s98
      %s101 = sphi 0, %s100
      %s115 = sphi 0, %s101
      %s119 = sphi 0, %s119
      %s121 = sphi 0, %s119
      %s122 = sphi 0, %s121
      %s136 = sphi 0, %s122
      %s140 = sphi 0, %s140
      %s142 = sphi 0, %s140
      %s143 = sphi 0, %s142
      %s157 = sphi 0, %s143
      %s161 = sphi 0, %s161
      %s163 = sphi 0, %s161
      %s164 = sphi 0, %s163
      %s178 = sphi 0, %s164
      %s182 = sphi 0, %s182
      %s184 = sphi 0, %s182
      %s185 = sphi 0, %s184
      %s199 = sphi 0, %s185
      %s203 = sphi 0, %s203
      %s205 = sphi 0, %s203
      %s206 = sphi 0, %s205
      %s220 = sphi 0, %s206
      %s224 = sphi 0, %s224
      %s226 = sphi 0, %s224
      %s227 = sphi 0, %s226
      %s241 = sphi 0, %s227
      %s245 = sphi 0, %s245
      %s247 = sphi 0, %s245
      %s248 = sphi 0, %s247
      %s262 = sphi 0, %s248
      %s266 = sphi 0, %s266
      %s268 = sphi 0, %s266
      %s269 = sphi 0, %s268
      %s283 = sphi 0, %s269
      %s287 = sphi 0, %s287
      %s289 = sphi 0, %s287
      %s290 = sphi 0, %s289
      %s304 = sphi 0, %s290
      %s310 = sphi 0, %s312
      %s313 = sphi 0, %s310
      %s314 = sphi 0, %s313
      %s330 = sphi 0, %s314
    $region4: #{lenet_forward.1} parent=1 // loop_header_branch
      %25 = sbr.rel (%p23) target = $region8
    $region5: #{lenet_forward.1} parent=1 // loop_body
      %s27 = ssub.s32 %s22, 1
      %s28 = ssub.s32 %s22, 2
      %s29 = sadd.s32 %s22, 1
      %s30 = ssub.s32 %s22, %s29
      %p31 = scmp.eq.s32.totalorder %s30, 0
      %s33 = sadd.s32 %s32, 1
      %s34 = scalar_select %p31, %s32, %s33
      %p37 = pneg %p31
      %p38 = scmp.eq.s32.totalorder %s22, 1
      %p39 = por %p37, %p38
      %p40 = scmp.ne.s32.totalorder %s32, %s35
      %p41 = scmp.eq.s32.totalorder %s22, 0
      %p42 = por %p40, %p41
      %p43 = scmp.ne.s32.totalorder %s32, %s35
      %p44 = scmp.eq.s32.totalorder %s27, 1
      %p45 = por %p43, %p44
      %p46 = scmp.ne.s32.totalorder %s35, %s36
      %p47 = scmp.eq.s32.totalorder %s27, 0
      %p48 = por %p46, %p47
      %p49 = scmp.ne.s32.totalorder %s35, %s36
      %p50 = scmp.eq.s32.totalorder %s28, 1
      %p51 = por %p49, %p50
      %p53 = scmp.ne.s32.totalorder %s36, %s52
      %p54 = scmp.eq.s32.totalorder %s28, 0
      %p55 = por %p53, %p54
      %s57 = sadd.s32 %s56, 1
      %p60 = scmp.eq.s32.totalorder %s22, 1
      %p61 = scmp.ne.s32.totalorder %s56, %s58
      %p62 = scmp.eq.s32.totalorder %s22, 0
      %p63 = por %p61, %p62
      %p64 = scmp.ne.s32.totalorder %s56, %s58
      %p65 = scmp.eq.s32.totalorder %s27, 1
      %p66 = por %p64, %p65
      %p67 = scmp.ne.s32.totalorder %s58, %s59
      %p68 = scmp.eq.s32.totalorder %s27, 0
      %p69 = por %p67, %p68
      %p70 = scmp.ne.s32.totalorder %s58, %s59
      %p71 = scmp.eq.s32.totalorder %s28, 1
      %p72 = por %p70, %p71
      %p74 = scmp.ne.s32.totalorder %s59, %s73
      %p75 = scmp.eq.s32.totalorder %s28, 0
      %p76 = por %p74, %p75
      %s78 = sadd.s32 %s77, 1
      %p81 = scmp.eq.s32.totalorder %s22, 1
      %p82 = scmp.ne.s32.totalorder %s77, %s79
      %p83 = scmp.eq.s32.totalorder %s22, 0
      %p84 = por %p82, %p83
      %p85 = scmp.ne.s32.totalorder %s77, %s79
      %p86 = scmp.eq.s32.totalorder %s27, 1
      %p87 = por %p85, %p86
      %p88 = scmp.ne.s32.totalorder %s79, %s80
      %p89 = scmp.eq.s32.totalorder %s27, 0
      %p90 = por %p88, %p89
      %p91 = scmp.ne.s32.totalorder %s79, %s80
      %p92 = scmp.eq.s32.totalorder %s28, 1
      %p93 = por %p91, %p92
      %p95 = scmp.ne.s32.totalorder %s80, %s94
      %p96 = scmp.eq.s32.totalorder %s28, 0
      %p97 = por %p95, %p96
      %s99 = sadd.s32 %s98, 1
      %p102 = scmp.eq.s32.totalorder %s22, 1
      %p103 = scmp.ne.s32.totalorder %s98, %s100
      %p104 = scmp.eq.s32.totalorder %s22, 0
      %p105 = por %p103, %p104
      %p106 = scmp.ne.s32.totalorder %s98, %s100
      %p107 = scmp.eq.s32.totalorder %s27, 1
      %p108 = por %p106, %p107
      %p109 = scmp.ne.s32.totalorder %s100, %s101
      %p110 = scmp.eq.s32.totalorder %s27, 0
      %p111 = por %p109, %p110
      %p112 = scmp.ne.s32.totalorder %s100, %s101
      %p113 = scmp.eq.s32.totalorder %s28, 1
      %p114 = por %p112, %p113
      %p116 = scmp.ne.s32.totalorder %s101, %s115
      %p117 = scmp.eq.s32.totalorder %s28, 0
      %p118 = por %p116, %p117
      %s120 = sadd.s32 %s119, 1
      %p123 = scmp.eq.s32.totalorder %s22, 1
      %p124 = scmp.ne.s32.totalorder %s119, %s121
      %p125 = scmp.eq.s32.totalorder %s22, 0
      %p126 = por %p124, %p125
      %p127 = scmp.ne.s32.totalorder %s119, %s121
      %p128 = scmp.eq.s32.totalorder %s27, 1
      %p129 = por %p127, %p128
      %p130 = scmp.ne.s32.totalorder %s121, %s122
      %p131 = scmp.eq.s32.totalorder %s27, 0
      %p132 = por %p130, %p131
      %p133 = scmp.ne.s32.totalorder %s121, %s122
      %p134 = scmp.eq.s32.totalorder %s28, 1
      %p135 = por %p133, %p134
      %p137 = scmp.ne.s32.totalorder %s122, %s136
      %p138 = scmp.eq.s32.totalorder %s28, 0
      %p139 = por %p137, %p138
      %s141 = sadd.s32 %s140, 1
      %p144 = scmp.eq.s32.totalorder %s22, 1
      %p145 = scmp.ne.s32.totalorder %s140, %s142
      %p146 = scmp.eq.s32.totalorder %s22, 0
      %p147 = por %p145, %p146
      %p148 = scmp.ne.s32.totalorder %s140, %s142
      %p149 = scmp.eq.s32.totalorder %s27, 1
      %p150 = por %p148, %p149
      %p151 = scmp.ne.s32.totalorder %s142, %s143
      %p152 = scmp.eq.s32.totalorder %s27, 0
      %p153 = por %p151, %p152
      %p154 = scmp.ne.s32.totalorder %s142, %s143
      %p155 = scmp.eq.s32.totalorder %s28, 1
      %p156 = por %p154, %p155
      %p158 = scmp.ne.s32.totalorder %s143, %s157
      %p159 = scmp.eq.s32.totalorder %s28, 0
      %p160 = por %p158, %p159
      %s162 = sadd.s32 %s161, 1
      %p165 = scmp.eq.s32.totalorder %s22, 1
      %p166 = scmp.ne.s32.totalorder %s161, %s163
      %p167 = scmp.eq.s32.totalorder %s22, 0
      %p168 = por %p166, %p167
      %p169 = scmp.ne.s32.totalorder %s161, %s163
      %p170 = scmp.eq.s32.totalorder %s27, 1
      %p171 = por %p169, %p170
      %p172 = scmp.ne.s32.totalorder %s163, %s164
      %p173 = scmp.eq.s32.totalorder %s27, 0
      %p174 = por %p172, %p173
      %p175 = scmp.ne.s32.totalorder %s163, %s164
      %p176 = scmp.eq.s32.totalorder %s28, 1
      %p177 = por %p175, %p176
      %p179 = scmp.ne.s32.totalorder %s164, %s178
      %p180 = scmp.eq.s32.totalorder %s28, 0
      %p181 = por %p179, %p180
      %s183 = sadd.s32 %s182, 1
      %p186 = scmp.eq.s32.totalorder %s22, 1
      %p187 = scmp.ne.s32.totalorder %s182, %s184
      %p188 = scmp.eq.s32.totalorder %s22, 0
      %p189 = por %p187, %p188
      %p190 = scmp.ne.s32.totalorder %s182, %s184
      %p191 = scmp.eq.s32.totalorder %s27, 1
      %p192 = por %p190, %p191
      %p193 = scmp.ne.s32.totalorder %s184, %s185
      %p194 = scmp.eq.s32.totalorder %s27, 0
      %p195 = por %p193, %p194
      %p196 = scmp.ne.s32.totalorder %s184, %s185
      %p197 = scmp.eq.s32.totalorder %s28, 1
      %p198 = por %p196, %p197
      %p200 = scmp.ne.s32.totalorder %s185, %s199
      %p201 = scmp.eq.s32.totalorder %s28, 0
      %p202 = por %p200, %p201
      %s204 = sadd.s32 %s203, 1
      %p207 = scmp.eq.s32.totalorder %s22, 1
      %p208 = scmp.ne.s32.totalorder %s203, %s205
      %p209 = scmp.eq.s32.totalorder %s22, 0
      %p210 = por %p208, %p209
      %p211 = scmp.ne.s32.totalorder %s203, %s205
      %p212 = scmp.eq.s32.totalorder %s27, 1
      %p213 = por %p211, %p212
      %p214 = scmp.ne.s32.totalorder %s205, %s206
      %p215 = scmp.eq.s32.totalorder %s27, 0
      %p216 = por %p214, %p215
      %p217 = scmp.ne.s32.totalorder %s205, %s206
      %p218 = scmp.eq.s32.totalorder %s28, 1
      %p219 = por %p217, %p218
      %p221 = scmp.ne.s32.totalorder %s206, %s220
      %p222 = scmp.eq.s32.totalorder %s28, 0
      %p223 = por %p221, %p222
      %s225 = sadd.s32 %s224, 1
      %p228 = scmp.eq.s32.totalorder %s22, 1
      %p229 = scmp.ne.s32.totalorder %s224, %s226
      %p230 = scmp.eq.s32.totalorder %s22, 0
      %p231 = por %p229, %p230
      %p232 = scmp.ne.s32.totalorder %s224, %s226
      %p233 = scmp.eq.s32.totalorder %s27, 1
      %p234 = por %p232, %p233
      %p235 = scmp.ne.s32.totalorder %s226, %s227
      %p236 = scmp.eq.s32.totalorder %s27, 0
      %p237 = por %p235, %p236
      %p238 = scmp.ne.s32.totalorder %s226, %s227
      %p239 = scmp.eq.s32.totalorder %s28, 1
      %p240 = por %p238, %p239
      %p242 = scmp.ne.s32.totalorder %s227, %s241
      %p243 = scmp.eq.s32.totalorder %s28, 0
      %p244 = por %p242, %p243
      %s246 = sadd.s32 %s245, 1
      %p249 = scmp.eq.s32.totalorder %s22, 1
      %p250 = scmp.ne.s32.totalorder %s245, %s247
      %p251 = scmp.eq.s32.totalorder %s22, 0
      %p252 = por %p250, %p251
      %p253 = scmp.ne.s32.totalorder %s245, %s247
      %p254 = scmp.eq.s32.totalorder %s27, 1
      %p255 = por %p253, %p254
      %p256 = scmp.ne.s32.totalorder %s247, %s248
      %p257 = scmp.eq.s32.totalorder %s27, 0
      %p258 = por %p256, %p257
      %p259 = scmp.ne.s32.totalorder %s247, %s248
      %p260 = scmp.eq.s32.totalorder %s28, 1
      %p261 = por %p259, %p260
      %p263 = scmp.ne.s32.totalorder %s248, %s262
      %p264 = scmp.eq.s32.totalorder %s28, 0
      %p265 = por %p263, %p264
      %s267 = sadd.s32 %s266, 1
      %p270 = scmp.eq.s32.totalorder %s22, 1
      %p271 = scmp.ne.s32.totalorder %s266, %s268
      %p272 = scmp.eq.s32.totalorder %s22, 0
      %p273 = por %p271, %p272
      %p274 = scmp.ne.s32.totalorder %s266, %s268
      %p275 = scmp.eq.s32.totalorder %s27, 1
      %p276 = por %p274, %p275
      %p277 = scmp.ne.s32.totalorder %s268, %s269
      %p278 = scmp.eq.s32.totalorder %s27, 0
      %p279 = por %p277, %p278
      %p280 = scmp.ne.s32.totalorder %s268, %s269
      %p281 = scmp.eq.s32.totalorder %s28, 1
      %p282 = por %p280, %p281
      %p284 = scmp.ne.s32.totalorder %s269, %s283
      %p285 = scmp.eq.s32.totalorder %s28, 0
      %p286 = por %p284, %p285
      %s288 = sadd.s32 %s287, 1
      %p291 = scmp.eq.s32.totalorder %s22, 1
      %p292 = scmp.ne.s32.totalorder %s287, %s289
      %p293 = scmp.eq.s32.totalorder %s22, 0
      %p294 = por %p292, %p293
      %p295 = scmp.ne.s32.totalorder %s287, %s289
      %p296 = scmp.eq.s32.totalorder %s27, 1
      %p297 = por %p295, %p296
      %p298 = scmp.ne.s32.totalorder %s289, %s290
      %p299 = scmp.eq.s32.totalorder %s27, 0
      %p300 = por %p298, %p299
      %p301 = scmp.ne.s32.totalorder %s289, %s290
      %p302 = scmp.eq.s32.totalorder %s28, 1
      %p303 = por %p301, %p302
      %p305 = scmp.ne.s32.totalorder %s290, %s304
      %p306 = scmp.eq.s32.totalorder %s28, 0
      %p307 = por %p305, %p306
      %s308 = ssub.s32 %s22, %s29
      %p309 = scmp.eq.s32.totalorder %s308, 0
      %s311 = sadd.s32 %s310, 1
      %s312 = scalar_select %p309, %s310, %s311
      %p315 = pneg %p309
      %p316 = scmp.eq.s32.totalorder %s22, 1
      %p317 = por %p315, %p316
      %p318 = scmp.ne.s32.totalorder %s310, %s313
      %p319 = scmp.eq.s32.totalorder %s22, 0
      %p320 = por %p318, %p319
      %p321 = scmp.ne.s32.totalorder %s310, %s313
      %p322 = scmp.eq.s32.totalorder %s27, 1
      %p323 = por %p321, %p322
      %p324 = scmp.ne.s32.totalorder %s313, %s314
      %p325 = scmp.eq.s32.totalorder %s27, 0
      %p326 = por %p324, %p325
      %p327 = scmp.ne.s32.totalorder %s313, %s314
      %p328 = scmp.eq.s32.totalorder %s28, 1
      %p329 = por %p327, %p328
      %p331 = scmp.ne.s32.totalorder %s314, %s330
      %p332 = scmp.eq.s32.totalorder %s28, 0
      %p333 = por %p331, %p332
      %p334 = scmp.le.s32.totalorder 1, %s22
      %p335 = scmp.lt.s32.totalorder %s22, 3
      %p336 = pnand %p334, %p335
      %p337 = pneg %p336
      // Predicated region
      $region9: #{lenet_forward.1} parent=5 // pred_check
        _
      $region10: #{lenet_forward.1} parent=5 // pred_check_branch
        %339 = sbr.rel (%p336) target = $region12
      $region11: #{lenet_forward.1} parent=5 // pred_region
        %s340 = ssub.s32 %s22, 1
        // Predicated region
        $region13: #{lenet_forward.1} parent=11 // pred_check
          %p341 = pneg %p69
        $region14: #{lenet_forward.1} parent=11 // pred_check_branch
          %343 = sbr.rel (%p341) target = $region16
        $region15: #{lenet_forward.1} parent=11 // pred_region
          _
        $region16: #{lenet_forward.1} parent=11 // pred_fallthru
          _
        // Predicated region
        $region17: #{lenet_forward.1} parent=11 // pred_check
          %p344 = pneg %p90
        $region18: #{lenet_forward.1} parent=11 // pred_check_branch
          %346 = sbr.rel (%p344) target = $region20
        $region19: #{lenet_forward.1} parent=11 // pred_region
          _
        $region20: #{lenet_forward.1} parent=11 // pred_fallthru
          _
        // Predicated region
        $region21: #{lenet_forward.1} parent=11 // pred_check
          %p347 = pneg %p111
        $region22: #{lenet_forward.1} parent=11 // pred_check_branch
          %349 = sbr.rel (%p347) target = $region24
        $region23: #{lenet_forward.1} parent=11 // pred_region
          _
        $region24: #{lenet_forward.1} parent=11 // pred_fallthru
          _
        // Predicated region
        $region25: #{lenet_forward.1} parent=11 // pred_check
          %p350 = pneg %p132
        $region26: #{lenet_forward.1} parent=11 // pred_check_branch
          %352 = sbr.rel (%p350) target = $region28
        $region27: #{lenet_forward.1} parent=11 // pred_region
          _
        $region28: #{lenet_forward.1} parent=11 // pred_fallthru
          _
        // Predicated region
        $region29: #{lenet_forward.1} parent=11 // pred_check
          %p353 = pneg %p153
        $region30: #{lenet_forward.1} parent=11 // pred_check_branch
          %355 = sbr.rel (%p353) target = $region32
        $region31: #{lenet_forward.1} parent=11 // pred_region
          _
        $region32: #{lenet_forward.1} parent=11 // pred_fallthru
          _
        // Predicated region
        $region33: #{lenet_forward.1} parent=11 // pred_check
          %p356 = pneg %p174
        $region34: #{lenet_forward.1} parent=11 // pred_check_branch
          %358 = sbr.rel (%p356) target = $region36
        $region35: #{lenet_forward.1} parent=11 // pred_region
          _
        $region36: #{lenet_forward.1} parent=11 // pred_fallthru
          _
        // Predicated region
        $region37: #{lenet_forward.1} parent=11 // pred_check
          %p359 = pneg %p195
        $region38: #{lenet_forward.1} parent=11 // pred_check_branch
          %361 = sbr.rel (%p359) target = $region40
        $region39: #{lenet_forward.1} parent=11 // pred_region
          _
        $region40: #{lenet_forward.1} parent=11 // pred_fallthru
          _
        // Predicated region
        $region41: #{lenet_forward.1} parent=11 // pred_check
          %p362 = pneg %p216
        $region42: #{lenet_forward.1} parent=11 // pred_check_branch
          %364 = sbr.rel (%p362) target = $region44
        $region43: #{lenet_forward.1} parent=11 // pred_region
          _
        $region44: #{lenet_forward.1} parent=11 // pred_fallthru
          _
        // Predicated region
        $region45: #{lenet_forward.1} parent=11 // pred_check
          %p365 = pneg %p237
        $region46: #{lenet_forward.1} parent=11 // pred_check_branch
          %367 = sbr.rel (%p365) target = $region48
        $region47: #{lenet_forward.1} parent=11 // pred_region
          _
        $region48: #{lenet_forward.1} parent=11 // pred_fallthru
          _
        // Predicated region
        $region49: #{lenet_forward.1} parent=11 // pred_check
          %p368 = pneg %p258
        $region50: #{lenet_forward.1} parent=11 // pred_check_branch
          %370 = sbr.rel (%p368) target = $region52
        $region51: #{lenet_forward.1} parent=11 // pred_region
          _
        $region52: #{lenet_forward.1} parent=11 // pred_fallthru
          _
        // Predicated region
        $region53: #{lenet_forward.1} parent=11 // pred_check
          %p371 = pneg %p279
        $region54: #{lenet_forward.1} parent=11 // pred_check_branch
          %373 = sbr.rel (%p371) target = $region56
        $region55: #{lenet_forward.1} parent=11 // pred_region
          _
        $region56: #{lenet_forward.1} parent=11 // pred_fallthru
          _
        // Predicated region
        $region57: #{lenet_forward.1} parent=11 // pred_check
          %p374 = pneg %p300
        $region58: #{lenet_forward.1} parent=11 // pred_check_branch
          %376 = sbr.rel (%p374) target = $region60
        $region59: #{lenet_forward.1} parent=11 // pred_region
          _
        $region60: #{lenet_forward.1} parent=11 // pred_fallthru
          _
      $region12: #{lenet_forward.1} parent=5 // pred_fallthru
        _
      %p377 = scmp.lt.s32.totalorder %s22, 2
      // Predicated region
      $region61: #{lenet_forward.1} parent=5 // pred_check
        %p378 = pneg %p377
      $region62: #{lenet_forward.1} parent=5 // pred_check_branch
        %380 = sbr.rel (%p378) target = $region64
      $region63: #{lenet_forward.1} parent=5 // pred_region
        // Predicated region
        $region65: #{lenet_forward.1} parent=63 // pred_check
          %p381 = pneg %p42
        $region66: #{lenet_forward.1} parent=63 // pred_check_branch
          %383 = sbr.rel (%p381) target = $region68
        $region67: #{lenet_forward.1} parent=63 // pred_region
          %s384 = smul.u32 8, %s22
          %p385 = scmp.lt.s32.totalorder %s384, 15
          %s386 = scalar_select %p385, %s384, 15
          %s387 = smul.addr %s386, 4
          %s388 = scalar_lea.vmem %s0, %s387
          %s389 = smul.u32 8, %s22
        $region68: #{lenet_forward.1} parent=63 // pred_fallthru
          _
      $region64: #{lenet_forward.1} parent=5 // pred_fallthru
        _
      %p390 = scmp.le.s32.totalorder 1, %s22
      %p391 = scmp.lt.s32.totalorder %s22, 3
      %p392 = pnand %p390, %p391
      %p393 = pneg %p392
      // Predicated region
      $region69: #{lenet_forward.1} parent=5 // pred_check
        _
      $region70: #{lenet_forward.1} parent=5 // pred_check_branch
        %395 = sbr.rel (%p392) target = $region72
      $region71: #{lenet_forward.1} parent=5 // pred_region
        %s396 = ssub.s32 %s22, 1
        %s397 = smul.u32 8, %s27
        %p398 = scmp.lt.s32.totalorder %s397, 15
        %s399 = scalar_select %p398, %s397, 15
        %s400 = smul.addr %s399, 4
        %s401 = scalar_lea.vmem %s0, %s400
        %p402 = pneg %p48
        %p403 = pneg %p45
        %p404 = pneg %p69
        %p405 = pneg %p66
        %p406 = pneg %p90
        %p407 = pneg %p87
        %p408 = pneg %p111
        %p409 = pneg %p108
        %p410 = pneg %p132
        %p411 = pneg %p129
        %p412 = pneg %p153
        %p413 = pneg %p150
        %p414 = pneg %p174
        %p415 = pneg %p171
        %p416 = pneg %p195
        %p417 = pneg %p192
        %p418 = pneg %p216
        %p419 = pneg %p213
        %p420 = pneg %p237
        %p421 = pneg %p234
        %p422 = pneg %p258
        %p423 = pneg %p255
        %p424 = pneg %p279
        %p425 = pneg %p276
        %p426 = pneg %p300
        %p427 = pneg %p297
        %p428 = pneg %p326
        %p429 = pneg %p323
        %s430 = sand.u32 %s313, 1
        %s431 = scalar_lea.sflag [#allocation5], %s430
        %s432 = sand.u32 %s313, 1
        %s433 = scalar_lea.vmem [#allocation4], %s432
        %s434 = smul.u32 8, %s27
        %p435 = scmp.lt.s32.totalorder %s434, 15
        %s436 = scalar_select %p435, %s434, 15
        %s437 = smul.addr %s436, 4
        %s438 = scalar_lea.vmem %s0, %s437
        %s439 = smul.u32 8, %s27
        %v441 = vld [vmem:[%s438] sm:$0xff]
        %v442 = vld [vmem:[%s438 + $0x8] sm:$0xff]
        %v443 = vld [vmem:[%s438 + $0x10] sm:$0xff]
        %v444 = vld [vmem:[%s438 + $0x18] sm:$0xff]
        %v445 = vunpack.c.l.bf16 %v441
        %v446 = vunpack.c.h.bf16 %v441
        %v447 = vunpack.c.l.bf16 %v442
        %v448 = vunpack.c.h.bf16 %v442
        %v449 = vunpack.c.l.bf16 %v443
        %v450 = vunpack.c.h.bf16 %v443
        %v451 = vunpack.c.l.bf16 %v444
        %v452 = vunpack.c.h.bf16 %v444
        %453 = vst [vmem:[#allocation2] sm:$0xff] %v445
        %454 = vst [vmem:[#allocation2 + $0x8] sm:$0xff] %v446
        %455 = vst [vmem:[#allocation2 + $0x10] sm:$0xff] %v447
        %456 = vst [vmem:[#allocation2 + $0x18] sm:$0xff] %v448
        %457 = vst [vmem:[#allocation2 + $0x20] sm:$0xff] %v449
        %458 = vst [vmem:[#allocation2 + $0x28] sm:$0xff] %v450
        %459 = vst [vmem:[#allocation2 + $0x30] sm:$0xff] %v451
        %460 = vst [vmem:[#allocation2 + $0x38] sm:$0xff] %v452
        %v465 = vunpack.c.l.b16 %v441
        %v466 = vunpack.c.h.b16 %v441
        %v467 = vunpack.c.l.b16 %v442
        %v468 = vunpack.c.h.b16 %v442
        %v469 = vunpack.c.l.b16 %v443
        %v470 = vunpack.c.h.b16 %v443
        %v471 = vunpack.c.l.b16 %v444
        %v472 = vunpack.c.h.b16 %v444
        %v473 = vpack.c.b16 %v465, %v465
        %v474 = vpack.c.b16 %v466, %v466
        %v475 = vpack.c.b16 %v467, %v467
        %v476 = vpack.c.b16 %v468, %v468
        %v477 = vpack.c.b16 %v469, %v469
        %v478 = vpack.c.b16 %v470, %v470
        %v479 = vpack.c.b16 %v471, %v471
        %v480 = vpack.c.b16 %v472, %v472
        %481 = vrot.lane.b32.xlu0 %v473, 127
        %v482 = vpop.permute.xlu0 %481
        %483 = vrot.lane.b32.xlu0 %v474, 127
        %v484 = vpop.permute.xlu0 %483
        %485 = vrot.lane.b32.xlu0 %v475, 127
        %v486 = vpop.permute.xlu0 %485
        %487 = vrot.lane.b32.xlu0 %v476, 127
        %v488 = vpop.permute.xlu0 %487
        %489 = vrot.lane.b32.xlu0 %v477, 127
        %v490 = vpop.permute.xlu0 %489
        %491 = vrot.lane.b32.xlu0 %v478, 127
        %v492 = vpop.permute.xlu0 %491
        %493 = vrot.lane.b32.xlu0 %v479, 127
        %v494 = vpop.permute.xlu0 %493
        %495 = vrot.lane.b32.xlu0 %v480, 127
        %v496 = vpop.permute.xlu0 %495
        %vm497 = vcmask 1039360
        %v498 = vsel %vm497, %v482, %v484
        %v499 = vsel %vm497, %v484, %v486
        %v500 = vsel %vm497, %v486, %v488
        %v501 = vsel %vm497, %v488, %v490
        %v502 = vsel %vm497, %v490, %v492
        %v503 = vsel %vm497, %v492, %v494
        %v504 = vsel %vm497, %v494, %v496
        %vm512 = vcmask 1039360
        %v515 = vsel %vm512, %v496, %v482
        %v517 = vunpack.c.l.bf16 %v498
        %v518 = vunpack.c.l.bf16 %v499
        %v519 = vunpack.c.l.bf16 %v500
        %v520 = vunpack.c.l.bf16 %v501
        %v521 = vunpack.c.l.bf16 %v502
        %v522 = vunpack.c.l.bf16 %v503
        %v523 = vunpack.c.l.bf16 %v504
        %v524 = vunpack.c.l.bf16 %v515
        %525 = vst [vmem:[#allocation2 + $0x40] sm:$0xff] %v517
        %526 = vst [vmem:[#allocation2 + $0x48] sm:$0xff] %v518
        %527 = vst [vmem:[#allocation2 + $0x50] sm:$0xff] %v519
        %528 = vst [vmem:[#allocation2 + $0x58] sm:$0xff] %v520
        %529 = vst [vmem:[#allocation2 + $0x60] sm:$0xff] %v521
        %530 = vst [vmem:[#allocation2 + $0x68] sm:$0xff] %v522
        %531 = vst [vmem:[#allocation2 + $0x70] sm:$0xff] %v523
        %532 = vst [vmem:[#allocation2 + $0x78] sm:$0xff] %v524
        %533 = vrot.lane.b32.xlu0 %v473, 126
        %v534 = vpop.permute.xlu0 %533
        %535 = vrot.lane.b32.xlu0 %v474, 126
        %v536 = vpop.permute.xlu0 %535
        %537 = vrot.lane.b32.xlu0 %v475, 126
        %v538 = vpop.permute.xlu0 %537
        %539 = vrot.lane.b32.xlu0 %v476, 126
        %v540 = vpop.permute.xlu0 %539
        %541 = vrot.lane.b32.xlu0 %v477, 126
        %v542 = vpop.permute.xlu0 %541
        %543 = vrot.lane.b32.xlu0 %v478, 126
        %v544 = vpop.permute.xlu0 %543
        %545 = vrot.lane.b32.xlu0 %v479, 126
        %v546 = vpop.permute.xlu0 %545
        %547 = vrot.lane.b32.xlu0 %v480, 126
        %v548 = vpop.permute.xlu0 %547
        %vm549 = vcmask 1031168
        %v550 = vsel %vm549, %v534, %v536
        %v551 = vsel %vm549, %v536, %v538
        %v552 = vsel %vm549, %v538, %v540
        %v553 = vsel %vm549, %v540, %v542
        %v554 = vsel %vm549, %v542, %v544
        %v555 = vsel %vm549, %v544, %v546
        %v556 = vsel %vm549, %v546, %v548
        %vm564 = vcmask 1031168
        %v567 = vsel %vm564, %v548, %v534
        %v569 = vunpack.c.l.bf16 %v550
        %v570 = vunpack.c.l.bf16 %v551
        %v571 = vunpack.c.l.bf16 %v552
        %v572 = vunpack.c.l.bf16 %v553
        %v573 = vunpack.c.l.bf16 %v554
        %v574 = vunpack.c.l.bf16 %v555
        %v575 = vunpack.c.l.bf16 %v556
        %v576 = vunpack.c.l.bf16 %v567
        %577 = vst [vmem:[#allocation2 + $0x80] sm:$0xff] %v569
        %578 = vst [vmem:[#allocation2 + $0x88] sm:$0xff] %v570
        %579 = vst [vmem:[#allocation2 + $0x90] sm:$0xff] %v571
        %580 = vst [vmem:[#allocation2 + $0x98] sm:$0xff] %v572
        %581 = vst [vmem:[#allocation2 + $0xa0] sm:$0xff] %v573
        %582 = vst [vmem:[#allocation2 + $0xa8] sm:$0xff] %v574
        %583 = vst [vmem:[#allocation2 + $0xb0] sm:$0xff] %v575
        %584 = vst [vmem:[#allocation2 + $0xb8] sm:$0xff] %v576
        %585 = vrot.lane.b32.xlu0 %v473, 125
        %v586 = vpop.permute.xlu0 %585
        %587 = vrot.lane.b32.xlu0 %v474, 125
        %v588 = vpop.permute.xlu0 %587
        %589 = vrot.lane.b32.xlu0 %v475, 125
        %v590 = vpop.permute.xlu0 %589
        %591 = vrot.lane.b32.xlu0 %v476, 125
        %v592 = vpop.permute.xlu0 %591
        %593 = vrot.lane.b32.xlu0 %v477, 125
        %v594 = vpop.permute.xlu0 %593
        %595 = vrot.lane.b32.xlu0 %v478, 125
        %v596 = vpop.permute.xlu0 %595
        %597 = vrot.lane.b32.xlu0 %v479, 125
        %v598 = vpop.permute.xlu0 %597
        %599 = vrot.lane.b32.xlu0 %v480, 125
        %v600 = vpop.permute.xlu0 %599
        %vm601 = vcmask 1022976
        %v602 = vsel %vm601, %v586, %v588
        %v603 = vsel %vm601, %v588, %v590
        %v604 = vsel %vm601, %v590, %v592
        %v605 = vsel %vm601, %v592, %v594
        %v606 = vsel %vm601, %v594, %v596
        %v607 = vsel %vm601, %v596, %v598
        %v608 = vsel %vm601, %v598, %v600
        %vm616 = vcmask 1022976
        %v619 = vsel %vm616, %v600, %v586
        %v621 = vunpack.c.l.bf16 %v602
        %v622 = vunpack.c.l.bf16 %v603
        %v623 = vunpack.c.l.bf16 %v604
        %v624 = vunpack.c.l.bf16 %v605
        %v625 = vunpack.c.l.bf16 %v606
        %v626 = vunpack.c.l.bf16 %v607
        %v627 = vunpack.c.l.bf16 %v608
        %v628 = vunpack.c.l.bf16 %v619
        %629 = vst [vmem:[#allocation2 + $0xc0] sm:$0xff] %v621
        %630 = vst [vmem:[#allocation2 + $0xc8] sm:$0xff] %v622
        %631 = vst [vmem:[#allocation2 + $0xd0] sm:$0xff] %v623
        %632 = vst [vmem:[#allocation2 + $0xd8] sm:$0xff] %v624
        %633 = vst [vmem:[#allocation2 + $0xe0] sm:$0xff] %v625
        %634 = vst [vmem:[#allocation2 + $0xe8] sm:$0xff] %v626
        %635 = vst [vmem:[#allocation2 + $0xf0] sm:$0xff] %v627
        %636 = vst [vmem:[#allocation2 + $0xf8] sm:$0xff] %v628
        %637 = vrot.lane.b32.xlu0 %v473, 124
        %v638 = vpop.permute.xlu0 %637
        %639 = vrot.lane.b32.xlu0 %v474, 124
        %v640 = vpop.permute.xlu0 %639
        %641 = vrot.lane.b32.xlu0 %v475, 124
        %v642 = vpop.permute.xlu0 %641
        %643 = vrot.lane.b32.xlu0 %v476, 124
        %v644 = vpop.permute.xlu0 %643
        %645 = vrot.lane.b32.xlu0 %v477, 124
        %v646 = vpop.permute.xlu0 %645
        %647 = vrot.lane.b32.xlu0 %v478, 124
        %v648 = vpop.permute.xlu0 %647
        %649 = vrot.lane.b32.xlu0 %v479, 124
        %v650 = vpop.permute.xlu0 %649
        %651 = vrot.lane.b32.xlu0 %v480, 124
        %v652 = vpop.permute.xlu0 %651
        %vm653 = vcmask 1014784
        %v654 = vsel %vm653, %v638, %v640
        %v655 = vsel %vm653, %v640, %v642
        %v656 = vsel %vm653, %v642, %v644
        %v657 = vsel %vm653, %v644, %v646
        %v658 = vsel %vm653, %v646, %v648
        %v659 = vsel %vm653, %v648, %v650
        %v660 = vsel %vm653, %v650, %v652
        %vm668 = vcmask 1014784
        %v671 = vsel %vm668, %v652, %v638
        %v673 = vunpack.c.l.bf16 %v654
        %v674 = vunpack.c.l.bf16 %v655
        %v675 = vunpack.c.l.bf16 %v656
        %v676 = vunpack.c.l.bf16 %v657
        %v677 = vunpack.c.l.bf16 %v658
        %v678 = vunpack.c.l.bf16 %v659
        %v679 = vunpack.c.l.bf16 %v660
        %v680 = vunpack.c.l.bf16 %v671
        %681 = vst [vmem:[#allocation2 + $0x100] sm:$0xff] %v673
        %682 = vst [vmem:[#allocation2 + $0x108] sm:$0xff] %v674
        %683 = vst [vmem:[#allocation2 + $0x110] sm:$0xff] %v675
        %684 = vst [vmem:[#allocation2 + $0x118] sm:$0xff] %v676
        %685 = vst [vmem:[#allocation2 + $0x120] sm:$0xff] %v677
        %686 = vst [vmem:[#allocation2 + $0x128] sm:$0xff] %v678
        %687 = vst [vmem:[#allocation2 + $0x130] sm:$0xff] %v679
        %688 = vst [vmem:[#allocation2 + $0x138] sm:$0xff] %v680
        %689 = vrot.lane.b32.xlu0 %v473, 96
        %v690 = vpop.permute.xlu0 %689
        %691 = vrot.lane.b32.xlu0 %v474, 96
        %v692 = vpop.permute.xlu0 %691
        %693 = vrot.lane.b32.xlu0 %v475, 96
        %v694 = vpop.permute.xlu0 %693
        %695 = vrot.lane.b32.xlu0 %v476, 96
        %v696 = vpop.permute.xlu0 %695
        %697 = vrot.lane.b32.xlu0 %v477, 96
        %v698 = vpop.permute.xlu0 %697
        %699 = vrot.lane.b32.xlu0 %v478, 96
        %v700 = vpop.permute.xlu0 %699
        %701 = vrot.lane.b32.xlu0 %v479, 96
        %v702 = vpop.permute.xlu0 %701
        %703 = vrot.lane.b32.xlu0 %v480, 96
        %v704 = vpop.permute.xlu0 %703
        %vm705 = vcmask 785408
        %v706 = vsel %vm705, %v690, %v692
        %v707 = vsel %vm705, %v692, %v694
        %v708 = vsel %vm705, %v694, %v696
        %v709 = vsel %vm705, %v696, %v698
        %v710 = vsel %vm705, %v698, %v700
        %v711 = vsel %vm705, %v700, %v702
        %v712 = vsel %vm705, %v702, %v704
        %vm720 = vcmask 785408
        %v723 = vsel %vm720, %v704, %v690
        %v725 = vunpack.c.l.bf16 %v706
        %v726 = vunpack.c.l.bf16 %v707
        %v727 = vunpack.c.l.bf16 %v708
        %v728 = vunpack.c.l.bf16 %v709
        %v729 = vunpack.c.l.bf16 %v710
        %v730 = vunpack.c.l.bf16 %v711
        %v731 = vunpack.c.l.bf16 %v712
        %v732 = vunpack.c.l.bf16 %v723
        %733 = vst [vmem:[#allocation2 + $0x140] sm:$0xff] %v725
        %734 = vst [vmem:[#allocation2 + $0x148] sm:$0xff] %v726
        %735 = vst [vmem:[#allocation2 + $0x150] sm:$0xff] %v727
        %736 = vst [vmem:[#allocation2 + $0x158] sm:$0xff] %v728
        %737 = vst [vmem:[#allocation2 + $0x160] sm:$0xff] %v729
        %738 = vst [vmem:[#allocation2 + $0x168] sm:$0xff] %v730
        %739 = vst [vmem:[#allocation2 + $0x170] sm:$0xff] %v731
        %740 = vst [vmem:[#allocation2 + $0x178] sm:$0xff] %v732
        %741 = vrot.lane.b32.xlu0 %v473, 95
        %v742 = vpop.permute.xlu0 %741
        %743 = vrot.lane.b32.xlu0 %v474, 95
        %v744 = vpop.permute.xlu0 %743
        %745 = vrot.lane.b32.xlu0 %v475, 95
        %v746 = vpop.permute.xlu0 %745
        %747 = vrot.lane.b32.xlu0 %v476, 95
        %v748 = vpop.permute.xlu0 %747
        %749 = vrot.lane.b32.xlu0 %v477, 95
        %v750 = vpop.permute.xlu0 %749
        %751 = vrot.lane.b32.xlu0 %v478, 95
        %v752 = vpop.permute.xlu0 %751
        %753 = vrot.lane.b32.xlu0 %v479, 95
        %v754 = vpop.permute.xlu0 %753
        %755 = vrot.lane.b32.xlu0 %v480, 95
        %v756 = vpop.permute.xlu0 %755
        %vm757 = vcmask 777216
        %v758 = vsel %vm757, %v742, %v744
        %v759 = vsel %vm757, %v744, %v746
        %v760 = vsel %vm757, %v746, %v748
        %v761 = vsel %vm757, %v748, %v750
        %v762 = vsel %vm757, %v750, %v752
        %v763 = vsel %vm757, %v752, %v754
        %v764 = vsel %vm757, %v754, %v756
        %vm772 = vcmask 777216
        %v775 = vsel %vm772, %v756, %v742
        %v777 = vunpack.c.l.bf16 %v758
        %v778 = vunpack.c.l.bf16 %v759
        %v779 = vunpack.c.l.bf16 %v760
        %v780 = vunpack.c.l.bf16 %v761
        %v781 = vunpack.c.l.bf16 %v762
        %v782 = vunpack.c.l.bf16 %v763
        %v783 = vunpack.c.l.bf16 %v764
        %v784 = vunpack.c.l.bf16 %v775
        %785 = vst [vmem:[#allocation2 + $0x180] sm:$0xff] %v777
        %786 = vst [vmem:[#allocation2 + $0x188] sm:$0xff] %v778
        %787 = vst [vmem:[#allocation2 + $0x190] sm:$0xff] %v779
        %788 = vst [vmem:[#allocation2 + $0x198] sm:$0xff] %v780
        %789 = vst [vmem:[#allocation2 + $0x1a0] sm:$0xff] %v781
        %790 = vst [vmem:[#allocation2 + $0x1a8] sm:$0xff] %v782
        %791 = vst [vmem:[#allocation2 + $0x1b0] sm:$0xff] %v783
        %792 = vst [vmem:[#allocation2 + $0x1b8] sm:$0xff] %v784
        %793 = vrot.lane.b32.xlu0 %v473, 94
        %v794 = vpop.permute.xlu0 %793
        %795 = vrot.lane.b32.xlu0 %v474, 94
        %v796 = vpop.permute.xlu0 %795
        %797 = vrot.lane.b32.xlu0 %v475, 94
        %v798 = vpop.permute.xlu0 %797
        %799 = vrot.lane.b32.xlu0 %v476, 94
        %v800 = vpop.permute.xlu0 %799
        %801 = vrot.lane.b32.xlu0 %v477, 94
        %v802 = vpop.permute.xlu0 %801
        %803 = vrot.lane.b32.xlu0 %v478, 94
        %v804 = vpop.permute.xlu0 %803
        %805 = vrot.lane.b32.xlu0 %v479, 94
        %v806 = vpop.permute.xlu0 %805
        %807 = vrot.lane.b32.xlu0 %v480, 94
        %v808 = vpop.permute.xlu0 %807
        %vm809 = vcmask 769024
        %v810 = vsel %vm809, %v794, %v796
        %v811 = vsel %vm809, %v796, %v798
        %v812 = vsel %vm809, %v798, %v800
        %v813 = vsel %vm809, %v800, %v802
        %v814 = vsel %vm809, %v802, %v804
        %v815 = vsel %vm809, %v804, %v806
        %v816 = vsel %vm809, %v806, %v808
        %vm824 = vcmask 769024
        %v827 = vsel %vm824, %v808, %v794
        %v829 = vunpack.c.l.bf16 %v810
        %v830 = vunpack.c.l.bf16 %v811
        %v831 = vunpack.c.l.bf16 %v812
        %v832 = vunpack.c.l.bf16 %v813
        %v833 = vunpack.c.l.bf16 %v814
        %v834 = vunpack.c.l.bf16 %v815
        %v835 = vunpack.c.l.bf16 %v816
        %v836 = vunpack.c.l.bf16 %v827
        %837 = vst [vmem:[#allocation2 + $0x1c0] sm:$0xff] %v829
        %838 = vst [vmem:[#allocation2 + $0x1c8] sm:$0xff] %v830
        %839 = vst [vmem:[#allocation2 + $0x1d0] sm:$0xff] %v831
        %840 = vst [vmem:[#allocation2 + $0x1d8] sm:$0xff] %v832
        %841 = vst [vmem:[#allocation2 + $0x1e0] sm:$0xff] %v833
        %842 = vst [vmem:[#allocation2 + $0x1e8] sm:$0xff] %v834
        %843 = vst [vmem:[#allocation2 + $0x1f0] sm:$0xff] %v835
        %844 = vst [vmem:[#allocation2 + $0x1f8] sm:$0xff] %v836
        %845 = vrot.lane.b32.xlu0 %v473, 93
        %v846 = vpop.permute.xlu0 %845
        %847 = vrot.lane.b32.xlu0 %v474, 93
        %v848 = vpop.permute.xlu0 %847
        %849 = vrot.lane.b32.xlu0 %v475, 93
        %v850 = vpop.permute.xlu0 %849
        %851 = vrot.lane.b32.xlu0 %v476, 93
        %v852 = vpop.permute.xlu0 %851
        %853 = vrot.lane.b32.xlu0 %v477, 93
        %v854 = vpop.permute.xlu0 %853
        %855 = vrot.lane.b32.xlu0 %v478, 93
        %v856 = vpop.permute.xlu0 %855
        %857 = vrot.lane.b32.xlu0 %v479, 93
        %v858 = vpop.permute.xlu0 %857
        %859 = vrot.lane.b32.xlu0 %v480, 93
        %v860 = vpop.permute.xlu0 %859
        %vm861 = vcmask 760832
        %v862 = vsel %vm861, %v846, %v848
        %v863 = vsel %vm861, %v848, %v850
        %v864 = vsel %vm861, %v850, %v852
        %v865 = vsel %vm861, %v852, %v854
        %v866 = vsel %vm861, %v854, %v856
        %v867 = vsel %vm861, %v856, %v858
        %v868 = vsel %vm861, %v858, %v860
        %vm876 = vcmask 760832
        %v879 = vsel %vm876, %v860, %v846
        %v881 = vunpack.c.l.bf16 %v862
        %v882 = vunpack.c.l.bf16 %v863
        %v883 = vunpack.c.l.bf16 %v864
        %v884 = vunpack.c.l.bf16 %v865
        %v885 = vunpack.c.l.bf16 %v866
        %v886 = vunpack.c.l.bf16 %v867
        %v887 = vunpack.c.l.bf16 %v868
        %v888 = vunpack.c.l.bf16 %v879
        %889 = vst [vmem:[#allocation2 + $0x200] sm:$0xff] %v881
        %890 = vst [vmem:[#allocation2 + $0x208] sm:$0xff] %v882
        %891 = vst [vmem:[#allocation2 + $0x210] sm:$0xff] %v883
        %892 = vst [vmem:[#allocation2 + $0x218] sm:$0xff] %v884
        %893 = vst [vmem:[#allocation2 + $0x220] sm:$0xff] %v885
        %894 = vst [vmem:[#allocation2 + $0x228] sm:$0xff] %v886
        %895 = vst [vmem:[#allocation2 + $0x230] sm:$0xff] %v887
        %896 = vst [vmem:[#allocation2 + $0x238] sm:$0xff] %v888
        %897 = vrot.lane.b32.xlu0 %v473, 92
        %v898 = vpop.permute.xlu0 %897
        %899 = vrot.lane.b32.xlu0 %v474, 92
        %v900 = vpop.permute.xlu0 %899
        %901 = vrot.lane.b32.xlu0 %v475, 92
        %v902 = vpop.permute.xlu0 %901
        %903 = vrot.lane.b32.xlu0 %v476, 92
        %v904 = vpop.permute.xlu0 %903
        %905 = vrot.lane.b32.xlu0 %v477, 92
        %v906 = vpop.permute.xlu0 %905
        %907 = vrot.lane.b32.xlu0 %v478, 92
        %v908 = vpop.permute.xlu0 %907
        %909 = vrot.lane.b32.xlu0 %v479, 92
        %v910 = vpop.permute.xlu0 %909
        %911 = vrot.lane.b32.xlu0 %v480, 92
        %v912 = vpop.permute.xlu0 %911
        %vm913 = vcmask 752640
        %v914 = vsel %vm913, %v898, %v900
        %v915 = vsel %vm913, %v900, %v902
        %v916 = vsel %vm913, %v902, %v904
        %v917 = vsel %vm913, %v904, %v906
        %v918 = vsel %vm913, %v906, %v908
        %v919 = vsel %vm913, %v908, %v910
        %v920 = vsel %vm913, %v910, %v912
        %vm928 = vcmask 752640
        %v931 = vsel %vm928, %v912, %v898
        %v933 = vunpack.c.l.bf16 %v914
        %v934 = vunpack.c.l.bf16 %v915
        %v935 = vunpack.c.l.bf16 %v916
        %v936 = vunpack.c.l.bf16 %v917
        %v937 = vunpack.c.l.bf16 %v918
        %v938 = vunpack.c.l.bf16 %v919
        %v939 = vunpack.c.l.bf16 %v920
        %v940 = vunpack.c.l.bf16 %v931
        %941 = vst [vmem:[#allocation2 + $0x240] sm:$0xff] %v933
        %942 = vst [vmem:[#allocation2 + $0x248] sm:$0xff] %v934
        %943 = vst [vmem:[#allocation2 + $0x250] sm:$0xff] %v935
        %944 = vst [vmem:[#allocation2 + $0x258] sm:$0xff] %v936
        %945 = vst [vmem:[#allocation2 + $0x260] sm:$0xff] %v937
        %946 = vst [vmem:[#allocation2 + $0x268] sm:$0xff] %v938
        %947 = vst [vmem:[#allocation2 + $0x270] sm:$0xff] %v939
        %948 = vst [vmem:[#allocation2 + $0x278] sm:$0xff] %v940
        %949 = vrot.lane.b32.xlu0 %v473, 64
        %v950 = vpop.permute.xlu0 %949
        %951 = vrot.lane.b32.xlu0 %v474, 64
        %v952 = vpop.permute.xlu0 %951
        %953 = vrot.lane.b32.xlu0 %v475, 64
        %v954 = vpop.permute.xlu0 %953
        %955 = vrot.lane.b32.xlu0 %v476, 64
        %v956 = vpop.permute.xlu0 %955
        %957 = vrot.lane.b32.xlu0 %v477, 64
        %v958 = vpop.permute.xlu0 %957
        %959 = vrot.lane.b32.xlu0 %v478, 64
        %v960 = vpop.permute.xlu0 %959
        %961 = vrot.lane.b32.xlu0 %v479, 64
        %v962 = vpop.permute.xlu0 %961
        %963 = vrot.lane.b32.xlu0 %v480, 64
        %v964 = vpop.permute.xlu0 %963
        %vm965 = vcmask 523264
        %v966 = vsel %vm965, %v950, %v952
        %v967 = vsel %vm965, %v952, %v954
        %v968 = vsel %vm965, %v954, %v956
        %v969 = vsel %vm965, %v956, %v958
        %v970 = vsel %vm965, %v958, %v960
        %v971 = vsel %vm965, %v960, %v962
        %v972 = vsel %vm965, %v962, %v964
        %vm980 = vcmask 523264
        %v983 = vsel %vm980, %v964, %v950
        %v985 = vunpack.c.l.bf16 %v966
        %v986 = vunpack.c.l.bf16 %v967
        %v987 = vunpack.c.l.bf16 %v968
        %v988 = vunpack.c.l.bf16 %v969
        %v989 = vunpack.c.l.bf16 %v970
        %v990 = vunpack.c.l.bf16 %v971
        %v991 = vunpack.c.l.bf16 %v972
        %v992 = vunpack.c.l.bf16 %v983
        %993 = vst [vmem:[#allocation2 + $0x280] sm:$0xff] %v985
        %994 = vst [vmem:[#allocation2 + $0x288] sm:$0xff] %v986
        %995 = vst [vmem:[#allocation2 + $0x290] sm:$0xff] %v987
        %996 = vst [vmem:[#allocation2 + $0x298] sm:$0xff] %v988
        %997 = vst [vmem:[#allocation2 + $0x2a0] sm:$0xff] %v989
        %998 = vst [vmem:[#allocation2 + $0x2a8] sm:$0xff] %v990
        %999 = vst [vmem:[#allocation2 + $0x2b0] sm:$0xff] %v991
        %1000 = vst [vmem:[#allocation2 + $0x2b8] sm:$0xff] %v992
        %1001 = vrot.lane.b32.xlu0 %v473, 63
        %v1002 = vpop.permute.xlu0 %1001
        %1003 = vrot.lane.b32.xlu0 %v474, 63
        %v1004 = vpop.permute.xlu0 %1003
        %1005 = vrot.lane.b32.xlu0 %v475, 63
        %v1006 = vpop.permute.xlu0 %1005
        %1007 = vrot.lane.b32.xlu0 %v476, 63
        %v1008 = vpop.permute.xlu0 %1007
        %1009 = vrot.lane.b32.xlu0 %v477, 63
        %v1010 = vpop.permute.xlu0 %1009
        %1011 = vrot.lane.b32.xlu0 %v478, 63
        %v1012 = vpop.permute.xlu0 %1011
        %1013 = vrot.lane.b32.xlu0 %v479, 63
        %v1014 = vpop.permute.xlu0 %1013
        %1015 = vrot.lane.b32.xlu0 %v480, 63
        %v1016 = vpop.permute.xlu0 %1015
        %vm1017 = vcmask 515072
        %v1018 = vsel %vm1017, %v1002, %v1004
        %v1019 = vsel %vm1017, %v1004, %v1006
        %v1020 = vsel %vm1017, %v1006, %v1008
        %v1021 = vsel %vm1017, %v1008, %v1010
        %v1022 = vsel %vm1017, %v1010, %v1012
        %v1023 = vsel %vm1017, %v1012, %v1014
        %v1024 = vsel %vm1017, %v1014, %v1016
        %vm1032 = vcmask 515072
        %v1035 = vsel %vm1032, %v1016, %v1002
        %v1037 = vunpack.c.l.bf16 %v1018
        %v1038 = vunpack.c.l.bf16 %v1019
        %v1039 = vunpack.c.l.bf16 %v1020
        %v1040 = vunpack.c.l.bf16 %v1021
        %v1041 = vunpack.c.l.bf16 %v1022
        %v1042 = vunpack.c.l.bf16 %v1023
        %v1043 = vunpack.c.l.bf16 %v1024
        %v1044 = vunpack.c.l.bf16 %v1035
        %1045 = vst [vmem:[#allocation2 + $0x2c0] sm:$0xff] %v1037
        %1046 = vst [vmem:[#allocation2 + $0x2c8] sm:$0xff] %v1038
        %1047 = vst [vmem:[#allocation2 + $0x2d0] sm:$0xff] %v1039
        %1048 = vst [vmem:[#allocation2 + $0x2d8] sm:$0xff] %v1040
        %1049 = vst [vmem:[#allocation2 + $0x2e0] sm:$0xff] %v1041
        %1050 = vst [vmem:[#allocation2 + $0x2e8] sm:$0xff] %v1042
        %1051 = vst [vmem:[#allocation2 + $0x2f0] sm:$0xff] %v1043
        %1052 = vst [vmem:[#allocation2 + $0x2f8] sm:$0xff] %v1044
        %1053 = vrot.lane.b32.xlu0 %v473, 62
        %v1054 = vpop.permute.xlu0 %1053
        %1055 = vrot.lane.b32.xlu0 %v474, 62
        %v1056 = vpop.permute.xlu0 %1055
        %1057 = vrot.lane.b32.xlu0 %v475, 62
        %v1058 = vpop.permute.xlu0 %1057
        %1059 = vrot.lane.b32.xlu0 %v476, 62
        %v1060 = vpop.permute.xlu0 %1059
        %1061 = vrot.lane.b32.xlu0 %v477, 62
        %v1062 = vpop.permute.xlu0 %1061
        %1063 = vrot.lane.b32.xlu0 %v478, 62
        %v1064 = vpop.permute.xlu0 %1063
        %1065 = vrot.lane.b32.xlu0 %v479, 62
        %v1066 = vpop.permute.xlu0 %1065
        %1067 = vrot.lane.b32.xlu0 %v480, 62
        %v1068 = vpop.permute.xlu0 %1067
        %vm1069 = vcmask 506880
        %v1070 = vsel %vm1069, %v1054, %v1056
        %v1071 = vsel %vm1069, %v1056, %v1058
        %v1072 = vsel %vm1069, %v1058, %v1060
        %v1073 = vsel %vm1069, %v1060, %v1062
        %v1074 = vsel %vm1069, %v1062, %v1064
        %v1075 = vsel %vm1069, %v1064, %v1066
        %v1076 = vsel %vm1069, %v1066, %v1068
        %vm1084 = vcmask 506880
        %v1087 = vsel %vm1084, %v1068, %v1054
        %v1089 = vunpack.c.l.bf16 %v1070
        %v1090 = vunpack.c.l.bf16 %v1071
        %v1091 = vunpack.c.l.bf16 %v1072
        %v1092 = vunpack.c.l.bf16 %v1073
        %v1093 = vunpack.c.l.bf16 %v1074
        %v1094 = vunpack.c.l.bf16 %v1075
        %v1095 = vunpack.c.l.bf16 %v1076
        %v1096 = vunpack.c.l.bf16 %v1087
        %1097 = vst [vmem:[#allocation2 + $0x300] sm:$0xff] %v1089
        %1098 = vst [vmem:[#allocation2 + $0x308] sm:$0xff] %v1090
        %1099 = vst [vmem:[#allocation2 + $0x310] sm:$0xff] %v1091
        %1100 = vst [vmem:[#allocation2 + $0x318] sm:$0xff] %v1092
        %1101 = vst [vmem:[#allocation2 + $0x320] sm:$0xff] %v1093
        %1102 = vst [vmem:[#allocation2 + $0x328] sm:$0xff] %v1094
        %1103 = vst [vmem:[#allocation2 + $0x330] sm:$0xff] %v1095
        %1104 = vst [vmem:[#allocation2 + $0x338] sm:$0xff] %v1096
        %1105 = vrot.lane.b32.xlu0 %v473, 61
        %v1106 = vpop.permute.xlu0 %1105
        %1107 = vrot.lane.b32.xlu0 %v474, 61
        %v1108 = vpop.permute.xlu0 %1107
        %1109 = vrot.lane.b32.xlu0 %v475, 61
        %v1110 = vpop.permute.xlu0 %1109
        %1111 = vrot.lane.b32.xlu0 %v476, 61
        %v1112 = vpop.permute.xlu0 %1111
        %1113 = vrot.lane.b32.xlu0 %v477, 61
        %v1114 = vpop.permute.xlu0 %1113
        %1115 = vrot.lane.b32.xlu0 %v478, 61
        %v1116 = vpop.permute.xlu0 %1115
        %1117 = vrot.lane.b32.xlu0 %v479, 61
        %v1118 = vpop.permute.xlu0 %1117
        %1119 = vrot.lane.b32.xlu0 %v480, 61
        %v1120 = vpop.permute.xlu0 %1119
        %vm1121 = vcmask 498688
        %v1122 = vsel %vm1121, %v1106, %v1108
        %v1123 = vsel %vm1121, %v1108, %v1110
        %v1124 = vsel %vm1121, %v1110, %v1112
        %v1125 = vsel %vm1121, %v1112, %v1114
        %v1126 = vsel %vm1121, %v1114, %v1116
        %v1127 = vsel %vm1121, %v1116, %v1118
        %v1128 = vsel %vm1121, %v1118, %v1120
        %vm1136 = vcmask 498688
        %v1139 = vsel %vm1136, %v1120, %v1106
        %v1141 = vunpack.c.l.bf16 %v1122
        %v1142 = vunpack.c.l.bf16 %v1123
        %v1143 = vunpack.c.l.bf16 %v1124
        %v1144 = vunpack.c.l.bf16 %v1125
        %v1145 = vunpack.c.l.bf16 %v1126
        %v1146 = vunpack.c.l.bf16 %v1127
        %v1147 = vunpack.c.l.bf16 %v1128
        %v1148 = vunpack.c.l.bf16 %v1139
        %1149 = vst [vmem:[#allocation2 + $0x340] sm:$0xff] %v1141
        %1150 = vst [vmem:[#allocation2 + $0x348] sm:$0xff] %v1142
        %1151 = vst [vmem:[#allocation2 + $0x350] sm:$0xff] %v1143
        %1152 = vst [vmem:[#allocation2 + $0x358] sm:$0xff] %v1144
        %1153 = vst [vmem:[#allocation2 + $0x360] sm:$0xff] %v1145
        %1154 = vst [vmem:[#allocation2 + $0x368] sm:$0xff] %v1146
        %1155 = vst [vmem:[#allocation2 + $0x370] sm:$0xff] %v1147
        %1156 = vst [vmem:[#allocation2 + $0x378] sm:$0xff] %v1148
        %1157 = vrot.lane.b32.xlu0 %v473, 60
        %v1158 = vpop.permute.xlu0 %1157
        %1159 = vrot.lane.b32.xlu0 %v474, 60
        %v1160 = vpop.permute.xlu0 %1159
        %1161 = vrot.lane.b32.xlu0 %v475, 60
        %v1162 = vpop.permute.xlu0 %1161
        %1163 = vrot.lane.b32.xlu0 %v476, 60
        %v1164 = vpop.permute.xlu0 %1163
        %1165 = vrot.lane.b32.xlu0 %v477, 60
        %v1166 = vpop.permute.xlu0 %1165
        %1167 = vrot.lane.b32.xlu0 %v478, 60
        %v1168 = vpop.permute.xlu0 %1167
        %1169 = vrot.lane.b32.xlu0 %v479, 60
        %v1170 = vpop.permute.xlu0 %1169
        %1171 = vrot.lane.b32.xlu0 %v480, 60
        %v1172 = vpop.permute.xlu0 %1171
        %vm1173 = vcmask 490496
        %v1174 = vsel %vm1173, %v1158, %v1160
        %v1175 = vsel %vm1173, %v1160, %v1162
        %v1176 = vsel %vm1173, %v1162, %v1164
        %v1177 = vsel %vm1173, %v1164, %v1166
        %v1178 = vsel %vm1173, %v1166, %v1168
        %v1179 = vsel %vm1173, %v1168, %v1170
        %v1180 = vsel %vm1173, %v1170, %v1172
        %vm1188 = vcmask 490496
        %v1191 = vsel %vm1188, %v1172, %v1158
        %v1193 = vunpack.c.l.bf16 %v1174
        %v1194 = vunpack.c.l.bf16 %v1175
        %v1195 = vunpack.c.l.bf16 %v1176
        %v1196 = vunpack.c.l.bf16 %v1177
        %v1197 = vunpack.c.l.bf16 %v1178
        %v1198 = vunpack.c.l.bf16 %v1179
        %v1199 = vunpack.c.l.bf16 %v1180
        %v1200 = vunpack.c.l.bf16 %v1191
        %1201 = vst [vmem:[#allocation2 + $0x380] sm:$0xff] %v1193
        %1202 = vst [vmem:[#allocation2 + $0x388] sm:$0xff] %v1194
        %1203 = vst [vmem:[#allocation2 + $0x390] sm:$0xff] %v1195
        %1204 = vst [vmem:[#allocation2 + $0x398] sm:$0xff] %v1196
        %1205 = vst [vmem:[#allocation2 + $0x3a0] sm:$0xff] %v1197
        %1206 = vst [vmem:[#allocation2 + $0x3a8] sm:$0xff] %v1198
        %1207 = vst [vmem:[#allocation2 + $0x3b0] sm:$0xff] %v1199
        %1208 = vst [vmem:[#allocation2 + $0x3b8] sm:$0xff] %v1200
        %1209 = vrot.lane.b32.xlu0 %v473, 32
        %v1210 = vpop.permute.xlu0 %1209
        %1211 = vrot.lane.b32.xlu0 %v474, 32
        %v1212 = vpop.permute.xlu0 %1211
        %1213 = vrot.lane.b32.xlu0 %v475, 32
        %v1214 = vpop.permute.xlu0 %1213
        %1215 = vrot.lane.b32.xlu0 %v476, 32
        %v1216 = vpop.permute.xlu0 %1215
        %1217 = vrot.lane.b32.xlu0 %v477, 32
        %v1218 = vpop.permute.xlu0 %1217
        %1219 = vrot.lane.b32.xlu0 %v478, 32
        %v1220 = vpop.permute.xlu0 %1219
        %1221 = vrot.lane.b32.xlu0 %v479, 32
        %v1222 = vpop.permute.xlu0 %1221
        %1223 = vrot.lane.b32.xlu0 %v480, 32
        %v1224 = vpop.permute.xlu0 %1223
        %vm1225 = vcmask 261120
        %v1226 = vsel %vm1225, %v1210, %v1212
        %v1227 = vsel %vm1225, %v1212, %v1214
        %v1228 = vsel %vm1225, %v1214, %v1216
        %v1229 = vsel %vm1225, %v1216, %v1218
        %v1230 = vsel %vm1225, %v1218, %v1220
        %v1231 = vsel %vm1225, %v1220, %v1222
        %v1232 = vsel %vm1225, %v1222, %v1224
        %vm1240 = vcmask 261120
        %v1243 = vsel %vm1240, %v1224, %v1210
        %v1245 = vunpack.c.l.bf16 %v1226
        %v1246 = vunpack.c.l.bf16 %v1227
        %v1247 = vunpack.c.l.bf16 %v1228
        %v1248 = vunpack.c.l.bf16 %v1229
        %v1249 = vunpack.c.l.bf16 %v1230
        %v1250 = vunpack.c.l.bf16 %v1231
        %v1251 = vunpack.c.l.bf16 %v1232
        %v1252 = vunpack.c.l.bf16 %v1243
        %1253 = vst [vmem:[#allocation2 + $0x3c0] sm:$0xff] %v1245
        %1254 = vst [vmem:[#allocation2 + $0x3c8] sm:$0xff] %v1246
        %1255 = vst [vmem:[#allocation2 + $0x3d0] sm:$0xff] %v1247
        %1256 = vst [vmem:[#allocation2 + $0x3d8] sm:$0xff] %v1248
        %1257 = vst [vmem:[#allocation2 + $0x3e0] sm:$0xff] %v1249
        %1258 = vst [vmem:[#allocation2 + $0x3e8] sm:$0xff] %v1250
        %1259 = vst [vmem:[#allocation2 + $0x3f0] sm:$0xff] %v1251
        %1260 = vst [vmem:[#allocation2 + $0x3f8] sm:$0xff] %v1252
        %1261 = vrot.lane.b32.xlu0 %v473, 31
        %v1262 = vpop.permute.xlu0 %1261
        %1263 = vrot.lane.b32.xlu0 %v474, 31
        %v1264 = vpop.permute.xlu0 %1263
        %1265 = vrot.lane.b32.xlu0 %v475, 31
        %v1266 = vpop.permute.xlu0 %1265
        %1267 = vrot.lane.b32.xlu0 %v476, 31
        %v1268 = vpop.permute.xlu0 %1267
        %1269 = vrot.lane.b32.xlu0 %v477, 31
        %v1270 = vpop.permute.xlu0 %1269
        %1271 = vrot.lane.b32.xlu0 %v478, 31
        %v1272 = vpop.permute.xlu0 %1271
        %1273 = vrot.lane.b32.xlu0 %v479, 31
        %v1274 = vpop.permute.xlu0 %1273
        %1275 = vrot.lane.b32.xlu0 %v480, 31
        %v1276 = vpop.permute.xlu0 %1275
        %vm1277 = vcmask 252928
        %v1278 = vsel %vm1277, %v1262, %v1264
        %v1279 = vsel %vm1277, %v1264, %v1266
        %v1280 = vsel %vm1277, %v1266, %v1268
        %v1281 = vsel %vm1277, %v1268, %v1270
        %v1282 = vsel %vm1277, %v1270, %v1272
        %v1283 = vsel %vm1277, %v1272, %v1274
        %v1284 = vsel %vm1277, %v1274, %v1276
        %vm1292 = vcmask 252928
        %v1295 = vsel %vm1292, %v1276, %v1262
        %v1297 = vunpack.c.l.bf16 %v1278
        %v1298 = vunpack.c.l.bf16 %v1279
        %v1299 = vunpack.c.l.bf16 %v1280
        %v1300 = vunpack.c.l.bf16 %v1281
        %v1301 = vunpack.c.l.bf16 %v1282
        %v1302 = vunpack.c.l.bf16 %v1283
        %v1303 = vunpack.c.l.bf16 %v1284
        %v1304 = vunpack.c.l.bf16 %v1295
        %1305 = vst [vmem:[#allocation2 + $0x400] sm:$0xff] %v1297
        %1306 = vst [vmem:[#allocation2 + $0x408] sm:$0xff] %v1298
        %1307 = vst [vmem:[#allocation2 + $0x410] sm:$0xff] %v1299
        %1308 = vst [vmem:[#allocation2 + $0x418] sm:$0xff] %v1300
        %1309 = vst [vmem:[#allocation2 + $0x420] sm:$0xff] %v1301
        %1310 = vst [vmem:[#allocation2 + $0x428] sm:$0xff] %v1302
        %1311 = vst [vmem:[#allocation2 + $0x430] sm:$0xff] %v1303
        %1312 = vst [vmem:[#allocation2 + $0x438] sm:$0xff] %v1304
        %1313 = vrot.lane.b32.xlu0 %v473, 30
        %v1314 = vpop.permute.xlu0 %1313
        %1315 = vrot.lane.b32.xlu0 %v474, 30
        %v1316 = vpop.permute.xlu0 %1315
        %1317 = vrot.lane.b32.xlu0 %v475, 30
        %v1318 = vpop.permute.xlu0 %1317
        %1319 = vrot.lane.b32.xlu0 %v476, 30
        %v1320 = vpop.permute.xlu0 %1319
        %1321 = vrot.lane.b32.xlu0 %v477, 30
        %v1322 = vpop.permute.xlu0 %1321
        %1323 = vrot.lane.b32.xlu0 %v478, 30
        %v1324 = vpop.permute.xlu0 %1323
        %1325 = vrot.lane.b32.xlu0 %v479, 30
        %v1326 = vpop.permute.xlu0 %1325
        %1327 = vrot.lane.b32.xlu0 %v480, 30
        %v1328 = vpop.permute.xlu0 %1327
        %vm1329 = vcmask 244736
        %v1330 = vsel %vm1329, %v1314, %v1316
        %v1331 = vsel %vm1329, %v1316, %v1318
        %v1332 = vsel %vm1329, %v1318, %v1320
        %v1333 = vsel %vm1329, %v1320, %v1322
        %v1334 = vsel %vm1329, %v1322, %v1324
        %v1335 = vsel %vm1329, %v1324, %v1326
        %v1336 = vsel %vm1329, %v1326, %v1328
        %vm1344 = vcmask 244736
        %v1347 = vsel %vm1344, %v1328, %v1314
        %v1349 = vunpack.c.l.bf16 %v1330
        %v1350 = vunpack.c.l.bf16 %v1331
        %v1351 = vunpack.c.l.bf16 %v1332
        %v1352 = vunpack.c.l.bf16 %v1333
        %v1353 = vunpack.c.l.bf16 %v1334
        %v1354 = vunpack.c.l.bf16 %v1335
        %v1355 = vunpack.c.l.bf16 %v1336
        %v1356 = vunpack.c.l.bf16 %v1347
        %1357 = vst [vmem:[#allocation2 + $0x440] sm:$0xff] %v1349
        %1358 = vst [vmem:[#allocation2 + $0x448] sm:$0xff] %v1350
        %1359 = vst [vmem:[#allocation2 + $0x450] sm:$0xff] %v1351
        %1360 = vst [vmem:[#allocation2 + $0x458] sm:$0xff] %v1352
        %1361 = vst [vmem:[#allocation2 + $0x460] sm:$0xff] %v1353
        %1362 = vst [vmem:[#allocation2 + $0x468] sm:$0xff] %v1354
        %1363 = vst [vmem:[#allocation2 + $0x470] sm:$0xff] %v1355
        %1364 = vst [vmem:[#allocation2 + $0x478] sm:$0xff] %v1356
        %1365 = vrot.lane.b32.xlu0 %v473, 29
        %v1366 = vpop.permute.xlu0 %1365
        %1367 = vrot.lane.b32.xlu0 %v474, 29
        %v1368 = vpop.permute.xlu0 %1367
        %1369 = vrot.lane.b32.xlu0 %v475, 29
        %v1370 = vpop.permute.xlu0 %1369
        %1371 = vrot.lane.b32.xlu0 %v476, 29
        %v1372 = vpop.permute.xlu0 %1371
        %1373 = vrot.lane.b32.xlu0 %v477, 29
        %v1374 = vpop.permute.xlu0 %1373
        %1375 = vrot.lane.b32.xlu0 %v478, 29
        %v1376 = vpop.permute.xlu0 %1375
        %1377 = vrot.lane.b32.xlu0 %v479, 29
        %v1378 = vpop.permute.xlu0 %1377
        %1379 = vrot.lane.b32.xlu0 %v480, 29
        %v1380 = vpop.permute.xlu0 %1379
        %vm1381 = vcmask 236544
        %v1382 = vsel %vm1381, %v1366, %v1368
        %v1383 = vsel %vm1381, %v1368, %v1370
        %v1384 = vsel %vm1381, %v1370, %v1372
        %v1385 = vsel %vm1381, %v1372, %v1374
        %v1386 = vsel %vm1381, %v1374, %v1376
        %v1387 = vsel %vm1381, %v1376, %v1378
        %v1388 = vsel %vm1381, %v1378, %v1380
        %vm1396 = vcmask 236544
        %v1399 = vsel %vm1396, %v1380, %v1366
        %v1401 = vunpack.c.l.bf16 %v1382
        %v1402 = vunpack.c.l.bf16 %v1383
        %v1403 = vunpack.c.l.bf16 %v1384
        %v1404 = vunpack.c.l.bf16 %v1385
        %v1405 = vunpack.c.l.bf16 %v1386
        %v1406 = vunpack.c.l.bf16 %v1387
        %v1407 = vunpack.c.l.bf16 %v1388
        %v1408 = vunpack.c.l.bf16 %v1399
        %1409 = vst [vmem:[#allocation2 + $0x480] sm:$0xff] %v1401
        %1410 = vst [vmem:[#allocation2 + $0x488] sm:$0xff] %v1402
        %1411 = vst [vmem:[#allocation2 + $0x490] sm:$0xff] %v1403
        %1412 = vst [vmem:[#allocation2 + $0x498] sm:$0xff] %v1404
        %1413 = vst [vmem:[#allocation2 + $0x4a0] sm:$0xff] %v1405
        %1414 = vst [vmem:[#allocation2 + $0x4a8] sm:$0xff] %v1406
        %1415 = vst [vmem:[#allocation2 + $0x4b0] sm:$0xff] %v1407
        %1416 = vst [vmem:[#allocation2 + $0x4b8] sm:$0xff] %v1408
        %1417 = vrot.lane.b32.xlu0 %v473, 28
        %v1418 = vpop.permute.xlu0 %1417
        %1419 = vrot.lane.b32.xlu0 %v474, 28
        %v1420 = vpop.permute.xlu0 %1419
        %1421 = vrot.lane.b32.xlu0 %v475, 28
        %v1422 = vpop.permute.xlu0 %1421
        %1423 = vrot.lane.b32.xlu0 %v476, 28
        %v1424 = vpop.permute.xlu0 %1423
        %1425 = vrot.lane.b32.xlu0 %v477, 28
        %v1426 = vpop.permute.xlu0 %1425
        %1427 = vrot.lane.b32.xlu0 %v478, 28
        %v1428 = vpop.permute.xlu0 %1427
        %1429 = vrot.lane.b32.xlu0 %v479, 28
        %v1430 = vpop.permute.xlu0 %1429
        %1431 = vrot.lane.b32.xlu0 %v480, 28
        %v1432 = vpop.permute.xlu0 %1431
        %vm1433 = vcmask 228352
        %v1434 = vsel %vm1433, %v1418, %v1420
        %v1435 = vsel %vm1433, %v1420, %v1422
        %v1436 = vsel %vm1433, %v1422, %v1424
        %v1437 = vsel %vm1433, %v1424, %v1426
        %v1438 = vsel %vm1433, %v1426, %v1428
        %v1439 = vsel %vm1433, %v1428, %v1430
        %v1440 = vsel %vm1433, %v1430, %v1432
        %vm1448 = vcmask 228352
        %v1451 = vsel %vm1448, %v1432, %v1418
        %v1453 = vunpack.c.l.bf16 %v1434
        %v1454 = vunpack.c.l.bf16 %v1435
        %v1455 = vunpack.c.l.bf16 %v1436
        %v1456 = vunpack.c.l.bf16 %v1437
        %v1457 = vunpack.c.l.bf16 %v1438
        %v1458 = vunpack.c.l.bf16 %v1439
        %v1459 = vunpack.c.l.bf16 %v1440
        %v1460 = vunpack.c.l.bf16 %v1451
        %1461 = vst [vmem:[#allocation2 + $0x4c0] sm:$0xff] %v1453
        %1462 = vst [vmem:[#allocation2 + $0x4c8] sm:$0xff] %v1454
        %1463 = vst [vmem:[#allocation2 + $0x4d0] sm:$0xff] %v1455
        %1464 = vst [vmem:[#allocation2 + $0x4d8] sm:$0xff] %v1456
        %1465 = vst [vmem:[#allocation2 + $0x4e0] sm:$0xff] %v1457
        %1466 = vst [vmem:[#allocation2 + $0x4e8] sm:$0xff] %v1458
        %1467 = vst [vmem:[#allocation2 + $0x4f0] sm:$0xff] %v1459
        %1468 = vst [vmem:[#allocation2 + $0x4f8] sm:$0xff] %v1460
        %v1476 = vunpack.c.l.bf16 %v474
        %v1477 = vunpack.c.l.bf16 %v475
        %v1478 = vunpack.c.l.bf16 %v476
        %v1479 = vunpack.c.l.bf16 %v477
        %v1480 = vunpack.c.l.bf16 %v478
        %v1481 = vunpack.c.l.bf16 %v479
        %v1482 = vunpack.c.l.bf16 %v480
        %1483 = vst [vmem:[#allocation2 + $0x500] sm:$0xff] %v1476
        %1484 = vst [vmem:[#allocation2 + $0x508] sm:$0xff] %v1477
        %1485 = vst [vmem:[#allocation2 + $0x510] sm:$0xff] %v1478
        %1486 = vst [vmem:[#allocation2 + $0x518] sm:$0xff] %v1479
        %1487 = vst [vmem:[#allocation2 + $0x520] sm:$0xff] %v1480
        %1488 = vst [vmem:[#allocation2 + $0x528] sm:$0xff] %v1481
        %1489 = vst [vmem:[#allocation2 + $0x530] sm:$0xff] %v1482
        %1490 = vst [vmem:[#allocation2 + $0x538] sm:$0xff] %v445
        %1491 = vst [vmem:[#allocation2 + $0x540] sm:$0xff] %v518
        %1492 = vst [vmem:[#allocation2 + $0x548] sm:$0xff] %v519
        %1493 = vst [vmem:[#allocation2 + $0x550] sm:$0xff] %v520
        %1494 = vst [vmem:[#allocation2 + $0x558] sm:$0xff] %v521
        %1495 = vst [vmem:[#allocation2 + $0x560] sm:$0xff] %v522
        %1496 = vst [vmem:[#allocation2 + $0x568] sm:$0xff] %v523
        %1497 = vst [vmem:[#allocation2 + $0x570] sm:$0xff] %v524
        %1498 = vst [vmem:[#allocation2 + $0x578] sm:$0xff] %v517
        %1499 = vst [vmem:[#allocation2 + $0x580] sm:$0xff] %v570
        %1500 = vst [vmem:[#allocation2 + $0x588] sm:$0xff] %v571
        %1501 = vst [vmem:[#allocation2 + $0x590] sm:$0xff] %v572
        %1502 = vst [vmem:[#allocation2 + $0x598] sm:$0xff] %v573
        %1503 = vst [vmem:[#allocation2 + $0x5a0] sm:$0xff] %v574
        %1504 = vst [vmem:[#allocation2 + $0x5a8] sm:$0xff] %v575
        %1505 = vst [vmem:[#allocation2 + $0x5b0] sm:$0xff] %v576
        %1506 = vst [vmem:[#allocation2 + $0x5b8] sm:$0xff] %v569
        %1507 = vst [vmem:[#allocation2 + $0x5c0] sm:$0xff] %v622
        %1508 = vst [vmem:[#allocation2 + $0x5c8] sm:$0xff] %v623
        %1509 = vst [vmem:[#allocation2 + $0x5d0] sm:$0xff] %v624
        %1510 = vst [vmem:[#allocation2 + $0x5d8] sm:$0xff] %v625
        %1511 = vst [vmem:[#allocation2 + $0x5e0] sm:$0xff] %v626
        %1512 = vst [vmem:[#allocation2 + $0x5e8] sm:$0xff] %v627
        %1513 = vst [vmem:[#allocation2 + $0x5f0] sm:$0xff] %v628
        %1514 = vst [vmem:[#allocation2 + $0x5f8] sm:$0xff] %v621
        %1515 = vst [vmem:[#allocation2 + $0x600] sm:$0xff] %v674
        %1516 = vst [vmem:[#allocation2 + $0x608] sm:$0xff] %v675
        %1517 = vst [vmem:[#allocation2 + $0x610] sm:$0xff] %v676
        %1518 = vst [vmem:[#allocation2 + $0x618] sm:$0xff] %v677
        %1519 = vst [vmem:[#allocation2 + $0x620] sm:$0xff] %v678
        %1520 = vst [vmem:[#allocation2 + $0x628] sm:$0xff] %v679
        %1521 = vst [vmem:[#allocation2 + $0x630] sm:$0xff] %v680
        %1522 = vst [vmem:[#allocation2 + $0x638] sm:$0xff] %v673
        %v1523 = vld [vmem:[%s1] sm:$0xff]
        %v1524 = vld [vmem:[#allocation2] sm:$0xff]
        %v1525 = vld [vmem:[#allocation2 + $0x8] sm:$0xff]
        %v1526 = vld [vmem:[#allocation2 + $0x10] sm:$0xff]
        %v1527 = vld [vmem:[#allocation2 + $0x18] sm:$0xff]
        %v1528 = vld [vmem:[#allocation2 + $0x20] sm:$0xff]
        %v1529 = vld [vmem:[#allocation2 + $0x28] sm:$0xff]
        %v1530 = vld [vmem:[#allocation2 + $0x30] sm:$0xff]
        %v1531 = vld [vmem:[#allocation2 + $0x38] sm:$0xff]
        %v1532 = vld [vmem:[#allocation2 + $0x40] sm:$0xff]
        %v1533 = vld [vmem:[#allocation2 + $0x48] sm:$0xff]
        %v1534 = vld [vmem:[#allocation2 + $0x50] sm:$0xff]
        %v1535 = vld [vmem:[#allocation2 + $0x58] sm:$0xff]
        %v1536 = vld [vmem:[#allocation2 + $0x60] sm:$0xff]
        %v1537 = vld [vmem:[#allocation2 + $0x68] sm:$0xff]
        %v1538 = vld [vmem:[#allocation2 + $0x70] sm:$0xff]
        %v1539 = vld [vmem:[#allocation2 + $0x78] sm:$0xff]
        %v1540 = vld [vmem:[#allocation2 + $0x80] sm:$0xff]
        %v1541 = vld [vmem:[#allocation2 + $0x88] sm:$0xff]
        %v1542 = vld [vmem:[#allocation2 + $0x90] sm:$0xff]
        %v1543 = vld [vmem:[#allocation2 + $0x98] sm:$0xff]
        %v1544 = vld [vmem:[#allocation2 + $0xa0] sm:$0xff]
        %v1545 = vld [vmem:[#allocation2 + $0xa8] sm:$0xff]
        %v1546 = vld [vmem:[#allocation2 + $0xb0] sm:$0xff]
        %v1547 = vld [vmem:[#allocation2 + $0xb8] sm:$0xff]
        %v1548 = vld [vmem:[#allocation2 + $0xc0] sm:$0xff]
        %v1549 = vld [vmem:[#allocation2 + $0xc8] sm:$0xff]
        %v1550 = vld [vmem:[#allocation2 + $0xd0] sm:$0xff]
        %v1551 = vld [vmem:[#allocation2 + $0xd8] sm:$0xff]
        %v1552 = vld [vmem:[#allocation2 + $0xe0] sm:$0xff]
        %v1553 = vld [vmem:[#allocation2 + $0xe8] sm:$0xff]
        %v1554 = vld [vmem:[#allocation2 + $0xf0] sm:$0xff]
        %v1555 = vld [vmem:[#allocation2 + $0xf8] sm:$0xff]
        %v1556 = vld [vmem:[#allocation2 + $0x100] sm:$0xff]
        %v1557 = vld [vmem:[#allocation2 + $0x108] sm:$0xff]
        %v1558 = vld [vmem:[#allocation2 + $0x110] sm:$0xff]
        %v1559 = vld [vmem:[#allocation2 + $0x118] sm:$0xff]
        %v1560 = vld [vmem:[#allocation2 + $0x120] sm:$0xff]
        %v1561 = vld [vmem:[#allocation2 + $0x128] sm:$0xff]
        %v1562 = vld [vmem:[#allocation2 + $0x130] sm:$0xff]
        %v1563 = vld [vmem:[#allocation2 + $0x138] sm:$0xff]
        %v1564 = vld [vmem:[#allocation2 + $0x140] sm:$0xff]
        %v1565 = vld [vmem:[#allocation2 + $0x148] sm:$0xff]
        %v1566 = vld [vmem:[#allocation2 + $0x150] sm:$0xff]
        %v1567 = vld [vmem:[#allocation2 + $0x158] sm:$0xff]
        %v1568 = vld [vmem:[#allocation2 + $0x160] sm:$0xff]
        %v1569 = vld [vmem:[#allocation2 + $0x168] sm:$0xff]
        %v1570 = vld [vmem:[#allocation2 + $0x170] sm:$0xff]
        %v1571 = vld [vmem:[#allocation2 + $0x178] sm:$0xff]
        %v1572 = vld [vmem:[#allocation2 + $0x180] sm:$0xff]
        %v1573 = vld [vmem:[#allocation2 + $0x188] sm:$0xff]
        %v1574 = vld [vmem:[#allocation2 + $0x190] sm:$0xff]
        %v1575 = vld [vmem:[#allocation2 + $0x198] sm:$0xff]
        %v1576 = vld [vmem:[#allocation2 + $0x1a0] sm:$0xff]
        %v1577 = vld [vmem:[#allocation2 + $0x1a8] sm:$0xff]
        %v1578 = vld [vmem:[#allocation2 + $0x1b0] sm:$0xff]
        %v1579 = vld [vmem:[#allocation2 + $0x1b8] sm:$0xff]
        %v1580 = vld [vmem:[#allocation2 + $0x1c0] sm:$0xff]
        %v1581 = vld [vmem:[#allocation2 + $0x1c8] sm:$0xff]
        %v1582 = vld [vmem:[#allocation2 + $0x1d0] sm:$0xff]
        %v1583 = vld [vmem:[#allocation2 + $0x1d8] sm:$0xff]
        %v1584 = vld [vmem:[#allocation2 + $0x1e0] sm:$0xff]
        %v1585 = vld [vmem:[#allocation2 + $0x1e8] sm:$0xff]
        %v1586 = vld [vmem:[#allocation2 + $0x1f0] sm:$0xff]
        %v1587 = vld [vmem:[#allocation2 + $0x1f8] sm:$0xff]
        %v1588 = vld [vmem:[#allocation2 + $0x200] sm:$0xff]
        %v1589 = vld [vmem:[#allocation2 + $0x208] sm:$0xff]
        %v1590 = vld [vmem:[#allocation2 + $0x210] sm:$0xff]
        %v1591 = vld [vmem:[#allocation2 + $0x218] sm:$0xff]
        %v1592 = vld [vmem:[#allocation2 + $0x220] sm:$0xff]
        %v1593 = vld [vmem:[#allocation2 + $0x228] sm:$0xff]
        %v1594 = vld [vmem:[#allocation2 + $0x230] sm:$0xff]
        %v1595 = vld [vmem:[#allocation2 + $0x238] sm:$0xff]
        %v1596 = vld [vmem:[#allocation2 + $0x240] sm:$0xff]
        %v1597 = vld [vmem:[#allocation2 + $0x248] sm:$0xff]
        %v1598 = vld [vmem:[#allocation2 + $0x250] sm:$0xff]
        %v1599 = vld [vmem:[#allocation2 + $0x258] sm:$0xff]
        %v1600 = vld [vmem:[#allocation2 + $0x260] sm:$0xff]
        %v1601 = vld [vmem:[#allocation2 + $0x268] sm:$0xff]
        %v1602 = vld [vmem:[#allocation2 + $0x270] sm:$0xff]
        %v1603 = vld [vmem:[#allocation2 + $0x278] sm:$0xff]
        %v1604 = vld [vmem:[#allocation2 + $0x280] sm:$0xff]
        %v1605 = vld [vmem:[#allocation2 + $0x288] sm:$0xff]
        %v1606 = vld [vmem:[#allocation2 + $0x290] sm:$0xff]
        %v1607 = vld [vmem:[#allocation2 + $0x298] sm:$0xff]
        %v1608 = vld [vmem:[#allocation2 + $0x2a0] sm:$0xff]
        %v1609 = vld [vmem:[#allocation2 + $0x2a8] sm:$0xff]
        %v1610 = vld [vmem:[#allocation2 + $0x2b0] sm:$0xff]
        %v1611 = vld [vmem:[#allocation2 + $0x2b8] sm:$0xff]
        %v1612 = vld [vmem:[#allocation2 + $0x2c0] sm:$0xff]
        %v1613 = vld [vmem:[#allocation2 + $0x2c8] sm:$0xff]
        %v1614 = vld [vmem:[#allocation2 + $0x2d0] sm:$0xff]
        %v1615 = vld [vmem:[#allocation2 + $0x2d8] sm:$0xff]
        %v1616 = vld [vmem:[#allocation2 + $0x2e0] sm:$0xff]
        %v1617 = vld [vmem:[#allocation2 + $0x2e8] sm:$0xff]
        %v1618 = vld [vmem:[#allocation2 + $0x2f0] sm:$0xff]
        %v1619 = vld [vmem:[#allocation2 + $0x2f8] sm:$0xff]
        %v1620 = vld [vmem:[#allocation2 + $0x300] sm:$0xff]
        %v1621 = vld [vmem:[#allocation2 + $0x308] sm:$0xff]
        %v1622 = vld [vmem:[#allocation2 + $0x310] sm:$0xff]
        %v1623 = vld [vmem:[#allocation2 + $0x318] sm:$0xff]
        %v1624 = vld [vmem:[#allocation2 + $0x320] sm:$0xff]
        %v1625 = vld [vmem:[#allocation2 + $0x328] sm:$0xff]
        %v1626 = vld [vmem:[#allocation2 + $0x330] sm:$0xff]
        %v1627 = vld [vmem:[#allocation2 + $0x338] sm:$0xff]
        %v1628 = vld [vmem:[#allocation2 + $0x340] sm:$0xff]
        %v1629 = vld [vmem:[#allocation2 + $0x348] sm:$0xff]
        %v1630 = vld [vmem:[#allocation2 + $0x350] sm:$0xff]
        %v1631 = vld [vmem:[#allocation2 + $0x358] sm:$0xff]
        %v1632 = vld [vmem:[#allocation2 + $0x360] sm:$0xff]
        %v1633 = vld [vmem:[#allocation2 + $0x368] sm:$0xff]
        %v1634 = vld [vmem:[#allocation2 + $0x370] sm:$0xff]
        %v1635 = vld [vmem:[#allocation2 + $0x378] sm:$0xff]
        %v1636 = vld [vmem:[#allocation2 + $0x380] sm:$0xff]
        %v1637 = vld [vmem:[#allocation2 + $0x388] sm:$0xff]
        %v1638 = vld [vmem:[#allocation2 + $0x390] sm:$0xff]
        %v1639 = vld [vmem:[#allocation2 + $0x398] sm:$0xff]
        %v1640 = vld [vmem:[#allocation2 + $0x3a0] sm:$0xff]
        %v1641 = vld [vmem:[#allocation2 + $0x3a8] sm:$0xff]
        %v1642 = vld [vmem:[#allocation2 + $0x3b0] sm:$0xff]
        %v1643 = vld [vmem:[#allocation2 + $0x3b8] sm:$0xff]
        %v1644 = vld [vmem:[#allocation2 + $0x3c0] sm:$0xff]
        %v1645 = vld [vmem:[#allocation2 + $0x3c8] sm:$0xff]
        %v1646 = vld [vmem:[#allocation2 + $0x3d0] sm:$0xff]
        %v1647 = vld [vmem:[#allocation2 + $0x3d8] sm:$0xff]
        %v1648 = vld [vmem:[#allocation2 + $0x3e0] sm:$0xff]
        %v1649 = vld [vmem:[#allocation2 + $0x3e8] sm:$0xff]
        %v1650 = vld [vmem:[#allocation2 + $0x3f0] sm:$0xff]
        %v1651 = vld [vmem:[#allocation2 + $0x3f8] sm:$0xff]
        %v1652 = vld [vmem:[#allocation2 + $0x400] sm:$0xff]
        %v1653 = vld [vmem:[#allocation2 + $0x408] sm:$0xff]
        %v1654 = vld [vmem:[#allocation2 + $0x410] sm:$0xff]
        %v1655 = vld [vmem:[#allocation2 + $0x418] sm:$0xff]
        %v1656 = vld [vmem:[#allocation2 + $0x420] sm:$0xff]
        %v1657 = vld [vmem:[#allocation2 + $0x428] sm:$0xff]
        %v1658 = vld [vmem:[#allocation2 + $0x430] sm:$0xff]
        %v1659 = vld [vmem:[#allocation2 + $0x438] sm:$0xff]
        %v1660 = vld [vmem:[#allocation2 + $0x440] sm:$0xff]
        %v1661 = vld [vmem:[#allocation2 + $0x448] sm:$0xff]
        %v1662 = vld [vmem:[#allocation2 + $0x450] sm:$0xff]
        %v1663 = vld [vmem:[#allocation2 + $0x458] sm:$0xff]
        %v1664 = vld [vmem:[#allocation2 + $0x460] sm:$0xff]
        %v1665 = vld [vmem:[#allocation2 + $0x468] sm:$0xff]
        %v1666 = vld [vmem:[#allocation2 + $0x470] sm:$0xff]
        %v1667 = vld [vmem:[#allocation2 + $0x478] sm:$0xff]
        %v1668 = vld [vmem:[#allocation2 + $0x480] sm:$0xff]
        %v1669 = vld [vmem:[#allocation2 + $0x488] sm:$0xff]
        %v1670 = vld [vmem:[#allocation2 + $0x490] sm:$0xff]
        %v1671 = vld [vmem:[#allocation2 + $0x498] sm:$0xff]
        %v1672 = vld [vmem:[#allocation2 + $0x4a0] sm:$0xff]
        %v1673 = vld [vmem:[#allocation2 + $0x4a8] sm:$0xff]
        %v1674 = vld [vmem:[#allocation2 + $0x4b0] sm:$0xff]
        %v1675 = vld [vmem:[#allocation2 + $0x4b8] sm:$0xff]
        %v1676 = vld [vmem:[#allocation2 + $0x4c0] sm:$0xff]
        %v1677 = vld [vmem:[#allocation2 + $0x4c8] sm:$0xff]
        %v1678 = vld [vmem:[#allocation2 + $0x4d0] sm:$0xff]
        %v1679 = vld [vmem:[#allocation2 + $0x4d8] sm:$0xff]
        %v1680 = vld [vmem:[#allocation2 + $0x4e0] sm:$0xff]
        %v1681 = vld [vmem:[#allocation2 + $0x4e8] sm:$0xff]
        %v1682 = vld [vmem:[#allocation2 + $0x4f0] sm:$0xff]
        %v1683 = vld [vmem:[#allocation2 + $0x4f8] sm:$0xff]
        %v1684 = vld [vmem:[#allocation2 + $0x500] sm:$0xff]
        %v1685 = vld [vmem:[#allocation2 + $0x508] sm:$0xff]
        %v1686 = vld [vmem:[#allocation2 + $0x510] sm:$0xff]
        %v1687 = vld [vmem:[#allocation2 + $0x518] sm:$0xff]
        %v1688 = vld [vmem:[#allocation2 + $0x520] sm:$0xff]
        %v1689 = vld [vmem:[#allocation2 + $0x528] sm:$0xff]
        %v1690 = vld [vmem:[#allocation2 + $0x530] sm:$0xff]
        %v1691 = vld [vmem:[#allocation2 + $0x538] sm:$0xff]
        %v1692 = vld [vmem:[#allocation2 + $0x540] sm:$0xff]
        %v1693 = vld [vmem:[#allocation2 + $0x548] sm:$0xff]
        %v1694 = vld [vmem:[#allocation2 + $0x550] sm:$0xff]
        %v1695 = vld [vmem:[#allocation2 + $0x558] sm:$0xff]
        %v1696 = vld [vmem:[#allocation2 + $0x560] sm:$0xff]
        %v1697 = vld [vmem:[#allocation2 + $0x568] sm:$0xff]
        %v1698 = vld [vmem:[#allocation2 + $0x570] sm:$0xff]
        %v1699 = vld [vmem:[#allocation2 + $0x578] sm:$0xff]
        %v1700 = vld [vmem:[#allocation2 + $0x580] sm:$0xff]
        %v1701 = vld [vmem:[#allocation2 + $0x588] sm:$0xff]
        %v1702 = vld [vmem:[#allocation2 + $0x590] sm:$0xff]
        %v1703 = vld [vmem:[#allocation2 + $0x598] sm:$0xff]
        %v1704 = vld [vmem:[#allocation2 + $0x5a0] sm:$0xff]
        %v1705 = vld [vmem:[#allocation2 + $0x5a8] sm:$0xff]
        %v1706 = vld [vmem:[#allocation2 + $0x5b0] sm:$0xff]
        %v1707 = vld [vmem:[#allocation2 + $0x5b8] sm:$0xff]
        %v1708 = vld [vmem:[#allocation2 + $0x5c0] sm:$0xff]
        %v1709 = vld [vmem:[#allocation2 + $0x5c8] sm:$0xff]
        %v1710 = vld [vmem:[#allocation2 + $0x5d0] sm:$0xff]
        %v1711 = vld [vmem:[#allocation2 + $0x5d8] sm:$0xff]
        %v1712 = vld [vmem:[#allocation2 + $0x5e0] sm:$0xff]
        %v1713 = vld [vmem:[#allocation2 + $0x5e8] sm:$0xff]
        %v1714 = vld [vmem:[#allocation2 + $0x5f0] sm:$0xff]
        %v1715 = vld [vmem:[#allocation2 + $0x5f8] sm:$0xff]
        %v1716 = vld [vmem:[#allocation2 + $0x600] sm:$0xff]
        %v1717 = vld [vmem:[#allocation2 + $0x608] sm:$0xff]
        %v1718 = vld [vmem:[#allocation2 + $0x610] sm:$0xff]
        %v1719 = vld [vmem:[#allocation2 + $0x618] sm:$0xff]
        %v1720 = vld [vmem:[#allocation2 + $0x620] sm:$0xff]
        %v1721 = vld [vmem:[#allocation2 + $0x628] sm:$0xff]
        %v1722 = vld [vmem:[#allocation2 + $0x630] sm:$0xff]
        %v1723 = vld [vmem:[#allocation2 + $0x638] sm:$0xff]
        %v1724 = vpack.c.bf16 %v1532, %v1524
        %v1725 = vpack.c.bf16 %v1533, %v1525
        %v1726 = vpack.c.bf16 %v1534, %v1526
        %v1727 = vpack.c.bf16 %v1535, %v1527
        %v1728 = vpack.c.bf16 %v1536, %v1528
        %v1729 = vpack.c.bf16 %v1537, %v1529
        %v1730 = vpack.c.bf16 %v1538, %v1530
        %v1731 = vpack.c.bf16 %v1539, %v1531
        %v1732 = vpack.c.bf16 %v1548, %v1540
        %v1733 = vpack.c.bf16 %v1549, %v1541
        %v1734 = vpack.c.bf16 %v1550, %v1542
        %v1735 = vpack.c.bf16 %v1551, %v1543
        %v1736 = vpack.c.bf16 %v1552, %v1544
        %v1737 = vpack.c.bf16 %v1553, %v1545
        %v1738 = vpack.c.bf16 %v1554, %v1546
        %v1739 = vpack.c.bf16 %v1555, %v1547
        %v1740 = vpack.c.bf16 %v1564, %v1556
        %v1741 = vpack.c.bf16 %v1565, %v1557
        %v1742 = vpack.c.bf16 %v1566, %v1558
        %v1743 = vpack.c.bf16 %v1567, %v1559
        %v1744 = vpack.c.bf16 %v1568, %v1560
        %v1745 = vpack.c.bf16 %v1569, %v1561
        %v1746 = vpack.c.bf16 %v1570, %v1562
        %v1747 = vpack.c.bf16 %v1571, %v1563
        %v1748 = vpack.c.bf16 %v1580, %v1572
        %v1749 = vpack.c.bf16 %v1581, %v1573
        %v1750 = vpack.c.bf16 %v1582, %v1574
        %v1751 = vpack.c.bf16 %v1583, %v1575
        %v1752 = vpack.c.bf16 %v1584, %v1576
        %v1753 = vpack.c.bf16 %v1585, %v1577
        %v1754 = vpack.c.bf16 %v1586, %v1578
        %v1755 = vpack.c.bf16 %v1587, %v1579
        %v1756 = vpack.c.bf16 %v1596, %v1588
        %v1757 = vpack.c.bf16 %v1597, %v1589
        %v1758 = vpack.c.bf16 %v1598, %v1590
        %v1759 = vpack.c.bf16 %v1599, %v1591
        %v1760 = vpack.c.bf16 %v1600, %v1592
        %v1761 = vpack.c.bf16 %v1601, %v1593
        %v1762 = vpack.c.bf16 %v1602, %v1594
        %v1763 = vpack.c.bf16 %v1603, %v1595
        %v1764 = vpack.c.bf16 %v1612, %v1604
        %v1765 = vpack.c.bf16 %v1613, %v1605
        %v1766 = vpack.c.bf16 %v1614, %v1606
        %v1767 = vpack.c.bf16 %v1615, %v1607
        %v1768 = vpack.c.bf16 %v1616, %v1608
        %v1769 = vpack.c.bf16 %v1617, %v1609
        %v1770 = vpack.c.bf16 %v1618, %v1610
        %v1771 = vpack.c.bf16 %v1619, %v1611
        %v1772 = vpack.c.bf16 %v1628, %v1620
        %v1773 = vpack.c.bf16 %v1629, %v1621
        %v1774 = vpack.c.bf16 %v1630, %v1622
        %v1775 = vpack.c.bf16 %v1631, %v1623
        %v1776 = vpack.c.bf16 %v1632, %v1624
        %v1777 = vpack.c.bf16 %v1633, %v1625
        %v1778 = vpack.c.bf16 %v1634, %v1626
        %v1779 = vpack.c.bf16 %v1635, %v1627
        %v1780 = vpack.c.bf16 %v1644, %v1636
        %v1781 = vpack.c.bf16 %v1645, %v1637
        %v1782 = vpack.c.bf16 %v1646, %v1638
        %v1783 = vpack.c.bf16 %v1647, %v1639
        %v1784 = vpack.c.bf16 %v1648, %v1640
        %v1785 = vpack.c.bf16 %v1649, %v1641
        %v1786 = vpack.c.bf16 %v1650, %v1642
        %v1787 = vpack.c.bf16 %v1651, %v1643
        %v1788 = vpack.c.bf16 %v1660, %v1652
        %v1789 = vpack.c.bf16 %v1661, %v1653
        %v1790 = vpack.c.bf16 %v1662, %v1654
        %v1791 = vpack.c.bf16 %v1663, %v1655
        %v1792 = vpack.c.bf16 %v1664, %v1656
        %v1793 = vpack.c.bf16 %v1665, %v1657
        %v1794 = vpack.c.bf16 %v1666, %v1658
        %v1795 = vpack.c.bf16 %v1667, %v1659
        %v1796 = vpack.c.bf16 %v1676, %v1668
        %v1797 = vpack.c.bf16 %v1677, %v1669
        %v1798 = vpack.c.bf16 %v1678, %v1670
        %v1799 = vpack.c.bf16 %v1679, %v1671
        %v1800 = vpack.c.bf16 %v1680, %v1672
        %v1801 = vpack.c.bf16 %v1681, %v1673
        %v1802 = vpack.c.bf16 %v1682, %v1674
        %v1803 = vpack.c.bf16 %v1683, %v1675
        %v1804 = vpack.c.bf16 %v1692, %v1684
        %v1805 = vpack.c.bf16 %v1693, %v1685
        %v1806 = vpack.c.bf16 %v1694, %v1686
        %v1807 = vpack.c.bf16 %v1695, %v1687
        %v1808 = vpack.c.bf16 %v1696, %v1688
        %v1809 = vpack.c.bf16 %v1697, %v1689
        %v1810 = vpack.c.bf16 %v1698, %v1690
        %v1811 = vpack.c.bf16 %v1699, %v1691
        %v1812 = vpack.c.bf16 %v1708, %v1700
        %v1813 = vpack.c.bf16 %v1709, %v1701
        %v1814 = vpack.c.bf16 %v1710, %v1702
        %v1815 = vpack.c.bf16 %v1711, %v1703
        %v1816 = vpack.c.bf16 %v1712, %v1704
        %v1817 = vpack.c.bf16 %v1713, %v1705
        %v1818 = vpack.c.bf16 %v1714, %v1706
        %v1819 = vpack.c.bf16 %v1715, %v1707
        %v1820 = vpack.c.bf16 %v1716, %v1716
        %v1821 = vpack.c.bf16 %v1717, %v1717
        %v1822 = vpack.c.bf16 %v1718, %v1718
        %v1823 = vpack.c.bf16 %v1719, %v1719
        %v1824 = vpack.c.bf16 %v1720, %v1720
        %v1825 = vpack.c.bf16 %v1721, %v1721
        %v1826 = vpack.c.bf16 %v1722, %v1722
        %v1827 = vpack.c.bf16 %v1723, %v1723
        %v1828 = vld [vmem:[%s2] sm:$0xff]
        %1830 = vset.pattern.permute.xlu0 0
        %1831 = vperm.xlu0 %1830, %v1828
        %v1832 = vpop.permute.xlu0 %1831
        %v1835 = vunpack.c.l.b16 %v1523
        %v1836 = vunpack.c.h.b16 %v1523
        %v1837 = vpack.c.b16 %v1835, %v1835
        %v1838 = vpack.c.b16 %v1836, %v1836
        %vm1840 = vcmask 588800
        %v1842 = vsel %vm1840, %v1838, 0
        %vm1844 = vcmask 1043456
        %v1846 = vsel %vm1844, %v1820, 0
        %v1849 = vsel %vm1844, %v1821, 0
        %v1852 = vsel %vm1844, %v1822, 0
        %v1855 = vsel %vm1844, %v1823, 0
        %v1858 = vsel %vm1844, %v1824, 0
        %v1861 = vsel %vm1844, %v1825, 0
        %v1864 = vsel %vm1844, %v1826, 0
        %v1867 = vsel %vm1844, %v1827, 0
        %1869 = vmatprep.subr.bf16.mxu0 %v1725
        %1870 = vmatpush1.bf16.msra.mxu0 %v1724
        %1871 = vmatprep.subr.bf16.mxu0 %v1733
        %1872 = vmatpush1.bf16.msra.mxu0 %v1732
        %1873 = vmatprep.subr.bf16.mxu0 %v1741
        %1874 = vmatpush1.bf16.msra.mxu0 %v1740
        %1875 = vmatprep.subr.bf16.mxu0 %v1749
        %1876 = vmatpush1.bf16.msra.mxu0 %v1748
        %1877 = vmatprep.subr.bf16.mxu0 %v1757
        %1878 = vmatpush1.bf16.msra.mxu0 %v1756
        %1879 = vmatprep.subr.bf16.mxu0 %v1765
        %1880 = vmatpush1.bf16.msra.mxu0 %v1764
        %1881 = vmatprep.subr.bf16.mxu0 %v1773
        %1882 = vmatpush1.bf16.msra.mxu0 %v1772
        %1883 = vmatprep.subr.bf16.mxu0 %v1781
        %1884 = vmatpush1.bf16.msra.mxu0 %v1780
        %1885 = vmatprep.subr.bf16.mxu0 %v1789
        %1886 = vmatpush1.bf16.msra.mxu0 %v1788
        %1887 = vmatprep.subr.bf16.mxu0 %v1797
        %1888 = vmatpush1.bf16.msra.mxu0 %v1796
        %1889 = vmatprep.subr.bf16.mxu0 %v1805
        %1890 = vmatpush1.bf16.msra.mxu0 %v1804
        %1891 = vmatprep.subr.bf16.mxu0 %v1813
        %1892 = vmatpush1.bf16.msra.mxu0 %v1812
        %1893 = vmatprep.subr.bf16.mxu0 %v1849
        %1894 = vmatpush1.bf16.msra.mxu0 %v1846
        %1895 = vmatprep.subr.bf16.mxu0 0
        %1896 = vmatpush1.bf16.msra.mxu0 0
        %1897 = vmatprep.subr.bf16.mxu0 0
        %1898 = vmatpush1.bf16.msra.mxu0 0
        %1899 = vmatprep.subr.bf16.mxu0 0
        %1900 = vmatpush1.bf16.msra.mxu0 0
        %1901 = vmatprep.mubr.bf16.mxu0 %v1842
        %1902 = vmatmul.mubr.bf16.gmra.mrb[0].mxu0 %v1837
        %v1903 = vpop.f32.mrb[0].mxu0
        %v1904 = vadd.f32 %v1832, %v1903
        %v1905 = vpop.f32.mrb[0].mxu0
        %v1906 = vadd.f32 %v1832, %v1905
        %v1907 = vpop.f32.mrb[0].mxu0
        %v1908 = vpop.f32.mrb[0].mxu0
        %1909 = vdwg.mxu0
        %1910 = vmatprep.subr.bf16.mxu0 %v1727
        %1911 = vmatpush1.bf16.msra.mxu0 %v1726
        %1912 = vmatprep.subr.bf16.mxu0 %v1735
        %1913 = vmatpush1.bf16.msra.mxu0 %v1734
        %1914 = vmatprep.subr.bf16.mxu0 %v1743
        %1915 = vmatpush1.bf16.msra.mxu0 %v1742
        %1916 = vmatprep.subr.bf16.mxu0 %v1751
        %1917 = vmatpush1.bf16.msra.mxu0 %v1750
        %1918 = vmatprep.subr.bf16.mxu0 %v1759
        %1919 = vmatpush1.bf16.msra.mxu0 %v1758
        %1920 = vmatprep.subr.bf16.mxu0 %v1767
        %1921 = vmatpush1.bf16.msra.mxu0 %v1766
        %1922 = vmatprep.subr.bf16.mxu0 %v1775
        %1923 = vmatpush1.bf16.msra.mxu0 %v1774
        %1924 = vmatprep.subr.bf16.mxu0 %v1783
        %1925 = vmatpush1.bf16.msra.mxu0 %v1782
        %1926 = vmatprep.subr.bf16.mxu0 %v1791
        %1927 = vmatpush1.bf16.msra.mxu0 %v1790
        %1928 = vmatprep.subr.bf16.mxu0 %v1799
        %1929 = vmatpush1.bf16.msra.mxu0 %v1798
        %1930 = vmatprep.subr.bf16.mxu0 %v1807
        %1931 = vmatpush1.bf16.msra.mxu0 %v1806
        %1932 = vmatprep.subr.bf16.mxu0 %v1815
        %1933 = vmatpush1.bf16.msra.mxu0 %v1814
        %1934 = vmatprep.subr.bf16.mxu0 %v1855
        %1935 = vmatpush1.bf16.msra.mxu0 %v1852
        %1936 = vmatprep.subr.bf16.mxu0 0
        %1937 = vmatpush1.bf16.msra.mxu0 0
        %1938 = vmatprep.subr.bf16.mxu0 0
        %1939 = vmatpush1.bf16.msra.mxu0 0
        %1940 = vmatprep.subr.bf16.mxu0 0
        %1941 = vmatpush1.bf16.msra.mxu0 0
        %1942 = vmatprep.mubr.bf16.mxu0 %v1842
        %1943 = vmatmul.mubr.bf16.gmra.mrb[0].mxu0 %v1837
        %v1944 = vpop.f32.mrb[0].mxu0
        %v1945 = vadd.f32 %v1832, %v1944
        %v1946 = vpop.f32.mrb[0].mxu0
        %v1947 = vadd.f32 %v1832, %v1946
        %v1948 = vpop.f32.mrb[0].mxu0
        %v1949 = vpop.f32.mrb[0].mxu0
        %1950 = vdwg.mxu0
        %1951 = vmatprep.subr.bf16.mxu0 %v1729
        %1952 = vmatpush1.bf16.msra.mxu0 %v1728
        %1953 = vmatprep.subr.bf16.mxu0 %v1737
        %1954 = vmatpush1.bf16.msra.mxu0 %v1736
        %1955 = vmatprep.subr.bf16.mxu0 %v1745
        %1956 = vmatpush1.bf16.msra.mxu0 %v1744
        %1957 = vmatprep.subr.bf16.mxu0 %v1753
        %1958 = vmatpush1.bf16.msra.mxu0 %v1752
        %1959 = vmatprep.subr.bf16.mxu0 %v1761
        %1960 = vmatpush1.bf16.msra.mxu0 %v1760
        %1961 = vmatprep.subr.bf16.mxu0 %v1769
        %1962 = vmatpush1.bf16.msra.mxu0 %v1768
        %1963 = vmatprep.subr.bf16.mxu0 %v1777
        %1964 = vmatpush1.bf16.msra.mxu0 %v1776
        %1965 = vmatprep.subr.bf16.mxu0 %v1785
        %1966 = vmatpush1.bf16.msra.mxu0 %v1784
        %1967 = vmatprep.subr.bf16.mxu0 %v1793
        %1968 = vmatpush1.bf16.msra.mxu0 %v1792
        %1969 = vmatprep.subr.bf16.mxu0 %v1801
        %1970 = vmatpush1.bf16.msra.mxu0 %v1800
        %1971 = vmatprep.subr.bf16.mxu0 %v1809
        %1972 = vmatpush1.bf16.msra.mxu0 %v1808
        %1973 = vmatprep.subr.bf16.mxu0 %v1817
        %1974 = vmatpush1.bf16.msra.mxu0 %v1816
        %1975 = vmatprep.subr.bf16.mxu0 %v1861
        %1976 = vmatpush1.bf16.msra.mxu0 %v1858
        %1977 = vmatprep.subr.bf16.mxu0 0
        %1978 = vmatpush1.bf16.msra.mxu0 0
        %1979 = vmatprep.subr.bf16.mxu0 0
        %1980 = vmatpush1.bf16.msra.mxu0 0
        %1981 = vmatprep.subr.bf16.mxu0 0
        %1982 = vmatpush1.bf16.msra.mxu0 0
        %1983 = vmatprep.mubr.bf16.mxu0 %v1842
        %1984 = vmatmul.mubr.bf16.gmra.mrb[0].mxu0 %v1837
        %v1985 = vpop.f32.mrb[0].mxu0
        %v1986 = vadd.f32 %v1832, %v1985
        %v1987 = vpop.f32.mrb[0].mxu0
        %v1988 = vadd.f32 %v1832, %v1987
        %v1989 = vpop.f32.mrb[0].mxu0
        %v1990 = vpop.f32.mrb[0].mxu0
        %1991 = vdwg.mxu0
        %1992 = vmatprep.subr.bf16.mxu0 %v1731
        %1993 = vmatpush1.bf16.msra.mxu0 %v1730
        %1994 = vmatprep.subr.bf16.mxu0 %v1739
        %1995 = vmatpush1.bf16.msra.mxu0 %v1738
        %1996 = vmatprep.subr.bf16.mxu0 %v1747
        %1997 = vmatpush1.bf16.msra.mxu0 %v1746
        %1998 = vmatprep.subr.bf16.mxu0 %v1755
        %1999 = vmatpush1.bf16.msra.mxu0 %v1754
        %2000 = vmatprep.subr.bf16.mxu0 %v1763
        %2001 = vmatpush1.bf16.msra.mxu0 %v1762
        %2002 = vmatprep.subr.bf16.mxu0 %v1771
        %2003 = vmatpush1.bf16.msra.mxu0 %v1770
        %2004 = vmatprep.subr.bf16.mxu0 %v1779
        %2005 = vmatpush1.bf16.msra.mxu0 %v1778
        %2006 = vmatprep.subr.bf16.mxu0 %v1787
        %2007 = vmatpush1.bf16.msra.mxu0 %v1786
        %2008 = vmatprep.subr.bf16.mxu0 %v1795
        %2009 = vmatpush1.bf16.msra.mxu0 %v1794
        %2010 = vmatprep.subr.bf16.mxu0 %v1803
        %2011 = vmatpush1.bf16.msra.mxu0 %v1802
        %2012 = vmatprep.subr.bf16.mxu0 %v1811
        %2013 = vmatpush1.bf16.msra.mxu0 %v1810
        %2014 = vmatprep.subr.bf16.mxu0 %v1819
        %2015 = vmatpush1.bf16.msra.mxu0 %v1818
        %2016 = vmatprep.subr.bf16.mxu0 %v1867
        %2017 = vmatpush1.bf16.msra.mxu0 %v1864
        %2018 = vmatprep.subr.bf16.mxu0 0
        %2019 = vmatpush1.bf16.msra.mxu0 0
        %2020 = vmatprep.subr.bf16.mxu0 0
        %2021 = vmatpush1.bf16.msra.mxu0 0
        %2022 = vmatprep.subr.bf16.mxu0 0
        %2023 = vmatpush1.bf16.msra.mxu0 0
        %2024 = vmatprep.mubr.bf16.mxu0 %v1842
        %2025 = vmatmul.mubr.bf16.gmra.mrb[0].mxu0 %v1837
        %v2026 = vpop.f32.mrb[0].mxu0
        %v2027 = vadd.f32 %v1832, %v2026
        %v2028 = vpop.f32.mrb[0].mxu0
        %v2029 = vadd.f32 %v1832, %v2028
        %v2030 = vpop.f32.mrb[0].mxu0
        %v2031 = vpop.f32.mrb[0].mxu0
        %2032 = vdwg.mxu0
        %v2033 = vmax.f32 %v1904, 0.0
        %v2034 = vmax.f32 %v1906, 0.0
        %v2035 = vmax.f32 %v1945, 0.0
        %v2036 = vmax.f32 %v1947, 0.0
        %v2037 = vmax.f32 %v1986, 0.0
        %v2038 = vmax.f32 %v1988, 0.0
        %v2039 = vmax.f32 %v2027, 0.0
        %v2040 = vmax.f32 %v2029, 0.0
        %2049 = vrot.lane.b32.xlu0 %v2033, 127
        %v2050 = vpop.permute.xlu0 %2049
        %2051 = vrot.lane.b32.xlu0 %v2034, 127
        %v2052 = vpop.permute.xlu0 %2051
        %2053 = vrot.lane.b32.xlu0 %v2035, 127
        %v2054 = vpop.permute.xlu0 %2053
        %2055 = vrot.lane.b32.xlu0 %v2036, 127
        %v2056 = vpop.permute.xlu0 %2055
        %2057 = vrot.lane.b32.xlu0 %v2037, 127
        %v2058 = vpop.permute.xlu0 %2057
        %2059 = vrot.lane.b32.xlu0 %v2038, 127
        %v2060 = vpop.permute.xlu0 %2059
        %2061 = vrot.lane.b32.xlu0 %v2039, 127
        %v2062 = vpop.permute.xlu0 %2061
        %2063 = vrot.lane.b32.xlu0 %v2040, 127
        %v2064 = vpop.permute.xlu0 %2063
        %v2065 = vsel %vm512, %v2050, %v2052
        %v2066 = vsel %vm512, %v2052, %v2054
        %v2067 = vsel %vm512, %v2054, %v2056
        %v2068 = vsel %vm512, %v2056, %v2058
        %v2069 = vsel %vm512, %v2058, %v2060
        %v2070 = vsel %vm512, %v2060, %v2062
        %v2071 = vsel %vm512, %v2062, %v2064
        %v2081 = vsel %vm512, %v2064, %v2050
        %v2082 = vmax.f32 %v2033, %v2065
        %v2083 = vmax.f32 %v2034, %v2066
        %v2084 = vmax.f32 %v2035, %v2067
        %v2085 = vmax.f32 %v2036, %v2068
        %v2086 = vmax.f32 %v2037, %v2069
        %v2087 = vmax.f32 %v2038, %v2070
        %v2088 = vmax.f32 %v2039, %v2071
        %v2089 = vmax.f32 %v2040, %v2081
        %2090 = vrot.lane.b32.xlu0 %v2033, 96
        %v2091 = vpop.permute.xlu0 %2090
        %2092 = vrot.lane.b32.xlu0 %v2034, 96
        %v2093 = vpop.permute.xlu0 %2092
        %2094 = vrot.lane.b32.xlu0 %v2035, 96
        %v2095 = vpop.permute.xlu0 %2094
        %2096 = vrot.lane.b32.xlu0 %v2036, 96
        %v2097 = vpop.permute.xlu0 %2096
        %2098 = vrot.lane.b32.xlu0 %v2037, 96
        %v2099 = vpop.permute.xlu0 %2098
        %2100 = vrot.lane.b32.xlu0 %v2038, 96
        %v2101 = vpop.permute.xlu0 %2100
        %2102 = vrot.lane.b32.xlu0 %v2039, 96
        %v2103 = vpop.permute.xlu0 %2102
        %2104 = vrot.lane.b32.xlu0 %v2040, 96
        %v2105 = vpop.permute.xlu0 %2104
        %v2106 = vsel %vm720, %v2091, %v2093
        %v2107 = vsel %vm720, %v2093, %v2095
        %v2108 = vsel %vm720, %v2095, %v2097
        %v2109 = vsel %vm720, %v2097, %v2099
        %v2110 = vsel %vm720, %v2099, %v2101
        %v2111 = vsel %vm720, %v2101, %v2103
        %v2112 = vsel %vm720, %v2103, %v2105
        %v2122 = vsel %vm720, %v2105, %v2091
        %2123 = vrot.lane.b32.xlu0 %v2033, 95
        %v2124 = vpop.permute.xlu0 %2123
        %2125 = vrot.lane.b32.xlu0 %v2034, 95
        %v2126 = vpop.permute.xlu0 %2125
        %2127 = vrot.lane.b32.xlu0 %v2035, 95
        %v2128 = vpop.permute.xlu0 %2127
        %2129 = vrot.lane.b32.xlu0 %v2036, 95
        %v2130 = vpop.permute.xlu0 %2129
        %2131 = vrot.lane.b32.xlu0 %v2037, 95
        %v2132 = vpop.permute.xlu0 %2131
        %2133 = vrot.lane.b32.xlu0 %v2038, 95
        %v2134 = vpop.permute.xlu0 %2133
        %2135 = vrot.lane.b32.xlu0 %v2039, 95
        %v2136 = vpop.permute.xlu0 %2135
        %2137 = vrot.lane.b32.xlu0 %v2040, 95
        %v2138 = vpop.permute.xlu0 %2137
        %v2139 = vsel %vm772, %v2124, %v2126
        %v2140 = vsel %vm772, %v2126, %v2128
        %v2141 = vsel %vm772, %v2128, %v2130
        %v2142 = vsel %vm772, %v2130, %v2132
        %v2143 = vsel %vm772, %v2132, %v2134
        %v2144 = vsel %vm772, %v2134, %v2136
        %v2145 = vsel %vm772, %v2136, %v2138
        %v2155 = vsel %vm772, %v2138, %v2124
        %v2156 = vmax.f32 %v2106, %v2139
        %v2157 = vmax.f32 %v2107, %v2140
        %v2158 = vmax.f32 %v2108, %v2141
        %v2159 = vmax.f32 %v2109, %v2142
        %v2160 = vmax.f32 %v2110, %v2143
        %v2161 = vmax.f32 %v2111, %v2144
        %v2162 = vmax.f32 %v2112, %v2145
        %v2163 = vmax.f32 %v2122, %v2155
        %v2164 = vmax.f32 %v2082, %v2156
        %v2165 = vmax.f32 %v2083, %v2157
        %v2166 = vmax.f32 %v2084, %v2158
        %v2167 = vmax.f32 %v2085, %v2159
        %v2168 = vmax.f32 %v2086, %v2160
        %v2169 = vmax.f32 %v2087, %v2161
        %v2170 = vmax.f32 %v2088, %v2162
        %v2171 = vmax.f32 %v2089, %v2163
        %v2172 = vpack.c.bf16 %v2164, %v2164
        %v2173 = vpack.c.bf16 %v2165, %v2165
        %v2174 = vpack.c.bf16 %v2166, %v2166
        %v2175 = vpack.c.bf16 %v2167, %v2167
        %v2176 = vpack.c.bf16 %v2168, %v2168
        %v2177 = vpack.c.bf16 %v2169, %v2169
        %v2178 = vpack.c.bf16 %v2170, %v2170
        %v2179 = vpack.c.bf16 %v2171, %v2171
        %v2180 = vunpack.c.l.bf16 %v2172
        %v2181 = vunpack.c.l.bf16 %v2173
        %v2182 = vunpack.c.l.bf16 %v2174
        %v2183 = vunpack.c.l.bf16 %v2175
        %v2184 = vunpack.c.l.bf16 %v2176
        %v2185 = vunpack.c.l.bf16 %v2177
        %v2186 = vunpack.c.l.bf16 %v2178
        %v2187 = vunpack.c.l.bf16 %v2179
        %2188 = vst [vmem:[#allocation3] sm:$0xff] %v2180
        %2189 = vst [vmem:[#allocation3 + $0x8] sm:$0xff] %v2181
        %2190 = vst [vmem:[#allocation3 + $0x10] sm:$0xff] %v2182
        %2191 = vst [vmem:[#allocation3 + $0x18] sm:$0xff] %v2183
        %2192 = vst [vmem:[#allocation3 + $0x20] sm:$0xff] %v2184
        %2193 = vst [vmem:[#allocation3 + $0x28] sm:$0xff] %v2185
        %2194 = vst [vmem:[#allocation3 + $0x30] sm:$0xff] %v2186
        %2195 = vst [vmem:[#allocation3 + $0x38] sm:$0xff] %v2187
        %2204 = vrot.lane.b32.xlu0 %v2172, 126
        %v2205 = vpop.permute.xlu0 %2204
        %2206 = vrot.lane.b32.xlu0 %v2173, 126
        %v2207 = vpop.permute.xlu0 %2206
        %2208 = vrot.lane.b32.xlu0 %v2174, 126
        %v2209 = vpop.permute.xlu0 %2208
        %2210 = vrot.lane.b32.xlu0 %v2175, 126
        %v2211 = vpop.permute.xlu0 %2210
        %2212 = vrot.lane.b32.xlu0 %v2176, 126
        %v2213 = vpop.permute.xlu0 %2212
        %2214 = vrot.lane.b32.xlu0 %v2177, 126
        %v2215 = vpop.permute.xlu0 %2214
        %2216 = vrot.lane.b32.xlu0 %v2178, 126
        %v2217 = vpop.permute.xlu0 %2216
        %2218 = vrot.lane.b32.xlu0 %v2179, 126
        %v2219 = vpop.permute.xlu0 %2218
        %v2220 = vsel %vm549, %v2205, %v2207
        %v2221 = vsel %vm549, %v2207, %v2209
        %v2222 = vsel %vm549, %v2209, %v2211
        %v2223 = vsel %vm549, %v2211, %v2213
        %v2224 = vsel %vm549, %v2213, %v2215
        %v2225 = vsel %vm549, %v2215, %v2217
        %v2226 = vsel %vm549, %v2217, %v2219
        %v2236 = vsel %vm564, %v2219, %v2205
        %v2238 = vunpack.c.l.bf16 %v2220
        %v2239 = vunpack.c.l.bf16 %v2221
        %v2240 = vunpack.c.l.bf16 %v2222
        %v2241 = vunpack.c.l.bf16 %v2223
        %v2242 = vunpack.c.l.bf16 %v2224
        %v2243 = vunpack.c.l.bf16 %v2225
        %v2244 = vunpack.c.l.bf16 %v2226
        %v2245 = vunpack.c.l.bf16 %v2236
        %2246 = vst [vmem:[#allocation3 + $0x40] sm:$0xff] %v2238
        %2247 = vst [vmem:[#allocation3 + $0x48] sm:$0xff] %v2239
        %2248 = vst [vmem:[#allocation3 + $0x50] sm:$0xff] %v2240
        %2249 = vst [vmem:[#allocation3 + $0x58] sm:$0xff] %v2241
        %2250 = vst [vmem:[#allocation3 + $0x60] sm:$0xff] %v2242
        %2251 = vst [vmem:[#allocation3 + $0x68] sm:$0xff] %v2243
        %2252 = vst [vmem:[#allocation3 + $0x70] sm:$0xff] %v2244
        %2253 = vst [vmem:[#allocation3 + $0x78] sm:$0xff] %v2245
        %2254 = vrot.lane.b32.xlu0 %v2172, 124
        %v2255 = vpop.permute.xlu0 %2254
        %2256 = vrot.lane.b32.xlu0 %v2173, 124
        %v2257 = vpop.permute.xlu0 %2256
        %2258 = vrot.lane.b32.xlu0 %v2174, 124
        %v2259 = vpop.permute.xlu0 %2258
        %2260 = vrot.lane.b32.xlu0 %v2175, 124
        %v2261 = vpop.permute.xlu0 %2260
        %2262 = vrot.lane.b32.xlu0 %v2176, 124
        %v2263 = vpop.permute.xlu0 %2262
        %2264 = vrot.lane.b32.xlu0 %v2177, 124
        %v2265 = vpop.permute.xlu0 %2264
        %2266 = vrot.lane.b32.xlu0 %v2178, 124
        %v2267 = vpop.permute.xlu0 %2266
        %2268 = vrot.lane.b32.xlu0 %v2179, 124
        %v2269 = vpop.permute.xlu0 %2268
        %v2270 = vsel %vm653, %v2255, %v2257
        %v2271 = vsel %vm653, %v2257, %v2259
        %v2272 = vsel %vm653, %v2259, %v2261
        %v2273 = vsel %vm653, %v2261, %v2263
        %v2274 = vsel %vm653, %v2263, %v2265
        %v2275 = vsel %vm653, %v2265, %v2267
        %v2276 = vsel %vm653, %v2267, %v2269
        %v2286 = vsel %vm668, %v2269, %v2255
        %v2288 = vunpack.c.l.bf16 %v2270
        %v2289 = vunpack.c.l.bf16 %v2271
        %v2290 = vunpack.c.l.bf16 %v2272
        %v2291 = vunpack.c.l.bf16 %v2273
        %v2292 = vunpack.c.l.bf16 %v2274
        %v2293 = vunpack.c.l.bf16 %v2275
        %v2294 = vunpack.c.l.bf16 %v2276
        %v2295 = vunpack.c.l.bf16 %v2286
        %2296 = vst [vmem:[#allocation3 + $0x80] sm:$0xff] %v2288
        %2297 = vst [vmem:[#allocation3 + $0x88] sm:$0xff] %v2289
        %2298 = vst [vmem:[#allocation3 + $0x90] sm:$0xff] %v2290
        %2299 = vst [vmem:[#allocation3 + $0x98] sm:$0xff] %v2291
        %2300 = vst [vmem:[#allocation3 + $0xa0] sm:$0xff] %v2292
        %2301 = vst [vmem:[#allocation3 + $0xa8] sm:$0xff] %v2293
        %2302 = vst [vmem:[#allocation3 + $0xb0] sm:$0xff] %v2294
        %2303 = vst [vmem:[#allocation3 + $0xb8] sm:$0xff] %v2295
        %2304 = vrot.lane.b32.xlu0 %v2172, 122
        %v2305 = vpop.permute.xlu0 %2304
        %2306 = vrot.lane.b32.xlu0 %v2173, 122
        %v2307 = vpop.permute.xlu0 %2306
        %2308 = vrot.lane.b32.xlu0 %v2174, 122
        %v2309 = vpop.permute.xlu0 %2308
        %2310 = vrot.lane.b32.xlu0 %v2175, 122
        %v2311 = vpop.permute.xlu0 %2310
        %2312 = vrot.lane.b32.xlu0 %v2176, 122
        %v2313 = vpop.permute.xlu0 %2312
        %2314 = vrot.lane.b32.xlu0 %v2177, 122
        %v2315 = vpop.permute.xlu0 %2314
        %2316 = vrot.lane.b32.xlu0 %v2178, 122
        %v2317 = vpop.permute.xlu0 %2316
        %2318 = vrot.lane.b32.xlu0 %v2179, 122
        %v2319 = vpop.permute.xlu0 %2318
        %vm2320 = vcmask 998400
        %v2321 = vsel %vm2320, %v2305, %v2307
        %v2322 = vsel %vm2320, %v2307, %v2309
        %v2323 = vsel %vm2320, %v2309, %v2311
        %v2324 = vsel %vm2320, %v2311, %v2313
        %v2325 = vsel %vm2320, %v2313, %v2315
        %v2326 = vsel %vm2320, %v2315, %v2317
        %v2327 = vsel %vm2320, %v2317, %v2319
        %vm2335 = vcmask 998400
        %v2338 = vsel %vm2335, %v2319, %v2305
        %v2340 = vunpack.c.l.bf16 %v2321
        %v2341 = vunpack.c.l.bf16 %v2322
        %v2342 = vunpack.c.l.bf16 %v2323
        %v2343 = vunpack.c.l.bf16 %v2324
        %v2344 = vunpack.c.l.bf16 %v2325
        %v2345 = vunpack.c.l.bf16 %v2326
        %v2346 = vunpack.c.l.bf16 %v2327
        %v2347 = vunpack.c.l.bf16 %v2338
        %2348 = vst [vmem:[#allocation3 + $0xc0] sm:$0xff] %v2340
        %2349 = vst [vmem:[#allocation3 + $0xc8] sm:$0xff] %v2341
        %2350 = vst [vmem:[#allocation3 + $0xd0] sm:$0xff] %v2342
        %2351 = vst [vmem:[#allocation3 + $0xd8] sm:$0xff] %v2343
        %2352 = vst [vmem:[#allocation3 + $0xe0] sm:$0xff] %v2344
        %2353 = vst [vmem:[#allocation3 + $0xe8] sm:$0xff] %v2345
        %2354 = vst [vmem:[#allocation3 + $0xf0] sm:$0xff] %v2346
        %2355 = vst [vmem:[#allocation3 + $0xf8] sm:$0xff] %v2347
        %2356 = vrot.lane.b32.xlu0 %v2172, 120
        %v2357 = vpop.permute.xlu0 %2356
        %2358 = vrot.lane.b32.xlu0 %v2173, 120
        %v2359 = vpop.permute.xlu0 %2358
        %2360 = vrot.lane.b32.xlu0 %v2174, 120
        %v2361 = vpop.permute.xlu0 %2360
        %2362 = vrot.lane.b32.xlu0 %v2175, 120
        %v2363 = vpop.permute.xlu0 %2362
        %2364 = vrot.lane.b32.xlu0 %v2176, 120
        %v2365 = vpop.permute.xlu0 %2364
        %2366 = vrot.lane.b32.xlu0 %v2177, 120
        %v2367 = vpop.permute.xlu0 %2366
        %2368 = vrot.lane.b32.xlu0 %v2178, 120
        %v2369 = vpop.permute.xlu0 %2368
        %2370 = vrot.lane.b32.xlu0 %v2179, 120
        %v2371 = vpop.permute.xlu0 %2370
        %vm2372 = vcmask 982016
        %v2373 = vsel %vm2372, %v2357, %v2359
        %v2374 = vsel %vm2372, %v2359, %v2361
        %v2375 = vsel %vm2372, %v2361, %v2363
        %v2376 = vsel %vm2372, %v2363, %v2365
        %v2377 = vsel %vm2372, %v2365, %v2367
        %v2378 = vsel %vm2372, %v2367, %v2369
        %v2379 = vsel %vm2372, %v2369, %v2371
        %vm2387 = vcmask 982016
        %v2390 = vsel %vm2387, %v2371, %v2357
        %v2392 = vunpack.c.l.bf16 %v2373
        %v2393 = vunpack.c.l.bf16 %v2374
        %v2394 = vunpack.c.l.bf16 %v2375
        %v2395 = vunpack.c.l.bf16 %v2376
        %v2396 = vunpack.c.l.bf16 %v2377
        %v2397 = vunpack.c.l.bf16 %v2378
        %v2398 = vunpack.c.l.bf16 %v2379
        %v2399 = vunpack.c.l.bf16 %v2390
        %2400 = vst [vmem:[#allocation3 + $0x100] sm:$0xff] %v2392
        %2401 = vst [vmem:[#allocation3 + $0x108] sm:$0xff] %v2393
        %2402 = vst [vmem:[#allocation3 + $0x110] sm:$0xff] %v2394
        %2403 = vst [vmem:[#allocation3 + $0x118] sm:$0xff] %v2395
        %2404 = vst [vmem:[#allocation3 + $0x120] sm:$0xff] %v2396
        %2405 = vst [vmem:[#allocation3 + $0x128] sm:$0xff] %v2397
        %2406 = vst [vmem:[#allocation3 + $0x130] sm:$0xff] %v2398
        %2407 = vst [vmem:[#allocation3 + $0x138] sm:$0xff] %v2399
        %2408 = vrot.lane.b32.xlu0 %v2172, 64
        %v2409 = vpop.permute.xlu0 %2408
        %2410 = vrot.lane.b32.xlu0 %v2173, 64
        %v2411 = vpop.permute.xlu0 %2410
        %2412 = vrot.lane.b32.xlu0 %v2174, 64
        %v2413 = vpop.permute.xlu0 %2412
        %2414 = vrot.lane.b32.xlu0 %v2175, 64
        %v2415 = vpop.permute.xlu0 %2414
        %2416 = vrot.lane.b32.xlu0 %v2176, 64
        %v2417 = vpop.permute.xlu0 %2416
        %2418 = vrot.lane.b32.xlu0 %v2177, 64
        %v2419 = vpop.permute.xlu0 %2418
        %2420 = vrot.lane.b32.xlu0 %v2178, 64
        %v2421 = vpop.permute.xlu0 %2420
        %2422 = vrot.lane.b32.xlu0 %v2179, 64
        %v2423 = vpop.permute.xlu0 %2422
        %v2424 = vsel %vm965, %v2409, %v2411
        %v2425 = vsel %vm965, %v2411, %v2413
        %v2426 = vsel %vm965, %v2413, %v2415
        %v2427 = vsel %vm965, %v2415, %v2417
        %v2428 = vsel %vm965, %v2417, %v2419
        %v2429 = vsel %vm965, %v2419, %v2421
        %v2430 = vsel %vm965, %v2421, %v2423
        %v2440 = vsel %vm980, %v2423, %v2409
        %v2442 = vunpack.c.l.bf16 %v2424
        %v2443 = vunpack.c.l.bf16 %v2425
        %v2444 = vunpack.c.l.bf16 %v2426
        %v2445 = vunpack.c.l.bf16 %v2427
        %v2446 = vunpack.c.l.bf16 %v2428
        %v2447 = vunpack.c.l.bf16 %v2429
        %v2448 = vunpack.c.l.bf16 %v2430
        %v2449 = vunpack.c.l.bf16 %v2440
        %2450 = vst [vmem:[#allocation3 + $0x140] sm:$0xff] %v2442
        %2451 = vst [vmem:[#allocation3 + $0x148] sm:$0xff] %v2443
        %2452 = vst [vmem:[#allocation3 + $0x150] sm:$0xff] %v2444
        %2453 = vst [vmem:[#allocation3 + $0x158] sm:$0xff] %v2445
        %2454 = vst [vmem:[#allocation3 + $0x160] sm:$0xff] %v2446
        %2455 = vst [vmem:[#allocation3 + $0x168] sm:$0xff] %v2447
        %2456 = vst [vmem:[#allocation3 + $0x170] sm:$0xff] %v2448
        %2457 = vst [vmem:[#allocation3 + $0x178] sm:$0xff] %v2449
        %2458 = vrot.lane.b32.xlu0 %v2172, 62
        %v2459 = vpop.permute.xlu0 %2458
        %2460 = vrot.lane.b32.xlu0 %v2173, 62
        %v2461 = vpop.permute.xlu0 %2460
        %2462 = vrot.lane.b32.xlu0 %v2174, 62
        %v2463 = vpop.permute.xlu0 %2462
        %2464 = vrot.lane.b32.xlu0 %v2175, 62
        %v2465 = vpop.permute.xlu0 %2464
        %2466 = vrot.lane.b32.xlu0 %v2176, 62
        %v2467 = vpop.permute.xlu0 %2466
        %2468 = vrot.lane.b32.xlu0 %v2177, 62
        %v2469 = vpop.permute.xlu0 %2468
        %2470 = vrot.lane.b32.xlu0 %v2178, 62
        %v2471 = vpop.permute.xlu0 %2470
        %2472 = vrot.lane.b32.xlu0 %v2179, 62
        %v2473 = vpop.permute.xlu0 %2472
        %v2474 = vsel %vm1069, %v2459, %v2461
        %v2475 = vsel %vm1069, %v2461, %v2463
        %v2476 = vsel %vm1069, %v2463, %v2465
        %v2477 = vsel %vm1069, %v2465, %v2467
        %v2478 = vsel %vm1069, %v2467, %v2469
        %v2479 = vsel %vm1069, %v2469, %v2471
        %v2480 = vsel %vm1069, %v2471, %v2473
        %v2490 = vsel %vm1084, %v2473, %v2459
        %v2492 = vunpack.c.l.bf16 %v2474
        %v2493 = vunpack.c.l.bf16 %v2475
        %v2494 = vunpack.c.l.bf16 %v2476
        %v2495 = vunpack.c.l.bf16 %v2477
        %v2496 = vunpack.c.l.bf16 %v2478
        %v2497 = vunpack.c.l.bf16 %v2479
        %v2498 = vunpack.c.l.bf16 %v2480
        %v2499 = vunpack.c.l.bf16 %v2490
        %2500 = vst [vmem:[#allocation3 + $0x180] sm:$0xff] %v2492
        %2501 = vst [vmem:[#allocation3 + $0x188] sm:$0xff] %v2493
        %2502 = vst [vmem:[#allocation3 + $0x190] sm:$0xff] %v2494
        %2503 = vst [vmem:[#allocation3 + $0x198] sm:$0xff] %v2495
        %2504 = vst [vmem:[#allocation3 + $0x1a0] sm:$0xff] %v2496
        %2505 = vst [vmem:[#allocation3 + $0x1a8] sm:$0xff] %v2497
        %2506 = vst [vmem:[#allocation3 + $0x1b0] sm:$0xff] %v2498
        %2507 = vst [vmem:[#allocation3 + $0x1b8] sm:$0xff] %v2499
        %2508 = vrot.lane.b32.xlu0 %v2172, 60
        %v2509 = vpop.permute.xlu0 %2508
        %2510 = vrot.lane.b32.xlu0 %v2173, 60
        %v2511 = vpop.permute.xlu0 %2510
        %2512 = vrot.lane.b32.xlu0 %v2174, 60
        %v2513 = vpop.permute.xlu0 %2512
        %2514 = vrot.lane.b32.xlu0 %v2175, 60
        %v2515 = vpop.permute.xlu0 %2514
        %2516 = vrot.lane.b32.xlu0 %v2176, 60
        %v2517 = vpop.permute.xlu0 %2516
        %2518 = vrot.lane.b32.xlu0 %v2177, 60
        %v2519 = vpop.permute.xlu0 %2518
        %2520 = vrot.lane.b32.xlu0 %v2178, 60
        %v2521 = vpop.permute.xlu0 %2520
        %2522 = vrot.lane.b32.xlu0 %v2179, 60
        %v2523 = vpop.permute.xlu0 %2522
        %v2524 = vsel %vm1173, %v2509, %v2511
        %v2525 = vsel %vm1173, %v2511, %v2513
        %v2526 = vsel %vm1173, %v2513, %v2515
        %v2527 = vsel %vm1173, %v2515, %v2517
        %v2528 = vsel %vm1173, %v2517, %v2519
        %v2529 = vsel %vm1173, %v2519, %v2521
        %v2530 = vsel %vm1173, %v2521, %v2523
        %v2540 = vsel %vm1188, %v2523, %v2509
        %v2542 = vunpack.c.l.bf16 %v2524
        %v2543 = vunpack.c.l.bf16 %v2525
        %v2544 = vunpack.c.l.bf16 %v2526
        %v2545 = vunpack.c.l.bf16 %v2527
        %v2546 = vunpack.c.l.bf16 %v2528
        %v2547 = vunpack.c.l.bf16 %v2529
        %v2548 = vunpack.c.l.bf16 %v2530
        %v2549 = vunpack.c.l.bf16 %v2540
        %2550 = vst [vmem:[#allocation3 + $0x1c0] sm:$0xff] %v2542
        %2551 = vst [vmem:[#allocation3 + $0x1c8] sm:$0xff] %v2543
        %2552 = vst [vmem:[#allocation3 + $0x1d0] sm:$0xff] %v2544
        %2553 = vst [vmem:[#allocation3 + $0x1d8] sm:$0xff] %v2545
        %2554 = vst [vmem:[#allocation3 + $0x1e0] sm:$0xff] %v2546
        %2555 = vst [vmem:[#allocation3 + $0x1e8] sm:$0xff] %v2547
        %2556 = vst [vmem:[#allocation3 + $0x1f0] sm:$0xff] %v2548
        %2557 = vst [vmem:[#allocation3 + $0x1f8] sm:$0xff] %v2549
        %2558 = vrot.lane.b32.xlu0 %v2172, 58
        %v2559 = vpop.permute.xlu0 %2558
        %2560 = vrot.lane.b32.xlu0 %v2173, 58
        %v2561 = vpop.permute.xlu0 %2560
        %2562 = vrot.lane.b32.xlu0 %v2174, 58
        %v2563 = vpop.permute.xlu0 %2562
        %2564 = vrot.lane.b32.xlu0 %v2175, 58
        %v2565 = vpop.permute.xlu0 %2564
        %2566 = vrot.lane.b32.xlu0 %v2176, 58
        %v2567 = vpop.permute.xlu0 %2566
        %2568 = vrot.lane.b32.xlu0 %v2177, 58
        %v2569 = vpop.permute.xlu0 %2568
        %2570 = vrot.lane.b32.xlu0 %v2178, 58
        %v2571 = vpop.permute.xlu0 %2570
        %2572 = vrot.lane.b32.xlu0 %v2179, 58
        %v2573 = vpop.permute.xlu0 %2572
        %vm2574 = vcmask 474112
        %v2575 = vsel %vm2574, %v2559, %v2561
        %v2576 = vsel %vm2574, %v2561, %v2563
        %v2577 = vsel %vm2574, %v2563, %v2565
        %v2578 = vsel %vm2574, %v2565, %v2567
        %v2579 = vsel %vm2574, %v2567, %v2569
        %v2580 = vsel %vm2574, %v2569, %v2571
        %v2581 = vsel %vm2574, %v2571, %v2573
        %vm2589 = vcmask 474112
        %v2592 = vsel %vm2589, %v2573, %v2559
        %v2594 = vunpack.c.l.bf16 %v2575
        %v2595 = vunpack.c.l.bf16 %v2576
        %v2596 = vunpack.c.l.bf16 %v2577
        %v2597 = vunpack.c.l.bf16 %v2578
        %v2598 = vunpack.c.l.bf16 %v2579
        %v2599 = vunpack.c.l.bf16 %v2580
        %v2600 = vunpack.c.l.bf16 %v2581
        %v2601 = vunpack.c.l.bf16 %v2592
        %2602 = vst [vmem:[#allocation3 + $0x200] sm:$0xff] %v2594
        %2603 = vst [vmem:[#allocation3 + $0x208] sm:$0xff] %v2595
        %2604 = vst [vmem:[#allocation3 + $0x210] sm:$0xff] %v2596
        %2605 = vst [vmem:[#allocation3 + $0x218] sm:$0xff] %v2597
        %2606 = vst [vmem:[#allocation3 + $0x220] sm:$0xff] %v2598
        %2607 = vst [vmem:[#allocation3 + $0x228] sm:$0xff] %v2599
        %2608 = vst [vmem:[#allocation3 + $0x230] sm:$0xff] %v2600
        %2609 = vst [vmem:[#allocation3 + $0x238] sm:$0xff] %v2601
        %2610 = vrot.lane.b32.xlu0 %v2172, 56
        %v2611 = vpop.permute.xlu0 %2610
        %2612 = vrot.lane.b32.xlu0 %v2173, 56
        %v2613 = vpop.permute.xlu0 %2612
        %2614 = vrot.lane.b32.xlu0 %v2174, 56
        %v2615 = vpop.permute.xlu0 %2614
        %2616 = vrot.lane.b32.xlu0 %v2175, 56
        %v2617 = vpop.permute.xlu0 %2616
        %2618 = vrot.lane.b32.xlu0 %v2176, 56
        %v2619 = vpop.permute.xlu0 %2618
        %2620 = vrot.lane.b32.xlu0 %v2177, 56
        %v2621 = vpop.permute.xlu0 %2620
        %2622 = vrot.lane.b32.xlu0 %v2178, 56
        %v2623 = vpop.permute.xlu0 %2622
        %2624 = vrot.lane.b32.xlu0 %v2179, 56
        %v2625 = vpop.permute.xlu0 %2624
        %vm2626 = vcmask 457728
        %v2627 = vsel %vm2626, %v2611, %v2613
        %v2628 = vsel %vm2626, %v2613, %v2615
        %v2629 = vsel %vm2626, %v2615, %v2617
        %v2630 = vsel %vm2626, %v2617, %v2619
        %v2631 = vsel %vm2626, %v2619, %v2621
        %v2632 = vsel %vm2626, %v2621, %v2623
        %v2633 = vsel %vm2626, %v2623, %v2625
        %vm2641 = vcmask 457728
        %v2644 = vsel %vm2641, %v2625, %v2611
        %v2646 = vunpack.c.l.bf16 %v2627
        %v2647 = vunpack.c.l.bf16 %v2628
        %v2648 = vunpack.c.l.bf16 %v2629
        %v2649 = vunpack.c.l.bf16 %v2630
        %v2650 = vunpack.c.l.bf16 %v2631
        %v2651 = vunpack.c.l.bf16 %v2632
        %v2652 = vunpack.c.l.bf16 %v2633
        %v2653 = vunpack.c.l.bf16 %v2644
        %2654 = vst [vmem:[#allocation3 + $0x240] sm:$0xff] %v2646
        %2655 = vst [vmem:[#allocation3 + $0x248] sm:$0xff] %v2647
        %2656 = vst [vmem:[#allocation3 + $0x250] sm:$0xff] %v2648
        %2657 = vst [vmem:[#allocation3 + $0x258] sm:$0xff] %v2649
        %2658 = vst [vmem:[#allocation3 + $0x260] sm:$0xff] %v2650
        %2659 = vst [vmem:[#allocation3 + $0x268] sm:$0xff] %v2651
        %2660 = vst [vmem:[#allocation3 + $0x270] sm:$0xff] %v2652
        %2661 = vst [vmem:[#allocation3 + $0x278] sm:$0xff] %v2653
        %2662 = vst [vmem:[#allocation3 + $0x280] sm:$0xff] %v2181
        %2663 = vst [vmem:[#allocation3 + $0x288] sm:$0xff] %v2182
        %2664 = vst [vmem:[#allocation3 + $0x290] sm:$0xff] %v2183
        %2665 = vst [vmem:[#allocation3 + $0x298] sm:$0xff] %v2184
        %2666 = vst [vmem:[#allocation3 + $0x2a0] sm:$0xff] %v2185
        %2667 = vst [vmem:[#allocation3 + $0x2a8] sm:$0xff] %v2186
        %2668 = vst [vmem:[#allocation3 + $0x2b0] sm:$0xff] %v2187
        %2669 = vst [vmem:[#allocation3 + $0x2b8] sm:$0xff] %v2180
        %2670 = vst [vmem:[#allocation3 + $0x2c0] sm:$0xff] %v2239
        %2671 = vst [vmem:[#allocation3 + $0x2c8] sm:$0xff] %v2240
        %2672 = vst [vmem:[#allocation3 + $0x2d0] sm:$0xff] %v2241
        %2673 = vst [vmem:[#allocation3 + $0x2d8] sm:$0xff] %v2242
        %2674 = vst [vmem:[#allocation3 + $0x2e0] sm:$0xff] %v2243
        %2675 = vst [vmem:[#allocation3 + $0x2e8] sm:$0xff] %v2244
        %2676 = vst [vmem:[#allocation3 + $0x2f0] sm:$0xff] %v2245
        %2677 = vst [vmem:[#allocation3 + $0x2f8] sm:$0xff] %v2238
        %2678 = vst [vmem:[#allocation3 + $0x300] sm:$0xff] %v2289
        %2679 = vst [vmem:[#allocation3 + $0x308] sm:$0xff] %v2290
        %2680 = vst [vmem:[#allocation3 + $0x310] sm:$0xff] %v2291
        %2681 = vst [vmem:[#allocation3 + $0x318] sm:$0xff] %v2292
        %2682 = vst [vmem:[#allocation3 + $0x320] sm:$0xff] %v2293
        %2683 = vst [vmem:[#allocation3 + $0x328] sm:$0xff] %v2294
        %2684 = vst [vmem:[#allocation3 + $0x330] sm:$0xff] %v2295
        %2685 = vst [vmem:[#allocation3 + $0x338] sm:$0xff] %v2288
        %2686 = vst [vmem:[#allocation3 + $0x340] sm:$0xff] %v2341
        %2687 = vst [vmem:[#allocation3 + $0x348] sm:$0xff] %v2342
        %2688 = vst [vmem:[#allocation3 + $0x350] sm:$0xff] %v2343
        %2689 = vst [vmem:[#allocation3 + $0x358] sm:$0xff] %v2344
        %2690 = vst [vmem:[#allocation3 + $0x360] sm:$0xff] %v2345
        %2691 = vst [vmem:[#allocation3 + $0x368] sm:$0xff] %v2346
        %2692 = vst [vmem:[#allocation3 + $0x370] sm:$0xff] %v2347
        %2693 = vst [vmem:[#allocation3 + $0x378] sm:$0xff] %v2340
        %2694 = vst [vmem:[#allocation3 + $0x380] sm:$0xff] %v2393
        %2695 = vst [vmem:[#allocation3 + $0x388] sm:$0xff] %v2394
        %2696 = vst [vmem:[#allocation3 + $0x390] sm:$0xff] %v2395
        %2697 = vst [vmem:[#allocation3 + $0x398] sm:$0xff] %v2396
        %2698 = vst [vmem:[#allocation3 + $0x3a0] sm:$0xff] %v2397
        %2699 = vst [vmem:[#allocation3 + $0x3a8] sm:$0xff] %v2398
        %2700 = vst [vmem:[#allocation3 + $0x3b0] sm:$0xff] %v2399
        %2701 = vst [vmem:[#allocation3 + $0x3b8] sm:$0xff] %v2392
        %2702 = vst [vmem:[#allocation3 + $0x3c0] sm:$0xff] %v2443
        %2703 = vst [vmem:[#allocation3 + $0x3c8] sm:$0xff] %v2444
        %2704 = vst [vmem:[#allocation3 + $0x3d0] sm:$0xff] %v2445
        %2705 = vst [vmem:[#allocation3 + $0x3d8] sm:$0xff] %v2446
        %2706 = vst [vmem:[#allocation3 + $0x3e0] sm:$0xff] %v2447
        %2707 = vst [vmem:[#allocation3 + $0x3e8] sm:$0xff] %v2448
        %2708 = vst [vmem:[#allocation3 + $0x3f0] sm:$0xff] %v2449
        %2709 = vst [vmem:[#allocation3 + $0x3f8] sm:$0xff] %v2442
        %2710 = vst [vmem:[#allocation3 + $0x400] sm:$0xff] %v2493
        %2711 = vst [vmem:[#allocation3 + $0x408] sm:$0xff] %v2494
        %2712 = vst [vmem:[#allocation3 + $0x410] sm:$0xff] %v2495
        %2713 = vst [vmem:[#allocation3 + $0x418] sm:$0xff] %v2496
        %2714 = vst [vmem:[#allocation3 + $0x420] sm:$0xff] %v2497
        %2715 = vst [vmem:[#allocation3 + $0x428] sm:$0xff] %v2498
        %2716 = vst [vmem:[#allocation3 + $0x430] sm:$0xff] %v2499
        %2717 = vst [vmem:[#allocation3 + $0x438] sm:$0xff] %v2492
        %2718 = vst [vmem:[#allocation3 + $0x440] sm:$0xff] %v2543
        %2719 = vst [vmem:[#allocation3 + $0x448] sm:$0xff] %v2544
        %2720 = vst [vmem:[#allocation3 + $0x450] sm:$0xff] %v2545
        %2721 = vst [vmem:[#allocation3 + $0x458] sm:$0xff] %v2546
        %2722 = vst [vmem:[#allocation3 + $0x460] sm:$0xff] %v2547
        %2723 = vst [vmem:[#allocation3 + $0x468] sm:$0xff] %v2548
        %2724 = vst [vmem:[#allocation3 + $0x470] sm:$0xff] %v2549
        %2725 = vst [vmem:[#allocation3 + $0x478] sm:$0xff] %v2542
        %2726 = vst [vmem:[#allocation3 + $0x480] sm:$0xff] %v2595
        %2727 = vst [vmem:[#allocation3 + $0x488] sm:$0xff] %v2596
        %2728 = vst [vmem:[#allocation3 + $0x490] sm:$0xff] %v2597
        %2729 = vst [vmem:[#allocation3 + $0x498] sm:$0xff] %v2598
        %2730 = vst [vmem:[#allocation3 + $0x4a0] sm:$0xff] %v2599
        %2731 = vst [vmem:[#allocation3 + $0x4a8] sm:$0xff] %v2600
        %2732 = vst [vmem:[#allocation3 + $0x4b0] sm:$0xff] %v2601
        %2733 = vst [vmem:[#allocation3 + $0x4b8] sm:$0xff] %v2594
        %2734 = vst [vmem:[#allocation3 + $0x4c0] sm:$0xff] %v2647
        %2735 = vst [vmem:[#allocation3 + $0x4c8] sm:$0xff] %v2648
        %2736 = vst [vmem:[#allocation3 + $0x4d0] sm:$0xff] %v2649
        %2737 = vst [vmem:[#allocation3 + $0x4d8] sm:$0xff] %v2650
        %2738 = vst [vmem:[#allocation3 + $0x4e0] sm:$0xff] %v2651
        %2739 = vst [vmem:[#allocation3 + $0x4e8] sm:$0xff] %v2652
        %2740 = vst [vmem:[#allocation3 + $0x4f0] sm:$0xff] %v2653
        %2741 = vst [vmem:[#allocation3 + $0x4f8] sm:$0xff] %v2646
        %2742 = vst [vmem:[#allocation3 + $0x500] sm:$0xff] %v2182
        %2743 = vst [vmem:[#allocation3 + $0x508] sm:$0xff] %v2183
        %2744 = vst [vmem:[#allocation3 + $0x510] sm:$0xff] %v2184
        %2745 = vst [vmem:[#allocation3 + $0x518] sm:$0xff] %v2185
        %2746 = vst [vmem:[#allocation3 + $0x520] sm:$0xff] %v2186
        %2747 = vst [vmem:[#allocation3 + $0x528] sm:$0xff] %v2187
        %2748 = vst [vmem:[#allocation3 + $0x530] sm:$0xff] %v2180
        %2749 = vst [vmem:[#allocation3 + $0x538] sm:$0xff] %v2181
        %2750 = vst [vmem:[#allocation3 + $0x540] sm:$0xff] %v2240
        %2751 = vst [vmem:[#allocation3 + $0x548] sm:$0xff] %v2241
        %2752 = vst [vmem:[#allocation3 + $0x550] sm:$0xff] %v2242
        %2753 = vst [vmem:[#allocation3 + $0x558] sm:$0xff] %v2243
        %2754 = vst [vmem:[#allocation3 + $0x560] sm:$0xff] %v2244
        %2755 = vst [vmem:[#allocation3 + $0x568] sm:$0xff] %v2245
        %2756 = vst [vmem:[#allocation3 + $0x570] sm:$0xff] %v2238
        %2757 = vst [vmem:[#allocation3 + $0x578] sm:$0xff] %v2239
        %2758 = vst [vmem:[#allocation3 + $0x580] sm:$0xff] %v2290
        %2759 = vst [vmem:[#allocation3 + $0x588] sm:$0xff] %v2291
        %2760 = vst [vmem:[#allocation3 + $0x590] sm:$0xff] %v2292
        %2761 = vst [vmem:[#allocation3 + $0x598] sm:$0xff] %v2293
        %2762 = vst [vmem:[#allocation3 + $0x5a0] sm:$0xff] %v2294
        %2763 = vst [vmem:[#allocation3 + $0x5a8] sm:$0xff] %v2295
        %2764 = vst [vmem:[#allocation3 + $0x5b0] sm:$0xff] %v2288
        %2765 = vst [vmem:[#allocation3 + $0x5b8] sm:$0xff] %v2289
        %2766 = vst [vmem:[#allocation3 + $0x5c0] sm:$0xff] %v2342
        %2767 = vst [vmem:[#allocation3 + $0x5c8] sm:$0xff] %v2343
        %2768 = vst [vmem:[#allocation3 + $0x5d0] sm:$0xff] %v2344
        %2769 = vst [vmem:[#allocation3 + $0x5d8] sm:$0xff] %v2345
        %2770 = vst [vmem:[#allocation3 + $0x5e0] sm:$0xff] %v2346
        %2771 = vst [vmem:[#allocation3 + $0x5e8] sm:$0xff] %v2347
        %2772 = vst [vmem:[#allocation3 + $0x5f0] sm:$0xff] %v2340
        %2773 = vst [vmem:[#allocation3 + $0x5f8] sm:$0xff] %v2341
        %2774 = vst [vmem:[#allocation3 + $0x600] sm:$0xff] %v2394
        %2775 = vst [vmem:[#allocation3 + $0x608] sm:$0xff] %v2395
        %2776 = vst [vmem:[#allocation3 + $0x610] sm:$0xff] %v2396
        %2777 = vst [vmem:[#allocation3 + $0x618] sm:$0xff] %v2397
        %2778 = vst [vmem:[#allocation3 + $0x620] sm:$0xff] %v2398
        %2779 = vst [vmem:[#allocation3 + $0x628] sm:$0xff] %v2399
        %2780 = vst [vmem:[#allocation3 + $0x630] sm:$0xff] %v2392
        %2781 = vst [vmem:[#allocation3 + $0x638] sm:$0xff] %v2393
        %v2782 = vld [vmem:[%s3] sm:$0xff]
        %v2783 = vld [vmem:[%s3 + $0x8] sm:$0xff]
        %v2784 = vld [vmem:[#allocation3] sm:$0xff]
        %v2785 = vld [vmem:[#allocation3 + $0x8] sm:$0xff]
        %v2786 = vld [vmem:[#allocation3 + $0x10] sm:$0xff]
        %v2787 = vld [vmem:[#allocation3 + $0x18] sm:$0xff]
        %v2788 = vld [vmem:[#allocation3 + $0x20] sm:$0xff]
        %v2789 = vld [vmem:[#allocation3 + $0x28] sm:$0xff]
        %v2790 = vld [vmem:[#allocation3 + $0x30] sm:$0xff]
        %v2791 = vld [vmem:[#allocation3 + $0x38] sm:$0xff]
        %v2792 = vld [vmem:[#allocation3 + $0x40] sm:$0xff]
        %v2793 = vld [vmem:[#allocation3 + $0x48] sm:$0xff]
        %v2794 = vld [vmem:[#allocation3 + $0x50] sm:$0xff]
        %v2795 = vld [vmem:[#allocation3 + $0x58] sm:$0xff]
        %v2796 = vld [vmem:[#allocation3 + $0x60] sm:$0xff]
        %v2797 = vld [vmem:[#allocation3 + $0x68] sm:$0xff]
        %v2798 = vld [vmem:[#allocation3 + $0x70] sm:$0xff]
        %v2799 = vld [vmem:[#allocation3 + $0x78] sm:$0xff]
        %v2800 = vld [vmem:[#allocation3 + $0x80] sm:$0xff]
        %v2801 = vld [vmem:[#allocation3 + $0x88] sm:$0xff]
        %v2802 = vld [vmem:[#allocation3 + $0x90] sm:$0xff]
        %v2803 = vld [vmem:[#allocation3 + $0x98] sm:$0xff]
        %v2804 = vld [vmem:[#allocation3 + $0xa0] sm:$0xff]
        %v2805 = vld [vmem:[#allocation3 + $0xa8] sm:$0xff]
        %v2806 = vld [vmem:[#allocation3 + $0xb0] sm:$0xff]
        %v2807 = vld [vmem:[#allocation3 + $0xb8] sm:$0xff]
        %v2808 = vld [vmem:[#allocation3 + $0xc0] sm:$0xff]
        %v2809 = vld [vmem:[#allocation3 + $0xc8] sm:$0xff]
        %v2810 = vld [vmem:[#allocation3 + $0xd0] sm:$0xff]
        %v2811 = vld [vmem:[#allocation3 + $0xd8] sm:$0xff]
        %v2812 = vld [vmem:[#allocation3 + $0xe0] sm:$0xff]
        %v2813 = vld [vmem:[#allocation3 + $0xe8] sm:$0xff]
        %v2814 = vld [vmem:[#allocation3 + $0xf0] sm:$0xff]
        %v2815 = vld [vmem:[#allocation3 + $0xf8] sm:$0xff]
        %v2816 = vld [vmem:[#allocation3 + $0x100] sm:$0xff]
        %v2817 = vld [vmem:[#allocation3 + $0x108] sm:$0xff]
        %v2818 = vld [vmem:[#allocation3 + $0x110] sm:$0xff]
        %v2819 = vld [vmem:[#allocation3 + $0x118] sm:$0xff]
        %v2820 = vld [vmem:[#allocation3 + $0x120] sm:$0xff]
        %v2821 = vld [vmem:[#allocation3 + $0x128] sm:$0xff]
        %v2822 = vld [vmem:[#allocation3 + $0x130] sm:$0xff]
        %v2823 = vld [vmem:[#allocation3 + $0x138] sm:$0xff]
        %v2824 = vld [vmem:[#allocation3 + $0x140] sm:$0xff]
        %v2825 = vld [vmem:[#allocation3 + $0x148] sm:$0xff]
        %v2826 = vld [vmem:[#allocation3 + $0x150] sm:$0xff]
        %v2827 = vld [vmem:[#allocation3 + $0x158] sm:$0xff]
        %v2828 = vld [vmem:[#allocation3 + $0x160] sm:$0xff]
        %v2829 = vld [vmem:[#allocation3 + $0x168] sm:$0xff]
        %v2830 = vld [vmem:[#allocation3 + $0x170] sm:$0xff]
        %v2831 = vld [vmem:[#allocation3 + $0x178] sm:$0xff]
        %v2832 = vld [vmem:[#allocation3 + $0x180] sm:$0xff]
        %v2833 = vld [vmem:[#allocation3 + $0x188] sm:$0xff]
        %v2834 = vld [vmem:[#allocation3 + $0x190] sm:$0xff]
        %v2835 = vld [vmem:[#allocation3 + $0x198] sm:$0xff]
        %v2836 = vld [vmem:[#allocation3 + $0x1a0] sm:$0xff]
        %v2837 = vld [vmem:[#allocation3 + $0x1a8] sm:$0xff]
        %v2838 = vld [vmem:[#allocation3 + $0x1b0] sm:$0xff]
        %v2839 = vld [vmem:[#allocation3 + $0x1b8] sm:$0xff]
        %v2840 = vld [vmem:[#allocation3 + $0x1c0] sm:$0xff]
        %v2841 = vld [vmem:[#allocation3 + $0x1c8] sm:$0xff]
        %v2842 = vld [vmem:[#allocation3 + $0x1d0] sm:$0xff]
        %v2843 = vld [vmem:[#allocation3 + $0x1d8] sm:$0xff]
        %v2844 = vld [vmem:[#allocation3 + $0x1e0] sm:$0xff]
        %v2845 = vld [vmem:[#allocation3 + $0x1e8] sm:$0xff]
        %v2846 = vld [vmem:[#allocation3 + $0x1f0] sm:$0xff]
        %v2847 = vld [vmem:[#allocation3 + $0x1f8] sm:$0xff]
        %v2848 = vld [vmem:[#allocation3 + $0x200] sm:$0xff]
        %v2849 = vld [vmem:[#allocation3 + $0x208] sm:$0xff]
        %v2850 = vld [vmem:[#allocation3 + $0x210] sm:$0xff]
        %v2851 = vld [vmem:[#allocation3 + $0x218] sm:$0xff]
        %v2852 = vld [vmem:[#allocation3 + $0x220] sm:$0xff]
        %v2853 = vld [vmem:[#allocation3 + $0x228] sm:$0xff]
        %v2854 = vld [vmem:[#allocation3 + $0x230] sm:$0xff]
        %v2855 = vld [vmem:[#allocation3 + $0x238] sm:$0xff]
        %v2856 = vld [vmem:[#allocation3 + $0x240] sm:$0xff]
        %v2857 = vld [vmem:[#allocation3 + $0x248] sm:$0xff]
        %v2858 = vld [vmem:[#allocation3 + $0x250] sm:$0xff]
        %v2859 = vld [vmem:[#allocation3 + $0x258] sm:$0xff]
        %v2860 = vld [vmem:[#allocation3 + $0x260] sm:$0xff]
        %v2861 = vld [vmem:[#allocation3 + $0x268] sm:$0xff]
        %v2862 = vld [vmem:[#allocation3 + $0x270] sm:$0xff]
        %v2863 = vld [vmem:[#allocation3 + $0x278] sm:$0xff]
        %v2864 = vld [vmem:[#allocation3 + $0x280] sm:$0xff]
        %v2865 = vld [vmem:[#allocation3 + $0x288] sm:$0xff]
        %v2866 = vld [vmem:[#allocation3 + $0x290] sm:$0xff]
        %v2867 = vld [vmem:[#allocation3 + $0x298] sm:$0xff]
        %v2868 = vld [vmem:[#allocation3 + $0x2a0] sm:$0xff]
        %v2869 = vld [vmem:[#allocation3 + $0x2a8] sm:$0xff]
        %v2870 = vld [vmem:[#allocation3 + $0x2b0] sm:$0xff]
        %v2871 = vld [vmem:[#allocation3 + $0x2b8] sm:$0xff]
        %v2872 = vld [vmem:[#allocation3 + $0x2c0] sm:$0xff]
        %v2873 = vld [vmem:[#allocation3 + $0x2c8] sm:$0xff]
        %v2874 = vld [vmem:[#allocation3 + $0x2d0] sm:$0xff]
        %v2875 = vld [vmem:[#allocation3 + $0x2d8] sm:$0xff]
        %v2876 = vld [vmem:[#allocation3 + $0x2e0] sm:$0xff]
        %v2877 = vld [vmem:[#allocation3 + $0x2e8] sm:$0xff]
        %v2878 = vld [vmem:[#allocation3 + $0x2f0] sm:$0xff]
        %v2879 = vld [vmem:[#allocation3 + $0x2f8] sm:$0xff]
        %v2880 = vld [vmem:[#allocation3 + $0x300] sm:$0xff]
        %v2881 = vld [vmem:[#allocation3 + $0x308] sm:$0xff]
        %v2882 = vld [vmem:[#allocation3 + $0x310] sm:$0xff]
        %v2883 = vld [vmem:[#allocation3 + $0x318] sm:$0xff]
        %v2884 = vld [vmem:[#allocation3 + $0x320] sm:$0xff]
        %v2885 = vld [vmem:[#allocation3 + $0x328] sm:$0xff]
        %v2886 = vld [vmem:[#allocation3 + $0x330] sm:$0xff]
        %v2887 = vld [vmem:[#allocation3 + $0x338] sm:$0xff]
        %v2888 = vld [vmem:[#allocation3 + $0x340] sm:$0xff]
        %v2889 = vld [vmem:[#allocation3 + $0x348] sm:$0xff]
        %v2890 = vld [vmem:[#allocation3 + $0x350] sm:$0xff]
        %v2891 = vld [vmem:[#allocation3 + $0x358] sm:$0xff]
        %v2892 = vld [vmem:[#allocation3 + $0x360] sm:$0xff]
        %v2893 = vld [vmem:[#allocation3 + $0x368] sm:$0xff]
        %v2894 = vld [vmem:[#allocation3 + $0x370] sm:$0xff]
        %v2895 = vld [vmem:[#allocation3 + $0x378] sm:$0xff]
        %v2896 = vld [vmem:[#allocation3 + $0x380] sm:$0xff]
        %v2897 = vld [vmem:[#allocation3 + $0x388] sm:$0xff]
        %v2898 = vld [vmem:[#allocation3 + $0x390] sm:$0xff]
        %v2899 = vld [vmem:[#allocation3 + $0x398] sm:$0xff]
        %v2900 = vld [vmem:[#allocation3 + $0x3a0] sm:$0xff]
        %v2901 = vld [vmem:[#allocation3 + $0x3a8] sm:$0xff]
        %v2902 = vld [vmem:[#allocation3 + $0x3b0] sm:$0xff]
        %v2903 = vld [vmem:[#allocation3 + $0x3b8] sm:$0xff]
        %v2904 = vld [vmem:[#allocation3 + $0x3c0] sm:$0xff]
        %v2905 = vld [vmem:[#allocation3 + $0x3c8] sm:$0xff]
        %v2906 = vld [vmem:[#allocation3 + $0x3d0] sm:$0xff]
        %v2907 = vld [vmem:[#allocation3 + $0x3d8] sm:$0xff]
        %v2908 = vld [vmem:[#allocation3 + $0x3e0] sm:$0xff]
        %v2909 = vld [vmem:[#allocation3 + $0x3e8] sm:$0xff]
        %v2910 = vld [vmem:[#allocation3 + $0x3f0] sm:$0xff]
        %v2911 = vld [vmem:[#allocation3 + $0x3f8] sm:$0xff]
        %v2912 = vld [vmem:[#allocation3 + $0x400] sm:$0xff]
        %v2913 = vld [vmem:[#allocation3 + $0x408] sm:$0xff]
        %v2914 = vld [vmem:[#allocation3 + $0x410] sm:$0xff]
        %v2915 = vld [vmem:[#allocation3 + $0x418] sm:$0xff]
        %v2916 = vld [vmem:[#allocation3 + $0x420] sm:$0xff]
        %v2917 = vld [vmem:[#allocation3 + $0x428] sm:$0xff]
        %v2918 = vld [vmem:[#allocation3 + $0x430] sm:$0xff]
        %v2919 = vld [vmem:[#allocation3 + $0x438] sm:$0xff]
        %v2920 = vld [vmem:[#allocation3 + $0x440] sm:$0xff]
        %v2921 = vld [vmem:[#allocation3 + $0x448] sm:$0xff]
        %v2922 = vld [vmem:[#allocation3 + $0x450] sm:$0xff]
        %v2923 = vld [vmem:[#allocation3 + $0x458] sm:$0xff]
        %v2924 = vld [vmem:[#allocation3 + $0x460] sm:$0xff]
        %v2925 = vld [vmem:[#allocation3 + $0x468] sm:$0xff]
        %v2926 = vld [vmem:[#allocation3 + $0x470] sm:$0xff]
        %v2927 = vld [vmem:[#allocation3 + $0x478] sm:$0xff]
        %v2928 = vld [vmem:[#allocation3 + $0x480] sm:$0xff]
        %v2929 = vld [vmem:[#allocation3 + $0x488] sm:$0xff]
        %v2930 = vld [vmem:[#allocation3 + $0x490] sm:$0xff]
        %v2931 = vld [vmem:[#allocation3 + $0x498] sm:$0xff]
        %v2932 = vld [vmem:[#allocation3 + $0x4a0] sm:$0xff]
        %v2933 = vld [vmem:[#allocation3 + $0x4a8] sm:$0xff]
        %v2934 = vld [vmem:[#allocation3 + $0x4b0] sm:$0xff]
        %v2935 = vld [vmem:[#allocation3 + $0x4b8] sm:$0xff]
        %v2936 = vld [vmem:[#allocation3 + $0x4c0] sm:$0xff]
        %v2937 = vld [vmem:[#allocation3 + $0x4c8] sm:$0xff]
        %v2938 = vld [vmem:[#allocation3 + $0x4d0] sm:$0xff]
        %v2939 = vld [vmem:[#allocation3 + $0x4d8] sm:$0xff]
        %v2940 = vld [vmem:[#allocation3 + $0x4e0] sm:$0xff]
        %v2941 = vld [vmem:[#allocation3 + $0x4e8] sm:$0xff]
        %v2942 = vld [vmem:[#allocation3 + $0x4f0] sm:$0xff]
        %v2943 = vld [vmem:[#allocation3 + $0x4f8] sm:$0xff]
        %v2944 = vld [vmem:[#allocation3 + $0x500] sm:$0xff]
        %v2945 = vld [vmem:[#allocation3 + $0x508] sm:$0xff]
        %v2946 = vld [vmem:[#allocation3 + $0x510] sm:$0xff]
        %v2947 = vld [vmem:[#allocation3 + $0x518] sm:$0xff]
        %v2948 = vld [vmem:[#allocation3 + $0x520] sm:$0xff]
        %v2949 = vld [vmem:[#allocation3 + $0x528] sm:$0xff]
        %v2950 = vld [vmem:[#allocation3 + $0x530] sm:$0xff]
        %v2951 = vld [vmem:[#allocation3 + $0x538] sm:$0xff]
        %v2952 = vld [vmem:[#allocation3 + $0x540] sm:$0xff]
        %v2953 = vld [vmem:[#allocation3 + $0x548] sm:$0xff]
        %v2954 = vld [vmem:[#allocation3 + $0x550] sm:$0xff]
        %v2955 = vld [vmem:[#allocation3 + $0x558] sm:$0xff]
        %v2956 = vld [vmem:[#allocation3 + $0x560] sm:$0xff]
        %v2957 = vld [vmem:[#allocation3 + $0x568] sm:$0xff]
        %v2958 = vld [vmem:[#allocation3 + $0x570] sm:$0xff]
        %v2959 = vld [vmem:[#allocation3 + $0x578] sm:$0xff]
        %v2960 = vld [vmem:[#allocation3 + $0x580] sm:$0xff]
        %v2961 = vld [vmem:[#allocation3 + $0x588] sm:$0xff]
        %v2962 = vld [vmem:[#allocation3 + $0x590] sm:$0xff]
        %v2963 = vld [vmem:[#allocation3 + $0x598] sm:$0xff]
        %v2964 = vld [vmem:[#allocation3 + $0x5a0] sm:$0xff]
        %v2965 = vld [vmem:[#allocation3 + $0x5a8] sm:$0xff]
        %v2966 = vld [vmem:[#allocation3 + $0x5b0] sm:$0xff]
        %v2967 = vld [vmem:[#allocation3 + $0x5b8] sm:$0xff]
        %v2968 = vld [vmem:[#allocation3 + $0x5c0] sm:$0xff]
        %v2969 = vld [vmem:[#allocation3 + $0x5c8] sm:$0xff]
        %v2970 = vld [vmem:[#allocation3 + $0x5d0] sm:$0xff]
        %v2971 = vld [vmem:[#allocation3 + $0x5d8] sm:$0xff]
        %v2972 = vld [vmem:[#allocation3 + $0x5e0] sm:$0xff]
        %v2973 = vld [vmem:[#allocation3 + $0x5e8] sm:$0xff]
        %v2974 = vld [vmem:[#allocation3 + $0x5f0] sm:$0xff]
        %v2975 = vld [vmem:[#allocation3 + $0x5f8] sm:$0xff]
        %v2976 = vld [vmem:[#allocation3 + $0x600] sm:$0xff]
        %v2977 = vld [vmem:[#allocation3 + $0x608] sm:$0xff]
        %v2978 = vld [vmem:[#allocation3 + $0x610] sm:$0xff]
        %v2979 = vld [vmem:[#allocation3 + $0x618] sm:$0xff]
        %v2980 = vld [vmem:[#allocation3 + $0x620] sm:$0xff]
        %v2981 = vld [vmem:[#allocation3 + $0x628] sm:$0xff]
        %v2982 = vld [vmem:[#allocation3 + $0x630] sm:$0xff]
        %v2983 = vld [vmem:[#allocation3 + $0x638] sm:$0xff]
        %v2984 = vpack.c.bf16 %v2792, %v2784
        %v2985 = vpack.c.bf16 %v2793, %v2785
        %v2986 = vpack.c.bf16 %v2794, %v2786
        %v2987 = vpack.c.bf16 %v2795, %v2787
        %v2988 = vpack.c.bf16 %v2796, %v2788
        %v2989 = vpack.c.bf16 %v2797, %v2789
        %v2990 = vpack.c.bf16 %v2798, %v2790
        %v2991 = vpack.c.bf16 %v2799, %v2791
        %v2992 = vpack.c.bf16 %v2808, %v2800
        %v2993 = vpack.c.bf16 %v2809, %v2801
        %v2994 = vpack.c.bf16 %v2810, %v2802
        %v2995 = vpack.c.bf16 %v2811, %v2803
        %v2996 = vpack.c.bf16 %v2812, %v2804
        %v2997 = vpack.c.bf16 %v2813, %v2805
        %v2998 = vpack.c.bf16 %v2814, %v2806
        %v2999 = vpack.c.bf16 %v2815, %v2807
        %v3000 = vpack.c.bf16 %v2824, %v2816
        %v3001 = vpack.c.bf16 %v2825, %v2817
        %v3002 = vpack.c.bf16 %v2826, %v2818
        %v3003 = vpack.c.bf16 %v2827, %v2819
        %v3004 = vpack.c.bf16 %v2828, %v2820
        %v3005 = vpack.c.bf16 %v2829, %v2821
        %v3006 = vpack.c.bf16 %v2830, %v2822
        %v3007 = vpack.c.bf16 %v2831, %v2823
        %v3008 = vpack.c.bf16 %v2840, %v2832
        %v3009 = vpack.c.bf16 %v2841, %v2833
        %v3010 = vpack.c.bf16 %v2842, %v2834
        %v3011 = vpack.c.bf16 %v2843, %v2835
        %v3012 = vpack.c.bf16 %v2844, %v2836
        %v3013 = vpack.c.bf16 %v2845, %v2837
        %v3014 = vpack.c.bf16 %v2846, %v2838
        %v3015 = vpack.c.bf16 %v2847, %v2839
        %v3016 = vpack.c.bf16 %v2856, %v2848
        %v3017 = vpack.c.bf16 %v2857, %v2849
        %v3018 = vpack.c.bf16 %v2858, %v2850
        %v3019 = vpack.c.bf16 %v2859, %v2851
        %v3020 = vpack.c.bf16 %v2860, %v2852
        %v3021 = vpack.c.bf16 %v2861, %v2853
        %v3022 = vpack.c.bf16 %v2862, %v2854
        %v3023 = vpack.c.bf16 %v2863, %v2855
        %v3024 = vpack.c.bf16 %v2872, %v2864
        %v3025 = vpack.c.bf16 %v2873, %v2865
        %v3026 = vpack.c.bf16 %v2874, %v2866
        %v3027 = vpack.c.bf16 %v2875, %v2867
        %v3028 = vpack.c.bf16 %v2876, %v2868
        %v3029 = vpack.c.bf16 %v2877, %v2869
        %v3030 = vpack.c.bf16 %v2878, %v2870
        %v3031 = vpack.c.bf16 %v2879, %v2871
        %v3032 = vpack.c.bf16 %v2888, %v2880
        %v3033 = vpack.c.bf16 %v2889, %v2881
        %v3034 = vpack.c.bf16 %v2890, %v2882
        %v3035 = vpack.c.bf16 %v2891, %v2883
        %v3036 = vpack.c.bf16 %v2892, %v2884
        %v3037 = vpack.c.bf16 %v2893, %v2885
        %v3038 = vpack.c.bf16 %v2894, %v2886
        %v3039 = vpack.c.bf16 %v2895, %v2887
        %v3040 = vpack.c.bf16 %v2904, %v2896
        %v3041 = vpack.c.bf16 %v2905, %v2897
        %v3042 = vpack.c.bf16 %v2906, %v2898
        %v3043 = vpack.c.bf16 %v2907, %v2899
        %v3044 = vpack.c.bf16 %v2908, %v2900
        %v3045 = vpack.c.bf16 %v2909, %v2901
        %v3046 = vpack.c.bf16 %v2910, %v2902
        %v3047 = vpack.c.bf16 %v2911, %v2903
        %v3048 = vpack.c.bf16 %v2920, %v2912
        %v3049 = vpack.c.bf16 %v2921, %v2913
        %v3050 = vpack.c.bf16 %v2922, %v2914
        %v3051 = vpack.c.bf16 %v2923, %v2915
        %v3052 = vpack.c.bf16 %v2924, %v2916
        %v3053 = vpack.c.bf16 %v2925, %v2917
        %v3054 = vpack.c.bf16 %v2926, %v2918
        %v3055 = vpack.c.bf16 %v2927, %v2919
        %v3056 = vpack.c.bf16 %v2936, %v2928
        %v3057 = vpack.c.bf16 %v2937, %v2929
        %v3058 = vpack.c.bf16 %v2938, %v2930
        %v3059 = vpack.c.bf16 %v2939, %v2931
        %v3060 = vpack.c.bf16 %v2940, %v2932
        %v3061 = vpack.c.bf16 %v2941, %v2933
        %v3062 = vpack.c.bf16 %v2942, %v2934
        %v3063 = vpack.c.bf16 %v2943, %v2935
        %v3064 = vpack.c.bf16 %v2952, %v2944
        %v3065 = vpack.c.bf16 %v2953, %v2945
        %v3066 = vpack.c.bf16 %v2954, %v2946
        %v3067 = vpack.c.bf16 %v2955, %v2947
        %v3068 = vpack.c.bf16 %v2956, %v2948
        %v3069 = vpack.c.bf16 %v2957, %v2949
        %v3070 = vpack.c.bf16 %v2958, %v2950
        %v3071 = vpack.c.bf16 %v2959, %v2951
        %v3072 = vpack.c.bf16 %v2968, %v2960
        %v3073 = vpack.c.bf16 %v2969, %v2961
        %v3074 = vpack.c.bf16 %v2970, %v2962
        %v3075 = vpack.c.bf16 %v2971, %v2963
        %v3076 = vpack.c.bf16 %v2972, %v2964
        %v3077 = vpack.c.bf16 %v2973, %v2965
        %v3078 = vpack.c.bf16 %v2974, %v2966
        %v3079 = vpack.c.bf16 %v2975, %v2967
        %v3080 = vpack.c.bf16 %v2976, %v2976
        %v3081 = vpack.c.bf16 %v2977, %v2977
        %v3082 = vpack.c.bf16 %v2978, %v2978
        %v3083 = vpack.c.bf16 %v2979, %v2979
        %v3084 = vpack.c.bf16 %v2980, %v2980
        %v3085 = vpack.c.bf16 %v2981, %v2981
        %v3086 = vpack.c.bf16 %v2982, %v2982
        %v3087 = vpack.c.bf16 %v2983, %v2983
        %v3088 = vld [vmem:[%s4] sm:$0xff]
        %v3089 = vld [vmem:[%s4 + $0x8] sm:$0xff]
        %3091 = vset.pattern.permute.xlu0 0
        %3092 = vperm.xlu0 %3091, %v3088
        %v3093 = vpop.permute.xlu0 %3092
        %3096 = vset.pattern.permute.xlu0 0
        %3097 = vperm.xlu0 %3096, %v3089
        %v3098 = vpop.permute.xlu0 %3097
        %v3102 = vunpack.c.l.b16 %v2782
        %v3103 = vunpack.c.h.b16 %v2782
        %v3104 = vunpack.c.l.b16 %v2783
        %v3105 = vunpack.c.h.b16 %v2783
        %v3106 = vpack.c.b16 %v3104, %v3102
        %v3107 = vpack.c.b16 %v3105, %v3103
        %v3110 = vsel %vm1840, %v3107, 0
        %v3113 = vsel %vm1844, %v3080, 0
        %v3116 = vsel %vm1844, %v3081, 0
        %v3119 = vsel %vm1844, %v3082, 0
        %v3122 = vsel %vm1844, %v3083, 0
        %v3125 = vsel %vm1844, %v3084, 0
        %v3128 = vsel %vm1844, %v3085, 0
        %v3131 = vsel %vm1844, %v3086, 0
        %v3134 = vsel %vm1844, %v3087, 0
        %3136 = vmatprep.subr.bf16.mxu0 %v2985
        %3137 = vmatpush1.bf16.msra.mxu0 %v2984
        %3138 = vmatprep.subr.bf16.mxu0 %v2993
        %3139 = vmatpush1.bf16.msra.mxu0 %v2992
        %3140 = vmatprep.subr.bf16.mxu0 %v3001
        %3141 = vmatpush1.bf16.msra.mxu0 %v3000
        %3142 = vmatprep.subr.bf16.mxu0 %v3009
        %3143 = vmatpush1.bf16.msra.mxu0 %v3008
        %3144 = vmatprep.subr.bf16.mxu0 %v3017
        %3145 = vmatpush1.bf16.msra.mxu0 %v3016
        %3146 = vmatprep.subr.bf16.mxu0 %v3025
        %3147 = vmatpush1.bf16.msra.mxu0 %v3024
        %3148 = vmatprep.subr.bf16.mxu0 %v3033
        %3149 = vmatpush1.bf16.msra.mxu0 %v3032
        %3150 = vmatprep.subr.bf16.mxu0 %v3041
        %3151 = vmatpush1.bf16.msra.mxu0 %v3040
        %3152 = vmatprep.subr.bf16.mxu0 %v3049
        %3153 = vmatpush1.bf16.msra.mxu0 %v3048
        %3154 = vmatprep.subr.bf16.mxu0 %v3057
        %3155 = vmatpush1.bf16.msra.mxu0 %v3056
        %3156 = vmatprep.subr.bf16.mxu0 %v3065
        %3157 = vmatpush1.bf16.msra.mxu0 %v3064
        %3158 = vmatprep.subr.bf16.mxu0 %v3073
        %3159 = vmatpush1.bf16.msra.mxu0 %v3072
        %3160 = vmatprep.subr.bf16.mxu0 %v3116
        %3161 = vmatpush1.bf16.msra.mxu0 %v3113
        %3162 = vmatprep.subr.bf16.mxu0 0
        %3163 = vmatpush1.bf16.msra.mxu0 0
        %3164 = vmatprep.subr.bf16.mxu0 0
        %3165 = vmatpush1.bf16.msra.mxu0 0
        %3166 = vmatprep.subr.bf16.mxu0 0
        %3167 = vmatpush1.bf16.msra.mxu0 0
        %3168 = vmatprep.mubr.bf16.mxu0 %v3110
        %3169 = vmatmul.mubr.bf16.gmra.mrb[0].mxu0 %v3106
        %v3170 = vpop.f32.mrb[0].mxu0
        %v3171 = vadd.f32 %v3093, %v3170
        %v3172 = vpop.f32.mrb[0].mxu0
        %v3173 = vadd.f32 %v3093, %v3172
        %v3174 = vpop.f32.mrb[0].mxu0
        %v3175 = vadd.f32 %v3098, %v3174
        %v3176 = vpop.f32.mrb[0].mxu0
        %v3177 = vadd.f32 %v3098, %v3176
        %3178 = vdwg.mxu0
        %3179 = vmatprep.subr.bf16.mxu0 %v2987
        %3180 = vmatpush1.bf16.msra.mxu0 %v2986
        %3181 = vmatprep.subr.bf16.mxu0 %v2995
        %3182 = vmatpush1.bf16.msra.mxu0 %v2994
        %3183 = vmatprep.subr.bf16.mxu0 %v3003
        %3184 = vmatpush1.bf16.msra.mxu0 %v3002
        %3185 = vmatprep.subr.bf16.mxu0 %v3011
        %3186 = vmatpush1.bf16.msra.mxu0 %v3010
        %3187 = vmatprep.subr.bf16.mxu0 %v3019
        %3188 = vmatpush1.bf16.msra.mxu0 %v3018
        %3189 = vmatprep.subr.bf16.mxu0 %v3027
        %3190 = vmatpush1.bf16.msra.mxu0 %v3026
        %3191 = vmatprep.subr.bf16.mxu0 %v3035
        %3192 = vmatpush1.bf16.msra.mxu0 %v3034
        %3193 = vmatprep.subr.bf16.mxu0 %v3043
        %3194 = vmatpush1.bf16.msra.mxu0 %v3042
        %3195 = vmatprep.subr.bf16.mxu0 %v3051
        %3196 = vmatpush1.bf16.msra.mxu0 %v3050
        %3197 = vmatprep.subr.bf16.mxu0 %v3059
        %3198 = vmatpush1.bf16.msra.mxu0 %v3058
        %3199 = vmatprep.subr.bf16.mxu0 %v3067
        %3200 = vmatpush1.bf16.msra.mxu0 %v3066
        %3201 = vmatprep.subr.bf16.mxu0 %v3075
        %3202 = vmatpush1.bf16.msra.mxu0 %v3074
        %3203 = vmatprep.subr.bf16.mxu0 %v3122
        %3204 = vmatpush1.bf16.msra.mxu0 %v3119
        %3205 = vmatprep.subr.bf16.mxu0 0
        %3206 = vmatpush1.bf16.msra.mxu0 0
        %3207 = vmatprep.subr.bf16.mxu0 0
        %3208 = vmatpush1.bf16.msra.mxu0 0
        %3209 = vmatprep.subr.bf16.mxu0 0
        %3210 = vmatpush1.bf16.msra.mxu0 0
        %3211 = vmatprep.mubr.bf16.mxu0 %v3110
        %3212 = vmatmul.mubr.bf16.gmra.mrb[0].mxu0 %v3106
        %v3213 = vpop.f32.mrb[0].mxu0
        %v3214 = vadd.f32 %v3093, %v3213
        %v3215 = vpop.f32.mrb[0].mxu0
        %v3216 = vadd.f32 %v3093, %v3215
        %v3217 = vpop.f32.mrb[0].mxu0
        %v3218 = vadd.f32 %v3098, %v3217
        %v3219 = vpop.f32.mrb[0].mxu0
        %v3220 = vadd.f32 %v3098, %v3219
        %3221 = vdwg.mxu0
        %3222 = vmatprep.subr.bf16.mxu0 %v2989
        %3223 = vmatpush1.bf16.msra.mxu0 %v2988
        %3224 = vmatprep.subr.bf16.mxu0 %v2997
        %3225 = vmatpush1.bf16.msra.mxu0 %v2996
        %3226 = vmatprep.subr.bf16.mxu0 %v3005
        %3227 = vmatpush1.bf16.msra.mxu0 %v3004
        %3228 = vmatprep.subr.bf16.mxu0 %v3013
        %3229 = vmatpush1.bf16.msra.mxu0 %v3012
        %3230 = vmatprep.subr.bf16.mxu0 %v3021
        %3231 = vmatpush1.bf16.msra.mxu0 %v3020
        %3232 = vmatprep.subr.bf16.mxu0 %v3029
        %3233 = vmatpush1.bf16.msra.mxu0 %v3028
        %3234 = vmatprep.subr.bf16.mxu0 %v3037
        %3235 = vmatpush1.bf16.msra.mxu0 %v3036
        %3236 = vmatprep.subr.bf16.mxu0 %v3045
        %3237 = vmatpush1.bf16.msra.mxu0 %v3044
        %3238 = vmatprep.subr.bf16.mxu0 %v3053
        %3239 = vmatpush1.bf16.msra.mxu0 %v3052
        %3240 = vmatprep.subr.bf16.mxu0 %v3061
        %3241 = vmatpush1.bf16.msra.mxu0 %v3060
        %3242 = vmatprep.subr.bf16.mxu0 %v3069
        %3243 = vmatpush1.bf16.msra.mxu0 %v3068
        %3244 = vmatprep.subr.bf16.mxu0 %v3077
        %3245 = vmatpush1.bf16.msra.mxu0 %v3076
        %3246 = vmatprep.subr.bf16.mxu0 %v3128
        %3247 = vmatpush1.bf16.msra.mxu0 %v3125
        %3248 = vmatprep.subr.bf16.mxu0 0
        %3249 = vmatpush1.bf16.msra.mxu0 0
        %3250 = vmatprep.subr.bf16.mxu0 0
        %3251 = vmatpush1.bf16.msra.mxu0 0
        %3252 = vmatprep.subr.bf16.mxu0 0
        %3253 = vmatpush1.bf16.msra.mxu0 0
        %3254 = vmatprep.mubr.bf16.mxu0 %v3110
        %3255 = vmatmul.mubr.bf16.gmra.mrb[0].mxu0 %v3106
        %v3256 = vpop.f32.mrb[0].mxu0
        %v3257 = vadd.f32 %v3093, %v3256
        %v3258 = vpop.f32.mrb[0].mxu0
        %v3259 = vadd.f32 %v3093, %v3258
        %v3260 = vpop.f32.mrb[0].mxu0
        %v3261 = vadd.f32 %v3098, %v3260
        %v3262 = vpop.f32.mrb[0].mxu0
        %v3263 = vadd.f32 %v3098, %v3262
        %3264 = vdwg.mxu0
        %3265 = vmatprep.subr.bf16.mxu0 %v2991
        %3266 = vmatpush1.bf16.msra.mxu0 %v2990
        %3267 = vmatprep.subr.bf16.mxu0 %v2999
        %3268 = vmatpush1.bf16.msra.mxu0 %v2998
        %3269 = vmatprep.subr.bf16.mxu0 %v3007
        %3270 = vmatpush1.bf16.msra.mxu0 %v3006
        %3271 = vmatprep.subr.bf16.mxu0 %v3015
        %3272 = vmatpush1.bf16.msra.mxu0 %v3014
        %3273 = vmatprep.subr.bf16.mxu0 %v3023
        %3274 = vmatpush1.bf16.msra.mxu0 %v3022
        %3275 = vmatprep.subr.bf16.mxu0 %v3031
        %3276 = vmatpush1.bf16.msra.mxu0 %v3030
        %3277 = vmatprep.subr.bf16.mxu0 %v3039
        %3278 = vmatpush1.bf16.msra.mxu0 %v3038
        %3279 = vmatprep.subr.bf16.mxu0 %v3047
        %3280 = vmatpush1.bf16.msra.mxu0 %v3046
        %3281 = vmatprep.subr.bf16.mxu0 %v3055
        %3282 = vmatpush1.bf16.msra.mxu0 %v3054
        %3283 = vmatprep.subr.bf16.mxu0 %v3063
        %3284 = vmatpush1.bf16.msra.mxu0 %v3062
        %3285 = vmatprep.subr.bf16.mxu0 %v3071
        %3286 = vmatpush1.bf16.msra.mxu0 %v3070
        %3287 = vmatprep.subr.bf16.mxu0 %v3079
        %3288 = vmatpush1.bf16.msra.mxu0 %v3078
        %3289 = vmatprep.subr.bf16.mxu0 %v3134
        %3290 = vmatpush1.bf16.msra.mxu0 %v3131
        %3291 = vmatprep.subr.bf16.mxu0 0
        %3292 = vmatpush1.bf16.msra.mxu0 0
        %3293 = vmatprep.subr.bf16.mxu0 0
        %3294 = vmatpush1.bf16.msra.mxu0 0
        %3295 = vmatprep.subr.bf16.mxu0 0
        %3296 = vmatpush1.bf16.msra.mxu0 0
        %3297 = vmatprep.mubr.bf16.mxu0 %v3110
        %3298 = vmatmul.mubr.bf16.gmra.mrb[0].mxu0 %v3106
        %v3299 = vpop.f32.mrb[0].mxu0
        %v3300 = vadd.f32 %v3093, %v3299
        %v3301 = vpop.f32.mrb[0].mxu0
        %v3302 = vadd.f32 %v3093, %v3301
        %v3303 = vpop.f32.mrb[0].mxu0
        %v3304 = vadd.f32 %v3098, %v3303
        %v3305 = vpop.f32.mrb[0].mxu0
        %v3306 = vadd.f32 %v3098, %v3305
        %3307 = vdwg.mxu0
        %v3308 = vmax.f32 %v3171, 0.0
        %v3309 = vmax.f32 %v3173, 0.0
        %v3310 = vmax.f32 %v3214, 0.0
        %v3311 = vmax.f32 %v3216, 0.0
        %v3312 = vmax.f32 %v3257, 0.0
        %v3313 = vmax.f32 %v3259, 0.0
        %v3314 = vmax.f32 %v3300, 0.0
        %v3315 = vmax.f32 %v3302, 0.0
        %v3316 = vmax.f32 %v3175, 0.0
        %v3317 = vmax.f32 %v3177, 0.0
        %v3318 = vmax.f32 %v3218, 0.0
        %v3319 = vmax.f32 %v3220, 0.0
        %v3320 = vmax.f32 %v3261, 0.0
        %v3321 = vmax.f32 %v3263, 0.0
        %v3322 = vmax.f32 %v3304, 0.0
        %v3323 = vmax.f32 %v3306, 0.0
        %3340 = vrot.lane.b32.xlu0 %v3308, 126
        %v3341 = vpop.permute.xlu0 %3340
        %3342 = vrot.lane.b32.xlu0 %v3309, 126
        %v3343 = vpop.permute.xlu0 %3342
        %3344 = vrot.lane.b32.xlu0 %v3310, 126
        %v3345 = vpop.permute.xlu0 %3344
        %3346 = vrot.lane.b32.xlu0 %v3311, 126
        %v3347 = vpop.permute.xlu0 %3346
        %3348 = vrot.lane.b32.xlu0 %v3312, 126
        %v3349 = vpop.permute.xlu0 %3348
        %3350 = vrot.lane.b32.xlu0 %v3313, 126
        %v3351 = vpop.permute.xlu0 %3350
        %3352 = vrot.lane.b32.xlu0 %v3314, 126
        %v3353 = vpop.permute.xlu0 %3352
        %3354 = vrot.lane.b32.xlu0 %v3315, 126
        %v3355 = vpop.permute.xlu0 %3354
        %3356 = vrot.lane.b32.xlu0 %v3316, 126
        %v3357 = vpop.permute.xlu0 %3356
        %3358 = vrot.lane.b32.xlu0 %v3317, 126
        %v3359 = vpop.permute.xlu0 %3358
        %3360 = vrot.lane.b32.xlu0 %v3318, 126
        %v3361 = vpop.permute.xlu0 %3360
        %3362 = vrot.lane.b32.xlu0 %v3319, 126
        %v3363 = vpop.permute.xlu0 %3362
        %3364 = vrot.lane.b32.xlu0 %v3320, 126
        %v3365 = vpop.permute.xlu0 %3364
        %3366 = vrot.lane.b32.xlu0 %v3321, 126
        %v3367 = vpop.permute.xlu0 %3366
        %3368 = vrot.lane.b32.xlu0 %v3322, 126
        %v3369 = vpop.permute.xlu0 %3368
        %3370 = vrot.lane.b32.xlu0 %v3323, 126
        %v3371 = vpop.permute.xlu0 %3370
        %v3372 = vsel %vm564, %v3341, %v3343
        %v3373 = vsel %vm564, %v3343, %v3345
        %v3374 = vsel %vm564, %v3345, %v3347
        %v3375 = vsel %vm564, %v3347, %v3349
        %v3376 = vsel %vm564, %v3349, %v3351
        %v3377 = vsel %vm564, %v3351, %v3353
        %v3378 = vsel %vm564, %v3353, %v3355
        %v3379 = vsel %vm564, %v3357, %v3359
        %v3380 = vsel %vm564, %v3359, %v3361
        %v3381 = vsel %vm564, %v3361, %v3363
        %v3382 = vsel %vm564, %v3363, %v3365
        %v3383 = vsel %vm564, %v3365, %v3367
        %v3384 = vsel %vm564, %v3367, %v3369
        %v3385 = vsel %vm564, %v3369, %v3371
        %v3404 = vsel %vm564, %v3355, %v3341
        %v3405 = vsel %vm564, %v3371, %v3357
        %v3406 = vmax.f32 %v3308, %v3372
        %v3407 = vmax.f32 %v3309, %v3373
        %v3408 = vmax.f32 %v3310, %v3374
        %v3409 = vmax.f32 %v3311, %v3375
        %v3410 = vmax.f32 %v3312, %v3376
        %v3411 = vmax.f32 %v3313, %v3377
        %v3412 = vmax.f32 %v3314, %v3378
        %v3413 = vmax.f32 %v3315, %v3404
        %v3414 = vmax.f32 %v3316, %v3379
        %v3415 = vmax.f32 %v3317, %v3380
        %v3416 = vmax.f32 %v3318, %v3381
        %v3417 = vmax.f32 %v3319, %v3382
        %v3418 = vmax.f32 %v3320, %v3383
        %v3419 = vmax.f32 %v3321, %v3384
        %v3420 = vmax.f32 %v3322, %v3385
        %v3421 = vmax.f32 %v3323, %v3405
        %3422 = vrot.lane.b32.xlu0 %v3308, 64
        %v3423 = vpop.permute.xlu0 %3422
        %3424 = vrot.lane.b32.xlu0 %v3309, 64
        %v3425 = vpop.permute.xlu0 %3424
        %3426 = vrot.lane.b32.xlu0 %v3310, 64
        %v3427 = vpop.permute.xlu0 %3426
        %3428 = vrot.lane.b32.xlu0 %v3311, 64
        %v3429 = vpop.permute.xlu0 %3428
        %3430 = vrot.lane.b32.xlu0 %v3312, 64
        %v3431 = vpop.permute.xlu0 %3430
        %3432 = vrot.lane.b32.xlu0 %v3313, 64
        %v3433 = vpop.permute.xlu0 %3432
        %3434 = vrot.lane.b32.xlu0 %v3314, 64
        %v3435 = vpop.permute.xlu0 %3434
        %3436 = vrot.lane.b32.xlu0 %v3315, 64
        %v3437 = vpop.permute.xlu0 %3436
        %3438 = vrot.lane.b32.xlu0 %v3316, 64
        %v3439 = vpop.permute.xlu0 %3438
        %3440 = vrot.lane.b32.xlu0 %v3317, 64
        %v3441 = vpop.permute.xlu0 %3440
        %3442 = vrot.lane.b32.xlu0 %v3318, 64
        %v3443 = vpop.permute.xlu0 %3442
        %3444 = vrot.lane.b32.xlu0 %v3319, 64
        %v3445 = vpop.permute.xlu0 %3444
        %3446 = vrot.lane.b32.xlu0 %v3320, 64
        %v3447 = vpop.permute.xlu0 %3446
        %3448 = vrot.lane.b32.xlu0 %v3321, 64
        %v3449 = vpop.permute.xlu0 %3448
        %3450 = vrot.lane.b32.xlu0 %v3322, 64
        %v3451 = vpop.permute.xlu0 %3450
        %3452 = vrot.lane.b32.xlu0 %v3323, 64
        %v3453 = vpop.permute.xlu0 %3452
        %v3454 = vsel %vm980, %v3423, %v3425
        %v3455 = vsel %vm980, %v3425, %v3427
        %v3456 = vsel %vm980, %v3427, %v3429
        %v3457 = vsel %vm980, %v3429, %v3431
        %v3458 = vsel %vm980, %v3431, %v3433
        %v3459 = vsel %vm980, %v3433, %v3435
        %v3460 = vsel %vm980, %v3435, %v3437
        %v3461 = vsel %vm980, %v3439, %v3441
        %v3462 = vsel %vm980, %v3441, %v3443
        %v3463 = vsel %vm980, %v3443, %v3445
        %v3464 = vsel %vm980, %v3445, %v3447
        %v3465 = vsel %vm980, %v3447, %v3449
        %v3466 = vsel %vm980, %v3449, %v3451
        %v3467 = vsel %vm980, %v3451, %v3453
        %v3486 = vsel %vm980, %v3437, %v3423
        %v3487 = vsel %vm980, %v3453, %v3439
        %3488 = vrot.lane.b32.xlu0 %v3308, 62
        %v3489 = vpop.permute.xlu0 %3488
        %3490 = vrot.lane.b32.xlu0 %v3309, 62
        %v3491 = vpop.permute.xlu0 %3490
        %3492 = vrot.lane.b32.xlu0 %v3310, 62
        %v3493 = vpop.permute.xlu0 %3492
        %3494 = vrot.lane.b32.xlu0 %v3311, 62
        %v3495 = vpop.permute.xlu0 %3494
        %3496 = vrot.lane.b32.xlu0 %v3312, 62
        %v3497 = vpop.permute.xlu0 %3496
        %3498 = vrot.lane.b32.xlu0 %v3313, 62
        %v3499 = vpop.permute.xlu0 %3498
        %3500 = vrot.lane.b32.xlu0 %v3314, 62
        %v3501 = vpop.permute.xlu0 %3500
        %3502 = vrot.lane.b32.xlu0 %v3315, 62
        %v3503 = vpop.permute.xlu0 %3502
        %3504 = vrot.lane.b32.xlu0 %v3316, 62
        %v3505 = vpop.permute.xlu0 %3504
        %3506 = vrot.lane.b32.xlu0 %v3317, 62
        %v3507 = vpop.permute.xlu0 %3506
        %3508 = vrot.lane.b32.xlu0 %v3318, 62
        %v3509 = vpop.permute.xlu0 %3508
        %3510 = vrot.lane.b32.xlu0 %v3319, 62
        %v3511 = vpop.permute.xlu0 %3510
        %3512 = vrot.lane.b32.xlu0 %v3320, 62
        %v3513 = vpop.permute.xlu0 %3512
        %3514 = vrot.lane.b32.xlu0 %v3321, 62
        %v3515 = vpop.permute.xlu0 %3514
        %3516 = vrot.lane.b32.xlu0 %v3322, 62
        %v3517 = vpop.permute.xlu0 %3516
        %3518 = vrot.lane.b32.xlu0 %v3323, 62
        %v3519 = vpop.permute.xlu0 %3518
        %v3520 = vsel %vm1084, %v3489, %v3491
        %v3521 = vsel %vm1084, %v3491, %v3493
        %v3522 = vsel %vm1084, %v3493, %v3495
        %v3523 = vsel %vm1084, %v3495, %v3497
        %v3524 = vsel %vm1084, %v3497, %v3499
        %v3525 = vsel %vm1084, %v3499, %v3501
        %v3526 = vsel %vm1084, %v3501, %v3503
        %v3527 = vsel %vm1084, %v3505, %v3507
        %v3528 = vsel %vm1084, %v3507, %v3509
        %v3529 = vsel %vm1084, %v3509, %v3511
        %v3530 = vsel %vm1084, %v3511, %v3513
        %v3531 = vsel %vm1084, %v3513, %v3515
        %v3532 = vsel %vm1084, %v3515, %v3517
        %v3533 = vsel %vm1084, %v3517, %v3519
        %v3552 = vsel %vm1084, %v3503, %v3489
        %v3553 = vsel %vm1084, %v3519, %v3505
        %v3554 = vmax.f32 %v3454, %v3520
        %v3555 = vmax.f32 %v3455, %v3521
        %v3556 = vmax.f32 %v3456, %v3522
        %v3557 = vmax.f32 %v3457, %v3523
        %v3558 = vmax.f32 %v3458, %v3524
        %v3559 = vmax.f32 %v3459, %v3525
        %v3560 = vmax.f32 %v3460, %v3526
        %v3561 = vmax.f32 %v3486, %v3552
        %v3562 = vmax.f32 %v3461, %v3527
        %v3563 = vmax.f32 %v3462, %v3528
        %v3564 = vmax.f32 %v3463, %v3529
        %v3565 = vmax.f32 %v3464, %v3530
        %v3566 = vmax.f32 %v3465, %v3531
        %v3567 = vmax.f32 %v3466, %v3532
        %v3568 = vmax.f32 %v3467, %v3533
        %v3569 = vmax.f32 %v3487, %v3553
        %v3570 = vmax.f32 %v3406, %v3554
        %v3571 = vmax.f32 %v3407, %v3555
        %v3572 = vmax.f32 %v3408, %v3556
        %v3573 = vmax.f32 %v3409, %v3557
        %v3574 = vmax.f32 %v3410, %v3558
        %v3575 = vmax.f32 %v3411, %v3559
        %v3576 = vmax.f32 %v3412, %v3560
        %v3577 = vmax.f32 %v3413, %v3561
        %v3578 = vmax.f32 %v3414, %v3562
        %v3579 = vmax.f32 %v3415, %v3563
        %v3580 = vmax.f32 %v3416, %v3564
        %v3581 = vmax.f32 %v3417, %v3565
        %v3582 = vmax.f32 %v3418, %v3566
        %v3583 = vmax.f32 %v3419, %v3567
        %v3584 = vmax.f32 %v3420, %v3568
        %v3585 = vmax.f32 %v3421, %v3569
        %v3586 = vpack.c.bf16 %v3578, %v3570
        %v3587 = vpack.c.bf16 %v3579, %v3571
        %v3588 = vpack.c.bf16 %v3580, %v3572
        %v3589 = vpack.c.bf16 %v3581, %v3573
        %v3590 = vpack.c.bf16 %v3582, %v3574
        %v3591 = vpack.c.bf16 %v3583, %v3575
        %v3592 = vpack.c.bf16 %v3584, %v3576
        %v3593 = vpack.c.bf16 %v3585, %v3577
        %v3594 = vld [vmem:[%s5] sm:$0xff]
        %v3595 = vld [vmem:[%s5 + $0x8] sm:$0xff]
        %v3596 = vld [vmem:[%s5 + $0x10] sm:$0xff]
        %v3597 = vld [vmem:[%s5 + $0x18] sm:$0xff]
        %v3598 = vld [vmem:[%s5 + $0x20] sm:$0xff]
        %v3599 = vld [vmem:[%s5 + $0x28] sm:$0xff]
        %v3600 = vld [vmem:[%s5 + $0x30] sm:$0xff]
        %v3601 = vld [vmem:[%s5 + $0x38] sm:$0xff]
        %v3602 = vld [vmem:[%s5 + $0x40] sm:$0xff]
        %v3603 = vld [vmem:[%s5 + $0x48] sm:$0xff]
        %v3604 = vld [vmem:[%s5 + $0x50] sm:$0xff]
        %v3605 = vld [vmem:[%s5 + $0x58] sm:$0xff]
        %v3606 = vld [vmem:[%s5 + $0x60] sm:$0xff]
        %v3607 = vld [vmem:[%s5 + $0x68] sm:$0xff]
        %v3608 = vld [vmem:[%s5 + $0x70] sm:$0xff]
        %v3609 = vld [vmem:[%s5 + $0x78] sm:$0xff]
        %v3610 = vld [vmem:[%s5 + $0x80] sm:$0xff]
        %v3611 = vld [vmem:[%s5 + $0x88] sm:$0xff]
        %v3612 = vld [vmem:[%s5 + $0x90] sm:$0xff]
        %v3613 = vld [vmem:[%s5 + $0x98] sm:$0xff]
        %v3614 = vld [vmem:[%s5 + $0xa0] sm:$0xff]
        %v3615 = vld [vmem:[%s5 + $0xa8] sm:$0xff]
        %v3616 = vld [vmem:[%s5 + $0xb0] sm:$0xff]
        %v3617 = vld [vmem:[%s5 + $0xb8] sm:$0xff]
        %v3618 = vld [vmem:[%s5 + $0xc0] sm:$0xff]
        %v3619 = vld [vmem:[%s5 + $0xc8] sm:$0xff]
        %v3620 = vld [vmem:[%s5 + $0xd0] sm:$0xff]
        %v3621 = vld [vmem:[%s5 + $0xd8] sm:$0xff]
        %v3622 = vld [vmem:[%s5 + $0xe0] sm:$0xff]
        %v3623 = vld [vmem:[%s5 + $0xe8] sm:$0xff]
        %v3624 = vld [vmem:[%s5 + $0xf0] sm:$0xff]
        %v3625 = vld [vmem:[%s5 + $0xf8] sm:$0xff]
        %v3626 = vld [vmem:[%s5 + $0x100] sm:$0xff]
        %v3627 = vld [vmem:[%s5 + $0x108] sm:$0xff]
        %v3628 = vld [vmem:[%s5 + $0x110] sm:$0xff]
        %v3629 = vld [vmem:[%s5 + $0x118] sm:$0xff]
        %v3630 = vld [vmem:[%s5 + $0x120] sm:$0xff]
        %v3631 = vld [vmem:[%s5 + $0x128] sm:$0xff]
        %v3632 = vld [vmem:[%s5 + $0x130] sm:$0xff]
        %v3633 = vld [vmem:[%s5 + $0x138] sm:$0xff]
        %v3634 = vld [vmem:[%s5 + $0x140] sm:$0xff]
        %v3635 = vld [vmem:[%s5 + $0x148] sm:$0xff]
        %v3636 = vld [vmem:[%s5 + $0x150] sm:$0xff]
        %v3637 = vld [vmem:[%s5 + $0x158] sm:$0xff]
        %v3638 = vld [vmem:[%s5 + $0x160] sm:$0xff]
        %v3639 = vld [vmem:[%s5 + $0x168] sm:$0xff]
        %v3640 = vld [vmem:[%s5 + $0x170] sm:$0xff]
        %v3641 = vld [vmem:[%s5 + $0x178] sm:$0xff]
        %v3642 = vld [vmem:[%s5 + $0x180] sm:$0xff]
        %v3643 = vld [vmem:[%s5 + $0x188] sm:$0xff]
        %v3644 = vld [vmem:[%s5 + $0x190] sm:$0xff]
        %v3645 = vld [vmem:[%s5 + $0x198] sm:$0xff]
        %v3646 = vld [vmem:[%s5 + $0x1a0] sm:$0xff]
        %v3647 = vld [vmem:[%s5 + $0x1a8] sm:$0xff]
        %v3648 = vld [vmem:[%s5 + $0x1b0] sm:$0xff]
        %v3649 = vld [vmem:[%s5 + $0x1b8] sm:$0xff]
        %v3650 = vld [vmem:[%s5 + $0x1c0] sm:$0xff]
        %v3651 = vld [vmem:[%s5 + $0x1c8] sm:$0xff]
        %v3652 = vld [vmem:[%s5 + $0x1d0] sm:$0xff]
        %v3653 = vld [vmem:[%s5 + $0x1d8] sm:$0xff]
        %v3654 = vld [vmem:[%s5 + $0x1e0] sm:$0xff]
        %v3655 = vld [vmem:[%s5 + $0x1e8] sm:$0xff]
        %v3656 = vld [vmem:[%s5 + $0x1f0] sm:$0xff]
        %v3657 = vld [vmem:[%s5 + $0x1f8] sm:$0xff]
        %v3658 = vld [vmem:[%s5 + $0x200] sm:$0xff]
        %v3659 = vld [vmem:[%s5 + $0x208] sm:$0xff]
        %v3660 = vld [vmem:[%s5 + $0x210] sm:$0xff]
        %v3661 = vld [vmem:[%s5 + $0x218] sm:$0xff]
        %v3662 = vld [vmem:[%s5 + $0x220] sm:$0xff]
        %v3663 = vld [vmem:[%s5 + $0x228] sm:$0xff]
        %v3664 = vld [vmem:[%s5 + $0x230] sm:$0xff]
        %v3665 = vld [vmem:[%s5 + $0x238] sm:$0xff]
        %v3666 = vld [vmem:[%s5 + $0x240] sm:$0xff]
        %v3667 = vld [vmem:[%s5 + $0x248] sm:$0xff]
        %v3668 = vld [vmem:[%s5 + $0x250] sm:$0xff]
        %v3669 = vld [vmem:[%s5 + $0x258] sm:$0xff]
        %v3670 = vld [vmem:[%s5 + $0x260] sm:$0xff]
        %v3671 = vld [vmem:[%s5 + $0x268] sm:$0xff]
        %v3672 = vld [vmem:[%s5 + $0x270] sm:$0xff]
        %v3673 = vld [vmem:[%s5 + $0x278] sm:$0xff]
        %v3674 = vld [vmem:[%s5 + $0x280] sm:$0xff]
        %v3675 = vld [vmem:[%s5 + $0x288] sm:$0xff]
        %v3676 = vld [vmem:[%s5 + $0x290] sm:$0xff]
        %v3677 = vld [vmem:[%s5 + $0x298] sm:$0xff]
        %v3678 = vld [vmem:[%s5 + $0x2a0] sm:$0xff]
        %v3679 = vld [vmem:[%s5 + $0x2a8] sm:$0xff]
        %v3680 = vld [vmem:[%s5 + $0x2b0] sm:$0xff]
        %v3681 = vld [vmem:[%s5 + $0x2b8] sm:$0xff]
        %v3682 = vld [vmem:[%s5 + $0x2c0] sm:$0xff]
        %v3683 = vld [vmem:[%s5 + $0x2c8] sm:$0xff]
        %v3684 = vld [vmem:[%s5 + $0x2d0] sm:$0xff]
        %v3685 = vld [vmem:[%s5 + $0x2d8] sm:$0xff]
        %v3686 = vld [vmem:[%s5 + $0x2e0] sm:$0xff]
        %v3687 = vld [vmem:[%s5 + $0x2e8] sm:$0xff]
        %v3688 = vld [vmem:[%s5 + $0x2f0] sm:$0xff]
        %v3689 = vld [vmem:[%s5 + $0x2f8] sm:$0xff]
        %v3690 = vld [vmem:[%s5 + $0x300] sm:$0xff]
        %v3691 = vld [vmem:[%s5 + $0x308] sm:$0xff]
        %v3692 = vld [vmem:[%s5 + $0x310] sm:$0xff]
        %v3693 = vld [vmem:[%s5 + $0x318] sm:$0xff]
        %v3694 = vld [vmem:[%s5 + $0x320] sm:$0xff]
        %v3695 = vld [vmem:[%s5 + $0x328] sm:$0xff]
        %v3696 = vld [vmem:[%s5 + $0x330] sm:$0xff]
        %v3697 = vld [vmem:[%s5 + $0x338] sm:$0xff]
        %v3698 = vld [vmem:[%s5 + $0x340] sm:$0xff]
        %v3699 = vld [vmem:[%s5 + $0x348] sm:$0xff]
        %v3700 = vld [vmem:[%s5 + $0x350] sm:$0xff]
        %v3701 = vld [vmem:[%s5 + $0x358] sm:$0xff]
        %v3702 = vld [vmem:[%s5 + $0x360] sm:$0xff]
        %v3703 = vld [vmem:[%s5 + $0x368] sm:$0xff]
        %v3704 = vld [vmem:[%s5 + $0x370] sm:$0xff]
        %v3705 = vld [vmem:[%s5 + $0x378] sm:$0xff]
        %v3706 = vld [vmem:[%s5 + $0x380] sm:$0xff]
        %v3707 = vld [vmem:[%s5 + $0x388] sm:$0xff]
        %v3708 = vld [vmem:[%s5 + $0x390] sm:$0xff]
        %v3709 = vld [vmem:[%s5 + $0x398] sm:$0xff]
        %v3710 = vld [vmem:[%s5 + $0x3a0] sm:$0xff]
        %v3711 = vld [vmem:[%s5 + $0x3a8] sm:$0xff]
        %v3712 = vld [vmem:[%s5 + $0x3b0] sm:$0xff]
        %v3713 = vld [vmem:[%s5 + $0x3b8] sm:$0xff]
        %v3714 = vld [vmem:[%s5 + $0x3c0] sm:$0xff]
        %v3715 = vld [vmem:[%s5 + $0x3c8] sm:$0xff]
        %v3716 = vld [vmem:[%s5 + $0x3d0] sm:$0xff]
        %v3717 = vld [vmem:[%s5 + $0x3d8] sm:$0xff]
        %v3718 = vld [vmem:[%s5 + $0x3e0] sm:$0xff]
        %v3719 = vld [vmem:[%s5 + $0x3e8] sm:$0xff]
        %v3720 = vld [vmem:[%s5 + $0x3f0] sm:$0xff]
        %v3721 = vld [vmem:[%s5 + $0x3f8] sm:$0xff]
        %v3722 = vld [vmem:[%s5 + $0x400] sm:$0xff]
        %v3723 = vld [vmem:[%s5 + $0x408] sm:$0xff]
        %v3724 = vld [vmem:[%s5 + $0x410] sm:$0xff]
        %v3725 = vld [vmem:[%s5 + $0x418] sm:$0xff]
        %v3726 = vld [vmem:[%s5 + $0x420] sm:$0xff]
        %v3727 = vld [vmem:[%s5 + $0x428] sm:$0xff]
        %v3728 = vld [vmem:[%s5 + $0x430] sm:$0xff]
        %v3729 = vld [vmem:[%s5 + $0x438] sm:$0xff]
        %v3730 = vld [vmem:[%s5 + $0x440] sm:$0xff]
        %v3731 = vld [vmem:[%s5 + $0x448] sm:$0xff]
        %v3732 = vld [vmem:[%s5 + $0x450] sm:$0xff]
        %v3733 = vld [vmem:[%s5 + $0x458] sm:$0xff]
        %v3734 = vld [vmem:[%s5 + $0x460] sm:$0xff]
        %v3735 = vld [vmem:[%s5 + $0x468] sm:$0xff]
        %v3736 = vld [vmem:[%s5 + $0x470] sm:$0xff]
        %v3737 = vld [vmem:[%s5 + $0x478] sm:$0xff]
        %v3738 = vld [vmem:[%s5 + $0x480] sm:$0xff]
        %v3739 = vld [vmem:[%s5 + $0x488] sm:$0xff]
        %v3740 = vld [vmem:[%s5 + $0x490] sm:$0xff]
        %v3741 = vld [vmem:[%s5 + $0x498] sm:$0xff]
        %v3742 = vld [vmem:[%s5 + $0x4a0] sm:$0xff]
        %v3743 = vld [vmem:[%s5 + $0x4a8] sm:$0xff]
        %v3744 = vld [vmem:[%s5 + $0x4b0] sm:$0xff]
        %v3745 = vld [vmem:[%s5 + $0x4b8] sm:$0xff]
        %v3746 = vld [vmem:[%s5 + $0x4c0] sm:$0xff]
        %v3747 = vld [vmem:[%s5 + $0x4c8] sm:$0xff]
        %v3748 = vld [vmem:[%s5 + $0x4d0] sm:$0xff]
        %v3749 = vld [vmem:[%s5 + $0x4d8] sm:$0xff]
        %v3750 = vld [vmem:[%s5 + $0x4e0] sm:$0xff]
        %v3751 = vld [vmem:[%s5 + $0x4e8] sm:$0xff]
        %v3752 = vld [vmem:[%s5 + $0x4f0] sm:$0xff]
        %v3753 = vld [vmem:[%s5 + $0x4f8] sm:$0xff]
        %v3754 = vld [vmem:[%s5 + $0x500] sm:$0xff]
        %v3755 = vld [vmem:[%s5 + $0x508] sm:$0xff]
        %v3756 = vld [vmem:[%s5 + $0x510] sm:$0xff]
        %v3757 = vld [vmem:[%s5 + $0x518] sm:$0xff]
        %v3758 = vld [vmem:[%s5 + $0x520] sm:$0xff]
        %v3759 = vld [vmem:[%s5 + $0x528] sm:$0xff]
        %v3760 = vld [vmem:[%s5 + $0x530] sm:$0xff]
        %v3761 = vld [vmem:[%s5 + $0x538] sm:$0xff]
        %v3762 = vld [vmem:[%s5 + $0x540] sm:$0xff]
        %v3763 = vld [vmem:[%s5 + $0x548] sm:$0xff]
        %v3764 = vld [vmem:[%s5 + $0x550] sm:$0xff]
        %v3765 = vld [vmem:[%s5 + $0x558] sm:$0xff]
        %v3766 = vld [vmem:[%s5 + $0x560] sm:$0xff]
        %v3767 = vld [vmem:[%s5 + $0x568] sm:$0xff]
        %v3768 = vld [vmem:[%s5 + $0x570] sm:$0xff]
        %v3769 = vld [vmem:[%s5 + $0x578] sm:$0xff]
        %v3770 = vld [vmem:[%s5 + $0x580] sm:$0xff]
        %v3771 = vld [vmem:[%s5 + $0x588] sm:$0xff]
        %v3772 = vld [vmem:[%s5 + $0x590] sm:$0xff]
        %v3773 = vld [vmem:[%s5 + $0x598] sm:$0xff]
        %v3774 = vld [vmem:[%s5 + $0x5a0] sm:$0xff]
        %v3775 = vld [vmem:[%s5 + $0x5a8] sm:$0xff]
        %v3776 = vld [vmem:[%s5 + $0x5b0] sm:$0xff]
        %v3777 = vld [vmem:[%s5 + $0x5b8] sm:$0xff]
        %v3778 = vld [vmem:[%s5 + $0x5c0] sm:$0xff]
        %v3779 = vld [vmem:[%s5 + $0x5c8] sm:$0xff]
        %v3780 = vld [vmem:[%s5 + $0x5d0] sm:$0xff]
        %v3781 = vld [vmem:[%s5 + $0x5d8] sm:$0xff]
        %v3782 = vld [vmem:[%s5 + $0x5e0] sm:$0xff]
        %v3783 = vld [vmem:[%s5 + $0x5e8] sm:$0xff]
        %v3784 = vld [vmem:[%s5 + $0x5f0] sm:$0xff]
        %v3785 = vld [vmem:[%s5 + $0x5f8] sm:$0xff]
        %v3786 = vld [vmem:[%s5 + $0x600] sm:$0xff]
        %v3787 = vld [vmem:[%s5 + $0x608] sm:$0xff]
        %v3788 = vld [vmem:[%s5 + $0x610] sm:$0xff]
        %v3789 = vld [vmem:[%s5 + $0x618] sm:$0xff]
        %v3790 = vld [vmem:[%s5 + $0x620] sm:$0xff]
        %v3791 = vld [vmem:[%s5 + $0x628] sm:$0xff]
        %v3792 = vld [vmem:[%s5 + $0x630] sm:$0xff]
        %v3793 = vld [vmem:[%s5 + $0x638] sm:$0xff]
        %v3794 = vld [vmem:[%s5 + $0x640] sm:$0xff]
        %v3795 = vld [vmem:[%s5 + $0x648] sm:$0xff]
        %v3796 = vld [vmem:[%s5 + $0x650] sm:$0xff]
        %v3797 = vld [vmem:[%s5 + $0x658] sm:$0xff]
        %v3798 = vld [vmem:[%s5 + $0x660] sm:$0xff]
        %v3799 = vld [vmem:[%s5 + $0x668] sm:$0xff]
        %v3800 = vld [vmem:[%s5 + $0x670] sm:$0xff]
        %v3801 = vld [vmem:[%s5 + $0x678] sm:$0xff]
        %v3802 = vld [vmem:[%s5 + $0x680] sm:$0xff]
        %v3803 = vld [vmem:[%s5 + $0x688] sm:$0xff]
        %v3804 = vld [vmem:[%s5 + $0x690] sm:$0xff]
        %v3805 = vld [vmem:[%s5 + $0x698] sm:$0xff]
        %v3806 = vld [vmem:[%s5 + $0x6a0] sm:$0xff]
        %v3807 = vld [vmem:[%s5 + $0x6a8] sm:$0xff]
        %v3808 = vld [vmem:[%s5 + $0x6b0] sm:$0xff]
        %v3809 = vld [vmem:[%s5 + $0x6b8] sm:$0xff]
        %v3810 = vld [vmem:[%s5 + $0x6c0] sm:$0xff]
        %v3811 = vld [vmem:[%s5 + $0x6c8] sm:$0xff]
        %v3812 = vld [vmem:[%s5 + $0x6d0] sm:$0xff]
        %v3813 = vld [vmem:[%s5 + $0x6d8] sm:$0xff]
        %v3814 = vld [vmem:[%s5 + $0x6e0] sm:$0xff]
        %v3815 = vld [vmem:[%s5 + $0x6e8] sm:$0xff]
        %v3816 = vld [vmem:[%s5 + $0x6f0] sm:$0xff]
        %v3817 = vld [vmem:[%s5 + $0x6f8] sm:$0xff]
        %v3818 = vld [vmem:[%s5 + $0x700] sm:$0xff]
        %v3819 = vld [vmem:[%s5 + $0x708] sm:$0xff]
        %v3820 = vld [vmem:[%s5 + $0x710] sm:$0xff]
        %v3821 = vld [vmem:[%s5 + $0x718] sm:$0xff]
        %v3822 = vld [vmem:[%s5 + $0x720] sm:$0xff]
        %v3823 = vld [vmem:[%s5 + $0x728] sm:$0xff]
        %v3824 = vld [vmem:[%s5 + $0x730] sm:$0xff]
        %v3825 = vld [vmem:[%s5 + $0x738] sm:$0xff]
        %v3826 = vld [vmem:[%s5 + $0x740] sm:$0xff]
        %v3827 = vld [vmem:[%s5 + $0x748] sm:$0xff]
        %v3828 = vld [vmem:[%s5 + $0x750] sm:$0xff]
        %v3829 = vld [vmem:[%s5 + $0x758] sm:$0xff]
        %v3830 = vld [vmem:[%s5 + $0x760] sm:$0xff]
        %v3831 = vld [vmem:[%s5 + $0x768] sm:$0xff]
        %v3832 = vld [vmem:[%s5 + $0x770] sm:$0xff]
        %v3833 = vld [vmem:[%s5 + $0x778] sm:$0xff]
        %v3834 = vld [vmem:[%s5 + $0x780] sm:$0xff]
        %v3835 = vld [vmem:[%s5 + $0x788] sm:$0xff]
        %v3836 = vld [vmem:[%s5 + $0x790] sm:$0xff]
        %v3837 = vld [vmem:[%s5 + $0x798] sm:$0xff]
        %v3838 = vld [vmem:[%s5 + $0x7a0] sm:$0xff]
        %v3839 = vld [vmem:[%s5 + $0x7a8] sm:$0xff]
        %v3840 = vld [vmem:[%s5 + $0x7b0] sm:$0xff]
        %v3841 = vld [vmem:[%s5 + $0x7b8] sm:$0xff]
        %v3842 = vld [vmem:[%s5 + $0x7c0] sm:$0xff]
        %v3843 = vld [vmem:[%s5 + $0x7c8] sm:$0xff]
        %v3844 = vld [vmem:[%s5 + $0x7d0] sm:$0xff]
        %v3845 = vld [vmem:[%s5 + $0x7d8] sm:$0xff]
        %v3846 = vld [vmem:[%s5 + $0x7e0] sm:$0xff]
        %v3847 = vld [vmem:[%s5 + $0x7e8] sm:$0xff]
        %v3848 = vld [vmem:[%s5 + $0x7f0] sm:$0xff]
        %v3849 = vld [vmem:[%s5 + $0x7f8] sm:$0xff]
        %v3850 = vld [vmem:[%s6] sm:$0xff]
        %v3851 = vld [vmem:[%s6 + $0x8] sm:$0xff]
        %v3852 = vld [vmem:[%s6 + $0x10] sm:$0xff]
        %v3853 = vld [vmem:[%s6 + $0x18] sm:$0xff]
        %v3854 = vld [vmem:[%s6 + $0x20] sm:$0xff]
        %v3855 = vld [vmem:[%s6 + $0x28] sm:$0xff]
        %v3856 = vld [vmem:[%s6 + $0x30] sm:$0xff]
        %v3857 = vld [vmem:[%s6 + $0x38] sm:$0xff]
        %v4114 = vunpack.c.l.b16 %v3594
        %v4115 = vunpack.c.h.b16 %v3594
        %v4116 = vunpack.c.l.b16 %v3595
        %v4117 = vunpack.c.h.b16 %v3595
        %v4118 = vunpack.c.l.b16 %v3596
        %v4119 = vunpack.c.h.b16 %v3596
        %v4120 = vunpack.c.l.b16 %v3597
        %v4121 = vunpack.c.h.b16 %v3597
        %v4122 = vunpack.c.l.b16 %v3598
        %v4123 = vunpack.c.h.b16 %v3598
        %v4124 = vunpack.c.l.b16 %v3599
        %v4125 = vunpack.c.h.b16 %v3599
        %v4126 = vunpack.c.l.b16 %v3600
        %v4127 = vunpack.c.h.b16 %v3600
        %v4128 = vunpack.c.l.b16 %v3601
        %v4129 = vunpack.c.h.b16 %v3601
        %v4130 = vunpack.c.l.b16 %v3602
        %v4131 = vunpack.c.h.b16 %v3602
        %v4132 = vunpack.c.l.b16 %v3603
        %v4133 = vunpack.c.h.b16 %v3603
        %v4134 = vunpack.c.l.b16 %v3604
        %v4135 = vunpack.c.h.b16 %v3604
        %v4136 = vunpack.c.l.b16 %v3605
        %v4137 = vunpack.c.h.b16 %v3605
        %v4138 = vunpack.c.l.b16 %v3606
        %v4139 = vunpack.c.h.b16 %v3606
        %v4140 = vunpack.c.l.b16 %v3607
        %v4141 = vunpack.c.h.b16 %v3607
        %v4142 = vunpack.c.l.b16 %v3608
        %v4143 = vunpack.c.h.b16 %v3608
        %v4144 = vunpack.c.l.b16 %v3609
        %v4145 = vunpack.c.h.b16 %v3609
        %v4146 = vunpack.c.l.b16 %v3610
        %v4147 = vunpack.c.h.b16 %v3610
        %v4148 = vunpack.c.l.b16 %v3611
        %v4149 = vunpack.c.h.b16 %v3611
        %v4150 = vunpack.c.l.b16 %v3612
        %v4151 = vunpack.c.h.b16 %v3612
        %v4152 = vunpack.c.l.b16 %v3613
        %v4153 = vunpack.c.h.b16 %v3613
        %v4154 = vunpack.c.l.b16 %v3614
        %v4155 = vunpack.c.h.b16 %v3614
        %v4156 = vunpack.c.l.b16 %v3615
        %v4157 = vunpack.c.h.b16 %v3615
        %v4158 = vunpack.c.l.b16 %v3616
        %v4159 = vunpack.c.h.b16 %v3616
        %v4160 = vunpack.c.l.b16 %v3617
        %v4161 = vunpack.c.h.b16 %v3617
        %v4162 = vunpack.c.l.b16 %v3618
        %v4163 = vunpack.c.h.b16 %v3618
        %v4164 = vunpack.c.l.b16 %v3619
        %v4165 = vunpack.c.h.b16 %v3619
        %v4166 = vunpack.c.l.b16 %v3620
        %v4167 = vunpack.c.h.b16 %v3620
        %v4168 = vunpack.c.l.b16 %v3621
        %v4169 = vunpack.c.h.b16 %v3621
        %v4170 = vunpack.c.l.b16 %v3622
        %v4171 = vunpack.c.h.b16 %v3622
        %v4172 = vunpack.c.l.b16 %v3623
        %v4173 = vunpack.c.h.b16 %v3623
        %v4174 = vunpack.c.l.b16 %v3624
        %v4175 = vunpack.c.h.b16 %v3624
        %v4176 = vunpack.c.l.b16 %v3625
        %v4177 = vunpack.c.h.b16 %v3625
        %v4178 = vunpack.c.l.b16 %v3626
        %v4179 = vunpack.c.h.b16 %v3626
        %v4180 = vunpack.c.l.b16 %v3627
        %v4181 = vunpack.c.h.b16 %v3627
        %v4182 = vunpack.c.l.b16 %v3628
        %v4183 = vunpack.c.h.b16 %v3628
        %v4184 = vunpack.c.l.b16 %v3629
        %v4185 = vunpack.c.h.b16 %v3629
        %v4186 = vunpack.c.l.b16 %v3630
        %v4187 = vunpack.c.h.b16 %v3630
        %v4188 = vunpack.c.l.b16 %v3631
        %v4189 = vunpack.c.h.b16 %v3631
        %v4190 = vunpack.c.l.b16 %v3632
        %v4191 = vunpack.c.h.b16 %v3632
        %v4192 = vunpack.c.l.b16 %v3633
        %v4193 = vunpack.c.h.b16 %v3633
        %v4194 = vunpack.c.l.b16 %v3634
        %v4195 = vunpack.c.h.b16 %v3634
        %v4196 = vunpack.c.l.b16 %v3635
        %v4197 = vunpack.c.h.b16 %v3635
        %v4198 = vunpack.c.l.b16 %v3636
        %v4199 = vunpack.c.h.b16 %v3636
        %v4200 = vunpack.c.l.b16 %v3637
        %v4201 = vunpack.c.h.b16 %v3637
        %v4202 = vunpack.c.l.b16 %v3638
        %v4203 = vunpack.c.h.b16 %v3638
        %v4204 = vunpack.c.l.b16 %v3639
        %v4205 = vunpack.c.h.b16 %v3639
        %v4206 = vunpack.c.l.b16 %v3640
        %v4207 = vunpack.c.h.b16 %v3640
        %v4208 = vunpack.c.l.b16 %v3641
        %v4209 = vunpack.c.h.b16 %v3641
        %v4210 = vunpack.c.l.b16 %v3642
        %v4211 = vunpack.c.h.b16 %v3642
        %v4212 = vunpack.c.l.b16 %v3643
        %v4213 = vunpack.c.h.b16 %v3643
        %v4214 = vunpack.c.l.b16 %v3644
        %v4215 = vunpack.c.h.b16 %v3644
        %v4216 = vunpack.c.l.b16 %v3645
        %v4217 = vunpack.c.h.b16 %v3645
        %v4218 = vunpack.c.l.b16 %v3646
        %v4219 = vunpack.c.h.b16 %v3646
        %v4220 = vunpack.c.l.b16 %v3647
        %v4221 = vunpack.c.h.b16 %v3647
        %v4222 = vunpack.c.l.b16 %v3648
        %v4223 = vunpack.c.h.b16 %v3648
        %v4224 = vunpack.c.l.b16 %v3649
        %v4225 = vunpack.c.h.b16 %v3649
        %v4226 = vunpack.c.l.b16 %v3650
        %v4227 = vunpack.c.h.b16 %v3650
        %v4228 = vunpack.c.l.b16 %v3651
        %v4229 = vunpack.c.h.b16 %v3651
        %v4230 = vunpack.c.l.b16 %v3652
        %v4231 = vunpack.c.h.b16 %v3652
        %v4232 = vunpack.c.l.b16 %v3653
        %v4233 = vunpack.c.h.b16 %v3653
        %v4234 = vunpack.c.l.b16 %v3654
        %v4235 = vunpack.c.h.b16 %v3654
        %v4236 = vunpack.c.l.b16 %v3655
        %v4237 = vunpack.c.h.b16 %v3655
        %v4238 = vunpack.c.l.b16 %v3656
        %v4239 = vunpack.c.h.b16 %v3656
        %v4240 = vunpack.c.l.b16 %v3657
        %v4241 = vunpack.c.h.b16 %v3657
        %v4242 = vunpack.c.l.b16 %v3658
        %v4243 = vunpack.c.h.b16 %v3658
        %v4244 = vunpack.c.l.b16 %v3659
        %v4245 = vunpack.c.h.b16 %v3659
        %v4246 = vunpack.c.l.b16 %v3660
        %v4247 = vunpack.c.h.b16 %v3660
        %v4248 = vunpack.c.l.b16 %v3661
        %v4249 = vunpack.c.h.b16 %v3661
        %v4250 = vunpack.c.l.b16 %v3662
        %v4251 = vunpack.c.h.b16 %v3662
        %v4252 = vunpack.c.l.b16 %v3663
        %v4253 = vunpack.c.h.b16 %v3663
        %v4254 = vunpack.c.l.b16 %v3664
        %v4255 = vunpack.c.h.b16 %v3664
        %v4256 = vunpack.c.l.b16 %v3665
        %v4257 = vunpack.c.h.b16 %v3665
        %v4258 = vunpack.c.l.b16 %v3666
        %v4259 = vunpack.c.h.b16 %v3666
        %v4260 = vunpack.c.l.b16 %v3667
        %v4261 = vunpack.c.h.b16 %v3667
        %v4262 = vunpack.c.l.b16 %v3668
        %v4263 = vunpack.c.h.b16 %v3668
        %v4264 = vunpack.c.l.b16 %v3669
        %v4265 = vunpack.c.h.b16 %v3669
        %v4266 = vunpack.c.l.b16 %v3670
        %v4267 = vunpack.c.h.b16 %v3670
        %v4268 = vunpack.c.l.b16 %v3671
        %v4269 = vunpack.c.h.b16 %v3671
        %v4270 = vunpack.c.l.b16 %v3672
        %v4271 = vunpack.c.h.b16 %v3672
        %v4272 = vunpack.c.l.b16 %v3673
        %v4273 = vunpack.c.h.b16 %v3673
        %v4274 = vunpack.c.l.b16 %v3674
        %v4275 = vunpack.c.h.b16 %v3674
        %v4276 = vunpack.c.l.b16 %v3675
        %v4277 = vunpack.c.h.b16 %v3675
        %v4278 = vunpack.c.l.b16 %v3676
        %v4279 = vunpack.c.h.b16 %v3676
        %v4280 = vunpack.c.l.b16 %v3677
        %v4281 = vunpack.c.h.b16 %v3677
        %v4282 = vunpack.c.l.b16 %v3678
        %v4283 = vunpack.c.h.b16 %v3678
        %v4284 = vunpack.c.l.b16 %v3679
        %v4285 = vunpack.c.h.b16 %v3679
        %v4286 = vunpack.c.l.b16 %v3680
        %v4287 = vunpack.c.h.b16 %v3680
        %v4288 = vunpack.c.l.b16 %v3681
        %v4289 = vunpack.c.h.b16 %v3681
        %v4290 = vunpack.c.l.b16 %v3682
        %v4291 = vunpack.c.h.b16 %v3682
        %v4292 = vunpack.c.l.b16 %v3683
        %v4293 = vunpack.c.h.b16 %v3683
        %v4294 = vunpack.c.l.b16 %v3684
        %v4295 = vunpack.c.h.b16 %v3684
        %v4296 = vunpack.c.l.b16 %v3685
        %v4297 = vunpack.c.h.b16 %v3685
        %v4298 = vunpack.c.l.b16 %v3686
        %v4299 = vunpack.c.h.b16 %v3686
        %v4300 = vunpack.c.l.b16 %v3687
        %v4301 = vunpack.c.h.b16 %v3687
        %v4302 = vunpack.c.l.b16 %v3688
        %v4303 = vunpack.c.h.b16 %v3688
        %v4304 = vunpack.c.l.b16 %v3689
        %v4305 = vunpack.c.h.b16 %v3689
        %v4306 = vunpack.c.l.b16 %v3690
        %v4307 = vunpack.c.h.b16 %v3690
        %v4308 = vunpack.c.l.b16 %v3691
        %v4309 = vunpack.c.h.b16 %v3691
        %v4310 = vunpack.c.l.b16 %v3692
        %v4311 = vunpack.c.h.b16 %v3692
        %v4312 = vunpack.c.l.b16 %v3693
        %v4313 = vunpack.c.h.b16 %v3693
        %v4314 = vunpack.c.l.b16 %v3694
        %v4315 = vunpack.c.h.b16 %v3694
        %v4316 = vunpack.c.l.b16 %v3695
        %v4317 = vunpack.c.h.b16 %v3695
        %v4318 = vunpack.c.l.b16 %v3696
        %v4319 = vunpack.c.h.b16 %v3696
        %v4320 = vunpack.c.l.b16 %v3697
        %v4321 = vunpack.c.h.b16 %v3697
        %v4322 = vunpack.c.l.b16 %v3698
        %v4323 = vunpack.c.h.b16 %v3698
        %v4324 = vunpack.c.l.b16 %v3699
        %v4325 = vunpack.c.h.b16 %v3699
        %v4326 = vunpack.c.l.b16 %v3700
        %v4327 = vunpack.c.h.b16 %v3700
        %v4328 = vunpack.c.l.b16 %v3701
        %v4329 = vunpack.c.h.b16 %v3701
        %v4330 = vunpack.c.l.b16 %v3702
        %v4331 = vunpack.c.h.b16 %v3702
        %v4332 = vunpack.c.l.b16 %v3703
        %v4333 = vunpack.c.h.b16 %v3703
        %v4334 = vunpack.c.l.b16 %v3704
        %v4335 = vunpack.c.h.b16 %v3704
        %v4336 = vunpack.c.l.b16 %v3705
        %v4337 = vunpack.c.h.b16 %v3705
        %v4338 = vunpack.c.l.b16 %v3706
        %v4339 = vunpack.c.h.b16 %v3706
        %v4340 = vunpack.c.l.b16 %v3707
        %v4341 = vunpack.c.h.b16 %v3707
        %v4342 = vunpack.c.l.b16 %v3708
        %v4343 = vunpack.c.h.b16 %v3708
        %v4344 = vunpack.c.l.b16 %v3709
        %v4345 = vunpack.c.h.b16 %v3709
        %v4346 = vunpack.c.l.b16 %v3710
        %v4347 = vunpack.c.h.b16 %v3710
        %v4348 = vunpack.c.l.b16 %v3711
        %v4349 = vunpack.c.h.b16 %v3711
        %v4350 = vunpack.c.l.b16 %v3712
        %v4351 = vunpack.c.h.b16 %v3712
        %v4352 = vunpack.c.l.b16 %v3713
        %v4353 = vunpack.c.h.b16 %v3713
        %v4354 = vunpack.c.l.b16 %v3714
        %v4355 = vunpack.c.h.b16 %v3714
        %v4356 = vunpack.c.l.b16 %v3715
        %v4357 = vunpack.c.h.b16 %v3715
        %v4358 = vunpack.c.l.b16 %v3716
        %v4359 = vunpack.c.h.b16 %v3716
        %v4360 = vunpack.c.l.b16 %v3717
        %v4361 = vunpack.c.h.b16 %v3717
        %v4362 = vunpack.c.l.b16 %v3718
        %v4363 = vunpack.c.h.b16 %v3718
        %v4364 = vunpack.c.l.b16 %v3719
        %v4365 = vunpack.c.h.b16 %v3719
        %v4366 = vunpack.c.l.b16 %v3720
        %v4367 = vunpack.c.h.b16 %v3720
        %v4368 = vunpack.c.l.b16 %v3721
        %v4369 = vunpack.c.h.b16 %v3721
        %v4370 = vunpack.c.l.b16 %v3722
        %v4371 = vunpack.c.h.b16 %v3722
        %v4372 = vunpack.c.l.b16 %v3723
        %v4373 = vunpack.c.h.b16 %v3723
        %v4374 = vunpack.c.l.b16 %v3724
        %v4375 = vunpack.c.h.b16 %v3724
        %v4376 = vunpack.c.l.b16 %v3725
        %v4377 = vunpack.c.h.b16 %v3725
        %v4378 = vunpack.c.l.b16 %v3726
        %v4379 = vunpack.c.h.b16 %v3726
        %v4380 = vunpack.c.l.b16 %v3727
        %v4381 = vunpack.c.h.b16 %v3727
        %v4382 = vunpack.c.l.b16 %v3728
        %v4383 = vunpack.c.h.b16 %v3728
        %v4384 = vunpack.c.l.b16 %v3729
        %v4385 = vunpack.c.h.b16 %v3729
        %v4386 = vunpack.c.l.b16 %v3730
        %v4387 = vunpack.c.h.b16 %v3730
        %v4388 = vunpack.c.l.b16 %v3731
        %v4389 = vunpack.c.h.b16 %v3731
        %v4390 = vunpack.c.l.b16 %v3732
        %v4391 = vunpack.c.h.b16 %v3732
        %v4392 = vunpack.c.l.b16 %v3733
        %v4393 = vunpack.c.h.b16 %v3733
        %v4394 = vunpack.c.l.b16 %v3734
        %v4395 = vunpack.c.h.b16 %v3734
        %v4396 = vunpack.c.l.b16 %v3735
        %v4397 = vunpack.c.h.b16 %v3735
        %v4398 = vunpack.c.l.b16 %v3736
        %v4399 = vunpack.c.h.b16 %v3736
        %v4400 = vunpack.c.l.b16 %v3737
        %v4401 = vunpack.c.h.b16 %v3737
        %v4402 = vunpack.c.l.b16 %v3738
        %v4403 = vunpack.c.h.b16 %v3738
        %v4404 = vunpack.c.l.b16 %v3739
        %v4405 = vunpack.c.h.b16 %v3739
        %v4406 = vunpack.c.l.b16 %v3740
        %v4407 = vunpack.c.h.b16 %v3740
        %v4408 = vunpack.c.l.b16 %v3741
        %v4409 = vunpack.c.h.b16 %v3741
        %v4410 = vunpack.c.l.b16 %v3742
        %v4411 = vunpack.c.h.b16 %v3742
        %v4412 = vunpack.c.l.b16 %v3743
        %v4413 = vunpack.c.h.b16 %v3743
        %v4414 = vunpack.c.l.b16 %v3744
        %v4415 = vunpack.c.h.b16 %v3744
        %v4416 = vunpack.c.l.b16 %v3745
        %v4417 = vunpack.c.h.b16 %v3745
        %v4418 = vunpack.c.l.b16 %v3746
        %v4419 = vunpack.c.h.b16 %v3746
        %v4420 = vunpack.c.l.b16 %v3747
        %v4421 = vunpack.c.h.b16 %v3747
        %v4422 = vunpack.c.l.b16 %v3748
        %v4423 = vunpack.c.h.b16 %v3748
        %v4424 = vunpack.c.l.b16 %v3749
        %v4425 = vunpack.c.h.b16 %v3749
        %v4426 = vunpack.c.l.b16 %v3750
        %v4427 = vunpack.c.h.b16 %v3750
        %v4428 = vunpack.c.l.b16 %v3751
        %v4429 = vunpack.c.h.b16 %v3751
        %v4430 = vunpack.c.l.b16 %v3752
        %v4431 = vunpack.c.h.b16 %v3752
        %v4432 = vunpack.c.l.b16 %v3753
        %v4433 = vunpack.c.h.b16 %v3753
        %v4434 = vunpack.c.l.b16 %v3754
        %v4435 = vunpack.c.h.b16 %v3754
        %v4436 = vunpack.c.l.b16 %v3755
        %v4437 = vunpack.c.h.b16 %v3755
        %v4438 = vunpack.c.l.b16 %v3756
        %v4439 = vunpack.c.h.b16 %v3756
        %v4440 = vunpack.c.l.b16 %v3757
        %v4441 = vunpack.c.h.b16 %v3757
        %v4442 = vunpack.c.l.b16 %v3758
        %v4443 = vunpack.c.h.b16 %v3758
        %v4444 = vunpack.c.l.b16 %v3759
        %v4445 = vunpack.c.h.b16 %v3759
        %v4446 = vunpack.c.l.b16 %v3760
        %v4447 = vunpack.c.h.b16 %v3760
        %v4448 = vunpack.c.l.b16 %v3761
        %v4449 = vunpack.c.h.b16 %v3761
        %v4450 = vunpack.c.l.b16 %v3762
        %v4451 = vunpack.c.h.b16 %v3762
        %v4452 = vunpack.c.l.b16 %v3763
        %v4453 = vunpack.c.h.b16 %v3763
        %v4454 = vunpack.c.l.b16 %v3764
        %v4455 = vunpack.c.h.b16 %v3764
        %v4456 = vunpack.c.l.b16 %v3765
        %v4457 = vunpack.c.h.b16 %v3765
        %v4458 = vunpack.c.l.b16 %v3766
        %v4459 = vunpack.c.h.b16 %v3766
        %v4460 = vunpack.c.l.b16 %v3767
        %v4461 = vunpack.c.h.b16 %v3767
        %v4462 = vunpack.c.l.b16 %v3768
        %v4463 = vunpack.c.h.b16 %v3768
        %v4464 = vunpack.c.l.b16 %v3769
        %v4465 = vunpack.c.h.b16 %v3769
        %v4466 = vunpack.c.l.b16 %v3770
        %v4467 = vunpack.c.h.b16 %v3770
        %v4468 = vunpack.c.l.b16 %v3771
        %v4469 = vunpack.c.h.b16 %v3771
        %v4470 = vunpack.c.l.b16 %v3772
        %v4471 = vunpack.c.h.b16 %v3772
        %v4472 = vunpack.c.l.b16 %v3773
        %v4473 = vunpack.c.h.b16 %v3773
        %v4474 = vunpack.c.l.b16 %v3774
        %v4475 = vunpack.c.h.b16 %v3774
        %v4476 = vunpack.c.l.b16 %v3775
        %v4477 = vunpack.c.h.b16 %v3775
        %v4478 = vunpack.c.l.b16 %v3776
        %v4479 = vunpack.c.h.b16 %v3776
        %v4480 = vunpack.c.l.b16 %v3777
        %v4481 = vunpack.c.h.b16 %v3777
        %v4482 = vunpack.c.l.b16 %v3778
        %v4483 = vunpack.c.h.b16 %v3778
        %v4484 = vunpack.c.l.b16 %v3779
        %v4485 = vunpack.c.h.b16 %v3779
        %v4486 = vunpack.c.l.b16 %v3780
        %v4487 = vunpack.c.h.b16 %v3780
        %v4488 = vunpack.c.l.b16 %v3781
        %v4489 = vunpack.c.h.b16 %v3781
        %v4490 = vunpack.c.l.b16 %v3782
        %v4491 = vunpack.c.h.b16 %v3782
        %v4492 = vunpack.c.l.b16 %v3783
        %v4493 = vunpack.c.h.b16 %v3783
        %v4494 = vunpack.c.l.b16 %v3784
        %v4495 = vunpack.c.h.b16 %v3784
        %v4496 = vunpack.c.l.b16 %v3785
        %v4497 = vunpack.c.h.b16 %v3785
        %v4498 = vunpack.c.l.b16 %v3786
        %v4499 = vunpack.c.h.b16 %v3786
        %v4500 = vunpack.c.l.b16 %v3787
        %v4501 = vunpack.c.h.b16 %v3787
        %v4502 = vunpack.c.l.b16 %v3788
        %v4503 = vunpack.c.h.b16 %v3788
        %v4504 = vunpack.c.l.b16 %v3789
        %v4505 = vunpack.c.h.b16 %v3789
        %v4506 = vunpack.c.l.b16 %v3790
        %v4507 = vunpack.c.h.b16 %v3790
        %v4508 = vunpack.c.l.b16 %v3791
        %v4509 = vunpack.c.h.b16 %v3791
        %v4510 = vunpack.c.l.b16 %v3792
        %v4511 = vunpack.c.h.b16 %v3792
        %v4512 = vunpack.c.l.b16 %v3793
        %v4513 = vunpack.c.h.b16 %v3793
        %v4514 = vunpack.c.l.b16 %v3794
        %v4515 = vunpack.c.h.b16 %v3794
        %v4516 = vunpack.c.l.b16 %v3795
        %v4517 = vunpack.c.h.b16 %v3795
        %v4518 = vunpack.c.l.b16 %v3796
        %v4519 = vunpack.c.h.b16 %v3796
        %v4520 = vunpack.c.l.b16 %v3797
        %v4521 = vunpack.c.h.b16 %v3797
        %v4522 = vunpack.c.l.b16 %v3798
        %v4523 = vunpack.c.h.b16 %v3798
        %v4524 = vunpack.c.l.b16 %v3799
        %v4525 = vunpack.c.h.b16 %v3799
        %v4526 = vunpack.c.l.b16 %v3800
        %v4527 = vunpack.c.h.b16 %v3800
        %v4528 = vunpack.c.l.b16 %v3801
        %v4529 = vunpack.c.h.b16 %v3801
        %v4530 = vunpack.c.l.b16 %v3802
        %v4531 = vunpack.c.h.b16 %v3802
        %v4532 = vunpack.c.l.b16 %v3803
        %v4533 = vunpack.c.h.b16 %v3803
        %v4534 = vunpack.c.l.b16 %v3804
        %v4535 = vunpack.c.h.b16 %v3804
        %v4536 = vunpack.c.l.b16 %v3805
        %v4537 = vunpack.c.h.b16 %v3805
        %v4538 = vunpack.c.l.b16 %v3806
        %v4539 = vunpack.c.h.b16 %v3806
        %v4540 = vunpack.c.l.b16 %v3807
        %v4541 = vunpack.c.h.b16 %v3807
        %v4542 = vunpack.c.l.b16 %v3808
        %v4543 = vunpack.c.h.b16 %v3808
        %v4544 = vunpack.c.l.b16 %v3809
        %v4545 = vunpack.c.h.b16 %v3809
        %v4546 = vunpack.c.l.b16 %v3810
        %v4547 = vunpack.c.h.b16 %v3810
        %v4548 = vunpack.c.l.b16 %v3811
        %v4549 = vunpack.c.h.b16 %v3811
        %v4550 = vunpack.c.l.b16 %v3812
        %v4551 = vunpack.c.h.b16 %v3812
        %v4552 = vunpack.c.l.b16 %v3813
        %v4553 = vunpack.c.h.b16 %v3813
        %v4554 = vunpack.c.l.b16 %v3814
        %v4555 = vunpack.c.h.b16 %v3814
        %v4556 = vunpack.c.l.b16 %v3815
        %v4557 = vunpack.c.h.b16 %v3815
        %v4558 = vunpack.c.l.b16 %v3816
        %v4559 = vunpack.c.h.b16 %v3816
        %v4560 = vunpack.c.l.b16 %v3817
        %v4561 = vunpack.c.h.b16 %v3817
        %v4562 = vunpack.c.l.b16 %v3818
        %v4563 = vunpack.c.h.b16 %v3818
        %v4564 = vunpack.c.l.b16 %v3819
        %v4565 = vunpack.c.h.b16 %v3819
        %v4566 = vunpack.c.l.b16 %v3820
        %v4567 = vunpack.c.h.b16 %v3820
        %v4568 = vunpack.c.l.b16 %v3821
        %v4569 = vunpack.c.h.b16 %v3821
        %v4570 = vunpack.c.l.b16 %v3822
        %v4571 = vunpack.c.h.b16 %v3822
        %v4572 = vunpack.c.l.b16 %v3823
        %v4573 = vunpack.c.h.b16 %v3823
        %v4574 = vunpack.c.l.b16 %v3824
        %v4575 = vunpack.c.h.b16 %v3824
        %v4576 = vunpack.c.l.b16 %v3825
        %v4577 = vunpack.c.h.b16 %v3825
        %v4578 = vunpack.c.l.b16 %v3826
        %v4579 = vunpack.c.h.b16 %v3826
        %v4580 = vunpack.c.l.b16 %v3827
        %v4581 = vunpack.c.h.b16 %v3827
        %v4582 = vunpack.c.l.b16 %v3828
        %v4583 = vunpack.c.h.b16 %v3828
        %v4584 = vunpack.c.l.b16 %v3829
        %v4585 = vunpack.c.h.b16 %v3829
        %v4586 = vunpack.c.l.b16 %v3830
        %v4587 = vunpack.c.h.b16 %v3830
        %v4588 = vunpack.c.l.b16 %v3831
        %v4589 = vunpack.c.h.b16 %v3831
        %v4590 = vunpack.c.l.b16 %v3832
        %v4591 = vunpack.c.h.b16 %v3832
        %v4592 = vunpack.c.l.b16 %v3833
        %v4593 = vunpack.c.h.b16 %v3833
        %v4594 = vunpack.c.l.b16 %v3834
        %v4595 = vunpack.c.h.b16 %v3834
        %v4596 = vunpack.c.l.b16 %v3835
        %v4597 = vunpack.c.h.b16 %v3835
        %v4598 = vunpack.c.l.b16 %v3836
        %v4599 = vunpack.c.h.b16 %v3836
        %v4600 = vunpack.c.l.b16 %v3837
        %v4601 = vunpack.c.h.b16 %v3837
        %v4602 = vunpack.c.l.b16 %v3838
        %v4603 = vunpack.c.h.b16 %v3838
        %v4604 = vunpack.c.l.b16 %v3839
        %v4605 = vunpack.c.h.b16 %v3839
        %v4606 = vunpack.c.l.b16 %v3840
        %v4607 = vunpack.c.h.b16 %v3840
        %v4608 = vunpack.c.l.b16 %v3841
        %v4609 = vunpack.c.h.b16 %v3841
        %v4610 = vunpack.c.l.b16 %v3842
        %v4611 = vunpack.c.h.b16 %v3842
        %v4612 = vunpack.c.l.b16 %v3843
        %v4613 = vunpack.c.h.b16 %v3843
        %v4614 = vunpack.c.l.b16 %v3844
        %v4615 = vunpack.c.h.b16 %v3844
        %v4616 = vunpack.c.l.b16 %v3845
        %v4617 = vunpack.c.h.b16 %v3845
        %v4618 = vunpack.c.l.b16 %v3846
        %v4619 = vunpack.c.h.b16 %v3846
        %v4620 = vunpack.c.l.b16 %v3847
        %v4621 = vunpack.c.h.b16 %v3847
        %v4622 = vunpack.c.l.b16 %v3848
        %v4623 = vunpack.c.h.b16 %v3848
        %v4624 = vunpack.c.l.b16 %v3849
        %v4625 = vunpack.c.h.b16 %v3849
        %v4626 = vpack.c.b16 %v4118, %v4114
        %v4627 = vpack.c.b16 %v4119, %v4115
        %v4628 = vpack.c.b16 %v4120, %v4116
        %v4629 = vpack.c.b16 %v4121, %v4117
        %v4630 = vpack.c.b16 %v4126, %v4122
        %v4631 = vpack.c.b16 %v4127, %v4123
        %v4632 = vpack.c.b16 %v4128, %v4124
        %v4633 = vpack.c.b16 %v4129, %v4125
        %v4634 = vpack.c.b16 %v4134, %v4130
        %v4635 = vpack.c.b16 %v4135, %v4131
        %v4636 = vpack.c.b16 %v4136, %v4132
        %v4637 = vpack.c.b16 %v4137, %v4133
        %v4638 = vpack.c.b16 %v4142, %v4138
        %v4639 = vpack.c.b16 %v4143, %v4139
        %v4640 = vpack.c.b16 %v4144, %v4140
        %v4641 = vpack.c.b16 %v4145, %v4141
        %v4642 = vpack.c.b16 %v4150, %v4146
        %v4643 = vpack.c.b16 %v4151, %v4147
        %v4644 = vpack.c.b16 %v4152, %v4148
        %v4645 = vpack.c.b16 %v4153, %v4149
        %v4646 = vpack.c.b16 %v4158, %v4154
        %v4647 = vpack.c.b16 %v4159, %v4155
        %v4648 = vpack.c.b16 %v4160, %v4156
        %v4649 = vpack.c.b16 %v4161, %v4157
        %v4650 = vpack.c.b16 %v4166, %v4162
        %v4651 = vpack.c.b16 %v4167, %v4163
        %v4652 = vpack.c.b16 %v4168, %v4164
        %v4653 = vpack.c.b16 %v4169, %v4165
        %v4654 = vpack.c.b16 %v4174, %v4170
        %v4655 = vpack.c.b16 %v4175, %v4171
        %v4656 = vpack.c.b16 %v4176, %v4172
        %v4657 = vpack.c.b16 %v4177, %v4173
        %v4658 = vpack.c.b16 %v4182, %v4178
        %v4659 = vpack.c.b16 %v4183, %v4179
        %v4660 = vpack.c.b16 %v4184, %v4180
        %v4661 = vpack.c.b16 %v4185, %v4181
        %v4662 = vpack.c.b16 %v4190, %v4186
        %v4663 = vpack.c.b16 %v4191, %v4187
        %v4664 = vpack.c.b16 %v4192, %v4188
        %v4665 = vpack.c.b16 %v4193, %v4189
        %v4666 = vpack.c.b16 %v4198, %v4194
        %v4667 = vpack.c.b16 %v4199, %v4195
        %v4668 = vpack.c.b16 %v4200, %v4196
        %v4669 = vpack.c.b16 %v4201, %v4197
        %v4670 = vpack.c.b16 %v4206, %v4202
        %v4671 = vpack.c.b16 %v4207, %v4203
        %v4672 = vpack.c.b16 %v4208, %v4204
        %v4673 = vpack.c.b16 %v4209, %v4205
        %v4674 = vpack.c.b16 %v4214, %v4210
        %v4675 = vpack.c.b16 %v4215, %v4211
        %v4676 = vpack.c.b16 %v4216, %v4212
        %v4677 = vpack.c.b16 %v4217, %v4213
        %v4678 = vpack.c.b16 %v4222, %v4218
        %v4679 = vpack.c.b16 %v4223, %v4219
        %v4680 = vpack.c.b16 %v4224, %v4220
        %v4681 = vpack.c.b16 %v4225, %v4221
        %v4682 = vpack.c.b16 %v4230, %v4226
        %v4683 = vpack.c.b16 %v4231, %v4227
        %v4684 = vpack.c.b16 %v4232, %v4228
        %v4685 = vpack.c.b16 %v4233, %v4229
        %v4686 = vpack.c.b16 %v4238, %v4234
        %v4687 = vpack.c.b16 %v4239, %v4235
        %v4688 = vpack.c.b16 %v4240, %v4236
        %v4689 = vpack.c.b16 %v4241, %v4237
        %v4690 = vpack.c.b16 %v4246, %v4242
        %v4691 = vpack.c.b16 %v4247, %v4243
        %v4692 = vpack.c.b16 %v4248, %v4244
        %v4693 = vpack.c.b16 %v4249, %v4245
        %v4694 = vpack.c.b16 %v4254, %v4250
        %v4695 = vpack.c.b16 %v4255, %v4251
        %v4696 = vpack.c.b16 %v4256, %v4252
        %v4697 = vpack.c.b16 %v4257, %v4253
        %v4698 = vpack.c.b16 %v4262, %v4258
        %v4699 = vpack.c.b16 %v4263, %v4259
        %v4700 = vpack.c.b16 %v4264, %v4260
        %v4701 = vpack.c.b16 %v4265, %v4261
        %v4702 = vpack.c.b16 %v4270, %v4266
        %v4703 = vpack.c.b16 %v4271, %v4267
        %v4704 = vpack.c.b16 %v4272, %v4268
        %v4705 = vpack.c.b16 %v4273, %v4269
        %v4706 = vpack.c.b16 %v4278, %v4274
        %v4707 = vpack.c.b16 %v4279, %v4275
        %v4708 = vpack.c.b16 %v4280, %v4276
        %v4709 = vpack.c.b16 %v4281, %v4277
        %v4710 = vpack.c.b16 %v4286, %v4282
        %v4711 = vpack.c.b16 %v4287, %v4283
        %v4712 = vpack.c.b16 %v4288, %v4284
        %v4713 = vpack.c.b16 %v4289, %v4285
        %v4714 = vpack.c.b16 %v4294, %v4290
        %v4715 = vpack.c.b16 %v4295, %v4291
        %v4716 = vpack.c.b16 %v4296, %v4292
        %v4717 = vpack.c.b16 %v4297, %v4293
        %v4718 = vpack.c.b16 %v4302, %v4298
        %v4719 = vpack.c.b16 %v4303, %v4299
        %v4720 = vpack.c.b16 %v4304, %v4300
        %v4721 = vpack.c.b16 %v4305, %v4301
        %v4722 = vpack.c.b16 %v4310, %v4306
        %v4723 = vpack.c.b16 %v4311, %v4307
        %v4724 = vpack.c.b16 %v4312, %v4308
        %v4725 = vpack.c.b16 %v4313, %v4309
        %v4726 = vpack.c.b16 %v4318, %v4314
        %v4727 = vpack.c.b16 %v4319, %v4315
        %v4728 = vpack.c.b16 %v4320, %v4316
        %v4729 = vpack.c.b16 %v4321, %v4317
        %v4730 = vpack.c.b16 %v4326, %v4322
        %v4731 = vpack.c.b16 %v4327, %v4323
        %v4732 = vpack.c.b16 %v4328, %v4324
        %v4733 = vpack.c.b16 %v4329, %v4325
        %v4734 = vpack.c.b16 %v4334, %v4330
        %v4735 = vpack.c.b16 %v4335, %v4331
        %v4736 = vpack.c.b16 %v4336, %v4332
        %v4737 = vpack.c.b16 %v4337, %v4333
        %v4738 = vpack.c.b16 %v4342, %v4338
        %v4739 = vpack.c.b16 %v4343, %v4339
        %v4740 = vpack.c.b16 %v4344, %v4340
        %v4741 = vpack.c.b16 %v4345, %v4341
        %v4742 = vpack.c.b16 %v4350, %v4346
        %v4743 = vpack.c.b16 %v4351, %v4347
        %v4744 = vpack.c.b16 %v4352, %v4348
        %v4745 = vpack.c.b16 %v4353, %v4349
        %v4746 = vpack.c.b16 %v4358, %v4354
        %v4747 = vpack.c.b16 %v4359, %v4355
        %v4748 = vpack.c.b16 %v4360, %v4356
        %v4749 = vpack.c.b16 %v4361, %v4357
        %v4750 = vpack.c.b16 %v4366, %v4362
        %v4751 = vpack.c.b16 %v4367, %v4363
        %v4752 = vpack.c.b16 %v4368, %v4364
        %v4753 = vpack.c.b16 %v4369, %v4365
        %v4754 = vpack.c.b16 %v4374, %v4370
        %v4755 = vpack.c.b16 %v4375, %v4371
        %v4756 = vpack.c.b16 %v4376, %v4372
        %v4757 = vpack.c.b16 %v4377, %v4373
        %v4758 = vpack.c.b16 %v4382, %v4378
        %v4759 = vpack.c.b16 %v4383, %v4379
        %v4760 = vpack.c.b16 %v4384, %v4380
        %v4761 = vpack.c.b16 %v4385, %v4381
        %v4762 = vpack.c.b16 %v4390, %v4386
        %v4763 = vpack.c.b16 %v4391, %v4387
        %v4764 = vpack.c.b16 %v4392, %v4388
        %v4765 = vpack.c.b16 %v4393, %v4389
        %v4766 = vpack.c.b16 %v4398, %v4394
        %v4767 = vpack.c.b16 %v4399, %v4395
        %v4768 = vpack.c.b16 %v4400, %v4396
        %v4769 = vpack.c.b16 %v4401, %v4397
        %v4770 = vpack.c.b16 %v4406, %v4402
        %v4771 = vpack.c.b16 %v4407, %v4403
        %v4772 = vpack.c.b16 %v4408, %v4404
        %v4773 = vpack.c.b16 %v4409, %v4405
        %v4774 = vpack.c.b16 %v4414, %v4410
        %v4775 = vpack.c.b16 %v4415, %v4411
        %v4776 = vpack.c.b16 %v4416, %v4412
        %v4777 = vpack.c.b16 %v4417, %v4413
        %v4778 = vpack.c.b16 %v4422, %v4418
        %v4779 = vpack.c.b16 %v4423, %v4419
        %v4780 = vpack.c.b16 %v4424, %v4420
        %v4781 = vpack.c.b16 %v4425, %v4421
        %v4782 = vpack.c.b16 %v4430, %v4426
        %v4783 = vpack.c.b16 %v4431, %v4427
        %v4784 = vpack.c.b16 %v4432, %v4428
        %v4785 = vpack.c.b16 %v4433, %v4429
        %v4786 = vpack.c.b16 %v4438, %v4434
        %v4787 = vpack.c.b16 %v4439, %v4435
        %v4788 = vpack.c.b16 %v4440, %v4436
        %v4789 = vpack.c.b16 %v4441, %v4437
        %v4790 = vpack.c.b16 %v4446, %v4442
        %v4791 = vpack.c.b16 %v4447, %v4443
        %v4792 = vpack.c.b16 %v4448, %v4444
        %v4793 = vpack.c.b16 %v4449, %v4445
        %v4794 = vpack.c.b16 %v4454, %v4450
        %v4795 = vpack.c.b16 %v4455, %v4451
        %v4796 = vpack.c.b16 %v4456, %v4452
        %v4797 = vpack.c.b16 %v4457, %v4453
        %v4798 = vpack.c.b16 %v4462, %v4458
        %v4799 = vpack.c.b16 %v4463, %v4459
        %v4800 = vpack.c.b16 %v4464, %v4460
        %v4801 = vpack.c.b16 %v4465, %v4461
        %v4802 = vpack.c.b16 %v4470, %v4466
        %v4803 = vpack.c.b16 %v4471, %v4467
        %v4804 = vpack.c.b16 %v4472, %v4468
        %v4805 = vpack.c.b16 %v4473, %v4469
        %v4806 = vpack.c.b16 %v4478, %v4474
        %v4807 = vpack.c.b16 %v4479, %v4475
        %v4808 = vpack.c.b16 %v4480, %v4476
        %v4809 = vpack.c.b16 %v4481, %v4477
        %v4810 = vpack.c.b16 %v4486, %v4482
        %v4811 = vpack.c.b16 %v4487, %v4483
        %v4812 = vpack.c.b16 %v4488, %v4484
        %v4813 = vpack.c.b16 %v4489, %v4485
        %v4814 = vpack.c.b16 %v4494, %v4490
        %v4815 = vpack.c.b16 %v4495, %v4491
        %v4816 = vpack.c.b16 %v4496, %v4492
        %v4817 = vpack.c.b16 %v4497, %v4493
        %v4818 = vpack.c.b16 %v4502, %v4498
        %v4819 = vpack.c.b16 %v4503, %v4499
        %v4820 = vpack.c.b16 %v4504, %v4500
        %v4821 = vpack.c.b16 %v4505, %v4501
        %v4822 = vpack.c.b16 %v4510, %v4506
        %v4823 = vpack.c.b16 %v4511, %v4507
        %v4824 = vpack.c.b16 %v4512, %v4508
        %v4825 = vpack.c.b16 %v4513, %v4509
        %v4826 = vpack.c.b16 %v4518, %v4514
        %v4827 = vpack.c.b16 %v4519, %v4515
        %v4828 = vpack.c.b16 %v4520, %v4516
        %v4829 = vpack.c.b16 %v4521, %v4517
        %v4830 = vpack.c.b16 %v4526, %v4522
        %v4831 = vpack.c.b16 %v4527, %v4523
        %v4832 = vpack.c.b16 %v4528, %v4524
        %v4833 = vpack.c.b16 %v4529, %v4525
        %v4834 = vpack.c.b16 %v4534, %v4530
        %v4835 = vpack.c.b16 %v4535, %v4531
        %v4836 = vpack.c.b16 %v4536, %v4532
        %v4837 = vpack.c.b16 %v4537, %v4533
        %v4838 = vpack.c.b16 %v4542, %v4538
        %v4839 = vpack.c.b16 %v4543, %v4539
        %v4840 = vpack.c.b16 %v4544, %v4540
        %v4841 = vpack.c.b16 %v4545, %v4541
        %v4842 = vpack.c.b16 %v4550, %v4546
        %v4843 = vpack.c.b16 %v4551, %v4547
        %v4844 = vpack.c.b16 %v4552, %v4548
        %v4845 = vpack.c.b16 %v4553, %v4549
        %v4846 = vpack.c.b16 %v4558, %v4554
        %v4847 = vpack.c.b16 %v4559, %v4555
        %v4848 = vpack.c.b16 %v4560, %v4556
        %v4849 = vpack.c.b16 %v4561, %v4557
        %v4850 = vpack.c.b16 %v4566, %v4562
        %v4851 = vpack.c.b16 %v4567, %v4563
        %v4852 = vpack.c.b16 %v4568, %v4564
        %v4853 = vpack.c.b16 %v4569, %v4565
        %v4854 = vpack.c.b16 %v4574, %v4570
        %v4855 = vpack.c.b16 %v4575, %v4571
        %v4856 = vpack.c.b16 %v4576, %v4572
        %v4857 = vpack.c.b16 %v4577, %v4573
        %v4858 = vpack.c.b16 %v4582, %v4578
        %v4859 = vpack.c.b16 %v4583, %v4579
        %v4860 = vpack.c.b16 %v4584, %v4580
        %v4861 = vpack.c.b16 %v4585, %v4581
        %v4862 = vpack.c.b16 %v4590, %v4586
        %v4863 = vpack.c.b16 %v4591, %v4587
        %v4864 = vpack.c.b16 %v4592, %v4588
        %v4865 = vpack.c.b16 %v4593, %v4589
        %v4866 = vpack.c.b16 %v4598, %v4594
        %v4867 = vpack.c.b16 %v4599, %v4595
        %v4868 = vpack.c.b16 %v4600, %v4596
        %v4869 = vpack.c.b16 %v4601, %v4597
        %v4870 = vpack.c.b16 %v4606, %v4602
        %v4871 = vpack.c.b16 %v4607, %v4603
        %v4872 = vpack.c.b16 %v4608, %v4604
        %v4873 = vpack.c.b16 %v4609, %v4605
        %v4874 = vpack.c.b16 %v4614, %v4610
        %v4875 = vpack.c.b16 %v4615, %v4611
        %v4876 = vpack.c.b16 %v4616, %v4612
        %v4877 = vpack.c.b16 %v4617, %v4613
        %v4878 = vpack.c.b16 %v4622, %v4618
        %v4879 = vpack.c.b16 %v4623, %v4619
        %v4880 = vpack.c.b16 %v4624, %v4620
        %v4881 = vpack.c.b16 %v4625, %v4621
        %5138 = vmatprep.subr.bf16.mxu0 %v4627
        %5139 = vmatpush1.bf16.msra.mxu0 %v4626
        %5140 = vmatprep.subr.bf16.mxu0 %v4631
        %5141 = vmatpush1.bf16.msra.mxu0 %v4630
        %5142 = vmatprep.subr.bf16.mxu0 %v4635
        %5143 = vmatpush1.bf16.msra.mxu0 %v4634
        %5144 = vmatprep.subr.bf16.mxu0 %v4639
        %5145 = vmatpush1.bf16.msra.mxu0 %v4638
        %5146 = vmatprep.subr.bf16.mxu0 %v4643
        %5147 = vmatpush1.bf16.msra.mxu0 %v4642
        %5148 = vmatprep.subr.bf16.mxu0 %v4647
        %5149 = vmatpush1.bf16.msra.mxu0 %v4646
        %5150 = vmatprep.subr.bf16.mxu0 %v4651
        %5151 = vmatpush1.bf16.msra.mxu0 %v4650
        %5152 = vmatprep.subr.bf16.mxu0 %v4655
        %5153 = vmatpush1.bf16.msra.mxu0 %v4654
        %5154 = vmatprep.subr.bf16.mxu0 %v4659
        %5155 = vmatpush1.bf16.msra.mxu0 %v4658
        %5156 = vmatprep.subr.bf16.mxu0 %v4663
        %5157 = vmatpush1.bf16.msra.mxu0 %v4662
        %5158 = vmatprep.subr.bf16.mxu0 %v4667
        %5159 = vmatpush1.bf16.msra.mxu0 %v4666
        %5160 = vmatprep.subr.bf16.mxu0 %v4671
        %5161 = vmatpush1.bf16.msra.mxu0 %v4670
        %5162 = vmatprep.subr.bf16.mxu0 %v4675
        %5163 = vmatpush1.bf16.msra.mxu0 %v4674
        %5164 = vmatprep.subr.bf16.mxu0 %v4679
        %5165 = vmatpush1.bf16.msra.mxu0 %v4678
        %5166 = vmatprep.subr.bf16.mxu0 %v4683
        %5167 = vmatpush1.bf16.msra.mxu0 %v4682
        %5168 = vmatprep.subr.bf16.mxu0 %v4687
        %5169 = vmatpush1.bf16.msra.mxu0 %v4686
        %5170 = vmatprep.mubr.bf16.mxu0 %v3587
        %5171 = vmatmul.mubr.bf16.gmra.mrb[0].mxu0 %v3586
        %v5172 = vpop.f32.mrb[0].mxu0
        %v5173 = vadd.f32 0.0, %v5172
        %v5174 = vpop.f32.mrb[0].mxu0
        %v5175 = vadd.f32 0.0, %v5174
        %v5176 = vpop.f32.mrb[0].mxu0
        %v5177 = vadd.f32 0.0, %v5176
        %v5178 = vpop.f32.mrb[0].mxu0
        %v5179 = vadd.f32 0.0, %v5178
        %5180 = vdwg.mxu0
        %5181 = vmatprep.subr.bf16.mxu0 %v4691
        %5182 = vmatpush1.bf16.msra.mxu0 %v4690
        %5183 = vmatprep.subr.bf16.mxu0 %v4695
        %5184 = vmatpush1.bf16.msra.mxu0 %v4694
        %5185 = vmatprep.subr.bf16.mxu0 %v4699
        %5186 = vmatpush1.bf16.msra.mxu0 %v4698
        %5187 = vmatprep.subr.bf16.mxu0 %v4703
        %5188 = vmatpush1.bf16.msra.mxu0 %v4702
        %5189 = vmatprep.subr.bf16.mxu0 %v4707
        %5190 = vmatpush1.bf16.msra.mxu0 %v4706
        %5191 = vmatprep.subr.bf16.mxu0 %v4711
        %5192 = vmatpush1.bf16.msra.mxu0 %v4710
        %5193 = vmatprep.subr.bf16.mxu0 %v4715
        %5194 = vmatpush1.bf16.msra.mxu0 %v4714
        %5195 = vmatprep.subr.bf16.mxu0 %v4719
        %5196 = vmatpush1.bf16.msra.mxu0 %v4718
        %5197 = vmatprep.subr.bf16.mxu0 %v4723
        %5198 = vmatpush1.bf16.msra.mxu0 %v4722
        %5199 = vmatprep.subr.bf16.mxu0 %v4727
        %5200 = vmatpush1.bf16.msra.mxu0 %v4726
        %5201 = vmatprep.subr.bf16.mxu0 %v4731
        %5202 = vmatpush1.bf16.msra.mxu0 %v4730
        %5203 = vmatprep.subr.bf16.mxu0 %v4735
        %5204 = vmatpush1.bf16.msra.mxu0 %v4734
        %5205 = vmatprep.subr.bf16.mxu0 %v4739
        %5206 = vmatpush1.bf16.msra.mxu0 %v4738
        %5207 = vmatprep.subr.bf16.mxu0 %v4743
        %5208 = vmatpush1.bf16.msra.mxu0 %v4742
        %5209 = vmatprep.subr.bf16.mxu0 %v4747
        %5210 = vmatpush1.bf16.msra.mxu0 %v4746
        %5211 = vmatprep.subr.bf16.mxu0 %v4751
        %5212 = vmatpush1.bf16.msra.mxu0 %v4750
        %5213 = vmatprep.mubr.bf16.mxu0 %v3589
        %5214 = vmatmul.mubr.bf16.gmra.mrb[0].mxu0 %v3588
        %v5215 = vpop.f32.mrb[0].mxu0
        %v5216 = vadd.f32 %v5173, %v5215
        %v5217 = vpop.f32.mrb[0].mxu0
        %v5218 = vadd.f32 %v5175, %v5217
        %v5219 = vpop.f32.mrb[0].mxu0
        %v5220 = vadd.f32 %v5177, %v5219
        %v5221 = vpop.f32.mrb[0].mxu0
        %v5222 = vadd.f32 %v5179, %v5221
        %5223 = vdwg.mxu0
        %5224 = vmatprep.subr.bf16.mxu0 %v4755
        %5225 = vmatpush1.bf16.msra.mxu0 %v4754
        %5226 = vmatprep.subr.bf16.mxu0 %v4759
        %5227 = vmatpush1.bf16.msra.mxu0 %v4758
        %5228 = vmatprep.subr.bf16.mxu0 %v4763
        %5229 = vmatpush1.bf16.msra.mxu0 %v4762
        %5230 = vmatprep.subr.bf16.mxu0 %v4767
        %5231 = vmatpush1.bf16.msra.mxu0 %v4766
        %5232 = vmatprep.subr.bf16.mxu0 %v4771
        %5233 = vmatpush1.bf16.msra.mxu0 %v4770
        %5234 = vmatprep.subr.bf16.mxu0 %v4775
        %5235 = vmatpush1.bf16.msra.mxu0 %v4774
        %5236 = vmatprep.subr.bf16.mxu0 %v4779
        %5237 = vmatpush1.bf16.msra.mxu0 %v4778
        %5238 = vmatprep.subr.bf16.mxu0 %v4783
        %5239 = vmatpush1.bf16.msra.mxu0 %v4782
        %5240 = vmatprep.subr.bf16.mxu0 %v4787
        %5241 = vmatpush1.bf16.msra.mxu0 %v4786
        %5242 = vmatprep.subr.bf16.mxu0 %v4791
        %5243 = vmatpush1.bf16.msra.mxu0 %v4790
        %5244 = vmatprep.subr.bf16.mxu0 %v4795
        %5245 = vmatpush1.bf16.msra.mxu0 %v4794
        %5246 = vmatprep.subr.bf16.mxu0 %v4799
        %5247 = vmatpush1.bf16.msra.mxu0 %v4798
        %5248 = vmatprep.subr.bf16.mxu0 %v4803
        %5249 = vmatpush1.bf16.msra.mxu0 %v4802
        %5250 = vmatprep.subr.bf16.mxu0 %v4807
        %5251 = vmatpush1.bf16.msra.mxu0 %v4806
        %5252 = vmatprep.subr.bf16.mxu0 %v4811
        %5253 = vmatpush1.bf16.msra.mxu0 %v4810
        %5254 = vmatprep.subr.bf16.mxu0 %v4815
        %5255 = vmatpush1.bf16.msra.mxu0 %v4814
        %5256 = vmatprep.mubr.bf16.mxu0 %v3591
        %5257 = vmatmul.mubr.bf16.gmra.mrb[0].mxu0 %v3590
        %v5258 = vpop.f32.mrb[0].mxu0
        %v5259 = vadd.f32 %v5216, %v5258
        %v5260 = vpop.f32.mrb[0].mxu0
        %v5261 = vadd.f32 %v5218, %v5260
        %v5262 = vpop.f32.mrb[0].mxu0
        %v5263 = vadd.f32 %v5220, %v5262
        %v5264 = vpop.f32.mrb[0].mxu0
        %v5265 = vadd.f32 %v5222, %v5264
        %5266 = vdwg.mxu0
        %5267 = vmatprep.subr.bf16.mxu0 %v4819
        %5268 = vmatpush1.bf16.msra.mxu0 %v4818
        %5269 = vmatprep.subr.bf16.mxu0 %v4823
        %5270 = vmatpush1.bf16.msra.mxu0 %v4822
        %5271 = vmatprep.subr.bf16.mxu0 %v4827
        %5272 = vmatpush1.bf16.msra.mxu0 %v4826
        %5273 = vmatprep.subr.bf16.mxu0 %v4831
        %5274 = vmatpush1.bf16.msra.mxu0 %v4830
        %5275 = vmatprep.subr.bf16.mxu0 %v4835
        %5276 = vmatpush1.bf16.msra.mxu0 %v4834
        %5277 = vmatprep.subr.bf16.mxu0 %v4839
        %5278 = vmatpush1.bf16.msra.mxu0 %v4838
        %5279 = vmatprep.subr.bf16.mxu0 %v4843
        %5280 = vmatpush1.bf16.msra.mxu0 %v4842
        %5281 = vmatprep.subr.bf16.mxu0 %v4847
        %5282 = vmatpush1.bf16.msra.mxu0 %v4846
        %5283 = vmatprep.subr.bf16.mxu0 %v4851
        %5284 = vmatpush1.bf16.msra.mxu0 %v4850
        %5285 = vmatprep.subr.bf16.mxu0 %v4855
        %5286 = vmatpush1.bf16.msra.mxu0 %v4854
        %5287 = vmatprep.subr.bf16.mxu0 %v4859
        %5288 = vmatpush1.bf16.msra.mxu0 %v4858
        %5289 = vmatprep.subr.bf16.mxu0 %v4863
        %5290 = vmatpush1.bf16.msra.mxu0 %v4862
        %5291 = vmatprep.subr.bf16.mxu0 %v4867
        %5292 = vmatpush1.bf16.msra.mxu0 %v4866
        %5293 = vmatprep.subr.bf16.mxu0 %v4871
        %5294 = vmatpush1.bf16.msra.mxu0 %v4870
        %5295 = vmatprep.subr.bf16.mxu0 %v4875
        %5296 = vmatpush1.bf16.msra.mxu0 %v4874
        %5297 = vmatprep.subr.bf16.mxu0 %v4879
        %5298 = vmatpush1.bf16.msra.mxu0 %v4878
        %5299 = vmatprep.mubr.bf16.mxu0 %v3593
        %5300 = vmatmul.mubr.bf16.gmra.mrb[0].mxu0 %v3592
        %v5301 = vpop.f32.mrb[0].mxu0
        %v5302 = vadd.f32 %v5259, %v5301
        %v5303 = vpop.f32.mrb[0].mxu0
        %v5304 = vadd.f32 %v5261, %v5303
        %v5305 = vpop.f32.mrb[0].mxu0
        %v5306 = vadd.f32 %v5263, %v5305
        %v5307 = vpop.f32.mrb[0].mxu0
        %v5308 = vadd.f32 %v5265, %v5307
        %5309 = vdwg.mxu0
        %5310 = vmatprep.subr.bf16.mxu0 %v4629
        %5311 = vmatpush1.bf16.msra.mxu0 %v4628
        %5312 = vmatprep.subr.bf16.mxu0 %v4633
        %5313 = vmatpush1.bf16.msra.mxu0 %v4632
        %5314 = vmatprep.subr.bf16.mxu0 %v4637
        %5315 = vmatpush1.bf16.msra.mxu0 %v4636
        %5316 = vmatprep.subr.bf16.mxu0 %v4641
        %5317 = vmatpush1.bf16.msra.mxu0 %v4640
        %5318 = vmatprep.subr.bf16.mxu0 %v4645
        %5319 = vmatpush1.bf16.msra.mxu0 %v4644
        %5320 = vmatprep.subr.bf16.mxu0 %v4649
        %5321 = vmatpush1.bf16.msra.mxu0 %v4648
        %5322 = vmatprep.subr.bf16.mxu0 %v4653
        %5323 = vmatpush1.bf16.msra.mxu0 %v4652
        %5324 = vmatprep.subr.bf16.mxu0 %v4657
        %5325 = vmatpush1.bf16.msra.mxu0 %v4656
        %5326 = vmatprep.subr.bf16.mxu0 %v4661
        %5327 = vmatpush1.bf16.msra.mxu0 %v4660
        %5328 = vmatprep.subr.bf16.mxu0 %v4665
        %5329 = vmatpush1.bf16.msra.mxu0 %v4664
        %5330 = vmatprep.subr.bf16.mxu0 %v4669
        %5331 = vmatpush1.bf16.msra.mxu0 %v4668
        %5332 = vmatprep.subr.bf16.mxu0 %v4673
        %5333 = vmatpush1.bf16.msra.mxu0 %v4672
        %5334 = vmatprep.subr.bf16.mxu0 %v4677
        %5335 = vmatpush1.bf16.msra.mxu0 %v4676
        %5336 = vmatprep.subr.bf16.mxu0 %v4681
        %5337 = vmatpush1.bf16.msra.mxu0 %v4680
        %5338 = vmatprep.subr.bf16.mxu0 %v4685
        %5339 = vmatpush1.bf16.msra.mxu0 %v4684
        %5340 = vmatprep.subr.bf16.mxu0 %v4689
        %5341 = vmatpush1.bf16.msra.mxu0 %v4688
        %5342 = vmatprep.mubr.bf16.mxu0 %v3587
        %5343 = vmatmul.mubr.bf16.gmra.mrb[0].mxu0 %v3586
        %v5344 = vpop.f32.mrb[0].mxu0
        %v5345 = vadd.f32 0.0, %v5344
        %v5346 = vpop.f32.mrb[0].mxu0
        %v5347 = vadd.f32 0.0, %v5346
        %v5348 = vpop.f32.mrb[0].mxu0
        %v5349 = vadd.f32 0.0, %v5348
        %v5350 = vpop.f32.mrb[0].mxu0
        %v5351 = vadd.f32 0.0, %v5350
        %5352 = vdwg.mxu0
        %5353 = vmatprep.subr.bf16.mxu0 %v4693
        %5354 = vmatpush1.bf16.msra.mxu0 %v4692
        %5355 = vmatprep.subr.bf16.mxu0 %v4697
        %5356 = vmatpush1.bf16.msra.mxu0 %v4696
        %5357 = vmatprep.subr.bf16.mxu0 %v4701
        %5358 = vmatpush1.bf16.msra.mxu0 %v4700
        %5359 = vmatprep.subr.bf16.mxu0 %v4705
        %5360 = vmatpush1.bf16.msra.mxu0 %v4704
        %5361 = vmatprep.subr.bf16.mxu0 %v4709
        %5362 = vmatpush1.bf16.msra.mxu0 %v4708
        %5363 = vmatprep.subr.bf16.mxu0 %v4713
        %5364 = vmatpush1.bf16.msra.mxu0 %v4712
        %5365 = vmatprep.subr.bf16.mxu0 %v4717
        %5366 = vmatpush1.bf16.msra.mxu0 %v4716
        %5367 = vmatprep.subr.bf16.mxu0 %v4721
        %5368 = vmatpush1.bf16.msra.mxu0 %v4720
        %5369 = vmatprep.subr.bf16.mxu0 %v4725
        %5370 = vmatpush1.bf16.msra.mxu0 %v4724
        %5371 = vmatprep.subr.bf16.mxu0 %v4729
        %5372 = vmatpush1.bf16.msra.mxu0 %v4728
        %5373 = vmatprep.subr.bf16.mxu0 %v4733
        %5374 = vmatpush1.bf16.msra.mxu0 %v4732
        %5375 = vmatprep.subr.bf16.mxu0 %v4737
        %5376 = vmatpush1.bf16.msra.mxu0 %v4736
        %5377 = vmatprep.subr.bf16.mxu0 %v4741
        %5378 = vmatpush1.bf16.msra.mxu0 %v4740
        %5379 = vmatprep.subr.bf16.mxu0 %v4745
        %5380 = vmatpush1.bf16.msra.mxu0 %v4744
        %5381 = vmatprep.subr.bf16.mxu0 %v4749
        %5382 = vmatpush1.bf16.msra.mxu0 %v4748
        %5383 = vmatprep.subr.bf16.mxu0 %v4753
        %5384 = vmatpush1.bf16.msra.mxu0 %v4752
        %5385 = vmatprep.mubr.bf16.mxu0 %v3589
        %5386 = vmatmul.mubr.bf16.gmra.mrb[0].mxu0 %v3588
        %v5387 = vpop.f32.mrb[0].mxu0
        %v5388 = vadd.f32 %v5345, %v5387
        %v5389 = vpop.f32.mrb[0].mxu0
        %v5390 = vadd.f32 %v5347, %v5389
        %v5391 = vpop.f32.mrb[0].mxu0
        %v5392 = vadd.f32 %v5349, %v5391
        %v5393 = vpop.f32.mrb[0].mxu0
        %v5394 = vadd.f32 %v5351, %v5393
        %5395 = vdwg.mxu0
        %5396 = vmatprep.subr.bf16.mxu0 %v4757
        %5397 = vmatpush1.bf16.msra.mxu0 %v4756
        %5398 = vmatprep.subr.bf16.mxu0 %v4761
        %5399 = vmatpush1.bf16.msra.mxu0 %v4760
        %5400 = vmatprep.subr.bf16.mxu0 %v4765
        %5401 = vmatpush1.bf16.msra.mxu0 %v4764
        %5402 = vmatprep.subr.bf16.mxu0 %v4769
        %5403 = vmatpush1.bf16.msra.mxu0 %v4768
        %5404 = vmatprep.subr.bf16.mxu0 %v4773
        %5405 = vmatpush1.bf16.msra.mxu0 %v4772
        %5406 = vmatprep.subr.bf16.mxu0 %v4777
        %5407 = vmatpush1.bf16.msra.mxu0 %v4776
        %5408 = vmatprep.subr.bf16.mxu0 %v4781
        %5409 = vmatpush1.bf16.msra.mxu0 %v4780
        %5410 = vmatprep.subr.bf16.mxu0 %v4785
        %5411 = vmatpush1.bf16.msra.mxu0 %v4784
        %5412 = vmatprep.subr.bf16.mxu0 %v4789
        %5413 = vmatpush1.bf16.msra.mxu0 %v4788
        %5414 = vmatprep.subr.bf16.mxu0 %v4793
        %5415 = vmatpush1.bf16.msra.mxu0 %v4792
        %5416 = vmatprep.subr.bf16.mxu0 %v4797
        %5417 = vmatpush1.bf16.msra.mxu0 %v4796
        %5418 = vmatprep.subr.bf16.mxu0 %v4801
        %5419 = vmatpush1.bf16.msra.mxu0 %v4800
        %5420 = vmatprep.subr.bf16.mxu0 %v4805
        %5421 = vmatpush1.bf16.msra.mxu0 %v4804
        %5422 = vmatprep.subr.bf16.mxu0 %v4809
        %5423 = vmatpush1.bf16.msra.mxu0 %v4808
        %5424 = vmatprep.subr.bf16.mxu0 %v4813
        %5425 = vmatpush1.bf16.msra.mxu0 %v4812
        %5426 = vmatprep.subr.bf16.mxu0 %v4817
        %5427 = vmatpush1.bf16.msra.mxu0 %v4816
        %5428 = vmatprep.mubr.bf16.mxu0 %v3591
        %5429 = vmatmul.mubr.bf16.gmra.mrb[0].mxu0 %v3590
        %v5430 = vpop.f32.mrb[0].mxu0
        %v5431 = vadd.f32 %v5388, %v5430
        %v5432 = vpop.f32.mrb[0].mxu0
        %v5433 = vadd.f32 %v5390, %v5432
        %v5434 = vpop.f32.mrb[0].mxu0
        %v5435 = vadd.f32 %v5392, %v5434
        %v5436 = vpop.f32.mrb[0].mxu0
        %v5437 = vadd.f32 %v5394, %v5436
        %5438 = vdwg.mxu0
        %5439 = vmatprep.subr.bf16.mxu0 %v4821
        %5440 = vmatpush1.bf16.msra.mxu0 %v4820
        %5441 = vmatprep.subr.bf16.mxu0 %v4825
        %5442 = vmatpush1.bf16.msra.mxu0 %v4824
        %5443 = vmatprep.subr.bf16.mxu0 %v4829
        %5444 = vmatpush1.bf16.msra.mxu0 %v4828
        %5445 = vmatprep.subr.bf16.mxu0 %v4833
        %5446 = vmatpush1.bf16.msra.mxu0 %v4832
        %5447 = vmatprep.subr.bf16.mxu0 %v4837
        %5448 = vmatpush1.bf16.msra.mxu0 %v4836
        %5449 = vmatprep.subr.bf16.mxu0 %v4841
        %5450 = vmatpush1.bf16.msra.mxu0 %v4840
        %5451 = vmatprep.subr.bf16.mxu0 %v4845
        %5452 = vmatpush1.bf16.msra.mxu0 %v4844
        %5453 = vmatprep.subr.bf16.mxu0 %v4849
        %5454 = vmatpush1.bf16.msra.mxu0 %v4848
        %5455 = vmatprep.subr.bf16.mxu0 %v4853
        %5456 = vmatpush1.bf16.msra.mxu0 %v4852
        %5457 = vmatprep.subr.bf16.mxu0 %v4857
        %5458 = vmatpush1.bf16.msra.mxu0 %v4856
        %5459 = vmatprep.subr.bf16.mxu0 %v4861
        %5460 = vmatpush1.bf16.msra.mxu0 %v4860
        %5461 = vmatprep.subr.bf16.mxu0 %v4865
        %5462 = vmatpush1.bf16.msra.mxu0 %v4864
        %5463 = vmatprep.subr.bf16.mxu0 %v4869
        %5464 = vmatpush1.bf16.msra.mxu0 %v4868
        %5465 = vmatprep.subr.bf16.mxu0 %v4873
        %5466 = vmatpush1.bf16.msra.mxu0 %v4872
        %5467 = vmatprep.subr.bf16.mxu0 %v4877
        %5468 = vmatpush1.bf16.msra.mxu0 %v4876
        %5469 = vmatprep.subr.bf16.mxu0 %v4881
        %5470 = vmatpush1.bf16.msra.mxu0 %v4880
        %5471 = vmatprep.mubr.bf16.mxu0 %v3593
        %5472 = vmatmul.mubr.bf16.gmra.mrb[0].mxu0 %v3592
        %v5473 = vpop.f32.mrb[0].mxu0
        %v5474 = vadd.f32 %v5431, %v5473
        %v5475 = vpop.f32.mrb[0].mxu0
        %v5476 = vadd.f32 %v5433, %v5475
        %v5477 = vpop.f32.mrb[0].mxu0
        %v5478 = vadd.f32 %v5435, %v5477
        %v5479 = vpop.f32.mrb[0].mxu0
        %v5480 = vadd.f32 %v5437, %v5479
        %5481 = vdwg.mxu0
        %v5482 = vmul.f32 %v5302, %v3850
        %v5483 = vmul.f32 %v5304, %v3851
        %v5484 = vmul.f32 %v5474, %v3852
        %v5485 = vmul.f32 %v5476, %v3853
        %v5486 = vmul.f32 %v5306, %v3854
        %v5487 = vmul.f32 %v5308, %v3855
        %v5488 = vmul.f32 %v5478, %v3856
        %v5489 = vmul.f32 %v5480, %v3857
        %v5490 = vadd.f32 %v5482, %v5486
        %v5491 = vrot.slane %v5490, 4
        %v5492 = vadd.f32 %v5490, %v5491
        %v5493 = vrot.slane %v5492, 2
        %v5494 = vadd.f32 %v5492, %v5493
        %v5495 = vrot.slane %v5494, 1
        %v5496 = vadd.f32 %v5494, %v5495
        %v5497 = vadd.f32 %v5483, %v5487
        %v5498 = vrot.slane %v5497, 4
        %v5499 = vadd.f32 %v5497, %v5498
        %v5500 = vrot.slane %v5499, 2
        %v5501 = vadd.f32 %v5499, %v5500
        %v5502 = vrot.slane %v5501, 1
        %v5503 = vadd.f32 %v5501, %v5502
        %v5504 = vadd.f32 %v5484, %v5488
        %v5505 = vrot.slane %v5504, 4
        %v5506 = vadd.f32 %v5504, %v5505
        %v5507 = vrot.slane %v5506, 2
        %v5508 = vadd.f32 %v5506, %v5507
        %v5509 = vrot.slane %v5508, 1
        %v5510 = vadd.f32 %v5508, %v5509
        %vm5511 = vcmask 130048
        %v5512 = vsel %vm5511, %v5485, 0.0
        %v5513 = vsel %vm5511, %v5489, 0.0
        %v5514 = vadd.f32 %v5512, %v5513
        %v5515 = vrot.slane %v5514, 4
        %v5516 = vadd.f32 %v5514, %v5515
        %v5517 = vrot.slane %v5516, 2
        %v5518 = vadd.f32 %v5516, %v5517
        %v5519 = vrot.slane %v5518, 1
        %v5520 = vadd.f32 %v5518, %v5519
        %v5521 = vpack.c.bf16 %v5496, %v5496
        %v5522 = vpack.c.bf16 %v5503, %v5503
        %v5523 = vpack.c.bf16 %v5510, %v5510
        %v5524 = vpack.c.bf16 %v5520, %v5520
        %v5525 = vld [vmem:[%s7] sm:$0xf]
        %v5526 = vld [vmem:[%s7 + $0x4] sm:$0xf]
        %v5527 = vld [vmem:[%s7 + $0x8] sm:$0xf]
        %v5528 = vld [vmem:[%s7 + $0xc] sm:$0xf]
        %v5529 = vld [vmem:[%s7 + $0x10] sm:$0xf]
        %v5530 = vld [vmem:[%s7 + $0x14] sm:$0xf]
        %v5531 = vld [vmem:[%s7 + $0x18] sm:$0xf]
        %v5532 = vld [vmem:[%s7 + $0x1c] sm:$0xf]
        %v5533 = vld [vmem:[%s7 + $0x20] sm:$0xf]
        %v5534 = vld [vmem:[%s7 + $0x24] sm:$0xf]
        %v5535 = vld [vmem:[%s7 + $0x28] sm:$0xf]
        %v5536 = vld [vmem:[%s7 + $0x2c] sm:$0xf]
        %v5537 = vld [vmem:[%s7 + $0x30] sm:$0xf]
        %v5538 = vld [vmem:[%s7 + $0x34] sm:$0xf]
        %v5539 = vld [vmem:[%s7 + $0x38] sm:$0xf]
        %v5540 = vld [vmem:[%s7 + $0x3c] sm:$0xf]
        %v5541 = vld [vmem:[%s7 + $0x40] sm:$0xf]
        %v5542 = vld [vmem:[%s7 + $0x44] sm:$0xf]
        %v5543 = vld [vmem:[%s7 + $0x48] sm:$0xf]
        %v5544 = vld [vmem:[%s7 + $0x4c] sm:$0xf]
        %v5545 = vld [vmem:[%s7 + $0x50] sm:$0xf]
        %v5546 = vld [vmem:[%s7 + $0x54] sm:$0xf]
        %v5547 = vld [vmem:[%s7 + $0x58] sm:$0xf]
        %v5548 = vld [vmem:[%s7 + $0x5c] sm:$0xf]
        %v5549 = vld [vmem:[%s7 + $0x60] sm:$0xf]
        %v5550 = vld [vmem:[%s7 + $0x64] sm:$0xf]
        %v5551 = vld [vmem:[%s7 + $0x68] sm:$0xf]
        %v5552 = vld [vmem:[%s7 + $0x6c] sm:$0xf]
        %v5553 = vld [vmem:[%s7 + $0x70] sm:$0xf]
        %v5554 = vld [vmem:[%s7 + $0x74] sm:$0xf]
        %v5555 = vld [vmem:[%s7 + $0x78] sm:$0xf]
        %v5556 = vld [vmem:[%s7 + $0x7c] sm:$0xf]
        %v5557 = vld [vmem:[%s7 + $0x80] sm:$0xf]
        %v5558 = vld [vmem:[%s7 + $0x84] sm:$0xf]
        %v5559 = vld [vmem:[%s7 + $0x88] sm:$0xf]
        %v5560 = vld [vmem:[%s7 + $0x8c] sm:$0xf]
        %v5561 = vld [vmem:[%s7 + $0x90] sm:$0xf]
        %v5562 = vld [vmem:[%s7 + $0x94] sm:$0xf]
        %v5563 = vld [vmem:[%s7 + $0x98] sm:$0xf]
        %v5564 = vld [vmem:[%s7 + $0x9c] sm:$0xf]
        %v5565 = vld [vmem:[%s7 + $0xa0] sm:$0xf]
        %v5566 = vld [vmem:[%s7 + $0xa4] sm:$0xf]
        %v5567 = vld [vmem:[%s7 + $0xa8] sm:$0xf]
        %v5568 = vld [vmem:[%s7 + $0xac] sm:$0xf]
        %v5569 = vld [vmem:[%s7 + $0xb0] sm:$0xf]
        %v5570 = vld [vmem:[%s7 + $0xb4] sm:$0xf]
        %v5571 = vld [vmem:[%s7 + $0xb8] sm:$0xf]
        %v5572 = vld [vmem:[%s7 + $0xbc] sm:$0xf]
        %v5573 = vld [vmem:[%s7 + $0xc0] sm:$0xf]
        %v5574 = vld [vmem:[%s7 + $0xc4] sm:$0xf]
        %v5575 = vld [vmem:[%s8] sm:$0x1]
        %v5626 = vunpack.c.l.b16 %v5525
        %v5627 = vunpack.c.l.b16 %v5526
        %v5628 = vunpack.c.l.b16 %v5527
        %v5629 = vunpack.c.l.b16 %v5528
        %v5630 = vunpack.c.l.b16 %v5529
        %v5631 = vunpack.c.l.b16 %v5530
        %v5632 = vunpack.c.l.b16 %v5531
        %v5633 = vunpack.c.l.b16 %v5532
        %v5634 = vunpack.c.l.b16 %v5533
        %v5635 = vunpack.c.l.b16 %v5534
        %v5636 = vunpack.c.l.b16 %v5535
        %v5637 = vunpack.c.l.b16 %v5536
        %v5638 = vunpack.c.l.b16 %v5537
        %v5639 = vunpack.c.l.b16 %v5538
        %v5640 = vunpack.c.l.b16 %v5539
        %v5641 = vunpack.c.l.b16 %v5540
        %v5642 = vunpack.c.l.b16 %v5541
        %v5643 = vunpack.c.l.b16 %v5542
        %v5644 = vunpack.c.l.b16 %v5543
        %v5645 = vunpack.c.l.b16 %v5544
        %v5646 = vunpack.c.l.b16 %v5545
        %v5647 = vunpack.c.l.b16 %v5546
        %v5648 = vunpack.c.l.b16 %v5547
        %v5649 = vunpack.c.l.b16 %v5548
        %v5650 = vunpack.c.l.b16 %v5549
        %v5651 = vunpack.c.l.b16 %v5550
        %v5652 = vunpack.c.l.b16 %v5551
        %v5653 = vunpack.c.l.b16 %v5552
        %v5654 = vunpack.c.l.b16 %v5553
        %v5655 = vunpack.c.l.b16 %v5554
        %v5656 = vunpack.c.l.b16 %v5555
        %v5657 = vunpack.c.l.b16 %v5556
        %v5658 = vunpack.c.l.b16 %v5557
        %v5659 = vunpack.c.l.b16 %v5558
        %v5660 = vunpack.c.l.b16 %v5559
        %v5661 = vunpack.c.l.b16 %v5560
        %v5662 = vunpack.c.l.b16 %v5561
        %v5663 = vunpack.c.l.b16 %v5562
        %v5664 = vunpack.c.l.b16 %v5563
        %v5665 = vunpack.c.l.b16 %v5564
        %v5666 = vunpack.c.l.b16 %v5565
        %v5667 = vunpack.c.l.b16 %v5566
        %v5668 = vunpack.c.l.b16 %v5567
        %v5669 = vunpack.c.l.b16 %v5568
        %v5670 = vunpack.c.l.b16 %v5569
        %v5671 = vunpack.c.l.b16 %v5570
        %v5672 = vunpack.c.l.b16 %v5571
        %v5673 = vunpack.c.l.b16 %v5572
        %v5674 = vunpack.c.l.b16 %v5573
        %v5675 = vunpack.c.l.b16 %v5574
        %v5676 = vpack.c.b16 %v5627, %v5626
        %v5677 = vpack.c.b16 %v5629, %v5628
        %v5678 = vpack.c.b16 %v5631, %v5630
        %v5679 = vpack.c.b16 %v5633, %v5632
        %v5680 = vpack.c.b16 %v5635, %v5634
        %v5681 = vpack.c.b16 %v5637, %v5636
        %v5682 = vpack.c.b16 %v5639, %v5638
        %v5683 = vpack.c.b16 %v5641, %v5640
        %v5684 = vpack.c.b16 %v5643, %v5642
        %v5685 = vpack.c.b16 %v5645, %v5644
        %v5686 = vpack.c.b16 %v5647, %v5646
        %v5687 = vpack.c.b16 %v5649, %v5648
        %v5688 = vpack.c.b16 %v5651, %v5650
        %v5689 = vpack.c.b16 %v5653, %v5652
        %v5690 = vpack.c.b16 %v5655, %v5654
        %v5691 = vpack.c.b16 %v5657, %v5656
        %v5692 = vpack.c.b16 %v5659, %v5658
        %v5693 = vpack.c.b16 %v5661, %v5660
        %v5694 = vpack.c.b16 %v5663, %v5662
        %v5695 = vpack.c.b16 %v5665, %v5664
        %v5696 = vpack.c.b16 %v5667, %v5666
        %v5697 = vpack.c.b16 %v5669, %v5668
        %v5698 = vpack.c.b16 %v5671, %v5670
        %v5699 = vpack.c.b16 %v5673, %v5672
        %v5700 = vpack.c.b16 %v5675, %v5674
        %v5727 = vsel %vm5511, %v5524, 0
        %5729 = vmatprep.subr.bf16.mxu0 0
        %5730 = vmatpush1.bf16.msra.mxu0 %v5676
        %5731 = vmatprep.subr.bf16.mxu0 0
        %5732 = vmatpush1.bf16.msra.mxu0 %v5677
        %5733 = vmatprep.subr.bf16.mxu0 0
        %5734 = vmatpush1.bf16.msra.mxu0 %v5678
        %5735 = vmatprep.subr.bf16.mxu0 0
        %5736 = vmatpush1.bf16.msra.mxu0 %v5679
        %5737 = vmatprep.subr.bf16.mxu0 0
        %5738 = vmatpush1.bf16.msra.mxu0 %v5680
        %5739 = vmatprep.subr.bf16.mxu0 0
        %5740 = vmatpush1.bf16.msra.mxu0 %v5681
        %5741 = vmatprep.subr.bf16.mxu0 0
        %5742 = vmatpush1.bf16.msra.mxu0 %v5682
        %5743 = vmatprep.subr.bf16.mxu0 0
        %5744 = vmatpush1.bf16.msra.mxu0 %v5683
        %5745 = vmatprep.subr.bf16.mxu0 0
        %5746 = vmatpush1.bf16.msra.mxu0 %v5684
        %5747 = vmatprep.subr.bf16.mxu0 0
        %5748 = vmatpush1.bf16.msra.mxu0 %v5685
        %5749 = vmatprep.subr.bf16.mxu0 0
        %5750 = vmatpush1.bf16.msra.mxu0 %v5686
        %5751 = vmatprep.subr.bf16.mxu0 0
        %5752 = vmatpush1.bf16.msra.mxu0 %v5687
        %5753 = vmatprep.subr.bf16.mxu0 0
        %5754 = vmatpush1.bf16.msra.mxu0 %v5688
        %5755 = vmatprep.subr.bf16.mxu0 0
        %5756 = vmatpush1.bf16.msra.mxu0 %v5689
        %5757 = vmatprep.subr.bf16.mxu0 0
        %5758 = vmatpush1.bf16.msra.mxu0 %v5690
        %5759 = vmatprep.subr.bf16.mxu0 0
        %5760 = vmatpush1.bf16.msra.mxu0 %v5691
        %5761 = vmatprep.mubr.bf16.mxu0 %v5522
        %5762 = vmatmul.mubr.bf16.gmra.mrb[0].mxu0 %v5521
        %v5763 = vpop.f32.mrb[0].mxu0
        %v5764 = vadd.f32 %v5575, %v5763
        %v5765 = vpop.f32.mrb[0].mxu0
        %v5766 = vpop.f32.mrb[0].mxu0
        %v5767 = vpop.f32.mrb[0].mxu0
        %5768 = vdwg.mxu0
        %5769 = vmatprep.subr.bf16.mxu0 0
        %5770 = vmatpush1.bf16.msra.mxu0 %v5692
        %5771 = vmatprep.subr.bf16.mxu0 0
        %5772 = vmatpush1.bf16.msra.mxu0 %v5693
        %5773 = vmatprep.subr.bf16.mxu0 0
        %5774 = vmatpush1.bf16.msra.mxu0 %v5694
        %5775 = vmatprep.subr.bf16.mxu0 0
        %5776 = vmatpush1.bf16.msra.mxu0 %v5695
        %5777 = vmatprep.subr.bf16.mxu0 0
        %5778 = vmatpush1.bf16.msra.mxu0 %v5696
        %5779 = vmatprep.subr.bf16.mxu0 0
        %5780 = vmatpush1.bf16.msra.mxu0 %v5697
        %5781 = vmatprep.subr.bf16.mxu0 0
        %5782 = vmatpush1.bf16.msra.mxu0 %v5698
        %5783 = vmatprep.subr.bf16.mxu0 0
        %5784 = vmatpush1.bf16.msra.mxu0 %v5699
        %5785 = vmatprep.subr.bf16.mxu0 0
        %5786 = vmatpush1.bf16.msra.mxu0 %v5700
        %5787 = vmatprep.subr.bf16.mxu0 0
        %5788 = vmatpush1.bf16.msra.mxu0 0
        %5789 = vmatprep.subr.bf16.mxu0 0
        %5790 = vmatpush1.bf16.msra.mxu0 0
        %5791 = vmatprep.subr.bf16.mxu0 0
        %5792 = vmatpush1.bf16.msra.mxu0 0
        %5793 = vmatprep.subr.bf16.mxu0 0
        %5794 = vmatpush1.bf16.msra.mxu0 0
        %5795 = vmatprep.subr.bf16.mxu0 0
        %5796 = vmatpush1.bf16.msra.mxu0 0
        %5797 = vmatprep.subr.bf16.mxu0 0
        %5798 = vmatpush1.bf16.msra.mxu0 0
        %5799 = vmatprep.subr.bf16.mxu0 0
        %5800 = vmatpush1.bf16.msra.mxu0 0
        %5801 = vmatprep.mubr.bf16.mxu0 %v5727
        %5802 = vmatmul.mubr.bf16.gmra.mrb[0].mxu0 %v5523
        %v5803 = vpop.f32.mrb[0].mxu0
        %v5804 = vadd.f32 %v5764, %v5803
        %v5805 = vpop.f32.mrb[0].mxu0
        %v5806 = vpop.f32.mrb[0].mxu0
        %v5807 = vpop.f32.mrb[0].mxu0
        %5808 = vdwg.mxu0
        %v5809 = vmax.f32 %v5804, 0.0
        %v5810 = vpack.c.bf16 %v5809, %v5809
        %v5811 = vld [vmem:[%s9] sm:$0xf]
        %v5812 = vld [vmem:[%s9 + $0x4] sm:$0xf]
        %v5813 = vld [vmem:[%s9 + $0x8] sm:$0xf]
        %v5814 = vld [vmem:[%s9 + $0xc] sm:$0xf]
        %v5815 = vld [vmem:[%s9 + $0x10] sm:$0xf]
        %v5816 = vld [vmem:[%s9 + $0x14] sm:$0xf]
        %v5817 = vld [vmem:[%s9 + $0x18] sm:$0xf]
        %v5818 = vld [vmem:[%s9 + $0x1c] sm:$0xf]
        %v5819 = vld [vmem:[%s9 + $0x20] sm:$0xf]
        %v5820 = vld [vmem:[%s9 + $0x24] sm:$0xf]
        %v5821 = vld [vmem:[%s9 + $0x28] sm:$0xf]
        %v5822 = vld [vmem:[%s9 + $0x2c] sm:$0xf]
        %v5823 = vld [vmem:[%s9 + $0x30] sm:$0xf]
        %v5824 = vld [vmem:[%s9 + $0x34] sm:$0xf]
        %v5825 = vld [vmem:[%s9 + $0x38] sm:$0xf]
        %v5826 = vld [vmem:[%s10] sm:$0x1]
        %v5842 = vunpack.c.l.b16 %v5811
        %v5843 = vunpack.c.l.b16 %v5812
        %v5844 = vunpack.c.l.b16 %v5813
        %v5845 = vunpack.c.l.b16 %v5814
        %v5846 = vunpack.c.l.b16 %v5815
        %v5847 = vunpack.c.l.b16 %v5816
        %v5848 = vunpack.c.l.b16 %v5817
        %v5849 = vunpack.c.l.b16 %v5818
        %v5850 = vunpack.c.l.b16 %v5819
        %v5851 = vunpack.c.l.b16 %v5820
        %v5852 = vunpack.c.l.b16 %v5821
        %v5853 = vunpack.c.l.b16 %v5822
        %v5854 = vunpack.c.l.b16 %v5823
        %v5855 = vunpack.c.l.b16 %v5824
        %v5856 = vunpack.c.l.b16 %v5825
        %v5857 = vpack.c.b16 %v5843, %v5842
        %v5858 = vpack.c.b16 %v5845, %v5844
        %v5859 = vpack.c.b16 %v5847, %v5846
        %v5860 = vpack.c.b16 %v5849, %v5848
        %v5861 = vpack.c.b16 %v5851, %v5850
        %v5862 = vpack.c.b16 %v5853, %v5852
        %v5863 = vpack.c.b16 %v5855, %v5854
        %v5864 = vpack.c.b16 %v5856, %v5856
        %v5873 = vsel %vm2387, %v5810, 0
        %v5876 = vsel %vm1844, %v5864, 0
        %5878 = vmatprep.subr.bf16.mxu0 0
        %5879 = vmatpush1.bf16.msra.mxu0 %v5857
        %5880 = vmatprep.subr.bf16.mxu0 0
        %5881 = vmatpush1.bf16.msra.mxu0 %v5858
        %5882 = vmatprep.subr.bf16.mxu0 0
        %5883 = vmatpush1.bf16.msra.mxu0 %v5859
        %5884 = vmatprep.subr.bf16.mxu0 0
        %5885 = vmatpush1.bf16.msra.mxu0 %v5860
        %5886 = vmatprep.subr.bf16.mxu0 0
        %5887 = vmatpush1.bf16.msra.mxu0 %v5861
        %5888 = vmatprep.subr.bf16.mxu0 0
        %5889 = vmatpush1.bf16.msra.mxu0 %v5862
        %5890 = vmatprep.subr.bf16.mxu0 0
        %5891 = vmatpush1.bf16.msra.mxu0 %v5863
        %5892 = vmatprep.subr.bf16.mxu0 0
        %5893 = vmatpush1.bf16.msra.mxu0 %v5876
        %5894 = vmatprep.subr.bf16.mxu0 0
        %5895 = vmatpush1.bf16.msra.mxu0 0
        %5896 = vmatprep.subr.bf16.mxu0 0
        %5897 = vmatpush1.bf16.msra.mxu0 0
        %5898 = vmatprep.subr.bf16.mxu0 0
        %5899 = vmatpush1.bf16.msra.mxu0 0
        %5900 = vmatprep.subr.bf16.mxu0 0
        %5901 = vmatpush1.bf16.msra.mxu0 0
        %5902 = vmatprep.subr.bf16.mxu0 0
        %5903 = vmatpush1.bf16.msra.mxu0 0
        %5904 = vmatprep.subr.bf16.mxu0 0
        %5905 = vmatpush1.bf16.msra.mxu0 0
        %5906 = vmatprep.subr.bf16.mxu0 0
        %5907 = vmatpush1.bf16.msra.mxu0 0
        %5908 = vmatprep.subr.bf16.mxu0 0
        %5909 = vmatpush1.bf16.msra.mxu0 0
        %5910 = vmatprep.mubr.bf16.mxu0 0
        %5911 = vmatmul.mubr.bf16.gmra.mrb[0].mxu0 %v5873
        %v5912 = vpop.f32.mrb[0].mxu0
        %v5913 = vadd.f32 %v5826, %v5912
        %v5914 = vpop.f32.mrb[0].mxu0
        %v5915 = vpop.f32.mrb[0].mxu0
        %v5916 = vpop.f32.mrb[0].mxu0
        %5917 = vdwg.mxu0
        %v5918 = vmax.f32 %v5913, 0.0
        %v5919 = vpack.c.bf16 %v5918, %v5918
        %v5920 = vld [vmem:[%s11] sm:$0xf]
        %v5921 = vld [vmem:[%s11 + $0x4] sm:$0xf]
        %v5922 = vld [vmem:[%s11 + $0x8] sm:$0xf]
        %v5923 = vld [vmem:[%s11 + $0xc] sm:$0xf]
        %v5924 = vld [vmem:[%s11 + $0x10] sm:$0xf]
        %v5925 = vld [vmem:[%s11 + $0x14] sm:$0xf]
        %v5926 = vld [vmem:[%s11 + $0x18] sm:$0xf]
        %v5927 = vld [vmem:[%s11 + $0x1c] sm:$0xf]
        %v5928 = vld [vmem:[%s11 + $0x20] sm:$0xf]
        %v5929 = vld [vmem:[%s11 + $0x24] sm:$0xf]
        %v5930 = vld [vmem:[%s11 + $0x28] sm:$0x3]
        %v5931 = vld [vmem:[%s12] sm:$0x1]
        %v5943 = vunpack.c.l.b16 %v5920
        %v5944 = vunpack.c.l.b16 %v5921
        %v5945 = vunpack.c.l.b16 %v5922
        %v5946 = vunpack.c.l.b16 %v5923
        %v5947 = vunpack.c.l.b16 %v5924
        %v5948 = vunpack.c.l.b16 %v5925
        %v5949 = vunpack.c.l.b16 %v5926
        %v5950 = vunpack.c.l.b16 %v5927
        %v5951 = vunpack.c.l.b16 %v5928
        %v5952 = vunpack.c.l.b16 %v5929
        %v5953 = vunpack.c.l.b16 %v5930
        %v5954 = vpack.c.b16 %v5944, %v5943
        %v5955 = vpack.c.b16 %v5946, %v5945
        %v5956 = vpack.c.b16 %v5948, %v5947
        %v5957 = vpack.c.b16 %v5950, %v5949
        %v5958 = vpack.c.b16 %v5952, %v5951
        %v5959 = vpack.c.b16 %v5953, %v5953
        %vm5965 = vcmask 687104
        %v5967 = vsel %vm5965, %v5919, 0
        %vm5969 = vcmask 1041408
        %v5971 = vsel %vm5969, %v5959, 0
        %5973 = vmatprep.subr.bf16.mxu0 0
        %5974 = vmatpush1.bf16.msra.mxu0 %v5954
        %5975 = vmatprep.subr.bf16.mxu0 0
        %5976 = vmatpush1.bf16.msra.mxu0 %v5955
        %5977 = vmatprep.subr.bf16.mxu0 0
        %5978 = vmatpush1.bf16.msra.mxu0 %v5956
        %5979 = vmatprep.subr.bf16.mxu0 0
        %5980 = vmatpush1.bf16.msra.mxu0 %v5957
        %5981 = vmatprep.subr.bf16.mxu0 0
        %5982 = vmatpush1.bf16.msra.mxu0 %v5958
        %5983 = vmatprep.subr.bf16.mxu0 0
        %5984 = vmatpush1.bf16.msra.mxu0 %v5971
        %5985 = vmatprep.subr.bf16.mxu0 0
        %5986 = vmatpush1.bf16.msra.mxu0 0
        %5987 = vmatprep.subr.bf16.mxu0 0
        %5988 = vmatpush1.bf16.msra.mxu0 0
        %5989 = vmatprep.subr.bf16.mxu0 0
        %5990 = vmatpush1.bf16.msra.mxu0 0
        %5991 = vmatprep.subr.bf16.mxu0 0
        %5992 = vmatpush1.bf16.msra.mxu0 0
        %5993 = vmatprep.subr.bf16.mxu0 0
        %5994 = vmatpush1.bf16.msra.mxu0 0
        %5995 = vmatprep.subr.bf16.mxu0 0
        %5996 = vmatpush1.bf16.msra.mxu0 0
        %5997 = vmatprep.subr.bf16.mxu0 0
        %5998 = vmatpush1.bf16.msra.mxu0 0
        %5999 = vmatprep.subr.bf16.mxu0 0
        %6000 = vmatpush1.bf16.msra.mxu0 0
        %6001 = vmatprep.subr.bf16.mxu0 0
        %6002 = vmatpush1.bf16.msra.mxu0 0
        %6003 = vmatprep.subr.bf16.mxu0 0
        %6004 = vmatpush1.bf16.msra.mxu0 0
        %6005 = vmatprep.mubr.bf16.mxu0 0
        %6006 = vmatmul.mubr.bf16.gmra.mrb[0].mxu0 %v5967
        %v6007 = vpop.f32.mrb[0].mxu0
        %v6008 = vadd.f32 %v5931, %v6007
        %v6009 = vpop.f32.mrb[0].mxu0
        %v6010 = vpop.f32.mrb[0].mxu0
        %v6011 = vpop.f32.mrb[0].mxu0
        %6012 = vdwg.mxu0
        %6013 = vst [vmem:[%s433] sm:$0x1] %v6008
        %s6014 = sand.u32 %s313, 1
        %s6015 = scalar_lea.sflag [#allocation5], %s6014
        %s6016 = sand.u32 %s313, 1
        %s6017 = scalar_lea.vmem [#allocation4], %s6016
        // Predicated region
        $region73: #{lenet_forward.1} parent=71 // pred_check
          %p6018 = pneg %p323
        $region74: #{lenet_forward.1} parent=71 // pred_check_branch
          %6020 = sbr.rel (%p6018) target = $region76
        $region75: #{lenet_forward.1} parent=71 // pred_region
          %s6022 = ssub.s32 16, 16
          %6023 = vsyncadd %s6015, %s6022
          %s6024 = smul.addr %s27, 16
          %s6025 = scalar_lea.hbm %s13, %s6024
          %s6027 = sshll.u32 %s6017, 4
          %s6028 = int_to_ptr.vmem [resolvable:$true] %s6027
          %6030 = dma.vmem_to_hbm [thread:$0]  %s6028, 16, %s6025, %s6015
        $region76: #{lenet_forward.1} parent=71 // pred_fallthru
          _
      $region72: #{lenet_forward.1} parent=5 // pred_fallthru
        _
      %p6031 = scmp.le.s32.totalorder 2, %s22
      // Predicated region
      $region77: #{lenet_forward.1} parent=5 // pred_check
        %p6032 = pneg %p6031
      $region78: #{lenet_forward.1} parent=5 // pred_check_branch
        %6034 = sbr.rel (%p6032) target = $region80
      $region79: #{lenet_forward.1} parent=5 // pred_region
        %s6035 = ssub.s32 %s22, 2
        // Predicated region
        $region81: #{lenet_forward.1} parent=79 // pred_check
          %p6036 = pneg %p329
        $region82: #{lenet_forward.1} parent=79 // pred_check_branch
          %6038 = sbr.rel (%p6036) target = $region84
        $region83: #{lenet_forward.1} parent=79 // pred_region
          %s6039 = sand.u32 %s314, 1
          %s6040 = scalar_lea.sflag [#allocation5], %s6039
          %s6041 = sand.u32 %s314, 1
          %s6042 = scalar_lea.vmem [#allocation4], %s6041
          %6043 = dma.done %s6040, 16
        $region84: #{lenet_forward.1} parent=79 // pred_fallthru
          _
      $region80: #{lenet_forward.1} parent=5 // pred_fallthru
        _
    $region6: #{lenet_forward.1} parent=1 // loop_footer
      %s26 = sadd.s32 1, %s22
    $region7: #{lenet_forward.1} parent=1 // loop_footer_branch
      %21 = sbr.rel target = $region3
    $region8: #{lenet_forward.1} parent=1 // loop_exit
      _
    %6044 = vsyncpa [#allocation5], 1
    %s6045 = scalar_lea.sflag [#allocation5], 1
    %6046 = vsyncpa %s6045, 1

</llo_original>
